<compile_context>
chip_gen: v7x
topology: tpu7x:2x2x1
jax: 0.10.0
libtpu: 0.0.40
codegen_flags: <defaults>
</compile_context>

<pallas_src>
import functools

import jax
import jax.numpy as jnp
from jax.experimental import pallas as pl
from jax.experimental.pallas import tpu as pltpu


_K = 5                       # all convs run as 'same' 5x5 (3x3 zero-padded is exact)
_PAD = _K // 2
_NTAP = _K * _K              # 25 real taps
_NPAIR = (_NTAP + 1) // 2    # 13 tap pairs; last pair padded with zero weight rows
_KKC_MULT = 2 * _NPAIR       # 26 (K dim = 26*C, a multiple of 128 for C=64)


# ----------------------------------------------------------------------------
# Fused subnet kernel.  One grid step = one layer applied to B images.
# ----------------------------------------------------------------------------
def _fused_subnet_kernel(enc_ref, wl_ref, wop_ref, x_ref, w_ref, b_ref, o_ref,
                         act_ref, col_ref, *, L, B, H, W, C):
    # enc_ref : SMEM (L,) i32  raw op id (0=conv3x3, 1=conv5x5, else skip)
    # wl/wop  : SMEM (L,) i32  weight block indices (used only by index_maps)
    # x_ref   : VMEM (B, H, W*C)           input images (fetched once per block)
    # w_ref   : VMEM (1, 1, 26*C, C)       selected layer weight (compute dtype)
    # b_ref   : VMEM (1, 1, 1, C)  f32     selected layer bias
    # o_ref   : VMEM (B, H, W*C)           output (written at the last layer)
    # act_ref : VMEM (B, H+2P, W+2P, C)    resident activation, zero halo
    # col_ref : VMEM (B, H, W, 26*C)       im2col slab (compute dtype)
    del wl_ref, wop_ref          # consumed by the weight BlockSpec index_maps
    l = pl.program_id(1)
    Cout = C

    # First layer for this batch block: zero the halo'd scratch, load the input.
    @pl.when(l == 0)
    def _init():
        # TODO(synk): only the halo ring strictly needs zeroing; the full clear
        # is a handful of vregs once per image and keeps the code simple.
        act_ref[...] = jnp.zeros_like(act_ref)
        act_ref[:, _PAD:_PAD + H, _PAD:_PAD + W, :] = (
            x_ref[...].reshape(B, H, W, C).astype(act_ref.dtype))

    op = enc_ref[l]

    # Conv layer (op 0 = 3x3-as-5x5, op 1 = 5x5).  Anything else = Identity:
    # the resident activation is left untouched.
    @pl.when(jnp.logical_or(op == 0, op == 1))
    def _conv():
        # im2col with PAIRED taps: each store writes two adjacent taps'
        # channels (2*64 = 128 lanes), so every col write is a full-width,
        # 128-lane-aligned unmasked store.
        for p in range(_NPAIR):
            t0, t1 = 2 * p, 2 * p + 1
            kh0, kw0 = divmod(t0, _K)
            a = act_ref[:, kh0:kh0 + H, kw0:kw0 + W, :]
            if t1 < _NTAP:
                kh1, kw1 = divmod(t1, _K)
                b = act_ref[:, kh1:kh1 + H, kw1:kw1 + W, :]
            else:
                # Phantom 26th tap: its weight rows are zero, so any filler
                # works; reuse `a` to avoid materializing a zeros slab.
                b = a
            col_ref[:, :, :, 2 * p * C:2 * (p + 1) * C] = (
                jnp.concatenate([a, b], axis=-1).astype(col_ref.dtype))

        # Single big-K MXU matmul: (B*H*W, 26*C) x (26*C, C), f32 accumulation.
        acc = jnp.dot(col_ref[...].reshape(B * H * W, _KKC_MULT * C),
                      w_ref[0, 0], preferred_element_type=jnp.float32)
        acc = acc + b_ref[0, 0]                               # bias stays f32
        act_ref[:, _PAD:_PAD + H, _PAD:_PAD + W, :] = (
            acc.reshape(B, H, W, Cout).astype(act_ref.dtype))

    # Last layer for this batch block: write the resident activation out as a
    # lane-dense (H, W*C) slab.
    @pl.when(l == L - 1)
    def _finalize():
        o_ref[...] = (act_ref[:, _PAD:_PAD + H, _PAD:_PAD + W, :]
                      .reshape(B, H, W * C).astype(o_ref.dtype))


def _pick_batch_block(n, max_block=8):
    """Largest divisor of n <= max_block, preferring >= 2 grid steps along the
    batch axis so both v7x TensorCores get work."""
    divisors = [b for b in range(1, min(max_block, n) + 1) if n % b == 0]
    multi_step = [b for b in divisors if n // b >= 2]
    return max(multi_step) if multi_step else max(divisors)


def _weight_select(enc_list):
    """Per-layer (layer, op) weight block indices.  Skip layers reuse the
    neighbouring conv layer's block index so they never trigger a weight
    re-DMA (same block index => Pallas skips the copy)."""
    conv = [(i, int(op)) for i, op in enumerate(enc_list) if op in (0, 1)]
    first = conv[0] if conv else (0, 0)
    wl, wop, prev = [], [], None
    for op in enc_list:
        if op in (0, 1):
            prev = (len(wl), int(op))
        sel = prev if prev is not None else first
        wl.append(sel[0])
        wop.append(sel[1])
    return wl, wop


def fused_subnet_forward(x_nhwc, w_stacked, b_stacked, enc, wl, wop,
                         max_batch_block=8):
    """Run the whole sampled subnet in one pallas_call.

    x_nhwc    : (N, H, W, C) float32
    w_stacked : (Lmax, 2, 26*C, C)  op 0 = 3x3 zero-padded to 5x5, op 1 = 5x5,
                64 trailing zero rows (phantom tap).  compute dtype.
    b_stacked : (Lmax, 2, 1, C) float32
    enc/wl/wop: (L,) int32 scalar-prefetch arrays.
    """
    N, H, W, C = x_nhwc.shape
    Lmax, _, KKC, Cout = w_stacked.shape
    L = int(enc.shape[0])
    assert Cout == C, "VMEM-resident activation requires Cin == Cout"
    assert KKC == _KKC_MULT * C
    assert 1 <= L <= Lmax

    B = _pick_batch_block(N, max_batch_block)
    cdt = w_stacked.dtype
    itemsize = lambda dt: jnp.dtype(dt).itemsize

    x2d = x_nhwc.reshape(N, H, W * C)     # lane-dense I/O (W*C multiple of 128)

    kernel = functools.partial(_fused_subnet_kernel, L=L, B=B, H=H, W=W, C=C)

    vmem_need = (B * (H + 2 * _PAD) * (W + 2 * _PAD) * C * itemsize(cdt)   # act
                 + B * H * W * KKC * itemsize(cdt)                         # col
                 + 2 * 2 * B * H * W * C * itemsize(x_nhwc.dtype)          # x/out dbl-buf
                 + 2 * (KKC * Cout * itemsize(cdt) + Cout * 4))            # w/b dbl-buf
    cp_kwargs = dict(dimension_semantics=("parallel", "arbitrary"))
    if vmem_need > 16 * 1024 * 1024:
        # Sized so the request stays well under v7x's 64 MiB physical VMEM.
        cp_kwargs["vmem_limit_bytes"] = min(int(1.5 * vmem_need), 48 * 1024 * 1024)

    flops = 2 * N * L * H * W * KKC * Cout
    bytes_accessed = (2 * N * H * W * C * itemsize(x_nhwc.dtype)
                      + (N // B) * L * (KKC * Cout * itemsize(cdt) + Cout * 4))

    y2d = pl.pallas_call(
        kernel,
        out_shape=jax.ShapeDtypeStruct((N, H, W * C), x_nhwc.dtype),
        grid_spec=pltpu.PrefetchScalarGridSpec(
            num_scalar_prefetch=3,
            grid=(N // B, L),
            in_specs=[
                pl.BlockSpec((B, H, W * C),
                             lambda n, l, enc, wl, wop: (n, 0, 0)),
                pl.BlockSpec((1, 1, KKC, Cout),
                             lambda n, l, enc, wl, wop: (wl[l], wop[l], 0, 0)),
                pl.BlockSpec((1, 1, 1, Cout),
                             lambda n, l, enc, wl, wop: (wl[l], wop[l], 0, 0)),
            ],
            out_specs=pl.BlockSpec((B, H, W * C),
                                   lambda n, l, enc, wl, wop: (n, 0, 0)),
            scratch_shapes=[
                pltpu.VMEM((B, H + 2 * _PAD, W + 2 * _PAD, C), cdt),
                pltpu.VMEM((B, H, W, KKC), cdt),
            ],
        ),
        compiler_params=pltpu.CompilerParams(**cp_kwargs),
        cost_estimate=pl.CostEstimate(flops=int(flops), transcendentals=0,
                                      bytes_accessed=int(bytes_accessed)),
    )(enc, wl, wop, x2d, w_stacked, b_stacked)
    return y2d.reshape(N, H, W, C)


@jax.jit
def _subnet_apply(x_nchw, enc, wl, wop, w_stacked, b_stacked):
    x = jnp.transpose(x_nchw, (0, 2, 3, 1))       # NCHW -> NHWC
    y = fused_subnet_forward(x, w_stacked, b_stacked, enc, wl, wop)
    return jnp.transpose(y, (0, 3, 1, 2))         # NHWC -> NCHW


# ----------------------------------------------------------------------------
# SuperStudent search space + subnet sampling (glue in plain JAX)
# ----------------------------------------------------------------------------
class SuperStudentPallas:
    """Mirrors SuperStudent.build_search_space(): per layer a conv3x3, a
    conv5x5 and a skip (identity).  Parameters use PyTorch Conv2d default init.

    compute_dtype: dtype of the matmul operands (weights + im2col slab +
    resident activation).  Default bfloat16 (native MXU rate, halved stores /
    weight DMA); float32 matches PyTorch exactly for validation.
    Accumulation is always float32 and biases stay float32.
    """

    def __init__(self, max_layers, key, compute_dtype=jnp.bfloat16):
        self.max_layers = max_layers
        self.compute_dtype = compute_dtype
        self.params = []
        C = 64
        for i in range(max_layers):
            k = jax.random.fold_in(key, i)
            k3w, k3b, k5w, k5b = jax.random.split(k, 4)
            fan3, fan5 = C * 3 * 3, C * 5 * 5
            lim3 = 1.0 / jnp.sqrt(jnp.float32(fan3))
            lim5 = 1.0 / jnp.sqrt(jnp.float32(fan5))
            self.params.append({
                "conv3x3_w": jax.random.uniform(k3w, (3, 3, C, C),
                                                jnp.float32, -lim3, lim3),
                "conv3x3_b": jax.random.uniform(k3b, (C,),
                                                jnp.float32, -lim3, lim3),
                "conv5x5_w": jax.random.uniform(k5w, (5, 5, C, C),
                                                jnp.float32, -lim5, lim5),
                "conv5x5_b": jax.random.uniform(k5b, (C,),
                                                jnp.float32, -lim5, lim5),
            })

        # Stack per-layer choices once: op 0 = conv3x3 zero-padded to 5x5
        # (exact for stride-1 'same' conv), op 1 = conv5x5.  64 trailing zero
        # rows pad the K dim to 26*C = 1664 (a multiple of 128) so the paired
        # 26th im2col tap contributes exactly zero.
        if max_layers > 0:
            pad_rows = (_KKC_MULT - _NTAP) * C
            w_rows, b_rows = [], []
            for p in self.params:
                w3p = jnp.pad(p["conv3x3_w"], ((1, 1), (1, 1), (0, 0), (0, 0)))
                w3r = jnp.pad(w3p.reshape(_NTAP * C, C), ((0, pad_rows), (0, 0)))
                w5r = jnp.pad(p["conv5x5_w"].reshape(_NTAP * C, C),
                              ((0, pad_rows), (0, 0)))
                w_rows.append(jnp.stack([w3r, w5r]))
                b_rows.append(jnp.stack([p["conv3x3_b"].reshape(1, C),
                                         p["conv5x5_b"].reshape(1, C)]))
            self.w_stacked = jnp.stack(w_rows).astype(compute_dtype)  # (L,2,1664,64)
            self.b_stacked = jnp.stack(b_rows)                        # (L,2,1,64) f32
        else:
            self.w_stacked = None
            self.b_stacked = None

    def sample_subnet(self, encoding):
        enc_list = [int(v) for v in encoding]
        L = len(enc_list)
        enc = jnp.asarray(enc_list, dtype=jnp.int32)
        wl_list, wop_list = _weight_select(enc_list)
        wl = jnp.asarray(wl_list, dtype=jnp.int32)
        wop = jnp.asarray(wop_list, dtype=jnp.int32)
        w_stacked, b_stacked = self.w_stacked, self.b_stacked

        def forward(x, t=None, **kwargs):
            # t accepted but unused, matching SubNet.forward(x, t, **kwargs).
            if L == 0:
                return x
            return _subnet_apply(x, enc, wl, wop, w_stacked, b_stacked)

        return forward


# ----------------------------------------------------------------------------
# Reference conv (XLA) for a correctness sanity check
# ----------------------------------------------------------------------------
def _conv_ref(x_nhwc, w_hwio, bias):
    y = jax.lax.conv_general_dilated(
        x_nhwc, w_hwio, window_strides=(1, 1), padding="SAME",
        dimension_numbers=("NHWC", "HWIO", "NHWC"))
    return y + bias[None, None, None, :]


if __name__ == "__main__":
    key = jax.random.PRNGKey(0)
    kx, kp = jax.random.split(key)

    # Small shapes consistent with the module: Conv2d(64, 64, ...) needs C=64.
    N, C, H, W = 2, 64, 16, 16
    x = jax.random.normal(kx, (N, C, H, W), jnp.float32)   # PyTorch NCHW input
    max_layers = 3

    def reference(model, encoding):
        xr = jnp.transpose(x, (0, 2, 3, 1))
        for i, op_idx in enumerate(encoding):
            p = model.params[i]
            if op_idx == 0:
                xr = _conv_ref(xr, p["conv3x3_w"], p["conv3x3_b"])
            elif op_idx == 1:
                xr = _conv_ref(xr, p["conv5x5_w"], p["conv5x5_b"])
        return jnp.transpose(xr, (0, 3, 1, 2))

    # Exercise conv3x3 / conv5x5 / skip placements, incl. all-skip identity
    # and a skip followed by convs (tests the skip weight-block reuse path).
    encodings = ([0, 1, 2], [2, 0, 1], [2, 2, 2], [1, 2, 0])

    # Exact validation with the f32 compute path.
    model_f32 = SuperStudentPallas(max_layers, kp, compute_dtype=jnp.float32)
    for encoding in encodings:
        subnet = model_f32.sample_subnet(encoding)
        out = jax.block_until_ready(subnet(x, t=None))
        assert out.shape == (N, C, H, W), out.shape
        ref = reference(model_f32, encoding)
        if not jnp.allclose(out, ref, atol=1e-4, rtol=1e-4):
            raise AssertionError(
                f"Pallas fused subnet (f32) mismatch vs XLA reference, enc={encoding}")

    # Default bf16 compute path (fast path): looser tolerance vs the f32 ref.
    model_bf16 = SuperStudentPallas(max_layers, kp)   # same key -> same params
    for encoding in encodings:
        subnet = model_bf16.sample_subnet(encoding)
        out = jax.block_until_ready(subnet(x, t=None))
        assert out.shape == (N, C, H, W), out.shape
        ref = reference(model_bf16, encoding)
        if not jnp.allclose(out, ref, atol=1e-1, rtol=1e-1):
            raise AssertionError(
                f"Pallas fused subnet (bf16) mismatch vs XLA reference, enc={encoding}")

    print("KERNEL_OK")
</pallas_src>

<mosaic_0001>
module attributes {stable_mosaic.version = 11 : i64} {
  func.func @_fused_subnet_kernel(%arg0: i32, %arg1: i32, %arg2: memref<3xi32, #tpu.memory_space<smem>>, %arg3: memref<3xi32, #tpu.memory_space<smem>>, %arg4: memref<3xi32, #tpu.memory_space<smem>>, %arg5: memref<1x16x1024xf32, #tpu.memory_space<vmem>>, %arg6: memref<1x1x1664x64xf32, #tpu.memory_space<vmem>>, %arg7: memref<1x1x1x64xf32, #tpu.memory_space<vmem>>, %arg8: memref<1x16x1024xf32, #tpu.memory_space<vmem>>, %arg9: memref<1x20x20x64xf32, #tpu.memory_space<vmem>>, %arg10: memref<1x16x16x1664xf32, #tpu.memory_space<vmem>>) attributes {dimension_semantics = [#tpu.dimension_semantics<parallel>, #tpu.dimension_semantics<arbitrary>], iteration_bounds = array<i64: 2, 3>, scalar_prefetch = 3 : i64, scratch_operands = 2 : i64, tpu.core_type = #tpu.core_type<tc>, window_params = [{transform_indices = @transform_0, window_bounds = array<i64: 1, 16, 1024>}, {transform_indices = @transform_1, window_bounds = array<i64: 1, 1, 1664, 64>}, {transform_indices = @transform_2, window_bounds = array<i64: 1, 1, 1, 64>}, {transform_indices = @transform_3, window_bounds = array<i64: 1, 16, 1024>}]} {
    %c0_i32 = arith.constant 0 : i32
    %0 = arith.cmpi eq, %arg1, %c0_i32 : i32
    %1 = arith.extui %0 : i1 to i32
    %c0_i32_0 = arith.constant 0 : i32
    %2 = arith.cmpi ne, %1, %c0_i32_0 : i32
    scf.if %2 {
      %cst = arith.constant 0.000000e+00 : f32
      %13 = vector.broadcast %cst : f32 to vector<1x20x20x64xf32>
      %c0 = arith.constant 0 : index
      %c0_4 = arith.constant 0 : index
      %c0_5 = arith.constant 0 : index
      %c0_6 = arith.constant 0 : index
      %14 = vector.load %arg9[%c0, %c0_4, %c0_5, %c0_6] : memref<1x20x20x64xf32, #tpu.memory_space<vmem>>, vector<1x20x20x64xf32>
      tpu.vector_store %arg9[%c0, %c0_4, %c0_5, %c0_6], %13 {strides = array<i32>} : memref<1x20x20x64xf32, #tpu.memory_space<vmem>>, vector<1x20x20x64xf32>,
      %c0_7 = arith.constant 0 : index
      %c0_8 = arith.constant 0 : index
      %c0_9 = arith.constant 0 : index
      %15 = vector.load %arg5[%c0_7, %c0_8, %c0_9] : memref<1x16x1024xf32, #tpu.memory_space<vmem>>, vector<1x16x1024xf32>
      %16 = vector.shape_cast %15 : vector<1x16x1024xf32> to vector<1x16x16x64xf32>
      %c0_10 = arith.constant 0 : index
      %c2 = arith.constant 2 : index
      %c2_11 = arith.constant 2 : index
      %c0_12 = arith.constant 0 : index
      %17 = vector.load %arg9[%c0_10, %c2, %c2_11, %c0_12] : memref<1x20x20x64xf32, #tpu.memory_space<vmem>>, vector<1x16x16x64xf32>
      tpu.vector_store %arg9[%c0_10, %c2, %c2_11, %c0_12], %16 {strides = array<i32>} : memref<1x20x20x64xf32, #tpu.memory_space<vmem>>, vector<1x16x16x64xf32>,
    } else {
    }
    %3 = arith.index_cast %arg1 : i32 to index
    %4 = memref.load %arg2[%3] : memref<3xi32, #tpu.memory_space<smem>>
    %c0_i32_1 = arith.constant 0 : i32
    %5 = arith.cmpi eq, %4, %c0_i32_1 : i32
    %c1_i32 = arith.constant 1 : i32
    %6 = arith.cmpi eq, %4, %c1_i32 : i32
    %7 = arith.ori %5, %6 : i1
    %8 = arith.extui %7 : i1 to i32
    %c0_i32_2 = arith.constant 0 : i32
    %9 = arith.cmpi ne, %8, %c0_i32_2 : i32
    scf.if %9 {
      %c0 = arith.constant 0 : index
      %c0_4 = arith.constant 0 : index
      %c0_5 = arith.constant 0 : index
      %c0_6 = arith.constant 0 : index
      %13 = vector.load %arg9[%c0, %c0_4, %c0_5, %c0_6] : memref<1x20x20x64xf32, #tpu.memory_space<vmem>>, vector<1x16x16x64xf32>
      %c0_7 = arith.constant 0 : index
      %c0_8 = arith.constant 0 : index
      %c1 = arith.constant 1 : index
      %c0_9 = arith.constant 0 : index
      %14 = vector.load %arg9[%c0_7, %c0_8, %c1, %c0_9] : memref<1x20x20x64xf32, #tpu.memory_space<vmem>>, vector<1x16x16x64xf32>
      %15 = tpu.concatenate %13, %14 in 3 : vector<1x16x16x64xf32>, vector<1x16x16x64xf32> -> vector<1x16x16x128xf32>
      %c0_10 = arith.constant 0 : index
      %c0_11 = arith.constant 0 : index
      %c0_12 = arith.constant 0 : index
      %c0_13 = arith.constant 0 : index
      %16 = vector.load %arg10[%c0_10, %c0_11, %c0_12, %c0_13] : memref<1x16x16x1664xf32, #tpu.memory_space<vmem>>, vector<1x16x16x128xf32>
      tpu.vector_store %arg10[%c0_10, %c0_11, %c0_12, %c0_13], %15 {strides = array<i32>} : memref<1x16x16x1664xf32, #tpu.memory_space<vmem>>, vector<1x16x16x128xf32>,
      %c0_14 = arith.constant 0 : index
      %c0_15 = arith.constant 0 : index
      %c2 = arith.constant 2 : index
      %c0_16 = arith.constant 0 : index
      %17 = vector.load %arg9[%c0_14, %c0_15, %c2, %c0_16] : memref<1x20x20x64xf32, #tpu.memory_space<vmem>>, vector<1x16x16x64xf32>
      %c0_17 = arith.constant 0 : index
      %c0_18 = arith.constant 0 : index
      %c3 = arith.constant 3 : index
      %c0_19 = arith.constant 0 : index
      %18 = vector.load %arg9[%c0_17, %c0_18, %c3, %c0_19] : memref<1x20x20x64xf32, #tpu.memory_space<vmem>>, vector<1x16x16x64xf32>
      %19 = tpu.concatenate %17, %18 in 3 : vector<1x16x16x64xf32>, vector<1x16x16x64xf32> -> vector<1x16x16x128xf32>
      %c0_20 = arith.constant 0 : index
      %c0_21 = arith.constant 0 : index
      %c0_22 = arith.constant 0 : index
      %c128 = arith.constant 128 : index
      %20 = vector.load %arg10[%c0_20, %c0_21, %c0_22, %c128] : memref<1x16x16x1664xf32, #tpu.memory_space<vmem>>, vector<1x16x16x128xf32>
      tpu.vector_store %arg10[%c0_20, %c0_21, %c0_22, %c128], %19 {strides = array<i32>} : memref<1x16x16x1664xf32, #tpu.memory_space<vmem>>, vector<1x16x16x128xf32>,
      %c0_23 = arith.constant 0 : index
      %c0_24 = arith.constant 0 : index
      %c4 = arith.constant 4 : index
      %c0_25 = arith.constant 0 : index
      %21 = vector.load %arg9[%c0_23, %c0_24, %c4, %c0_25] : memref<1x20x20x64xf32, #tpu.memory_space<vmem>>, vector<1x16x16x64xf32>
      %c0_26 = arith.constant 0 : index
      %c1_27 = arith.constant 1 : index
      %c0_28 = arith.constant 0 : index
      %c0_29 = arith.constant 0 : index
      %22 = vector.load %arg9[%c0_26, %c1_27, %c0_28, %c0_29] : memref<1x20x20x64xf32, #tpu.memory_space<vmem>>, vector<1x16x16x64xf32>
      %23 = tpu.concatenate %21, %22 in 3 : vector<1x16x16x64xf32>, vector<1x16x16x64xf32> -> vector<1x16x16x128xf32>
      %c0_30 = arith.constant 0 : index
      %c0_31 = arith.constant 0 : index
      %c0_32 = arith.constant 0 : index
      %c256 = arith.constant 256 : index
      %24 = vector.load %arg10[%c0_30, %c0_31, %c0_32, %c256] : memref<1x16x16x1664xf32, #tpu.memory_space<vmem>>, vector<1x16x16x128xf32>
      tpu.vector_store %arg10[%c0_30, %c0_31, %c0_32, %c256], %23 {strides = array<i32>} : memref<1x16x16x1664xf32, #tpu.memory_space<vmem>>, vector<1x16x16x128xf32>,
      %c0_33 = arith.constant 0 : index
      %c1_34 = arith.constant 1 : index
      %c1_35 = arith.constant 1 : index
      %c0_36 = arith.constant 0 : index
      %25 = vector.load %arg9[%c0_33, %c1_34, %c1_35, %c0_36] : memref<1x20x20x64xf32, #tpu.memory_space<vmem>>, vector<1x16x16x64xf32>
      %c0_37 = arith.constant 0 : index
      %c1_38 = arith.constant 1 : index
      %c2_39 = arith.constant 2 : index
      %c0_40 = arith.constant 0 : index
      %26 = vector.load %arg9[%c0_37, %c1_38, %c2_39, %c0_40] : memref<1x20x20x64xf32, #tpu.memory_space<vmem>>, vector<1x16x16x64xf32>
      %27 = tpu.concatenate %25, %26 in 3 : vector<1x16x16x64xf32>, vector<1x16x16x64xf32> -> vector<1x16x16x128xf32>
      %c0_41 = arith.constant 0 : index
      %c0_42 = arith.constant 0 : index
      %c0_43 = arith.constant 0 : index
      %c384 = arith.constant 384 : index
      %28 = vector.load %arg10[%c0_41, %c0_42, %c0_43, %c384] : memref<1x16x16x1664xf32, #tpu.memory_space<vmem>>, vector<1x16x16x128xf32>
      tpu.vector_store %arg10[%c0_41, %c0_42, %c0_43, %c384], %27 {strides = array<i32>} : memref<1x16x16x1664xf32, #tpu.memory_space<vmem>>, vector<1x16x16x128xf32>,
      %c0_44 = arith.constant 0 : index
      %c1_45 = arith.constant 1 : index
      %c3_46 = arith.constant 3 : index
      %c0_47 = arith.constant 0 : index
      %29 = vector.load %arg9[%c0_44, %c1_45, %c3_46, %c0_47] : memref<1x20x20x64xf32, #tpu.memory_space<vmem>>, vector<1x16x16x64xf32>
      %c0_48 = arith.constant 0 : index
      %c1_49 = arith.constant 1 : index
      %c4_50 = arith.constant 4 : index
      %c0_51 = arith.constant 0 : index
      %30 = vector.load %arg9[%c0_48, %c1_49, %c4_50, %c0_51] : memref<1x20x20x64xf32, #tpu.memory_space<vmem>>, vector<1x16x16x64xf32>
      %31 = tpu.concatenate %29, %30 in 3 : vector<1x16x16x64xf32>, vector<1x16x16x64xf32> -> vector<1x16x16x128xf32>
      %c0_52 = arith.constant 0 : index
      %c0_53 = arith.constant 0 : index
      %c0_54 = arith.constant 0 : index
      %c512 = arith.constant 512 : index
      %32 = vector.load %arg10[%c0_52, %c0_53, %c0_54, %c512] : memref<1x16x16x1664xf32, #tpu.memory_space<vmem>>, vector<1x16x16x128xf32>
      tpu.vector_store %arg10[%c0_52, %c0_53, %c0_54, %c512], %31 {strides = array<i32>} : memref<1x16x16x1664xf32, #tpu.memory_space<vmem>>, vector<1x16x16x128xf32>,
      %c0_55 = arith.constant 0 : index
      %c2_56 = arith.constant 2 : index
      %c0_57 = arith.constant 0 : index
      %c0_58 = arith.constant 0 : index
      %33 = vector.load %arg9[%c0_55, %c2_56, %c0_57, %c0_58] : memref<1x20x20x64xf32, #tpu.memory_space<vmem>>, vector<1x16x16x64xf32>
      %c0_59 = arith.constant 0 : index
      %c2_60 = arith.constant 2 : index
      %c1_61 = arith.constant 1 : index
      %c0_62 = arith.constant 0 : index
      %34 = vector.load %arg9[%c0_59, %c2_60, %c1_61, %c0_62] : memref<1x20x20x64xf32, #tpu.memory_space<vmem>>, vector<1x16x16x64xf32>
      %35 = tpu.concatenate %33, %34 in 3 : vector<1x16x16x64xf32>, vector<1x16x16x64xf32> -> vector<1x16x16x128xf32>
      %c0_63 = arith.constant 0 : index
      %c0_64 = arith.constant 0 : index
      %c0_65 = arith.constant 0 : index
      %c640 = arith.constant 640 : index
      %36 = vector.load %arg10[%c0_63, %c0_64, %c0_65, %c640] : memref<1x16x16x1664xf32, #tpu.memory_space<vmem>>, vector<1x16x16x128xf32>
      tpu.vector_store %arg10[%c0_63, %c0_64, %c0_65, %c640], %35 {strides = array<i32>} : memref<1x16x16x1664xf32, #tpu.memory_space<vmem>>, vector<1x16x16x128xf32>,
      %c0_66 = arith.constant 0 : index
      %c2_67 = arith.constant 2 : index
      %c2_68 = arith.constant 2 : index
      %c0_69 = arith.constant 0 : index
      %37 = vector.load %arg9[%c0_66, %c2_67, %c2_68, %c0_69] : memref<1x20x20x64xf32, #tpu.memory_space<vmem>>, vector<1x16x16x64xf32>
      %c0_70 = arith.constant 0 : index
      %c2_71 = arith.constant 2 : index
      %c3_72 = arith.constant 3 : index
      %c0_73 = arith.constant 0 : index
      %38 = vector.load %arg9[%c0_70, %c2_71, %c3_72, %c0_73] : memref<1x20x20x64xf32, #tpu.memory_space<vmem>>, vector<1x16x16x64xf32>
      %39 = tpu.concatenate %37, %38 in 3 : vector<1x16x16x64xf32>, vector<1x16x16x64xf32> -> vector<1x16x16x128xf32>
      %c0_74 = arith.constant 0 : index
      %c0_75 = arith.constant 0 : index
      %c0_76 = arith.constant 0 : index
      %c768 = arith.constant 768 : index
      %40 = vector.load %arg10[%c0_74, %c0_75, %c0_76, %c768] : memref<1x16x16x1664xf32, #tpu.memory_space<vmem>>, vector<1x16x16x128xf32>
      tpu.vector_store %arg10[%c0_74, %c0_75, %c0_76, %c768], %39 {strides = array<i32>} : memref<1x16x16x1664xf32, #tpu.memory_space<vmem>>, vector<1x16x16x128xf32>,
      %c0_77 = arith.constant 0 : index
      %c2_78 = arith.constant 2 : index
      %c4_79 = arith.constant 4 : index
      %c0_80 = arith.constant 0 : index
      %41 = vector.load %arg9[%c0_77, %c2_78, %c4_79, %c0_80] : memref<1x20x20x64xf32, #tpu.memory_space<vmem>>, vector<1x16x16x64xf32>
      %c0_81 = arith.constant 0 : index
      %c3_82 = arith.constant 3 : index
      %c0_83 = arith.constant 0 : index
      %c0_84 = arith.constant 0 : index
      %42 = vector.load %arg9[%c0_81, %c3_82, %c0_83, %c0_84] : memref<1x20x20x64xf32, #tpu.memory_space<vmem>>, vector<1x16x16x64xf32>
      %43 = tpu.concatenate %41, %42 in 3 : vector<1x16x16x64xf32>, vector<1x16x16x64xf32> -> vector<1x16x16x128xf32>
      %c0_85 = arith.constant 0 : index
      %c0_86 = arith.constant 0 : index
      %c0_87 = arith.constant 0 : index
      %c896 = arith.constant 896 : index
      %44 = vector.load %arg10[%c0_85, %c0_86, %c0_87, %c896] : memref<1x16x16x1664xf32, #tpu.memory_space<vmem>>, vector<1x16x16x128xf32>
      tpu.vector_store %arg10[%c0_85, %c0_86, %c0_87, %c896], %43 {strides = array<i32>} : memref<1x16x16x1664xf32, #tpu.memory_space<vmem>>, vector<1x16x16x128xf32>,
      %c0_88 = arith.constant 0 : index
      %c3_89 = arith.constant 3 : index
      %c1_90 = arith.constant 1 : index
      %c0_91 = arith.constant 0 : index
      %45 = vector.load %arg9[%c0_88, %c3_89, %c1_90, %c0_91] : memref<1x20x20x64xf32, #tpu.memory_space<vmem>>, vector<1x16x16x64xf32>
      %c0_92 = arith.constant 0 : index
      %c3_93 = arith.constant 3 : index
      %c2_94 = arith.constant 2 : index
      %c0_95 = arith.constant 0 : index
      %46 = vector.load %arg9[%c0_92, %c3_93, %c2_94, %c0_95] : memref<1x20x20x64xf32, #tpu.memory_space<vmem>>, vector<1x16x16x64xf32>
      %47 = tpu.concatenate %45, %46 in 3 : vector<1x16x16x64xf32>, vector<1x16x16x64xf32> -> vector<1x16x16x128xf32>
      %c0_96 = arith.constant 0 : index
      %c0_97 = arith.constant 0 : index
      %c0_98 = arith.constant 0 : index
      %c1024 = arith.constant 1024 : index
      %48 = vector.load %arg10[%c0_96, %c0_97, %c0_98, %c1024] : memref<1x16x16x1664xf32, #tpu.memory_space<vmem>>, vector<1x16x16x128xf32>
      tpu.vector_store %arg10[%c0_96, %c0_97, %c0_98, %c1024], %47 {strides = array<i32>} : memref<1x16x16x1664xf32, #tpu.memory_space<vmem>>, vector<1x16x16x128xf32>,
      %c0_99 = arith.constant 0 : index
      %c3_100 = arith.constant 3 : index
      %c3_101 = arith.constant 3 : index
      %c0_102 = arith.constant 0 : index
      %49 = vector.load %arg9[%c0_99, %c3_100, %c3_101, %c0_102] : memref<1x20x20x64xf32, #tpu.memory_space<vmem>>, vector<1x16x16x64xf32>
      %c0_103 = arith.constant 0 : index
      %c3_104 = arith.constant 3 : index
      %c4_105 = arith.constant 4 : index
      %c0_106 = arith.constant 0 : index
      %50 = vector.load %arg9[%c0_103, %c3_104, %c4_105, %c0_106] : memref<1x20x20x64xf32, #tpu.memory_space<vmem>>, vector<1x16x16x64xf32>
      %51 = tpu.concatenate %49, %50 in 3 : vector<1x16x16x64xf32>, vector<1x16x16x64xf32> -> vector<1x16x16x128xf32>
      %c0_107 = arith.constant 0 : index
      %c0_108 = arith.constant 0 : index
      %c0_109 = arith.constant 0 : index
      %c1152 = arith.constant 1152 : index
      %52 = vector.load %arg10[%c0_107, %c0_108, %c0_109, %c1152] : memref<1x16x16x1664xf32, #tpu.memory_space<vmem>>, vector<1x16x16x128xf32>
      tpu.vector_store %arg10[%c0_107, %c0_108, %c0_109, %c1152], %51 {strides = array<i32>} : memref<1x16x16x1664xf32, #tpu.memory_space<vmem>>, vector<1x16x16x128xf32>,
      %c0_110 = arith.constant 0 : index
      %c4_111 = arith.constant 4 : index
      %c0_112 = arith.constant 0 : index
      %c0_113 = arith.constant 0 : index
      %53 = vector.load %arg9[%c0_110, %c4_111, %c0_112, %c0_113] : memref<1x20x20x64xf32, #tpu.memory_space<vmem>>, vector<1x16x16x64xf32>
      %c0_114 = arith.constant 0 : index
      %c4_115 = arith.constant 4 : index
      %c1_116 = arith.constant 1 : index
      %c0_117 = arith.constant 0 : index
      %54 = vector.load %arg9[%c0_114, %c4_115, %c1_116, %c0_117] : memref<1x20x20x64xf32, #tpu.memory_space<vmem>>, vector<1x16x16x64xf32>
      %55 = tpu.concatenate %53, %54 in 3 : vector<1x16x16x64xf32>, vector<1x16x16x64xf32> -> vector<1x16x16x128xf32>
      %c0_118 = arith.constant 0 : index
      %c0_119 = arith.constant 0 : index
      %c0_120 = arith.constant 0 : index
      %c1280 = arith.constant 1280 : index
      %56 = vector.load %arg10[%c0_118, %c0_119, %c0_120, %c1280] : memref<1x16x16x1664xf32, #tpu.memory_space<vmem>>, vector<1x16x16x128xf32>
      tpu.vector_store %arg10[%c0_118, %c0_119, %c0_120, %c1280], %55 {strides = array<i32>} : memref<1x16x16x1664xf32, #tpu.memory_space<vmem>>, vector<1x16x16x128xf32>,
      %c0_121 = arith.constant 0 : index
      %c4_122 = arith.constant 4 : index
      %c2_123 = arith.constant 2 : index
      %c0_124 = arith.constant 0 : index
      %57 = vector.load %arg9[%c0_121, %c4_122, %c2_123, %c0_124] : memref<1x20x20x64xf32, #tpu.memory_space<vmem>>, vector<1x16x16x64xf32>
      %c0_125 = arith.constant 0 : index
      %c4_126 = arith.constant 4 : index
      %c3_127 = arith.constant 3 : index
      %c0_128 = arith.constant 0 : index
      %58 = vector.load %arg9[%c0_125, %c4_126, %c3_127, %c0_128] : memref<1x20x20x64xf32, #tpu.memory_space<vmem>>, vector<1x16x16x64xf32>
      %59 = tpu.concatenate %57, %58 in 3 : vector<1x16x16x64xf32>, vector<1x16x16x64xf32> -> vector<1x16x16x128xf32>
      %c0_129 = arith.constant 0 : index
      %c0_130 = arith.constant 0 : index
      %c0_131 = arith.constant 0 : index
      %c1408 = arith.constant 1408 : index
      %60 = vector.load %arg10[%c0_129, %c0_130, %c0_131, %c1408] : memref<1x16x16x1664xf32, #tpu.memory_space<vmem>>, vector<1x16x16x128xf32>
      tpu.vector_store %arg10[%c0_129, %c0_130, %c0_131, %c1408], %59 {strides = array<i32>} : memref<1x16x16x1664xf32, #tpu.memory_space<vmem>>, vector<1x16x16x128xf32>,
      %c0_132 = arith.constant 0 : index
      %c4_133 = arith.constant 4 : index
      %c4_134 = arith.constant 4 : index
      %c0_135 = arith.constant 0 : index
      %61 = vector.load %arg9[%c0_132, %c4_133, %c4_134, %c0_135] : memref<1x20x20x64xf32, #tpu.memory_space<vmem>>, vector<1x16x16x64xf32>
      %62 = tpu.concatenate %61, %61 in 3 : vector<1x16x16x64xf32>, vector<1x16x16x64xf32> -> vector<1x16x16x128xf32>
      %c0_136 = arith.constant 0 : index
      %c0_137 = arith.constant 0 : index
      %c0_138 = arith.constant 0 : index
      %c1536 = arith.constant 1536 : index
      %63 = vector.load %arg10[%c0_136, %c0_137, %c0_138, %c1536] : memref<1x16x16x1664xf32, #tpu.memory_space<vmem>>, vector<1x16x16x128xf32>
      tpu.vector_store %arg10[%c0_136, %c0_137, %c0_138, %c1536], %62 {strides = array<i32>} : memref<1x16x16x1664xf32, #tpu.memory_space<vmem>>, vector<1x16x16x128xf32>,
      %c0_139 = arith.constant 0 : index
      %c0_140 = arith.constant 0 : index
      %c0_141 = arith.constant 0 : index
      %c0_142 = arith.constant 0 : index
      %64 = vector.load %arg10[%c0_139, %c0_140, %c0_141, %c0_142] : memref<1x16x16x1664xf32, #tpu.memory_space<vmem>>, vector<1x16x16x1664xf32>
      %65 = vector.shape_cast %64 : vector<1x16x16x1664xf32> to vector<256x1664xf32>
      %c0_143 = arith.constant 0 : index
      %c0_144 = arith.constant 0 : index
      %c0_145 = arith.constant 0 : index
      %c0_146 = arith.constant 0 : index
      %66 = vector.load %arg6[%c0_143, %c0_144, %c0_145, %c0_146] : memref<1x1x1664x64xf32, #tpu.memory_space<vmem>>, vector<1x1x1664x64xf32>
      %67 = vector.shape_cast %66 : vector<1x1x1664x64xf32> to vector<1664x64xf32>
      %cst = arith.constant dense<0.000000e+00> : vector<256x64xf32>
      %68 = tpu.matmul %65, %67, %cst {dimension_numbers = #tpu.dot_dimension_numbers<[1], [0], [0], [1], [0, 0, 1, 1], [], []>} : vector<256x1664xf32>, vector<1664x64xf32>, vector<256x64xf32> -> vector<256x64xf32>
      %c0_147 = arith.constant 0 : index
      %c0_148 = arith.constant 0 : index
      %c0_149 = arith.constant 0 : index
      %c0_150 = arith.constant 0 : index
      %69 = vector.load %arg7[%c0_147, %c0_148, %c0_149, %c0_150] : memref<1x1x1x64xf32, #tpu.memory_space<vmem>>, vector<1x1x1x64xf32>
      %70 = vector.shape_cast %69 : vector<1x1x1x64xf32> to vector<1x64xf32>
      %71 = vector.broadcast %70 : vector<1x64xf32> to vector<256x64xf32>
      %72 = arith.addf %68, %71 : vector<256x64xf32>
      %73 = vector.shape_cast %72 : vector<256x64xf32> to vector<1x16x16x64xf32>
      %c0_151 = arith.constant 0 : index
      %c2_152 = arith.constant 2 : index
      %c2_153 = arith.constant 2 : index
      %c0_154 = arith.constant 0 : index
      %74 = vector.load %arg9[%c0_151, %c2_152, %c2_153, %c0_154] : memref<1x20x20x64xf32, #tpu.memory_space<vmem>>, vector<1x16x16x64xf32>
      tpu.vector_store %arg9[%c0_151, %c2_152, %c2_153, %c0_154], %73 {strides = array<i32>} : memref<1x20x20x64xf32, #tpu.memory_space<vmem>>, vector<1x16x16x64xf32>,
    } else {
    }
    %c2_i32 = arith.constant 2 : i32
    %10 = arith.cmpi eq, %arg1, %c2_i32 : i32
    %11 = arith.extui %10 : i1 to i32
    %c0_i32_3 = arith.constant 0 : i32
    %12 = arith.cmpi ne, %11, %c0_i32_3 : i32
    scf.if %12 {
      %c0 = arith.constant 0 : index
      %c2 = arith.constant 2 : index
      %c2_4 = arith.constant 2 : index
      %c0_5 = arith.constant 0 : index
      %13 = vector.load %arg9[%c0, %c2, %c2_4, %c0_5] : memref<1x20x20x64xf32, #tpu.memory_space<vmem>>, vector<1x16x16x64xf32>
      %14 = vector.shape_cast %13 : vector<1x16x16x64xf32> to vector<1x16x1024xf32>
      %c0_6 = arith.constant 0 : index
      %c0_7 = arith.constant 0 : index
      %c0_8 = arith.constant 0 : index
      %15 = vector.load %arg8[%c0_6, %c0_7, %c0_8] : memref<1x16x1024xf32, #tpu.memory_space<vmem>>, vector<1x16x1024xf32>
      tpu.vector_store %arg8[%c0_6, %c0_7, %c0_8], %14 {strides = array<i32>} : memref<1x16x1024xf32, #tpu.memory_space<vmem>>, vector<1x16x1024xf32>,
    } else {
    }
    return
  }
  func.func @transform_0(%arg0: i32, %arg1: i32, %arg2: memref<3xi32, #tpu.memory_space<smem>>, %arg3: memref<3xi32, #tpu.memory_space<smem>>, %arg4: memref<3xi32, #tpu.memory_space<smem>>) -> (i32, i32, i32) {
    %c0_i32 = arith.constant 0 : i32
    %c0_i32_0 = arith.constant 0 : i32
    %c0_i32_1 = arith.constant 0 : i32
    return %arg0, %c0_i32, %c0_i32_0 : i32, i32, i32
  }
  func.func @transform_1(%arg0: i32, %arg1: i32, %arg2: memref<3xi32, #tpu.memory_space<smem>>, %arg3: memref<3xi32, #tpu.memory_space<smem>>, %arg4: memref<3xi32, #tpu.memory_space<smem>>) -> (i32, i32, i32, i32) {
    %0 = arith.index_cast %arg1 : i32 to index
    %1 = memref.load %arg3[%0] : memref<3xi32, #tpu.memory_space<smem>>
    %2 = arith.index_cast %arg1 : i32 to index
    %3 = memref.load %arg4[%2] : memref<3xi32, #tpu.memory_space<smem>>
    %c0_i32 = arith.constant 0 : i32
    %c0_i32_0 = arith.constant 0 : i32
    %c0_i32_1 = arith.constant 0 : i32
    return %1, %3, %c0_i32, %c0_i32_0 : i32, i32, i32, i32
  }
  func.func @transform_2(%arg0: i32, %arg1: i32, %arg2: memref<3xi32, #tpu.memory_space<smem>>, %arg3: memref<3xi32, #tpu.memory_space<smem>>, %arg4: memref<3xi32, #tpu.memory_space<smem>>) -> (i32, i32, i32, i32) {
    %0 = arith.index_cast %arg1 : i32 to index
    %1 = memref.load %arg3[%0] : memref<3xi32, #tpu.memory_space<smem>>
    %2 = arith.index_cast %arg1 : i32 to index
    %3 = memref.load %arg4[%2] : memref<3xi32, #tpu.memory_space<smem>>
    %c0_i32 = arith.constant 0 : i32
    %c0_i32_0 = arith.constant 0 : i32
    %c0_i32_1 = arith.constant 0 : i32
    return %1, %3, %c0_i32, %c0_i32_0 : i32, i32, i32, i32
  }
  func.func @transform_3(%arg0: i32, %arg1: i32, %arg2: memref<3xi32, #tpu.memory_space<smem>>, %arg3: memref<3xi32, #tpu.memory_space<smem>>, %arg4: memref<3xi32, #tpu.memory_space<smem>>) -> (i32, i32, i32) {
    %c0_i32 = arith.constant 0 : i32
    %c0_i32_0 = arith.constant 0 : i32
    %c0_i32_1 = arith.constant 0 : i32
    return %arg0, %c0_i32, %c0_i32_0 : i32, i32, i32
  }
}

</mosaic_0001>

<llo_original>
// kernel: _subnet_apply.1
$region0: #{_subnet_apply.1}
  #allocation0 [shape = 'u32[]', space=smem, size = 0x4, offset = 0x4, fixed_abs, tag = 'smem constant byte address 0x4 - core index']
  #allocation1 [shape = 'u32[144,128]{1,0:T(1,128)}', space=vmem, size = 0x12000, scoped, tag = 'internal scratch']
  #allocation2 [shape = 'f32[1,20,20,64]{3,2,1,0:T(8,128)}', space=vmem, size = 0x3c000, scoped, tag = 'scratch operand']
  #allocation3 [shape = 'f32[1,16,16,1664]{3,2,1,0:T(8,128)}', space=vmem, size = 0x1a0000, scoped, tag = 'scratch operand']
  #allocation4 [shape = 's32[1]{0}', space=sflag, size = 0x4, scoped, tag = 'scoped memory for _subnet_apply.1']
  #allocation5 [shape = 'u8[512]{0}', space=smem, size = 0x200, scoped, tag = 'prefetched SMEM operand 0']
  #allocation6 [shape = 'u8[512]{0}', space=smem, size = 0x200, scoped, tag = 'prefetched SMEM operand 1']
  #allocation7 [shape = 'u8[512]{0}', space=smem, size = 0x200, scoped, tag = 'prefetched SMEM operand 2']
  %s0 = inlined_call_operand.vmem [shape: s32[3], index: 0, kind: input, shape index: {}]
  %s1 = inlined_call_operand.vmem [shape: s32[3], index: 1, kind: input, shape index: {}]
  %s2 = inlined_call_operand.vmem [shape: s32[3], index: 2, kind: input, shape index: {}]
  %s3 = inlined_call_operand.vmem [shape: f32[2,16,1024], index: 3, kind: input, shape index: {}]
  %s4 = inlined_call_operand.vmem [shape: f32[3,2,1664,64], index: 4, kind: input, shape index: {}]
  %s5 = inlined_call_operand.vmem [shape: f32[3,2,1,64], index: 5, kind: input, shape index: {}]
  %s6 = inlined_call_operand.vmem [shape: f32[2,16,1024], index: 6, kind: output, shape index: {}]
  %s7 = sld [smem:[#allocation0]]
  $region57: #{_subnet_apply.1} parent=0
    _
  %s9 = ssub.s32 1, %s7
  %s10 = scalar_select 0, %s9, %s7
  %s11 = sshll.u32 %s0, 4
  %s12 = int_to_ptr.vmem [resolvable:$true] %s11
  %14 = dma.vmem_to_smem %s12, 16, [#allocation5], [#allocation4]
  %s15 = sshll.u32 %s1, 4
  %s16 = int_to_ptr.vmem [resolvable:$true] %s15
  %18 = dma.vmem_to_smem %s16, 16, [#allocation6], [#allocation4]
  %s19 = sshll.u32 %s2, 4
  %s20 = int_to_ptr.vmem [resolvable:$true] %s19
  %22 = dma.vmem_to_smem %s20, 16, [#allocation7], [#allocation4]
  %23 = dma.done [#allocation4], 48
  %24 = sfence
  loop: start=0, step=1, limit=8
  $region2: #{_subnet_apply.1} parent=0 // loop_pre_header
    _
  $region3: #{_subnet_apply.1} parent=0 // loop_header
    %s26 = sphi 0, %s30
    %p27 = scmp.ge.s32.totalorder %s26, 8
    %s33 = sphi 0, %s45
    %s34 = sphi 0, %s41
    %s35 = sphi 0, %s33
    %s36 = sphi 0, %s34
    %s37 = sphi 0, %s35
    %s38 = sphi 0, %s36
    %s48 = sphi 0, %s50
    %s51 = sphi 0, %s48
    %s52 = sphi 0, %s51
    %s68 = sphi 0, %s52
    %s80 = sphi 0, %s82
    %s83 = sphi 0, %s80
    %s84 = sphi 0, %s83
    %s100 = sphi 0, %s84
    %s112 = sphi 0, %s114
    %s115 = sphi 0, %s112
    %s116 = sphi 0, %s115
    %s132 = sphi 0, %s116
    %s138 = sphi 0, %s140
    %s141 = sphi 0, %s138
    %s142 = sphi 0, %s141
    %s158 = sphi 0, %s142
  $region4: #{_subnet_apply.1} parent=0 // loop_header_branch
    %29 = sbr.rel (%p27) target = $region8
  $region5: #{_subnet_apply.1} parent=0 // loop_body
    %s31 = ssub.s32 %s26, 1
    %s32 = ssub.s32 %s26, 2
    %s39 = sadd.s32 1, %s34
    %p40 = scmp.ge.s32.totalorder %s39, 3
    %s41 = scalar_select %p40, 0, %s39
    %s42 = sadd.s32 1, %s33
    %s43 = scalar_select %p40, %s42, %s33
    %p44 = scmp.ge.s32.totalorder %s43, 2
    %s45 = scalar_select %p44, 0, %s43
    %s46 = ssub.s32 %s33, %s45
    %p47 = scmp.eq.s32.totalorder %s46, 0
    %s49 = sadd.s32 %s48, 1
    %s50 = scalar_select %p47, %s48, %s49
    %p53 = pneg %p47
    %p54 = scmp.eq.s32.totalorder %s26, 5
    %p55 = por %p53, %p54
    %p56 = scmp.ne.s32.totalorder %s48, %s51
    %p57 = scmp.eq.s32.totalorder %s26, 0
    %p58 = por %p56, %p57
    %p59 = scmp.ne.s32.totalorder %s48, %s51
    %p60 = scmp.eq.s32.totalorder %s31, 5
    %p61 = por %p59, %p60
    %p62 = scmp.ne.s32.totalorder %s51, %s52
    %p63 = scmp.eq.s32.totalorder %s31, 0
    %p64 = por %p62, %p63
    %p65 = scmp.ne.s32.totalorder %s51, %s52
    %p66 = scmp.eq.s32.totalorder %s32, 5
    %p67 = por %p65, %p66
    %p69 = scmp.ne.s32.totalorder %s52, %s68
    %p70 = scmp.eq.s32.totalorder %s32, 0
    %p71 = por %p69, %p70
    %s72 = sld [smem:[#allocation6 + %s34]]
    %s73 = sld [smem:[#allocation7 + %s34]]
    %s74 = sld [smem:[#allocation6 + %s41]]
    %s75 = sld [smem:[#allocation7 + %s41]]
    %s76 = ssub.s32 %s72, %s74
    %s77 = ssub.s32 %s73, %s75
    %s78 = sor.u32 %s76, %s77
    %p79 = scmp.eq.s32.totalorder %s78, 0
    %s81 = sadd.s32 %s80, 1
    %s82 = scalar_select %p79, %s80, %s81
    %p85 = pneg %p79
    %p86 = scmp.eq.s32.totalorder %s26, 5
    %p87 = por %p85, %p86
    %p88 = scmp.ne.s32.totalorder %s80, %s83
    %p89 = scmp.eq.s32.totalorder %s26, 0
    %p90 = por %p88, %p89
    %p91 = scmp.ne.s32.totalorder %s80, %s83
    %p92 = scmp.eq.s32.totalorder %s31, 5
    %p93 = por %p91, %p92
    %p94 = scmp.ne.s32.totalorder %s83, %s84
    %p95 = scmp.eq.s32.totalorder %s31, 0
    %p96 = por %p94, %p95
    %p97 = scmp.ne.s32.totalorder %s83, %s84
    %p98 = scmp.eq.s32.totalorder %s32, 5
    %p99 = por %p97, %p98
    %p101 = scmp.ne.s32.totalorder %s84, %s100
    %p102 = scmp.eq.s32.totalorder %s32, 0
    %p103 = por %p101, %p102
    %s104 = sld [smem:[#allocation6 + %s34]]
    %s105 = sld [smem:[#allocation7 + %s34]]
    %s106 = sld [smem:[#allocation6 + %s41]]
    %s107 = sld [smem:[#allocation7 + %s41]]
    %s108 = ssub.s32 %s104, %s106
    %s109 = ssub.s32 %s105, %s107
    %s110 = sor.u32 %s108, %s109
    %p111 = scmp.eq.s32.totalorder %s110, 0
    %s113 = sadd.s32 %s112, 1
    %s114 = scalar_select %p111, %s112, %s113
    %p117 = pneg %p111
    %p118 = scmp.eq.s32.totalorder %s26, 5
    %p119 = por %p117, %p118
    %p120 = scmp.ne.s32.totalorder %s112, %s115
    %p121 = scmp.eq.s32.totalorder %s26, 0
    %p122 = por %p120, %p121
    %p123 = scmp.ne.s32.totalorder %s112, %s115
    %p124 = scmp.eq.s32.totalorder %s31, 5
    %p125 = por %p123, %p124
    %p126 = scmp.ne.s32.totalorder %s115, %s116
    %p127 = scmp.eq.s32.totalorder %s31, 0
    %p128 = por %p126, %p127
    %p129 = scmp.ne.s32.totalorder %s115, %s116
    %p130 = scmp.eq.s32.totalorder %s32, 5
    %p131 = por %p129, %p130
    %p133 = scmp.ne.s32.totalorder %s116, %s132
    %p134 = scmp.eq.s32.totalorder %s32, 0
    %p135 = por %p133, %p134
    %s136 = ssub.s32 %s33, %s45
    %p137 = scmp.eq.s32.totalorder %s136, 0
    %s139 = sadd.s32 %s138, 1
    %s140 = scalar_select %p137, %s138, %s139
    %p143 = pneg %p137
    %p144 = scmp.eq.s32.totalorder %s26, 5
    %p145 = por %p143, %p144
    %p146 = scmp.ne.s32.totalorder %s138, %s141
    %p147 = scmp.eq.s32.totalorder %s26, 0
    %p148 = por %p146, %p147
    %p149 = scmp.ne.s32.totalorder %s138, %s141
    %p150 = scmp.eq.s32.totalorder %s31, 5
    %p151 = por %p149, %p150
    %p152 = scmp.ne.s32.totalorder %s141, %s142
    %p153 = scmp.eq.s32.totalorder %s31, 0
    %p154 = por %p152, %p153
    %p155 = scmp.ne.s32.totalorder %s141, %s142
    %p156 = scmp.eq.s32.totalorder %s32, 5
    %p157 = por %p155, %p156
    %p159 = scmp.ne.s32.totalorder %s142, %s158
    %p160 = scmp.eq.s32.totalorder %s32, 0
    %p161 = por %p159, %p160
    %p162 = scmp.le.s32.totalorder 1, %s26
    %p163 = scmp.lt.s32.totalorder %s26, 7
    %p164 = pnand %p162, %p163
    %p165 = pneg %p164
    // Predicated region
    $region9: #{_subnet_apply.1} parent=5 // pred_check
      _
    $region10: #{_subnet_apply.1} parent=5 // pred_check_branch
      %167 = sbr.rel (%p164) target = $region12
    $region11: #{_subnet_apply.1} parent=5 // pred_region
      %s168 = ssub.s32 %s26, 1
    $region12: #{_subnet_apply.1} parent=5 // pred_fallthru
      _
    %p169 = scmp.lt.s32.totalorder %s26, 6
    // Predicated region
    $region13: #{_subnet_apply.1} parent=5 // pred_check
      %p170 = pneg %p169
    $region14: #{_subnet_apply.1} parent=5 // pred_check_branch
      %172 = sbr.rel (%p170) target = $region16
    $region15: #{_subnet_apply.1} parent=5 // pred_region
      // Predicated region
      $region17: #{_subnet_apply.1} parent=15 // pred_check
        %p173 = pneg %p58
      $region18: #{_subnet_apply.1} parent=15 // pred_check_branch
        %175 = sbr.rel (%p173) target = $region20
      $region19: #{_subnet_apply.1} parent=15 // pred_region
        %p176 = scmp.lt.s32.totalorder %s33, 1
        %s177 = scalar_select %p176, %s33, 1
        %s178 = smul.addr %s177, 16
        %s179 = smul.addr %s178, 8
        %s180 = scalar_lea.vmem %s3, %s179
      $region20: #{_subnet_apply.1} parent=15 // pred_fallthru
        _
      // Predicated region
      $region21: #{_subnet_apply.1} parent=15 // pred_check
        %p181 = pneg %p90
      $region22: #{_subnet_apply.1} parent=15 // pred_check_branch
        %183 = sbr.rel (%p181) target = $region24
      $region23: #{_subnet_apply.1} parent=15 // pred_region
        %s184 = sld [smem:[#allocation6 + %s34]]
        %s185 = sld [smem:[#allocation7 + %s34]]
        %p186 = scmp.lt.s32.totalorder %s184, 2
        %s187 = scalar_select %p186, %s184, 2
        %p188 = scmp.lt.s32.totalorder %s185, 1
        %s189 = scalar_select %p188, %s185, 1
        %s190 = smul.addr %s189, 208
        %s191 = smul.addr %s187, 416
        %s192 = sadd.s32 %s190, %s191
        %s193 = smul.addr %s192, 8
        %s194 = scalar_lea.vmem %s4, %s193
        %s195 = sld [smem:[#allocation6 + %s34]]
        %s196 = sld [smem:[#allocation7 + %s34]]
      $region24: #{_subnet_apply.1} parent=15 // pred_fallthru
        _
      // Predicated region
      $region25: #{_subnet_apply.1} parent=15 // pred_check
        %p197 = pneg %p122
      $region26: #{_subnet_apply.1} parent=15 // pred_check_branch
        %199 = sbr.rel (%p197) target = $region28
      $region27: #{_subnet_apply.1} parent=15 // pred_region
        %s200 = sld [smem:[#allocation6 + %s34]]
        %s201 = sld [smem:[#allocation7 + %s34]]
        %p202 = scmp.lt.s32.totalorder %s200, 2
        %s203 = scalar_select %p202, %s200, 2
        %p204 = scmp.lt.s32.totalorder %s201, 1
        %s205 = scalar_select %p204, %s201, 1
        %s206 = smul.addr %s203, 2
        %s207 = sadd.s32 %s205, %s206
        %s208 = scalar_lea.vmem %s5, %s207
        %s209 = sld [smem:[#allocation6 + %s34]]
        %s210 = sld [smem:[#allocation7 + %s34]]
      $region28: #{_subnet_apply.1} parent=15 // pred_fallthru
        _
    $region16: #{_subnet_apply.1} parent=5 // pred_fallthru
      _
    %p211 = scmp.le.s32.totalorder 1, %s26
    %p212 = scmp.lt.s32.totalorder %s26, 7
    %p213 = pnand %p211, %p212
    %p214 = pneg %p213
    // Predicated region
    $region29: #{_subnet_apply.1} parent=5 // pred_check
      _
    $region30: #{_subnet_apply.1} parent=5 // pred_check_branch
      %216 = sbr.rel (%p213) target = $region32
    $region31: #{_subnet_apply.1} parent=5 // pred_region
      %s217 = ssub.s32 %s26, 1
      %p218 = scmp.lt.s32.totalorder %s35, 1
      %s219 = scalar_select %p218, %s35, 1
      %s220 = smul.addr %s219, 16
      %s221 = smul.addr %s220, 8
      %s222 = scalar_lea.vmem %s3, %s221
      %p223 = pneg %p64
      %p224 = pneg %p61
      %s225 = sld [smem:[#allocation6 + %s36]]
      %s226 = sld [smem:[#allocation7 + %s36]]
      %p227 = scmp.lt.s32.totalorder %s225, 2
      %s228 = scalar_select %p227, %s225, 2
      %p229 = scmp.lt.s32.totalorder %s226, 1
      %s230 = scalar_select %p229, %s226, 1
      %s231 = smul.addr %s230, 208
      %s232 = smul.addr %s228, 416
      %s233 = sadd.s32 %s231, %s232
      %s234 = smul.addr %s233, 8
      %s235 = scalar_lea.vmem %s4, %s234
      %p236 = pneg %p96
      %p237 = pneg %p93
      %s238 = sld [smem:[#allocation6 + %s36]]
      %s239 = sld [smem:[#allocation7 + %s36]]
      %p240 = scmp.lt.s32.totalorder %s238, 2
      %s241 = scalar_select %p240, %s238, 2
      %p242 = scmp.lt.s32.totalorder %s239, 1
      %s243 = scalar_select %p242, %s239, 1
      %s244 = smul.addr %s241, 2
      %s245 = sadd.s32 %s243, %s244
      %s246 = scalar_lea.vmem %s5, %s245
      %p247 = pneg %p128
      %p248 = pneg %p125
      %p249 = pneg %p154
      %p250 = pneg %p151
      %p251 = scmp.lt.s32.totalorder %s35, 1
      %s252 = scalar_select %p251, %s35, 1
      %s253 = smul.addr %s252, 16
      %s254 = smul.addr %s253, 8
      %s255 = scalar_lea.vmem %s6, %s254
      %p256 = scmp.lt.s32.totalorder %s35, 1
      %s257 = scalar_select %p256, %s35, 1
      %s258 = smul.addr %s257, 16
      %s259 = smul.addr %s258, 8
      %s260 = scalar_lea.vmem %s3, %s259
      %s261 = sld [smem:[#allocation6 + %s36]]
      %s262 = sld [smem:[#allocation7 + %s36]]
      %p263 = scmp.lt.s32.totalorder %s261, 2
      %s264 = scalar_select %p263, %s261, 2
      %p265 = scmp.lt.s32.totalorder %s262, 1
      %s266 = scalar_select %p265, %s262, 1
      %s267 = smul.addr %s266, 208
      %s268 = smul.addr %s264, 416
      %s269 = sadd.s32 %s267, %s268
      %s270 = smul.addr %s269, 8
      %s271 = scalar_lea.vmem %s4, %s270
      %s272 = sld [smem:[#allocation6 + %s36]]
      %s273 = sld [smem:[#allocation7 + %s36]]
      %s274 = sld [smem:[#allocation6 + %s36]]
      %s275 = sld [smem:[#allocation7 + %s36]]
      %p276 = scmp.lt.s32.totalorder %s274, 2
      %s277 = scalar_select %p276, %s274, 2
      %p278 = scmp.lt.s32.totalorder %s275, 1
      %s279 = scalar_select %p278, %s275, 1
      %s280 = smul.addr %s277, 2
      %s281 = sadd.s32 %s279, %s280
      %s282 = scalar_lea.vmem %s5, %s281
      %s283 = sld [smem:[#allocation6 + %s36]]
      %s284 = sld [smem:[#allocation7 + %s36]]
      %p285 = scmp.lt.s32.totalorder %s35, 1
      %s286 = scalar_select %p285, %s35, 1
      %s287 = smul.addr %s286, 16
      %s288 = smul.addr %s287, 8
      %s289 = scalar_lea.vmem %s6, %s288
      %p290 = scmp.eq.s32.totalorder %s36, 0
      // Predicated region
      $region33: #{_subnet_apply.1} parent=31 // pred_check
        %p291 = pneg %p290
      $region34: #{_subnet_apply.1} parent=31 // pred_check_branch
        %293 = sbr.rel (%p291) target = $region36
      $region35: #{_subnet_apply.1} parent=31 // pred_region
        %vm294 = vcmask 523264
        %295 = vst.msk [vmem:[#allocation2] sm:$0xff] %vm294, 0.0
        %296 = vst.msk [vmem:[#allocation2 + $0x8] sm:$0xff] %vm294, 0.0
        %vm297 = vcmask 519168
        %298 = vst.msk [vmem:[#allocation2 + $0x10] sm:$0xf] %vm297, 0.0
        %299 = vst.msk [vmem:[#allocation2 + $0x18] sm:$0xff] %vm294, 0.0
        %300 = vst.msk [vmem:[#allocation2 + $0x20] sm:$0xff] %vm294, 0.0
        %301 = vst.msk [vmem:[#allocation2 + $0x28] sm:$0xf] %vm297, 0.0
        %302 = vst.msk [vmem:[#allocation2 + $0x30] sm:$0xff] %vm294, 0.0
        %303 = vst.msk [vmem:[#allocation2 + $0x38] sm:$0xff] %vm294, 0.0
        %304 = vst.msk [vmem:[#allocation2 + $0x40] sm:$0xf] %vm297, 0.0
        %305 = vst.msk [vmem:[#allocation2 + $0x48] sm:$0xff] %vm294, 0.0
        %306 = vst.msk [vmem:[#allocation2 + $0x50] sm:$0xff] %vm294, 0.0
        %307 = vst.msk [vmem:[#allocation2 + $0x58] sm:$0xf] %vm297, 0.0
        %308 = vst.msk [vmem:[#allocation2 + $0x60] sm:$0xff] %vm294, 0.0
        %309 = vst.msk [vmem:[#allocation2 + $0x68] sm:$0xff] %vm294, 0.0
        %310 = vst.msk [vmem:[#allocation2 + $0x70] sm:$0xf] %vm297, 0.0
        %311 = vst.msk [vmem:[#allocation2 + $0x78] sm:$0xff] %vm294, 0.0
        %312 = vst.msk [vmem:[#allocation2 + $0x80] sm:$0xff] %vm294, 0.0
        %313 = vst.msk [vmem:[#allocation2 + $0x88] sm:$0xf] %vm297, 0.0
        %314 = vst.msk [vmem:[#allocation2 + $0x90] sm:$0xff] %vm294, 0.0
        %315 = vst.msk [vmem:[#allocation2 + $0x98] sm:$0xff] %vm294, 0.0
        %316 = vst.msk [vmem:[#allocation2 + $0xa0] sm:$0xf] %vm297, 0.0
        %317 = vst.msk [vmem:[#allocation2 + $0xa8] sm:$0xff] %vm294, 0.0
        %318 = vst.msk [vmem:[#allocation2 + $0xb0] sm:$0xff] %vm294, 0.0
        %319 = vst.msk [vmem:[#allocation2 + $0xb8] sm:$0xf] %vm297, 0.0
        %320 = vst.msk [vmem:[#allocation2 + $0xc0] sm:$0xff] %vm294, 0.0
        %321 = vst.msk [vmem:[#allocation2 + $0xc8] sm:$0xff] %vm294, 0.0
        %322 = vst.msk [vmem:[#allocation2 + $0xd0] sm:$0xf] %vm297, 0.0
        %323 = vst.msk [vmem:[#allocation2 + $0xd8] sm:$0xff] %vm294, 0.0
        %324 = vst.msk [vmem:[#allocation2 + $0xe0] sm:$0xff] %vm294, 0.0
        %325 = vst.msk [vmem:[#allocation2 + $0xe8] sm:$0xf] %vm297, 0.0
        %326 = vst.msk [vmem:[#allocation2 + $0xf0] sm:$0xff] %vm294, 0.0
        %327 = vst.msk [vmem:[#allocation2 + $0xf8] sm:$0xff] %vm294, 0.0
        %328 = vst.msk [vmem:[#allocation2 + $0x100] sm:$0xf] %vm297, 0.0
        %329 = vst.msk [vmem:[#allocation2 + $0x108] sm:$0xff] %vm294, 0.0
        %330 = vst.msk [vmem:[#allocation2 + $0x110] sm:$0xff] %vm294, 0.0
        %331 = vst.msk [vmem:[#allocation2 + $0x118] sm:$0xf] %vm297, 0.0
        %332 = vst.msk [vmem:[#allocation2 + $0x120] sm:$0xff] %vm294, 0.0
        %333 = vst.msk [vmem:[#allocation2 + $0x128] sm:$0xff] %vm294, 0.0
        %334 = vst.msk [vmem:[#allocation2 + $0x130] sm:$0xf] %vm297, 0.0
        %335 = vst.msk [vmem:[#allocation2 + $0x138] sm:$0xff] %vm294, 0.0
        %336 = vst.msk [vmem:[#allocation2 + $0x140] sm:$0xff] %vm294, 0.0
        %337 = vst.msk [vmem:[#allocation2 + $0x148] sm:$0xf] %vm297, 0.0
        %338 = vst.msk [vmem:[#allocation2 + $0x150] sm:$0xff] %vm294, 0.0
        %339 = vst.msk [vmem:[#allocation2 + $0x158] sm:$0xff] %vm294, 0.0
        %340 = vst.msk [vmem:[#allocation2 + $0x160] sm:$0xf] %vm297, 0.0
        %341 = vst.msk [vmem:[#allocation2 + $0x168] sm:$0xff] %vm294, 0.0
        %342 = vst.msk [vmem:[#allocation2 + $0x170] sm:$0xff] %vm294, 0.0
        %343 = vst.msk [vmem:[#allocation2 + $0x178] sm:$0xf] %vm297, 0.0
        %344 = vst.msk [vmem:[#allocation2 + $0x180] sm:$0xff] %vm294, 0.0
        %345 = vst.msk [vmem:[#allocation2 + $0x188] sm:$0xff] %vm294, 0.0
        %346 = vst.msk [vmem:[#allocation2 + $0x190] sm:$0xf] %vm297, 0.0
        %347 = vst.msk [vmem:[#allocation2 + $0x198] sm:$0xff] %vm294, 0.0
        %348 = vst.msk [vmem:[#allocation2 + $0x1a0] sm:$0xff] %vm294, 0.0
        %349 = vst.msk [vmem:[#allocation2 + $0x1a8] sm:$0xf] %vm297, 0.0
        %350 = vst.msk [vmem:[#allocation2 + $0x1b0] sm:$0xff] %vm294, 0.0
        %351 = vst.msk [vmem:[#allocation2 + $0x1b8] sm:$0xff] %vm294, 0.0
        %352 = vst.msk [vmem:[#allocation2 + $0x1c0] sm:$0xf] %vm297, 0.0
        %353 = vst.msk [vmem:[#allocation2 + $0x1c8] sm:$0xff] %vm294, 0.0
        %354 = vst.msk [vmem:[#allocation2 + $0x1d0] sm:$0xff] %vm294, 0.0
        %355 = vst.msk [vmem:[#allocation2 + $0x1d8] sm:$0xf] %vm297, 0.0
        %v356 = vld [vmem:[%s260] sm:$0xff]
        %v357 = vld [vmem:[%s260 + $0x8] sm:$0xff]
        %v358 = vld [vmem:[%s260 + $0x10] sm:$0xff]
        %v359 = vld [vmem:[%s260 + $0x18] sm:$0xff]
        %v360 = vld [vmem:[%s260 + $0x20] sm:$0xff]
        %v361 = vld [vmem:[%s260 + $0x28] sm:$0xff]
        %v362 = vld [vmem:[%s260 + $0x30] sm:$0xff]
        %v363 = vld [vmem:[%s260 + $0x38] sm:$0xff]
        %v364 = vld [vmem:[%s260 + $0x40] sm:$0xff]
        %v365 = vld [vmem:[%s260 + $0x48] sm:$0xff]
        %v366 = vld [vmem:[%s260 + $0x50] sm:$0xff]
        %v367 = vld [vmem:[%s260 + $0x58] sm:$0xff]
        %v368 = vld [vmem:[%s260 + $0x60] sm:$0xff]
        %v369 = vld [vmem:[%s260 + $0x68] sm:$0xff]
        %v370 = vld [vmem:[%s260 + $0x70] sm:$0xff]
        %v371 = vld [vmem:[%s260 + $0x78] sm:$0xff]
        %374 = vrot.lane.b32.xlu0 %v356, 64
        %v375 = vpop.permute.xlu0 %374
        %376 = vrot.lane.b32.xlu0 %v364, 64
        %v377 = vpop.permute.xlu0 %376
        %382 = vrot.lane.b32.xlu0 %v357, 64
        %v383 = vpop.permute.xlu0 %382
        %384 = vrot.lane.b32.xlu0 %v365, 64
        %v385 = vpop.permute.xlu0 %384
        %390 = vrot.lane.b32.xlu0 %v358, 64
        %v391 = vpop.permute.xlu0 %390
        %392 = vrot.lane.b32.xlu0 %v366, 64
        %v393 = vpop.permute.xlu0 %392
        %398 = vrot.lane.b32.xlu0 %v359, 64
        %v399 = vpop.permute.xlu0 %398
        %400 = vrot.lane.b32.xlu0 %v367, 64
        %v401 = vpop.permute.xlu0 %400
        %406 = vrot.lane.b32.xlu0 %v360, 64
        %v407 = vpop.permute.xlu0 %406
        %408 = vrot.lane.b32.xlu0 %v368, 64
        %v409 = vpop.permute.xlu0 %408
        %414 = vrot.lane.b32.xlu0 %v361, 64
        %v415 = vpop.permute.xlu0 %414
        %416 = vrot.lane.b32.xlu0 %v369, 64
        %v417 = vpop.permute.xlu0 %416
        %422 = vrot.lane.b32.xlu0 %v362, 64
        %v423 = vpop.permute.xlu0 %422
        %424 = vrot.lane.b32.xlu0 %v370, 64
        %v425 = vpop.permute.xlu0 %424
        %430 = vrot.lane.b32.xlu0 %v363, 64
        %v431 = vpop.permute.xlu0 %430
        %432 = vrot.lane.b32.xlu0 %v371, 64
        %v433 = vpop.permute.xlu0 %432
        %v436 = vcombine.low %v356, %v357
        %v437 = vcombine.high %v356, %v357
        %v439 = vunpack.c.l.s4 1983009808
        %v440 = vunpack.c.0.s8 %v439
        %v441 = vlaneseq
        %v442 = vshrl.u32 %v441, 7
        %v443 = vsub.s32 %v440, %v442
        %v444 = vrot.slane %v436, %v443
        %v446 = vunpack.c.l.s4 1983009808
        %v447 = vunpack.c.0.s8 %v446
        %v448 = vlaneseq
        %v449 = vshrl.u32 %v448, 7
        %v450 = vsub.s32 %v447, %v449
        %v451 = vrot.slane %v437, %v450
        %v452 = vcombine.low %v375, %v383
        %v453 = vcombine.high %v375, %v383
        %v455 = vunpack.c.l.s4 1983009808
        %v456 = vunpack.c.0.s8 %v455
        %v457 = vlaneseq
        %v458 = vshrl.u32 %v457, 7
        %v459 = vsub.s32 %v456, %v458
        %v460 = vrot.slane %v452, %v459
        %v462 = vunpack.c.l.s4 1983009808
        %v463 = vunpack.c.0.s8 %v462
        %v464 = vlaneseq
        %v465 = vshrl.u32 %v464, 7
        %v466 = vsub.s32 %v463, %v465
        %v467 = vrot.slane %v453, %v466
        %v468 = vcombine.low %v358, %v359
        %v469 = vcombine.high %v358, %v359
        %v471 = vunpack.c.l.s4 1983009808
        %v472 = vunpack.c.0.s8 %v471
        %v473 = vlaneseq
        %v474 = vshrl.u32 %v473, 7
        %v475 = vsub.s32 %v472, %v474
        %v476 = vrot.slane %v468, %v475
        %v478 = vunpack.c.l.s4 1983009808
        %v479 = vunpack.c.0.s8 %v478
        %v480 = vlaneseq
        %v481 = vshrl.u32 %v480, 7
        %v482 = vsub.s32 %v479, %v481
        %v483 = vrot.slane %v469, %v482
        %v484 = vcombine.low %v391, %v399
        %v485 = vcombine.high %v391, %v399
        %v487 = vunpack.c.l.s4 1983009808
        %v488 = vunpack.c.0.s8 %v487
        %v489 = vlaneseq
        %v490 = vshrl.u32 %v489, 7
        %v491 = vsub.s32 %v488, %v490
        %v492 = vrot.slane %v484, %v491
        %v494 = vunpack.c.l.s4 1983009808
        %v495 = vunpack.c.0.s8 %v494
        %v496 = vlaneseq
        %v497 = vshrl.u32 %v496, 7
        %v498 = vsub.s32 %v495, %v497
        %v499 = vrot.slane %v485, %v498
        %v500 = vcombine.low %v444, %v460
        %v501 = vcombine.high %v444, %v460
        %v503 = vunpack.c.l.s4 1934713408
        %v504 = vunpack.c.0.s8 %v503
        %v505 = vlaneseq
        %v506 = vshrl.u32 %v505, 7
        %v507 = vsub.s32 %v504, %v506
        %v508 = vrot.slane %v500, %v507
        %v510 = vunpack.c.l.s4 1934713408
        %v511 = vunpack.c.0.s8 %v510
        %v512 = vlaneseq
        %v513 = vshrl.u32 %v512, 7
        %v514 = vsub.s32 %v511, %v513
        %v515 = vrot.slane %v501, %v514
        %v516 = vcombine.low %v451, %v467
        %v517 = vcombine.high %v451, %v467
        %v519 = vunpack.c.l.s4 1934713408
        %v520 = vunpack.c.0.s8 %v519
        %v521 = vlaneseq
        %v522 = vshrl.u32 %v521, 7
        %v523 = vsub.s32 %v520, %v522
        %v524 = vrot.slane %v516, %v523
        %v526 = vunpack.c.l.s4 1934713408
        %v527 = vunpack.c.0.s8 %v526
        %v528 = vlaneseq
        %v529 = vshrl.u32 %v528, 7
        %v530 = vsub.s32 %v527, %v529
        %v531 = vrot.slane %v517, %v530
        %v532 = vcombine.low %v476, %v492
        %v533 = vcombine.high %v476, %v492
        %v535 = vunpack.c.l.s4 1934713408
        %v536 = vunpack.c.0.s8 %v535
        %v537 = vlaneseq
        %v538 = vshrl.u32 %v537, 7
        %v539 = vsub.s32 %v536, %v538
        %v540 = vrot.slane %v532, %v539
        %v542 = vunpack.c.l.s4 1934713408
        %v543 = vunpack.c.0.s8 %v542
        %v544 = vlaneseq
        %v545 = vshrl.u32 %v544, 7
        %v546 = vsub.s32 %v543, %v545
        %v547 = vrot.slane %v533, %v546
        %v548 = vcombine.low %v483, %v499
        %v549 = vcombine.high %v483, %v499
        %v551 = vunpack.c.l.s4 1934713408
        %v552 = vunpack.c.0.s8 %v551
        %v553 = vlaneseq
        %v554 = vshrl.u32 %v553, 7
        %v555 = vsub.s32 %v552, %v554
        %v556 = vrot.slane %v548, %v555
        %v558 = vunpack.c.l.s4 1934713408
        %v559 = vunpack.c.0.s8 %v558
        %v560 = vlaneseq
        %v561 = vshrl.u32 %v560, 7
        %v562 = vsub.s32 %v559, %v561
        %v563 = vrot.slane %v549, %v562
        %v564 = vcombine.low %v508, %v540
        %v565 = vcombine.high %v508, %v540
        %v566 = vcombine.low %v515, %v547
        %v567 = vcombine.high %v515, %v547
        %v568 = vcombine.low %v524, %v556
        %v569 = vcombine.high %v524, %v556
        %v570 = vcombine.low %v531, %v563
        %v571 = vcombine.high %v531, %v563
        %v572 = vcombine.low %v360, %v361
        %v573 = vcombine.high %v360, %v361
        %v575 = vunpack.c.l.s4 1983009808
        %v576 = vunpack.c.0.s8 %v575
        %v577 = vlaneseq
        %v578 = vshrl.u32 %v577, 7
        %v579 = vsub.s32 %v576, %v578
        %v580 = vrot.slane %v572, %v579
        %v582 = vunpack.c.l.s4 1983009808
        %v583 = vunpack.c.0.s8 %v582
        %v584 = vlaneseq
        %v585 = vshrl.u32 %v584, 7
        %v586 = vsub.s32 %v583, %v585
        %v587 = vrot.slane %v573, %v586
        %v588 = vcombine.low %v407, %v415
        %v589 = vcombine.high %v407, %v415
        %v591 = vunpack.c.l.s4 1983009808
        %v592 = vunpack.c.0.s8 %v591
        %v593 = vlaneseq
        %v594 = vshrl.u32 %v593, 7
        %v595 = vsub.s32 %v592, %v594
        %v596 = vrot.slane %v588, %v595
        %v598 = vunpack.c.l.s4 1983009808
        %v599 = vunpack.c.0.s8 %v598
        %v600 = vlaneseq
        %v601 = vshrl.u32 %v600, 7
        %v602 = vsub.s32 %v599, %v601
        %v603 = vrot.slane %v589, %v602
        %v604 = vcombine.low %v362, %v363
        %v605 = vcombine.high %v362, %v363
        %v607 = vunpack.c.l.s4 1983009808
        %v608 = vunpack.c.0.s8 %v607
        %v609 = vlaneseq
        %v610 = vshrl.u32 %v609, 7
        %v611 = vsub.s32 %v608, %v610
        %v612 = vrot.slane %v604, %v611
        %v614 = vunpack.c.l.s4 1983009808
        %v615 = vunpack.c.0.s8 %v614
        %v616 = vlaneseq
        %v617 = vshrl.u32 %v616, 7
        %v618 = vsub.s32 %v615, %v617
        %v619 = vrot.slane %v605, %v618
        %v620 = vcombine.low %v423, %v431
        %v621 = vcombine.high %v423, %v431
        %v623 = vunpack.c.l.s4 1983009808
        %v624 = vunpack.c.0.s8 %v623
        %v625 = vlaneseq
        %v626 = vshrl.u32 %v625, 7
        %v627 = vsub.s32 %v624, %v626
        %v628 = vrot.slane %v620, %v627
        %v630 = vunpack.c.l.s4 1983009808
        %v631 = vunpack.c.0.s8 %v630
        %v632 = vlaneseq
        %v633 = vshrl.u32 %v632, 7
        %v634 = vsub.s32 %v631, %v633
        %v635 = vrot.slane %v621, %v634
        %v636 = vcombine.low %v580, %v596
        %v637 = vcombine.high %v580, %v596
        %v639 = vunpack.c.l.s4 1934713408
        %v640 = vunpack.c.0.s8 %v639
        %v641 = vlaneseq
        %v642 = vshrl.u32 %v641, 7
        %v643 = vsub.s32 %v640, %v642
        %v644 = vrot.slane %v636, %v643
        %v646 = vunpack.c.l.s4 1934713408
        %v647 = vunpack.c.0.s8 %v646
        %v648 = vlaneseq
        %v649 = vshrl.u32 %v648, 7
        %v650 = vsub.s32 %v647, %v649
        %v651 = vrot.slane %v637, %v650
        %v652 = vcombine.low %v587, %v603
        %v653 = vcombine.high %v587, %v603
        %v655 = vunpack.c.l.s4 1934713408
        %v656 = vunpack.c.0.s8 %v655
        %v657 = vlaneseq
        %v658 = vshrl.u32 %v657, 7
        %v659 = vsub.s32 %v656, %v658
        %v660 = vrot.slane %v652, %v659
        %v662 = vunpack.c.l.s4 1934713408
        %v663 = vunpack.c.0.s8 %v662
        %v664 = vlaneseq
        %v665 = vshrl.u32 %v664, 7
        %v666 = vsub.s32 %v663, %v665
        %v667 = vrot.slane %v653, %v666
        %v668 = vcombine.low %v612, %v628
        %v669 = vcombine.high %v612, %v628
        %v671 = vunpack.c.l.s4 1934713408
        %v672 = vunpack.c.0.s8 %v671
        %v673 = vlaneseq
        %v674 = vshrl.u32 %v673, 7
        %v675 = vsub.s32 %v672, %v674
        %v676 = vrot.slane %v668, %v675
        %v678 = vunpack.c.l.s4 1934713408
        %v679 = vunpack.c.0.s8 %v678
        %v680 = vlaneseq
        %v681 = vshrl.u32 %v680, 7
        %v682 = vsub.s32 %v679, %v681
        %v683 = vrot.slane %v669, %v682
        %v684 = vcombine.low %v619, %v635
        %v685 = vcombine.high %v619, %v635
        %v687 = vunpack.c.l.s4 1934713408
        %v688 = vunpack.c.0.s8 %v687
        %v689 = vlaneseq
        %v690 = vshrl.u32 %v689, 7
        %v691 = vsub.s32 %v688, %v690
        %v692 = vrot.slane %v684, %v691
        %v694 = vunpack.c.l.s4 1934713408
        %v695 = vunpack.c.0.s8 %v694
        %v696 = vlaneseq
        %v697 = vshrl.u32 %v696, 7
        %v698 = vsub.s32 %v695, %v697
        %v699 = vrot.slane %v685, %v698
        %v700 = vcombine.low %v644, %v676
        %v701 = vcombine.high %v644, %v676
        %v702 = vcombine.low %v651, %v683
        %v703 = vcombine.high %v651, %v683
        %v704 = vcombine.low %v660, %v692
        %v705 = vcombine.high %v660, %v692
        %v706 = vcombine.low %v667, %v699
        %v707 = vcombine.high %v667, %v699
        %v708 = vcombine.low %v364, %v365
        %v709 = vcombine.high %v364, %v365
        %v711 = vunpack.c.l.s4 1983009808
        %v712 = vunpack.c.0.s8 %v711
        %v713 = vlaneseq
        %v714 = vshrl.u32 %v713, 7
        %v715 = vsub.s32 %v712, %v714
        %v716 = vrot.slane %v708, %v715
        %v718 = vunpack.c.l.s4 1983009808
        %v719 = vunpack.c.0.s8 %v718
        %v720 = vlaneseq
        %v721 = vshrl.u32 %v720, 7
        %v722 = vsub.s32 %v719, %v721
        %v723 = vrot.slane %v709, %v722
        %v724 = vcombine.low %v377, %v385
        %v725 = vcombine.high %v377, %v385
        %v727 = vunpack.c.l.s4 1983009808
        %v728 = vunpack.c.0.s8 %v727
        %v729 = vlaneseq
        %v730 = vshrl.u32 %v729, 7
        %v731 = vsub.s32 %v728, %v730
        %v732 = vrot.slane %v724, %v731
        %v734 = vunpack.c.l.s4 1983009808
        %v735 = vunpack.c.0.s8 %v734
        %v736 = vlaneseq
        %v737 = vshrl.u32 %v736, 7
        %v738 = vsub.s32 %v735, %v737
        %v739 = vrot.slane %v725, %v738
        %v740 = vcombine.low %v366, %v367
        %v741 = vcombine.high %v366, %v367
        %v743 = vunpack.c.l.s4 1983009808
        %v744 = vunpack.c.0.s8 %v743
        %v745 = vlaneseq
        %v746 = vshrl.u32 %v745, 7
        %v747 = vsub.s32 %v744, %v746
        %v748 = vrot.slane %v740, %v747
        %v750 = vunpack.c.l.s4 1983009808
        %v751 = vunpack.c.0.s8 %v750
        %v752 = vlaneseq
        %v753 = vshrl.u32 %v752, 7
        %v754 = vsub.s32 %v751, %v753
        %v755 = vrot.slane %v741, %v754
        %v756 = vcombine.low %v393, %v401
        %v757 = vcombine.high %v393, %v401
        %v759 = vunpack.c.l.s4 1983009808
        %v760 = vunpack.c.0.s8 %v759
        %v761 = vlaneseq
        %v762 = vshrl.u32 %v761, 7
        %v763 = vsub.s32 %v760, %v762
        %v764 = vrot.slane %v756, %v763
        %v766 = vunpack.c.l.s4 1983009808
        %v767 = vunpack.c.0.s8 %v766
        %v768 = vlaneseq
        %v769 = vshrl.u32 %v768, 7
        %v770 = vsub.s32 %v767, %v769
        %v771 = vrot.slane %v757, %v770
        %v772 = vcombine.low %v716, %v732
        %v773 = vcombine.high %v716, %v732
        %v775 = vunpack.c.l.s4 1934713408
        %v776 = vunpack.c.0.s8 %v775
        %v777 = vlaneseq
        %v778 = vshrl.u32 %v777, 7
        %v779 = vsub.s32 %v776, %v778
        %v780 = vrot.slane %v772, %v779
        %v782 = vunpack.c.l.s4 1934713408
        %v783 = vunpack.c.0.s8 %v782
        %v784 = vlaneseq
        %v785 = vshrl.u32 %v784, 7
        %v786 = vsub.s32 %v783, %v785
        %v787 = vrot.slane %v773, %v786
        %v788 = vcombine.low %v723, %v739
        %v789 = vcombine.high %v723, %v739
        %v791 = vunpack.c.l.s4 1934713408
        %v792 = vunpack.c.0.s8 %v791
        %v793 = vlaneseq
        %v794 = vshrl.u32 %v793, 7
        %v795 = vsub.s32 %v792, %v794
        %v796 = vrot.slane %v788, %v795
        %v798 = vunpack.c.l.s4 1934713408
        %v799 = vunpack.c.0.s8 %v798
        %v800 = vlaneseq
        %v801 = vshrl.u32 %v800, 7
        %v802 = vsub.s32 %v799, %v801
        %v803 = vrot.slane %v789, %v802
        %v804 = vcombine.low %v748, %v764
        %v805 = vcombine.high %v748, %v764
        %v807 = vunpack.c.l.s4 1934713408
        %v808 = vunpack.c.0.s8 %v807
        %v809 = vlaneseq
        %v810 = vshrl.u32 %v809, 7
        %v811 = vsub.s32 %v808, %v810
        %v812 = vrot.slane %v804, %v811
        %v814 = vunpack.c.l.s4 1934713408
        %v815 = vunpack.c.0.s8 %v814
        %v816 = vlaneseq
        %v817 = vshrl.u32 %v816, 7
        %v818 = vsub.s32 %v815, %v817
        %v819 = vrot.slane %v805, %v818
        %v820 = vcombine.low %v755, %v771
        %v821 = vcombine.high %v755, %v771
        %v823 = vunpack.c.l.s4 1934713408
        %v824 = vunpack.c.0.s8 %v823
        %v825 = vlaneseq
        %v826 = vshrl.u32 %v825, 7
        %v827 = vsub.s32 %v824, %v826
        %v828 = vrot.slane %v820, %v827
        %v830 = vunpack.c.l.s4 1934713408
        %v831 = vunpack.c.0.s8 %v830
        %v832 = vlaneseq
        %v833 = vshrl.u32 %v832, 7
        %v834 = vsub.s32 %v831, %v833
        %v835 = vrot.slane %v821, %v834
        %v836 = vcombine.low %v780, %v812
        %v837 = vcombine.high %v780, %v812
        %v838 = vcombine.low %v787, %v819
        %v839 = vcombine.high %v787, %v819
        %v840 = vcombine.low %v796, %v828
        %v841 = vcombine.high %v796, %v828
        %v842 = vcombine.low %v803, %v835
        %v843 = vcombine.high %v803, %v835
        %v844 = vcombine.low %v368, %v369
        %v845 = vcombine.high %v368, %v369
        %v847 = vunpack.c.l.s4 1983009808
        %v848 = vunpack.c.0.s8 %v847
        %v849 = vlaneseq
        %v850 = vshrl.u32 %v849, 7
        %v851 = vsub.s32 %v848, %v850
        %v852 = vrot.slane %v844, %v851
        %v854 = vunpack.c.l.s4 1983009808
        %v855 = vunpack.c.0.s8 %v854
        %v856 = vlaneseq
        %v857 = vshrl.u32 %v856, 7
        %v858 = vsub.s32 %v855, %v857
        %v859 = vrot.slane %v845, %v858
        %v860 = vcombine.low %v409, %v417
        %v861 = vcombine.high %v409, %v417
        %v863 = vunpack.c.l.s4 1983009808
        %v864 = vunpack.c.0.s8 %v863
        %v865 = vlaneseq
        %v866 = vshrl.u32 %v865, 7
        %v867 = vsub.s32 %v864, %v866
        %v868 = vrot.slane %v860, %v867
        %v870 = vunpack.c.l.s4 1983009808
        %v871 = vunpack.c.0.s8 %v870
        %v872 = vlaneseq
        %v873 = vshrl.u32 %v872, 7
        %v874 = vsub.s32 %v871, %v873
        %v875 = vrot.slane %v861, %v874
        %v876 = vcombine.low %v370, %v371
        %v877 = vcombine.high %v370, %v371
        %v879 = vunpack.c.l.s4 1983009808
        %v880 = vunpack.c.0.s8 %v879
        %v881 = vlaneseq
        %v882 = vshrl.u32 %v881, 7
        %v883 = vsub.s32 %v880, %v882
        %v884 = vrot.slane %v876, %v883
        %v886 = vunpack.c.l.s4 1983009808
        %v887 = vunpack.c.0.s8 %v886
        %v888 = vlaneseq
        %v889 = vshrl.u32 %v888, 7
        %v890 = vsub.s32 %v887, %v889
        %v891 = vrot.slane %v877, %v890
        %v892 = vcombine.low %v425, %v433
        %v893 = vcombine.high %v425, %v433
        %v895 = vunpack.c.l.s4 1983009808
        %v896 = vunpack.c.0.s8 %v895
        %v897 = vlaneseq
        %v898 = vshrl.u32 %v897, 7
        %v899 = vsub.s32 %v896, %v898
        %v900 = vrot.slane %v892, %v899
        %v902 = vunpack.c.l.s4 1983009808
        %v903 = vunpack.c.0.s8 %v902
        %v904 = vlaneseq
        %v905 = vshrl.u32 %v904, 7
        %v906 = vsub.s32 %v903, %v905
        %v907 = vrot.slane %v893, %v906
        %v908 = vcombine.low %v852, %v868
        %v909 = vcombine.high %v852, %v868
        %v911 = vunpack.c.l.s4 1934713408
        %v912 = vunpack.c.0.s8 %v911
        %v913 = vlaneseq
        %v914 = vshrl.u32 %v913, 7
        %v915 = vsub.s32 %v912, %v914
        %v916 = vrot.slane %v908, %v915
        %v918 = vunpack.c.l.s4 1934713408
        %v919 = vunpack.c.0.s8 %v918
        %v920 = vlaneseq
        %v921 = vshrl.u32 %v920, 7
        %v922 = vsub.s32 %v919, %v921
        %v923 = vrot.slane %v909, %v922
        %v924 = vcombine.low %v859, %v875
        %v925 = vcombine.high %v859, %v875
        %v927 = vunpack.c.l.s4 1934713408
        %v928 = vunpack.c.0.s8 %v927
        %v929 = vlaneseq
        %v930 = vshrl.u32 %v929, 7
        %v931 = vsub.s32 %v928, %v930
        %v932 = vrot.slane %v924, %v931
        %v934 = vunpack.c.l.s4 1934713408
        %v935 = vunpack.c.0.s8 %v934
        %v936 = vlaneseq
        %v937 = vshrl.u32 %v936, 7
        %v938 = vsub.s32 %v935, %v937
        %v939 = vrot.slane %v925, %v938
        %v940 = vcombine.low %v884, %v900
        %v941 = vcombine.high %v884, %v900
        %v943 = vunpack.c.l.s4 1934713408
        %v944 = vunpack.c.0.s8 %v943
        %v945 = vlaneseq
        %v946 = vshrl.u32 %v945, 7
        %v947 = vsub.s32 %v944, %v946
        %v948 = vrot.slane %v940, %v947
        %v950 = vunpack.c.l.s4 1934713408
        %v951 = vunpack.c.0.s8 %v950
        %v952 = vlaneseq
        %v953 = vshrl.u32 %v952, 7
        %v954 = vsub.s32 %v951, %v953
        %v955 = vrot.slane %v941, %v954
        %v956 = vcombine.low %v891, %v907
        %v957 = vcombine.high %v891, %v907
        %v959 = vunpack.c.l.s4 1934713408
        %v960 = vunpack.c.0.s8 %v959
        %v961 = vlaneseq
        %v962 = vshrl.u32 %v961, 7
        %v963 = vsub.s32 %v960, %v962
        %v964 = vrot.slane %v956, %v963
        %v966 = vunpack.c.l.s4 1934713408
        %v967 = vunpack.c.0.s8 %v966
        %v968 = vlaneseq
        %v969 = vshrl.u32 %v968, 7
        %v970 = vsub.s32 %v967, %v969
        %v971 = vrot.slane %v957, %v970
        %v972 = vcombine.low %v916, %v948
        %v973 = vcombine.high %v916, %v948
        %v974 = vcombine.low %v923, %v955
        %v975 = vcombine.high %v923, %v955
        %v976 = vcombine.low %v932, %v964
        %v977 = vcombine.high %v932, %v964
        %v978 = vcombine.low %v939, %v971
        %v979 = vcombine.high %v939, %v971
        %s980 = scalar_lea.vmem [#allocation2], 48
        %981 = vst.msk [vmem:[%s980 + $0x2] sm:$0xff] %vm294, %v564
        %982 = vst.msk [vmem:[%s980 + $0xa] sm:$0xff] %vm294, %v700
        %983 = vst.msk [vmem:[%s980 + $0x1a] sm:$0xff] %vm294, %v565
        %984 = vst.msk [vmem:[%s980 + $0x22] sm:$0xff] %vm294, %v701
        %985 = vst.msk [vmem:[%s980 + $0x32] sm:$0xff] %vm294, %v566
        %986 = vst.msk [vmem:[%s980 + $0x3a] sm:$0xff] %vm294, %v702
        %987 = vst.msk [vmem:[%s980 + $0x4a] sm:$0xff] %vm294, %v567
        %988 = vst.msk [vmem:[%s980 + $0x52] sm:$0xff] %vm294, %v703
        %989 = vst.msk [vmem:[%s980 + $0x62] sm:$0xff] %vm294, %v568
        %990 = vst.msk [vmem:[%s980 + $0x6a] sm:$0xff] %vm294, %v704
        %991 = vst.msk [vmem:[%s980 + $0x7a] sm:$0xff] %vm294, %v569
        %992 = vst.msk [vmem:[%s980 + $0x82] sm:$0xff] %vm294, %v705
        %993 = vst.msk [vmem:[%s980 + $0x92] sm:$0xff] %vm294, %v570
        %994 = vst.msk [vmem:[%s980 + $0x9a] sm:$0xff] %vm294, %v706
        %995 = vst.msk [vmem:[%s980 + $0xaa] sm:$0xff] %vm294, %v571
        %996 = vst.msk [vmem:[%s980 + $0xb2] sm:$0xff] %vm294, %v707
        %997 = vst.msk [vmem:[%s980 + $0xc2] sm:$0xff] %vm294, %v836
        %998 = vst.msk [vmem:[%s980 + $0xca] sm:$0xff] %vm294, %v972
        %999 = vst.msk [vmem:[%s980 + $0xda] sm:$0xff] %vm294, %v837
        %1000 = vst.msk [vmem:[%s980 + $0xe2] sm:$0xff] %vm294, %v973
        %1001 = vst.msk [vmem:[%s980 + $0xf2] sm:$0xff] %vm294, %v838
        %1002 = vst.msk [vmem:[%s980 + $0xfa] sm:$0xff] %vm294, %v974
        %1003 = vst.msk [vmem:[%s980 + $0x10a] sm:$0xff] %vm294, %v839
        %1004 = vst.msk [vmem:[%s980 + $0x112] sm:$0xff] %vm294, %v975
        %1005 = vst.msk [vmem:[%s980 + $0x122] sm:$0xff] %vm294, %v840
        %1006 = vst.msk [vmem:[%s980 + $0x12a] sm:$0xff] %vm294, %v976
        %1007 = vst.msk [vmem:[%s980 + $0x13a] sm:$0xff] %vm294, %v841
        %1008 = vst.msk [vmem:[%s980 + $0x142] sm:$0xff] %vm294, %v977
        %1009 = vst.msk [vmem:[%s980 + $0x152] sm:$0xff] %vm294, %v842
        %1010 = vst.msk [vmem:[%s980 + $0x15a] sm:$0xff] %vm294, %v978
        %1011 = vst.msk [vmem:[%s980 + $0x16a] sm:$0xff] %vm294, %v843
        %1012 = vst.msk [vmem:[%s980 + $0x172] sm:$0xff] %vm294, %v979
      $region36: #{_subnet_apply.1} parent=31 // pred_fallthru
        _
      %s1013 = sld [smem:[#allocation5 + %s36]]
      %p1014 = scmp.eq.s32.totalorder %s1013, 0
      %p1015 = scmp.eq.s32.totalorder %s1013, 1
      %p1016 = por %p1014, %p1015
      // Predicated region
      $region37: #{_subnet_apply.1} parent=31 // pred_check
        %p1017 = pneg %p1016
      $region38: #{_subnet_apply.1} parent=31 // pred_check_branch
        %1019 = sbr.rel (%p1017) target = $region40
      $region39: #{_subnet_apply.1} parent=31 // pred_region
        %v1020 = vld [vmem:[#allocation2] sm:$0xff]
        %v1021 = vld [vmem:[#allocation2 + $0x8] sm:$0xff]
        %v1022 = vld [vmem:[#allocation2 + $0x18] sm:$0xff]
        %v1023 = vld [vmem:[#allocation2 + $0x20] sm:$0xff]
        %v1024 = vld [vmem:[#allocation2 + $0x30] sm:$0xff]
        %v1025 = vld [vmem:[#allocation2 + $0x38] sm:$0xff]
        %v1026 = vld [vmem:[#allocation2 + $0x48] sm:$0xff]
        %v1027 = vld [vmem:[#allocation2 + $0x50] sm:$0xff]
        %v1028 = vld [vmem:[#allocation2 + $0x60] sm:$0xff]
        %v1029 = vld [vmem:[#allocation2 + $0x68] sm:$0xff]
        %v1030 = vld [vmem:[#allocation2 + $0x78] sm:$0xff]
        %v1031 = vld [vmem:[#allocation2 + $0x80] sm:$0xff]
        %v1032 = vld [vmem:[#allocation2 + $0x90] sm:$0xff]
        %v1033 = vld [vmem:[#allocation2 + $0x98] sm:$0xff]
        %v1034 = vld [vmem:[#allocation2 + $0xa8] sm:$0xff]
        %v1035 = vld [vmem:[#allocation2 + $0xb0] sm:$0xff]
        %v1036 = vld [vmem:[#allocation2 + $0xc0] sm:$0xff]
        %v1037 = vld [vmem:[#allocation2 + $0xc8] sm:$0xff]
        %v1038 = vld [vmem:[#allocation2 + $0xd8] sm:$0xff]
        %v1039 = vld [vmem:[#allocation2 + $0xe0] sm:$0xff]
        %v1040 = vld [vmem:[#allocation2 + $0xf0] sm:$0xff]
        %v1041 = vld [vmem:[#allocation2 + $0xf8] sm:$0xff]
        %v1042 = vld [vmem:[#allocation2 + $0x108] sm:$0xff]
        %v1043 = vld [vmem:[#allocation2 + $0x110] sm:$0xff]
        %v1044 = vld [vmem:[#allocation2 + $0x120] sm:$0xff]
        %v1045 = vld [vmem:[#allocation2 + $0x128] sm:$0xff]
        %v1046 = vld [vmem:[#allocation2 + $0x138] sm:$0xff]
        %v1047 = vld [vmem:[#allocation2 + $0x140] sm:$0xff]
        %v1048 = vld [vmem:[#allocation2 + $0x150] sm:$0xff]
        %v1049 = vld [vmem:[#allocation2 + $0x158] sm:$0xff]
        %v1050 = vld [vmem:[#allocation2 + $0x168] sm:$0xff]
        %v1051 = vld [vmem:[#allocation2 + $0x170] sm:$0xff]
        %v1052 = vld [vmem:[#allocation2 + $0x1] sm:$0xff]
        %v1053 = vld [vmem:[#allocation2 + $0x9] sm:$0xff]
        %v1054 = vld [vmem:[#allocation2 + $0x19] sm:$0xff]
        %v1055 = vld [vmem:[#allocation2 + $0x21] sm:$0xff]
        %v1056 = vld [vmem:[#allocation2 + $0x31] sm:$0xff]
        %v1057 = vld [vmem:[#allocation2 + $0x39] sm:$0xff]
        %v1058 = vld [vmem:[#allocation2 + $0x49] sm:$0xff]
        %v1059 = vld [vmem:[#allocation2 + $0x51] sm:$0xff]
        %v1060 = vld [vmem:[#allocation2 + $0x61] sm:$0xff]
        %v1061 = vld [vmem:[#allocation2 + $0x69] sm:$0xff]
        %v1062 = vld [vmem:[#allocation2 + $0x79] sm:$0xff]
        %v1063 = vld [vmem:[#allocation2 + $0x81] sm:$0xff]
        %v1064 = vld [vmem:[#allocation2 + $0x91] sm:$0xff]
        %v1065 = vld [vmem:[#allocation2 + $0x99] sm:$0xff]
        %v1066 = vld [vmem:[#allocation2 + $0xa9] sm:$0xff]
        %v1067 = vld [vmem:[#allocation2 + $0xb1] sm:$0xff]
        %v1068 = vld [vmem:[#allocation2 + $0xc1] sm:$0xff]
        %v1069 = vld [vmem:[#allocation2 + $0xc9] sm:$0xff]
        %v1070 = vld [vmem:[#allocation2 + $0xd9] sm:$0xff]
        %v1071 = vld [vmem:[#allocation2 + $0xe1] sm:$0xff]
        %v1072 = vld [vmem:[#allocation2 + $0xf1] sm:$0xff]
        %v1073 = vld [vmem:[#allocation2 + $0xf9] sm:$0xff]
        %v1074 = vld [vmem:[#allocation2 + $0x109] sm:$0xff]
        %v1075 = vld [vmem:[#allocation2 + $0x111] sm:$0xff]
        %v1076 = vld [vmem:[#allocation2 + $0x121] sm:$0xff]
        %v1077 = vld [vmem:[#allocation2 + $0x129] sm:$0xff]
        %v1078 = vld [vmem:[#allocation2 + $0x139] sm:$0xff]
        %v1079 = vld [vmem:[#allocation2 + $0x141] sm:$0xff]
        %v1080 = vld [vmem:[#allocation2 + $0x151] sm:$0xff]
        %v1081 = vld [vmem:[#allocation2 + $0x159] sm:$0xff]
        %v1082 = vld [vmem:[#allocation2 + $0x169] sm:$0xff]
        %v1083 = vld [vmem:[#allocation2 + $0x171] sm:$0xff]
        %1116 = vrot.lane.b32.xlu0 %v1052, 64
        %v1117 = vpop.permute.xlu0 %1116
        %1118 = vrot.lane.b32.xlu0 %v1053, 64
        %v1119 = vpop.permute.xlu0 %1118
        %1120 = vrot.lane.b32.xlu0 %v1054, 64
        %v1121 = vpop.permute.xlu0 %1120
        %1122 = vrot.lane.b32.xlu0 %v1055, 64
        %v1123 = vpop.permute.xlu0 %1122
        %1124 = vrot.lane.b32.xlu0 %v1056, 64
        %v1125 = vpop.permute.xlu0 %1124
        %1126 = vrot.lane.b32.xlu0 %v1057, 64
        %v1127 = vpop.permute.xlu0 %1126
        %1128 = vrot.lane.b32.xlu0 %v1058, 64
        %v1129 = vpop.permute.xlu0 %1128
        %1130 = vrot.lane.b32.xlu0 %v1059, 64
        %v1131 = vpop.permute.xlu0 %1130
        %1132 = vrot.lane.b32.xlu0 %v1060, 64
        %v1133 = vpop.permute.xlu0 %1132
        %1134 = vrot.lane.b32.xlu0 %v1061, 64
        %v1135 = vpop.permute.xlu0 %1134
        %1136 = vrot.lane.b32.xlu0 %v1062, 64
        %v1137 = vpop.permute.xlu0 %1136
        %1138 = vrot.lane.b32.xlu0 %v1063, 64
        %v1139 = vpop.permute.xlu0 %1138
        %1140 = vrot.lane.b32.xlu0 %v1064, 64
        %v1141 = vpop.permute.xlu0 %1140
        %1142 = vrot.lane.b32.xlu0 %v1065, 64
        %v1143 = vpop.permute.xlu0 %1142
        %1144 = vrot.lane.b32.xlu0 %v1066, 64
        %v1145 = vpop.permute.xlu0 %1144
        %1146 = vrot.lane.b32.xlu0 %v1067, 64
        %v1147 = vpop.permute.xlu0 %1146
        %1148 = vrot.lane.b32.xlu0 %v1068, 64
        %v1149 = vpop.permute.xlu0 %1148
        %1150 = vrot.lane.b32.xlu0 %v1069, 64
        %v1151 = vpop.permute.xlu0 %1150
        %1152 = vrot.lane.b32.xlu0 %v1070, 64
        %v1153 = vpop.permute.xlu0 %1152
        %1154 = vrot.lane.b32.xlu0 %v1071, 64
        %v1155 = vpop.permute.xlu0 %1154
        %1156 = vrot.lane.b32.xlu0 %v1072, 64
        %v1157 = vpop.permute.xlu0 %1156
        %1158 = vrot.lane.b32.xlu0 %v1073, 64
        %v1159 = vpop.permute.xlu0 %1158
        %1160 = vrot.lane.b32.xlu0 %v1074, 64
        %v1161 = vpop.permute.xlu0 %1160
        %1162 = vrot.lane.b32.xlu0 %v1075, 64
        %v1163 = vpop.permute.xlu0 %1162
        %1164 = vrot.lane.b32.xlu0 %v1076, 64
        %v1165 = vpop.permute.xlu0 %1164
        %1166 = vrot.lane.b32.xlu0 %v1077, 64
        %v1167 = vpop.permute.xlu0 %1166
        %1168 = vrot.lane.b32.xlu0 %v1078, 64
        %v1169 = vpop.permute.xlu0 %1168
        %1170 = vrot.lane.b32.xlu0 %v1079, 64
        %v1171 = vpop.permute.xlu0 %1170
        %1172 = vrot.lane.b32.xlu0 %v1080, 64
        %v1173 = vpop.permute.xlu0 %1172
        %1174 = vrot.lane.b32.xlu0 %v1081, 64
        %v1175 = vpop.permute.xlu0 %1174
        %1176 = vrot.lane.b32.xlu0 %v1082, 64
        %v1177 = vpop.permute.xlu0 %1176
        %1178 = vrot.lane.b32.xlu0 %v1083, 64
        %v1179 = vpop.permute.xlu0 %1178
        %vm1212 = vcmask 523264
        %v1213 = vsel %vm1212, %v1020, %v1117
        %v1214 = vsel %vm1212, %v1021, %v1119
        %v1215 = vsel %vm1212, %v1022, %v1121
        %v1216 = vsel %vm1212, %v1023, %v1123
        %v1217 = vsel %vm1212, %v1024, %v1125
        %v1218 = vsel %vm1212, %v1025, %v1127
        %v1219 = vsel %vm1212, %v1026, %v1129
        %v1220 = vsel %vm1212, %v1027, %v1131
        %v1221 = vsel %vm1212, %v1028, %v1133
        %v1222 = vsel %vm1212, %v1029, %v1135
        %v1223 = vsel %vm1212, %v1030, %v1137
        %v1224 = vsel %vm1212, %v1031, %v1139
        %v1225 = vsel %vm1212, %v1032, %v1141
        %v1226 = vsel %vm1212, %v1033, %v1143
        %v1227 = vsel %vm1212, %v1034, %v1145
        %v1228 = vsel %vm1212, %v1035, %v1147
        %v1229 = vsel %vm1212, %v1036, %v1149
        %v1230 = vsel %vm1212, %v1037, %v1151
        %v1231 = vsel %vm1212, %v1038, %v1153
        %v1232 = vsel %vm1212, %v1039, %v1155
        %v1233 = vsel %vm1212, %v1040, %v1157
        %v1234 = vsel %vm1212, %v1041, %v1159
        %v1235 = vsel %vm1212, %v1042, %v1161
        %v1236 = vsel %vm1212, %v1043, %v1163
        %v1237 = vsel %vm1212, %v1044, %v1165
        %v1238 = vsel %vm1212, %v1045, %v1167
        %v1239 = vsel %vm1212, %v1046, %v1169
        %v1240 = vsel %vm1212, %v1047, %v1171
        %v1241 = vsel %vm1212, %v1048, %v1173
        %v1242 = vsel %vm1212, %v1049, %v1175
        %v1243 = vsel %vm1212, %v1050, %v1177
        %v1244 = vsel %vm1212, %v1051, %v1179
        %1245 = vst [vmem:[#allocation3] sm:$0xff] %v1213
        %1246 = vst [vmem:[#allocation3 + $0x68] sm:$0xff] %v1214
        %1247 = vst [vmem:[#allocation3 + $0xd0] sm:$0xff] %v1215
        %1248 = vst [vmem:[#allocation3 + $0x138] sm:$0xff] %v1216
        %1249 = vst [vmem:[#allocation3 + $0x1a0] sm:$0xff] %v1217
        %1250 = vst [vmem:[#allocation3 + $0x208] sm:$0xff] %v1218
        %1251 = vst [vmem:[#allocation3 + $0x270] sm:$0xff] %v1219
        %1252 = vst [vmem:[#allocation3 + $0x2d8] sm:$0xff] %v1220
        %1253 = vst [vmem:[#allocation3 + $0x340] sm:$0xff] %v1221
        %1254 = vst [vmem:[#allocation3 + $0x3a8] sm:$0xff] %v1222
        %1255 = vst [vmem:[#allocation3 + $0x410] sm:$0xff] %v1223
        %1256 = vst [vmem:[#allocation3 + $0x478] sm:$0xff] %v1224
        %1257 = vst [vmem:[#allocation3 + $0x4e0] sm:$0xff] %v1225
        %1258 = vst [vmem:[#allocation3 + $0x548] sm:$0xff] %v1226
        %1259 = vst [vmem:[#allocation3 + $0x5b0] sm:$0xff] %v1227
        %1260 = vst [vmem:[#allocation3 + $0x618] sm:$0xff] %v1228
        %1261 = vst [vmem:[#allocation3 + $0x680] sm:$0xff] %v1229
        %1262 = vst [vmem:[#allocation3 + $0x6e8] sm:$0xff] %v1230
        %1263 = vst [vmem:[#allocation3 + $0x750] sm:$0xff] %v1231
        %1264 = vst [vmem:[#allocation3 + $0x7b8] sm:$0xff] %v1232
        %1265 = vst [vmem:[#allocation3 + $0x820] sm:$0xff] %v1233
        %1266 = vst [vmem:[#allocation3 + $0x888] sm:$0xff] %v1234
        %1267 = vst [vmem:[#allocation3 + $0x8f0] sm:$0xff] %v1235
        %1268 = vst [vmem:[#allocation3 + $0x958] sm:$0xff] %v1236
        %1269 = vst [vmem:[#allocation3 + $0x9c0] sm:$0xff] %v1237
        %1270 = vst [vmem:[#allocation3 + $0xa28] sm:$0xff] %v1238
        %1271 = vst [vmem:[#allocation3 + $0xa90] sm:$0xff] %v1239
        %1272 = vst [vmem:[#allocation3 + $0xaf8] sm:$0xff] %v1240
        %1273 = vst [vmem:[#allocation3 + $0xb60] sm:$0xff] %v1241
        %1274 = vst [vmem:[#allocation3 + $0xbc8] sm:$0xff] %v1242
        %1275 = vst [vmem:[#allocation3 + $0xc30] sm:$0xff] %v1243
        %1276 = vst [vmem:[#allocation3 + $0xc98] sm:$0xff] %v1244
        %v1277 = vld [vmem:[#allocation2 + $0x2] sm:$0xff]
        %v1278 = vld [vmem:[#allocation2 + $0xa] sm:$0xff]
        %v1279 = vld [vmem:[#allocation2 + $0x1a] sm:$0xff]
        %v1280 = vld [vmem:[#allocation2 + $0x22] sm:$0xff]
        %v1281 = vld [vmem:[#allocation2 + $0x32] sm:$0xff]
        %v1282 = vld [vmem:[#allocation2 + $0x3a] sm:$0xff]
        %v1283 = vld [vmem:[#allocation2 + $0x4a] sm:$0xff]
        %v1284 = vld [vmem:[#allocation2 + $0x52] sm:$0xff]
        %v1285 = vld [vmem:[#allocation2 + $0x62] sm:$0xff]
        %v1286 = vld [vmem:[#allocation2 + $0x6a] sm:$0xff]
        %v1287 = vld [vmem:[#allocation2 + $0x7a] sm:$0xff]
        %v1288 = vld [vmem:[#allocation2 + $0x82] sm:$0xff]
        %v1289 = vld [vmem:[#allocation2 + $0x92] sm:$0xff]
        %v1290 = vld [vmem:[#allocation2 + $0x9a] sm:$0xff]
        %v1291 = vld [vmem:[#allocation2 + $0xaa] sm:$0xff]
        %v1292 = vld [vmem:[#allocation2 + $0xb2] sm:$0xff]
        %v1293 = vld [vmem:[#allocation2 + $0xc2] sm:$0xff]
        %v1294 = vld [vmem:[#allocation2 + $0xca] sm:$0xff]
        %v1295 = vld [vmem:[#allocation2 + $0xda] sm:$0xff]
        %v1296 = vld [vmem:[#allocation2 + $0xe2] sm:$0xff]
        %v1297 = vld [vmem:[#allocation2 + $0xf2] sm:$0xff]
        %v1298 = vld [vmem:[#allocation2 + $0xfa] sm:$0xff]
        %v1299 = vld [vmem:[#allocation2 + $0x10a] sm:$0xff]
        %v1300 = vld [vmem:[#allocation2 + $0x112] sm:$0xff]
        %v1301 = vld [vmem:[#allocation2 + $0x122] sm:$0xff]
        %v1302 = vld [vmem:[#allocation2 + $0x12a] sm:$0xff]
        %v1303 = vld [vmem:[#allocation2 + $0x13a] sm:$0xff]
        %v1304 = vld [vmem:[#allocation2 + $0x142] sm:$0xff]
        %v1305 = vld [vmem:[#allocation2 + $0x152] sm:$0xff]
        %v1306 = vld [vmem:[#allocation2 + $0x15a] sm:$0xff]
        %v1307 = vld [vmem:[#allocation2 + $0x16a] sm:$0xff]
        %v1308 = vld [vmem:[#allocation2 + $0x172] sm:$0xff]
        %v1309 = vld [vmem:[#allocation2 + $0x3] sm:$0xff]
        %v1310 = vld [vmem:[#allocation2 + $0xb] sm:$0xff]
        %v1311 = vld [vmem:[#allocation2 + $0x1b] sm:$0xff]
        %v1312 = vld [vmem:[#allocation2 + $0x23] sm:$0xff]
        %v1313 = vld [vmem:[#allocation2 + $0x33] sm:$0xff]
        %v1314 = vld [vmem:[#allocation2 + $0x3b] sm:$0xff]
        %v1315 = vld [vmem:[#allocation2 + $0x4b] sm:$0xff]
        %v1316 = vld [vmem:[#allocation2 + $0x53] sm:$0xff]
        %v1317 = vld [vmem:[#allocation2 + $0x63] sm:$0xff]
        %v1318 = vld [vmem:[#allocation2 + $0x6b] sm:$0xff]
        %v1319 = vld [vmem:[#allocation2 + $0x7b] sm:$0xff]
        %v1320 = vld [vmem:[#allocation2 + $0x83] sm:$0xff]
        %v1321 = vld [vmem:[#allocation2 + $0x93] sm:$0xff]
        %v1322 = vld [vmem:[#allocation2 + $0x9b] sm:$0xff]
        %v1323 = vld [vmem:[#allocation2 + $0xab] sm:$0xff]
        %v1324 = vld [vmem:[#allocation2 + $0xb3] sm:$0xff]
        %v1325 = vld [vmem:[#allocation2 + $0xc3] sm:$0xff]
        %v1326 = vld [vmem:[#allocation2 + $0xcb] sm:$0xff]
        %v1327 = vld [vmem:[#allocation2 + $0xdb] sm:$0xff]
        %v1328 = vld [vmem:[#allocation2 + $0xe3] sm:$0xff]
        %v1329 = vld [vmem:[#allocation2 + $0xf3] sm:$0xff]
        %v1330 = vld [vmem:[#allocation2 + $0xfb] sm:$0xff]
        %v1331 = vld [vmem:[#allocation2 + $0x10b] sm:$0xff]
        %v1332 = vld [vmem:[#allocation2 + $0x113] sm:$0xff]
        %v1333 = vld [vmem:[#allocation2 + $0x123] sm:$0xff]
        %v1334 = vld [vmem:[#allocation2 + $0x12b] sm:$0xff]
        %v1335 = vld [vmem:[#allocation2 + $0x13b] sm:$0xff]
        %v1336 = vld [vmem:[#allocation2 + $0x143] sm:$0xff]
        %v1337 = vld [vmem:[#allocation2 + $0x153] sm:$0xff]
        %v1338 = vld [vmem:[#allocation2 + $0x15b] sm:$0xff]
        %v1339 = vld [vmem:[#allocation2 + $0x16b] sm:$0xff]
        %v1340 = vld [vmem:[#allocation2 + $0x173] sm:$0xff]
        %1373 = vrot.lane.b32.xlu0 %v1309, 64
        %v1374 = vpop.permute.xlu0 %1373
        %1375 = vrot.lane.b32.xlu0 %v1310, 64
        %v1376 = vpop.permute.xlu0 %1375
        %1377 = vrot.lane.b32.xlu0 %v1311, 64
        %v1378 = vpop.permute.xlu0 %1377
        %1379 = vrot.lane.b32.xlu0 %v1312, 64
        %v1380 = vpop.permute.xlu0 %1379
        %1381 = vrot.lane.b32.xlu0 %v1313, 64
        %v1382 = vpop.permute.xlu0 %1381
        %1383 = vrot.lane.b32.xlu0 %v1314, 64
        %v1384 = vpop.permute.xlu0 %1383
        %1385 = vrot.lane.b32.xlu0 %v1315, 64
        %v1386 = vpop.permute.xlu0 %1385
        %1387 = vrot.lane.b32.xlu0 %v1316, 64
        %v1388 = vpop.permute.xlu0 %1387
        %1389 = vrot.lane.b32.xlu0 %v1317, 64
        %v1390 = vpop.permute.xlu0 %1389
        %1391 = vrot.lane.b32.xlu0 %v1318, 64
        %v1392 = vpop.permute.xlu0 %1391
        %1393 = vrot.lane.b32.xlu0 %v1319, 64
        %v1394 = vpop.permute.xlu0 %1393
        %1395 = vrot.lane.b32.xlu0 %v1320, 64
        %v1396 = vpop.permute.xlu0 %1395
        %1397 = vrot.lane.b32.xlu0 %v1321, 64
        %v1398 = vpop.permute.xlu0 %1397
        %1399 = vrot.lane.b32.xlu0 %v1322, 64
        %v1400 = vpop.permute.xlu0 %1399
        %1401 = vrot.lane.b32.xlu0 %v1323, 64
        %v1402 = vpop.permute.xlu0 %1401
        %1403 = vrot.lane.b32.xlu0 %v1324, 64
        %v1404 = vpop.permute.xlu0 %1403
        %1405 = vrot.lane.b32.xlu0 %v1325, 64
        %v1406 = vpop.permute.xlu0 %1405
        %1407 = vrot.lane.b32.xlu0 %v1326, 64
        %v1408 = vpop.permute.xlu0 %1407
        %1409 = vrot.lane.b32.xlu0 %v1327, 64
        %v1410 = vpop.permute.xlu0 %1409
        %1411 = vrot.lane.b32.xlu0 %v1328, 64
        %v1412 = vpop.permute.xlu0 %1411
        %1413 = vrot.lane.b32.xlu0 %v1329, 64
        %v1414 = vpop.permute.xlu0 %1413
        %1415 = vrot.lane.b32.xlu0 %v1330, 64
        %v1416 = vpop.permute.xlu0 %1415
        %1417 = vrot.lane.b32.xlu0 %v1331, 64
        %v1418 = vpop.permute.xlu0 %1417
        %1419 = vrot.lane.b32.xlu0 %v1332, 64
        %v1420 = vpop.permute.xlu0 %1419
        %1421 = vrot.lane.b32.xlu0 %v1333, 64
        %v1422 = vpop.permute.xlu0 %1421
        %1423 = vrot.lane.b32.xlu0 %v1334, 64
        %v1424 = vpop.permute.xlu0 %1423
        %1425 = vrot.lane.b32.xlu0 %v1335, 64
        %v1426 = vpop.permute.xlu0 %1425
        %1427 = vrot.lane.b32.xlu0 %v1336, 64
        %v1428 = vpop.permute.xlu0 %1427
        %1429 = vrot.lane.b32.xlu0 %v1337, 64
        %v1430 = vpop.permute.xlu0 %1429
        %1431 = vrot.lane.b32.xlu0 %v1338, 64
        %v1432 = vpop.permute.xlu0 %1431
        %1433 = vrot.lane.b32.xlu0 %v1339, 64
        %v1434 = vpop.permute.xlu0 %1433
        %1435 = vrot.lane.b32.xlu0 %v1340, 64
        %v1436 = vpop.permute.xlu0 %1435
        %v1469 = vsel %vm1212, %v1277, %v1374
        %v1470 = vsel %vm1212, %v1278, %v1376
        %v1471 = vsel %vm1212, %v1279, %v1378
        %v1472 = vsel %vm1212, %v1280, %v1380
        %v1473 = vsel %vm1212, %v1281, %v1382
        %v1474 = vsel %vm1212, %v1282, %v1384
        %v1475 = vsel %vm1212, %v1283, %v1386
        %v1476 = vsel %vm1212, %v1284, %v1388
        %v1477 = vsel %vm1212, %v1285, %v1390
        %v1478 = vsel %vm1212, %v1286, %v1392
        %v1479 = vsel %vm1212, %v1287, %v1394
        %v1480 = vsel %vm1212, %v1288, %v1396
        %v1481 = vsel %vm1212, %v1289, %v1398
        %v1482 = vsel %vm1212, %v1290, %v1400
        %v1483 = vsel %vm1212, %v1291, %v1402
        %v1484 = vsel %vm1212, %v1292, %v1404
        %v1485 = vsel %vm1212, %v1293, %v1406
        %v1486 = vsel %vm1212, %v1294, %v1408
        %v1487 = vsel %vm1212, %v1295, %v1410
        %v1488 = vsel %vm1212, %v1296, %v1412
        %v1489 = vsel %vm1212, %v1297, %v1414
        %v1490 = vsel %vm1212, %v1298, %v1416
        %v1491 = vsel %vm1212, %v1299, %v1418
        %v1492 = vsel %vm1212, %v1300, %v1420
        %v1493 = vsel %vm1212, %v1301, %v1422
        %v1494 = vsel %vm1212, %v1302, %v1424
        %v1495 = vsel %vm1212, %v1303, %v1426
        %v1496 = vsel %vm1212, %v1304, %v1428
        %v1497 = vsel %vm1212, %v1305, %v1430
        %v1498 = vsel %vm1212, %v1306, %v1432
        %v1499 = vsel %vm1212, %v1307, %v1434
        %v1500 = vsel %vm1212, %v1308, %v1436
        %1501 = vst [vmem:[#allocation3 + $0x8] sm:$0xff] %v1469
        %1502 = vst [vmem:[#allocation3 + $0x70] sm:$0xff] %v1470
        %1503 = vst [vmem:[#allocation3 + $0xd8] sm:$0xff] %v1471
        %1504 = vst [vmem:[#allocation3 + $0x140] sm:$0xff] %v1472
        %1505 = vst [vmem:[#allocation3 + $0x1a8] sm:$0xff] %v1473
        %1506 = vst [vmem:[#allocation3 + $0x210] sm:$0xff] %v1474
        %1507 = vst [vmem:[#allocation3 + $0x278] sm:$0xff] %v1475
        %1508 = vst [vmem:[#allocation3 + $0x2e0] sm:$0xff] %v1476
        %1509 = vst [vmem:[#allocation3 + $0x348] sm:$0xff] %v1477
        %1510 = vst [vmem:[#allocation3 + $0x3b0] sm:$0xff] %v1478
        %1511 = vst [vmem:[#allocation3 + $0x418] sm:$0xff] %v1479
        %1512 = vst [vmem:[#allocation3 + $0x480] sm:$0xff] %v1480
        %1513 = vst [vmem:[#allocation3 + $0x4e8] sm:$0xff] %v1481
        %1514 = vst [vmem:[#allocation3 + $0x550] sm:$0xff] %v1482
        %1515 = vst [vmem:[#allocation3 + $0x5b8] sm:$0xff] %v1483
        %1516 = vst [vmem:[#allocation3 + $0x620] sm:$0xff] %v1484
        %1517 = vst [vmem:[#allocation3 + $0x688] sm:$0xff] %v1485
        %1518 = vst [vmem:[#allocation3 + $0x6f0] sm:$0xff] %v1486
        %1519 = vst [vmem:[#allocation3 + $0x758] sm:$0xff] %v1487
        %1520 = vst [vmem:[#allocation3 + $0x7c0] sm:$0xff] %v1488
        %1521 = vst [vmem:[#allocation3 + $0x828] sm:$0xff] %v1489
        %1522 = vst [vmem:[#allocation3 + $0x890] sm:$0xff] %v1490
        %1523 = vst [vmem:[#allocation3 + $0x8f8] sm:$0xff] %v1491
        %1524 = vst [vmem:[#allocation3 + $0x960] sm:$0xff] %v1492
        %1525 = vst [vmem:[#allocation3 + $0x9c8] sm:$0xff] %v1493
        %1526 = vst [vmem:[#allocation3 + $0xa30] sm:$0xff] %v1494
        %1527 = vst [vmem:[#allocation3 + $0xa98] sm:$0xff] %v1495
        %1528 = vst [vmem:[#allocation3 + $0xb00] sm:$0xff] %v1496
        %1529 = vst [vmem:[#allocation3 + $0xb68] sm:$0xff] %v1497
        %1530 = vst [vmem:[#allocation3 + $0xbd0] sm:$0xff] %v1498
        %1531 = vst [vmem:[#allocation3 + $0xc38] sm:$0xff] %v1499
        %1532 = vst [vmem:[#allocation3 + $0xca0] sm:$0xff] %v1500
        %v1533 = vld [vmem:[#allocation2 + $0x4] sm:$0xff]
        %v1534 = vld [vmem:[#allocation2 + $0xc] sm:$0xff]
        %v1535 = vld [vmem:[#allocation2 + $0x1c] sm:$0xff]
        %v1536 = vld [vmem:[#allocation2 + $0x24] sm:$0xff]
        %v1537 = vld [vmem:[#allocation2 + $0x34] sm:$0xff]
        %v1538 = vld [vmem:[#allocation2 + $0x3c] sm:$0xff]
        %v1539 = vld [vmem:[#allocation2 + $0x4c] sm:$0xff]
        %v1540 = vld [vmem:[#allocation2 + $0x54] sm:$0xff]
        %v1541 = vld [vmem:[#allocation2 + $0x64] sm:$0xff]
        %v1542 = vld [vmem:[#allocation2 + $0x6c] sm:$0xff]
        %v1543 = vld [vmem:[#allocation2 + $0x7c] sm:$0xff]
        %v1544 = vld [vmem:[#allocation2 + $0x84] sm:$0xff]
        %v1545 = vld [vmem:[#allocation2 + $0x94] sm:$0xff]
        %v1546 = vld [vmem:[#allocation2 + $0x9c] sm:$0xff]
        %v1547 = vld [vmem:[#allocation2 + $0xac] sm:$0xff]
        %v1548 = vld [vmem:[#allocation2 + $0xb4] sm:$0xff]
        %v1549 = vld [vmem:[#allocation2 + $0xc4] sm:$0xff]
        %v1550 = vld [vmem:[#allocation2 + $0xcc] sm:$0xff]
        %v1551 = vld [vmem:[#allocation2 + $0xdc] sm:$0xff]
        %v1552 = vld [vmem:[#allocation2 + $0xe4] sm:$0xff]
        %v1553 = vld [vmem:[#allocation2 + $0xf4] sm:$0xff]
        %v1554 = vld [vmem:[#allocation2 + $0xfc] sm:$0xff]
        %v1555 = vld [vmem:[#allocation2 + $0x10c] sm:$0xff]
        %v1556 = vld [vmem:[#allocation2 + $0x114] sm:$0xff]
        %v1557 = vld [vmem:[#allocation2 + $0x124] sm:$0xff]
        %v1558 = vld [vmem:[#allocation2 + $0x12c] sm:$0xff]
        %v1559 = vld [vmem:[#allocation2 + $0x13c] sm:$0xff]
        %v1560 = vld [vmem:[#allocation2 + $0x144] sm:$0xff]
        %v1561 = vld [vmem:[#allocation2 + $0x154] sm:$0xff]
        %v1562 = vld [vmem:[#allocation2 + $0x15c] sm:$0xff]
        %v1563 = vld [vmem:[#allocation2 + $0x16c] sm:$0xff]
        %v1564 = vld [vmem:[#allocation2 + $0x174] sm:$0xff]
        %s1565 = scalar_lea.vmem [#allocation2], 24
        %v1566 = vld [vmem:[%s1565] sm:$0xff]
        %v1567 = vld [vmem:[%s1565 + $0x8] sm:$0xff]
        %v1568 = vld [vmem:[%s1565 + $0x18] sm:$0xff]
        %v1569 = vld [vmem:[%s1565 + $0x20] sm:$0xff]
        %v1570 = vld [vmem:[%s1565 + $0x30] sm:$0xff]
        %v1571 = vld [vmem:[%s1565 + $0x38] sm:$0xff]
        %v1572 = vld [vmem:[%s1565 + $0x48] sm:$0xff]
        %v1573 = vld [vmem:[%s1565 + $0x50] sm:$0xff]
        %v1574 = vld [vmem:[%s1565 + $0x60] sm:$0xff]
        %v1575 = vld [vmem:[%s1565 + $0x68] sm:$0xff]
        %v1576 = vld [vmem:[%s1565 + $0x78] sm:$0xff]
        %v1577 = vld [vmem:[%s1565 + $0x80] sm:$0xff]
        %v1578 = vld [vmem:[%s1565 + $0x90] sm:$0xff]
        %v1579 = vld [vmem:[%s1565 + $0x98] sm:$0xff]
        %v1580 = vld [vmem:[%s1565 + $0xa8] sm:$0xff]
        %v1581 = vld [vmem:[%s1565 + $0xb0] sm:$0xff]
        %v1582 = vld [vmem:[%s1565 + $0xc0] sm:$0xff]
        %v1583 = vld [vmem:[%s1565 + $0xc8] sm:$0xff]
        %v1584 = vld [vmem:[%s1565 + $0xd8] sm:$0xff]
        %v1585 = vld [vmem:[%s1565 + $0xe0] sm:$0xff]
        %v1586 = vld [vmem:[%s1565 + $0xf0] sm:$0xff]
        %v1587 = vld [vmem:[%s1565 + $0xf8] sm:$0xff]
        %v1588 = vld [vmem:[%s1565 + $0x108] sm:$0xff]
        %v1589 = vld [vmem:[%s1565 + $0x110] sm:$0xff]
        %v1590 = vld [vmem:[%s1565 + $0x120] sm:$0xff]
        %v1591 = vld [vmem:[%s1565 + $0x128] sm:$0xff]
        %v1592 = vld [vmem:[%s1565 + $0x138] sm:$0xff]
        %v1593 = vld [vmem:[%s1565 + $0x140] sm:$0xff]
        %v1594 = vld [vmem:[%s1565 + $0x150] sm:$0xff]
        %v1595 = vld [vmem:[%s1565 + $0x158] sm:$0xff]
        %v1596 = vld [vmem:[%s1565 + $0x168] sm:$0xff]
        %v1597 = vld [vmem:[%s1565 + $0x170] sm:$0xff]
        %1630 = vrot.lane.b32.xlu0 %v1566, 64
        %v1631 = vpop.permute.xlu0 %1630
        %1632 = vrot.lane.b32.xlu0 %v1567, 64
        %v1633 = vpop.permute.xlu0 %1632
        %1634 = vrot.lane.b32.xlu0 %v1568, 64
        %v1635 = vpop.permute.xlu0 %1634
        %1636 = vrot.lane.b32.xlu0 %v1569, 64
        %v1637 = vpop.permute.xlu0 %1636
        %1638 = vrot.lane.b32.xlu0 %v1570, 64
        %v1639 = vpop.permute.xlu0 %1638
        %1640 = vrot.lane.b32.xlu0 %v1571, 64
        %v1641 = vpop.permute.xlu0 %1640
        %1642 = vrot.lane.b32.xlu0 %v1572, 64
        %v1643 = vpop.permute.xlu0 %1642
        %1644 = vrot.lane.b32.xlu0 %v1573, 64
        %v1645 = vpop.permute.xlu0 %1644
        %1646 = vrot.lane.b32.xlu0 %v1574, 64
        %v1647 = vpop.permute.xlu0 %1646
        %1648 = vrot.lane.b32.xlu0 %v1575, 64
        %v1649 = vpop.permute.xlu0 %1648
        %1650 = vrot.lane.b32.xlu0 %v1576, 64
        %v1651 = vpop.permute.xlu0 %1650
        %1652 = vrot.lane.b32.xlu0 %v1577, 64
        %v1653 = vpop.permute.xlu0 %1652
        %1654 = vrot.lane.b32.xlu0 %v1578, 64
        %v1655 = vpop.permute.xlu0 %1654
        %1656 = vrot.lane.b32.xlu0 %v1579, 64
        %v1657 = vpop.permute.xlu0 %1656
        %1658 = vrot.lane.b32.xlu0 %v1580, 64
        %v1659 = vpop.permute.xlu0 %1658
        %1660 = vrot.lane.b32.xlu0 %v1581, 64
        %v1661 = vpop.permute.xlu0 %1660
        %1662 = vrot.lane.b32.xlu0 %v1582, 64
        %v1663 = vpop.permute.xlu0 %1662
        %1664 = vrot.lane.b32.xlu0 %v1583, 64
        %v1665 = vpop.permute.xlu0 %1664
        %1666 = vrot.lane.b32.xlu0 %v1584, 64
        %v1667 = vpop.permute.xlu0 %1666
        %1668 = vrot.lane.b32.xlu0 %v1585, 64
        %v1669 = vpop.permute.xlu0 %1668
        %1670 = vrot.lane.b32.xlu0 %v1586, 64
        %v1671 = vpop.permute.xlu0 %1670
        %1672 = vrot.lane.b32.xlu0 %v1587, 64
        %v1673 = vpop.permute.xlu0 %1672
        %1674 = vrot.lane.b32.xlu0 %v1588, 64
        %v1675 = vpop.permute.xlu0 %1674
        %1676 = vrot.lane.b32.xlu0 %v1589, 64
        %v1677 = vpop.permute.xlu0 %1676
        %1678 = vrot.lane.b32.xlu0 %v1590, 64
        %v1679 = vpop.permute.xlu0 %1678
        %1680 = vrot.lane.b32.xlu0 %v1591, 64
        %v1681 = vpop.permute.xlu0 %1680
        %1682 = vrot.lane.b32.xlu0 %v1592, 64
        %v1683 = vpop.permute.xlu0 %1682
        %1684 = vrot.lane.b32.xlu0 %v1593, 64
        %v1685 = vpop.permute.xlu0 %1684
        %1686 = vrot.lane.b32.xlu0 %v1594, 64
        %v1687 = vpop.permute.xlu0 %1686
        %1688 = vrot.lane.b32.xlu0 %v1595, 64
        %v1689 = vpop.permute.xlu0 %1688
        %1690 = vrot.lane.b32.xlu0 %v1596, 64
        %v1691 = vpop.permute.xlu0 %1690
        %1692 = vrot.lane.b32.xlu0 %v1597, 64
        %v1693 = vpop.permute.xlu0 %1692
        %v1726 = vsel %vm1212, %v1533, %v1631
        %v1727 = vsel %vm1212, %v1534, %v1633
        %v1728 = vsel %vm1212, %v1535, %v1635
        %v1729 = vsel %vm1212, %v1536, %v1637
        %v1730 = vsel %vm1212, %v1537, %v1639
        %v1731 = vsel %vm1212, %v1538, %v1641
        %v1732 = vsel %vm1212, %v1539, %v1643
        %v1733 = vsel %vm1212, %v1540, %v1645
        %v1734 = vsel %vm1212, %v1541, %v1647
        %v1735 = vsel %vm1212, %v1542, %v1649
        %v1736 = vsel %vm1212, %v1543, %v1651
        %v1737 = vsel %vm1212, %v1544, %v1653
        %v1738 = vsel %vm1212, %v1545, %v1655
        %v1739 = vsel %vm1212, %v1546, %v1657
        %v1740 = vsel %vm1212, %v1547, %v1659
        %v1741 = vsel %vm1212, %v1548, %v1661
        %v1742 = vsel %vm1212, %v1549, %v1663
        %v1743 = vsel %vm1212, %v1550, %v1665
        %v1744 = vsel %vm1212, %v1551, %v1667
        %v1745 = vsel %vm1212, %v1552, %v1669
        %v1746 = vsel %vm1212, %v1553, %v1671
        %v1747 = vsel %vm1212, %v1554, %v1673
        %v1748 = vsel %vm1212, %v1555, %v1675
        %v1749 = vsel %vm1212, %v1556, %v1677
        %v1750 = vsel %vm1212, %v1557, %v1679
        %v1751 = vsel %vm1212, %v1558, %v1681
        %v1752 = vsel %vm1212, %v1559, %v1683
        %v1753 = vsel %vm1212, %v1560, %v1685
        %v1754 = vsel %vm1212, %v1561, %v1687
        %v1755 = vsel %vm1212, %v1562, %v1689
        %v1756 = vsel %vm1212, %v1563, %v1691
        %v1757 = vsel %vm1212, %v1564, %v1693
        %1758 = vst [vmem:[#allocation3 + $0x10] sm:$0xff] %v1726
        %1759 = vst [vmem:[#allocation3 + $0x78] sm:$0xff] %v1727
        %1760 = vst [vmem:[#allocation3 + $0xe0] sm:$0xff] %v1728
        %1761 = vst [vmem:[#allocation3 + $0x148] sm:$0xff] %v1729
        %1762 = vst [vmem:[#allocation3 + $0x1b0] sm:$0xff] %v1730
        %1763 = vst [vmem:[#allocation3 + $0x218] sm:$0xff] %v1731
        %1764 = vst [vmem:[#allocation3 + $0x280] sm:$0xff] %v1732
        %1765 = vst [vmem:[#allocation3 + $0x2e8] sm:$0xff] %v1733
        %1766 = vst [vmem:[#allocation3 + $0x350] sm:$0xff] %v1734
        %1767 = vst [vmem:[#allocation3 + $0x3b8] sm:$0xff] %v1735
        %1768 = vst [vmem:[#allocation3 + $0x420] sm:$0xff] %v1736
        %1769 = vst [vmem:[#allocation3 + $0x488] sm:$0xff] %v1737
        %1770 = vst [vmem:[#allocation3 + $0x4f0] sm:$0xff] %v1738
        %1771 = vst [vmem:[#allocation3 + $0x558] sm:$0xff] %v1739
        %1772 = vst [vmem:[#allocation3 + $0x5c0] sm:$0xff] %v1740
        %1773 = vst [vmem:[#allocation3 + $0x628] sm:$0xff] %v1741
        %1774 = vst [vmem:[#allocation3 + $0x690] sm:$0xff] %v1742
        %1775 = vst [vmem:[#allocation3 + $0x6f8] sm:$0xff] %v1743
        %1776 = vst [vmem:[#allocation3 + $0x760] sm:$0xff] %v1744
        %1777 = vst [vmem:[#allocation3 + $0x7c8] sm:$0xff] %v1745
        %1778 = vst [vmem:[#allocation3 + $0x830] sm:$0xff] %v1746
        %1779 = vst [vmem:[#allocation3 + $0x898] sm:$0xff] %v1747
        %1780 = vst [vmem:[#allocation3 + $0x900] sm:$0xff] %v1748
        %1781 = vst [vmem:[#allocation3 + $0x968] sm:$0xff] %v1749
        %1782 = vst [vmem:[#allocation3 + $0x9d0] sm:$0xff] %v1750
        %1783 = vst [vmem:[#allocation3 + $0xa38] sm:$0xff] %v1751
        %1784 = vst [vmem:[#allocation3 + $0xaa0] sm:$0xff] %v1752
        %1785 = vst [vmem:[#allocation3 + $0xb08] sm:$0xff] %v1753
        %1786 = vst [vmem:[#allocation3 + $0xb70] sm:$0xff] %v1754
        %1787 = vst [vmem:[#allocation3 + $0xbd8] sm:$0xff] %v1755
        %1788 = vst [vmem:[#allocation3 + $0xc40] sm:$0xff] %v1756
        %1789 = vst [vmem:[#allocation3 + $0xca8] sm:$0xff] %v1757
        %v1790 = vld [vmem:[%s1565 + $0x1] sm:$0xff]
        %v1791 = vld [vmem:[%s1565 + $0x9] sm:$0xff]
        %v1792 = vld [vmem:[%s1565 + $0x19] sm:$0xff]
        %v1793 = vld [vmem:[%s1565 + $0x21] sm:$0xff]
        %v1794 = vld [vmem:[%s1565 + $0x31] sm:$0xff]
        %v1795 = vld [vmem:[%s1565 + $0x39] sm:$0xff]
        %v1796 = vld [vmem:[%s1565 + $0x49] sm:$0xff]
        %v1797 = vld [vmem:[%s1565 + $0x51] sm:$0xff]
        %v1798 = vld [vmem:[%s1565 + $0x61] sm:$0xff]
        %v1799 = vld [vmem:[%s1565 + $0x69] sm:$0xff]
        %v1800 = vld [vmem:[%s1565 + $0x79] sm:$0xff]
        %v1801 = vld [vmem:[%s1565 + $0x81] sm:$0xff]
        %v1802 = vld [vmem:[%s1565 + $0x91] sm:$0xff]
        %v1803 = vld [vmem:[%s1565 + $0x99] sm:$0xff]
        %v1804 = vld [vmem:[%s1565 + $0xa9] sm:$0xff]
        %v1805 = vld [vmem:[%s1565 + $0xb1] sm:$0xff]
        %v1806 = vld [vmem:[%s1565 + $0xc1] sm:$0xff]
        %v1807 = vld [vmem:[%s1565 + $0xc9] sm:$0xff]
        %v1808 = vld [vmem:[%s1565 + $0xd9] sm:$0xff]
        %v1809 = vld [vmem:[%s1565 + $0xe1] sm:$0xff]
        %v1810 = vld [vmem:[%s1565 + $0xf1] sm:$0xff]
        %v1811 = vld [vmem:[%s1565 + $0xf9] sm:$0xff]
        %v1812 = vld [vmem:[%s1565 + $0x109] sm:$0xff]
        %v1813 = vld [vmem:[%s1565 + $0x111] sm:$0xff]
        %v1814 = vld [vmem:[%s1565 + $0x121] sm:$0xff]
        %v1815 = vld [vmem:[%s1565 + $0x129] sm:$0xff]
        %v1816 = vld [vmem:[%s1565 + $0x139] sm:$0xff]
        %v1817 = vld [vmem:[%s1565 + $0x141] sm:$0xff]
        %v1818 = vld [vmem:[%s1565 + $0x151] sm:$0xff]
        %v1819 = vld [vmem:[%s1565 + $0x159] sm:$0xff]
        %v1820 = vld [vmem:[%s1565 + $0x169] sm:$0xff]
        %v1821 = vld [vmem:[%s1565 + $0x171] sm:$0xff]
        %v1822 = vld [vmem:[%s1565 + $0x2] sm:$0xff]
        %v1823 = vld [vmem:[%s1565 + $0xa] sm:$0xff]
        %v1824 = vld [vmem:[%s1565 + $0x1a] sm:$0xff]
        %v1825 = vld [vmem:[%s1565 + $0x22] sm:$0xff]
        %v1826 = vld [vmem:[%s1565 + $0x32] sm:$0xff]
        %v1827 = vld [vmem:[%s1565 + $0x3a] sm:$0xff]
        %v1828 = vld [vmem:[%s1565 + $0x4a] sm:$0xff]
        %v1829 = vld [vmem:[%s1565 + $0x52] sm:$0xff]
        %v1830 = vld [vmem:[%s1565 + $0x62] sm:$0xff]
        %v1831 = vld [vmem:[%s1565 + $0x6a] sm:$0xff]
        %v1832 = vld [vmem:[%s1565 + $0x7a] sm:$0xff]
        %v1833 = vld [vmem:[%s1565 + $0x82] sm:$0xff]
        %v1834 = vld [vmem:[%s1565 + $0x92] sm:$0xff]
        %v1835 = vld [vmem:[%s1565 + $0x9a] sm:$0xff]
        %v1836 = vld [vmem:[%s1565 + $0xaa] sm:$0xff]
        %v1837 = vld [vmem:[%s1565 + $0xb2] sm:$0xff]
        %v1838 = vld [vmem:[%s1565 + $0xc2] sm:$0xff]
        %v1839 = vld [vmem:[%s1565 + $0xca] sm:$0xff]
        %v1840 = vld [vmem:[%s1565 + $0xda] sm:$0xff]
        %v1841 = vld [vmem:[%s1565 + $0xe2] sm:$0xff]
        %v1842 = vld [vmem:[%s1565 + $0xf2] sm:$0xff]
        %v1843 = vld [vmem:[%s1565 + $0xfa] sm:$0xff]
        %v1844 = vld [vmem:[%s1565 + $0x10a] sm:$0xff]
        %v1845 = vld [vmem:[%s1565 + $0x112] sm:$0xff]
        %v1846 = vld [vmem:[%s1565 + $0x122] sm:$0xff]
        %v1847 = vld [vmem:[%s1565 + $0x12a] sm:$0xff]
        %v1848 = vld [vmem:[%s1565 + $0x13a] sm:$0xff]
        %v1849 = vld [vmem:[%s1565 + $0x142] sm:$0xff]
        %v1850 = vld [vmem:[%s1565 + $0x152] sm:$0xff]
        %v1851 = vld [vmem:[%s1565 + $0x15a] sm:$0xff]
        %v1852 = vld [vmem:[%s1565 + $0x16a] sm:$0xff]
        %v1853 = vld [vmem:[%s1565 + $0x172] sm:$0xff]
        %1886 = vrot.lane.b32.xlu0 %v1822, 64
        %v1887 = vpop.permute.xlu0 %1886
        %1888 = vrot.lane.b32.xlu0 %v1823, 64
        %v1889 = vpop.permute.xlu0 %1888
        %1890 = vrot.lane.b32.xlu0 %v1824, 64
        %v1891 = vpop.permute.xlu0 %1890
        %1892 = vrot.lane.b32.xlu0 %v1825, 64
        %v1893 = vpop.permute.xlu0 %1892
        %1894 = vrot.lane.b32.xlu0 %v1826, 64
        %v1895 = vpop.permute.xlu0 %1894
        %1896 = vrot.lane.b32.xlu0 %v1827, 64
        %v1897 = vpop.permute.xlu0 %1896
        %1898 = vrot.lane.b32.xlu0 %v1828, 64
        %v1899 = vpop.permute.xlu0 %1898
        %1900 = vrot.lane.b32.xlu0 %v1829, 64
        %v1901 = vpop.permute.xlu0 %1900
        %1902 = vrot.lane.b32.xlu0 %v1830, 64
        %v1903 = vpop.permute.xlu0 %1902
        %1904 = vrot.lane.b32.xlu0 %v1831, 64
        %v1905 = vpop.permute.xlu0 %1904
        %1906 = vrot.lane.b32.xlu0 %v1832, 64
        %v1907 = vpop.permute.xlu0 %1906
        %1908 = vrot.lane.b32.xlu0 %v1833, 64
        %v1909 = vpop.permute.xlu0 %1908
        %1910 = vrot.lane.b32.xlu0 %v1834, 64
        %v1911 = vpop.permute.xlu0 %1910
        %1912 = vrot.lane.b32.xlu0 %v1835, 64
        %v1913 = vpop.permute.xlu0 %1912
        %1914 = vrot.lane.b32.xlu0 %v1836, 64
        %v1915 = vpop.permute.xlu0 %1914
        %1916 = vrot.lane.b32.xlu0 %v1837, 64
        %v1917 = vpop.permute.xlu0 %1916
        %1918 = vrot.lane.b32.xlu0 %v1838, 64
        %v1919 = vpop.permute.xlu0 %1918
        %1920 = vrot.lane.b32.xlu0 %v1839, 64
        %v1921 = vpop.permute.xlu0 %1920
        %1922 = vrot.lane.b32.xlu0 %v1840, 64
        %v1923 = vpop.permute.xlu0 %1922
        %1924 = vrot.lane.b32.xlu0 %v1841, 64
        %v1925 = vpop.permute.xlu0 %1924
        %1926 = vrot.lane.b32.xlu0 %v1842, 64
        %v1927 = vpop.permute.xlu0 %1926
        %1928 = vrot.lane.b32.xlu0 %v1843, 64
        %v1929 = vpop.permute.xlu0 %1928
        %1930 = vrot.lane.b32.xlu0 %v1844, 64
        %v1931 = vpop.permute.xlu0 %1930
        %1932 = vrot.lane.b32.xlu0 %v1845, 64
        %v1933 = vpop.permute.xlu0 %1932
        %1934 = vrot.lane.b32.xlu0 %v1846, 64
        %v1935 = vpop.permute.xlu0 %1934
        %1936 = vrot.lane.b32.xlu0 %v1847, 64
        %v1937 = vpop.permute.xlu0 %1936
        %1938 = vrot.lane.b32.xlu0 %v1848, 64
        %v1939 = vpop.permute.xlu0 %1938
        %1940 = vrot.lane.b32.xlu0 %v1849, 64
        %v1941 = vpop.permute.xlu0 %1940
        %1942 = vrot.lane.b32.xlu0 %v1850, 64
        %v1943 = vpop.permute.xlu0 %1942
        %1944 = vrot.lane.b32.xlu0 %v1851, 64
        %v1945 = vpop.permute.xlu0 %1944
        %1946 = vrot.lane.b32.xlu0 %v1852, 64
        %v1947 = vpop.permute.xlu0 %1946
        %1948 = vrot.lane.b32.xlu0 %v1853, 64
        %v1949 = vpop.permute.xlu0 %1948
        %v1982 = vsel %vm1212, %v1790, %v1887
        %v1983 = vsel %vm1212, %v1791, %v1889
        %v1984 = vsel %vm1212, %v1792, %v1891
        %v1985 = vsel %vm1212, %v1793, %v1893
        %v1986 = vsel %vm1212, %v1794, %v1895
        %v1987 = vsel %vm1212, %v1795, %v1897
        %v1988 = vsel %vm1212, %v1796, %v1899
        %v1989 = vsel %vm1212, %v1797, %v1901
        %v1990 = vsel %vm1212, %v1798, %v1903
        %v1991 = vsel %vm1212, %v1799, %v1905
        %v1992 = vsel %vm1212, %v1800, %v1907
        %v1993 = vsel %vm1212, %v1801, %v1909
        %v1994 = vsel %vm1212, %v1802, %v1911
        %v1995 = vsel %vm1212, %v1803, %v1913
        %v1996 = vsel %vm1212, %v1804, %v1915
        %v1997 = vsel %vm1212, %v1805, %v1917
        %v1998 = vsel %vm1212, %v1806, %v1919
        %v1999 = vsel %vm1212, %v1807, %v1921
        %v2000 = vsel %vm1212, %v1808, %v1923
        %v2001 = vsel %vm1212, %v1809, %v1925
        %v2002 = vsel %vm1212, %v1810, %v1927
        %v2003 = vsel %vm1212, %v1811, %v1929
        %v2004 = vsel %vm1212, %v1812, %v1931
        %v2005 = vsel %vm1212, %v1813, %v1933
        %v2006 = vsel %vm1212, %v1814, %v1935
        %v2007 = vsel %vm1212, %v1815, %v1937
        %v2008 = vsel %vm1212, %v1816, %v1939
        %v2009 = vsel %vm1212, %v1817, %v1941
        %v2010 = vsel %vm1212, %v1818, %v1943
        %v2011 = vsel %vm1212, %v1819, %v1945
        %v2012 = vsel %vm1212, %v1820, %v1947
        %v2013 = vsel %vm1212, %v1821, %v1949
        %2014 = vst [vmem:[#allocation3 + $0x18] sm:$0xff] %v1982
        %2015 = vst [vmem:[#allocation3 + $0x80] sm:$0xff] %v1983
        %2016 = vst [vmem:[#allocation3 + $0xe8] sm:$0xff] %v1984
        %2017 = vst [vmem:[#allocation3 + $0x150] sm:$0xff] %v1985
        %2018 = vst [vmem:[#allocation3 + $0x1b8] sm:$0xff] %v1986
        %2019 = vst [vmem:[#allocation3 + $0x220] sm:$0xff] %v1987
        %2020 = vst [vmem:[#allocation3 + $0x288] sm:$0xff] %v1988
        %2021 = vst [vmem:[#allocation3 + $0x2f0] sm:$0xff] %v1989
        %2022 = vst [vmem:[#allocation3 + $0x358] sm:$0xff] %v1990
        %2023 = vst [vmem:[#allocation3 + $0x3c0] sm:$0xff] %v1991
        %2024 = vst [vmem:[#allocation3 + $0x428] sm:$0xff] %v1992
        %2025 = vst [vmem:[#allocation3 + $0x490] sm:$0xff] %v1993
        %2026 = vst [vmem:[#allocation3 + $0x4f8] sm:$0xff] %v1994
        %2027 = vst [vmem:[#allocation3 + $0x560] sm:$0xff] %v1995
        %2028 = vst [vmem:[#allocation3 + $0x5c8] sm:$0xff] %v1996
        %2029 = vst [vmem:[#allocation3 + $0x630] sm:$0xff] %v1997
        %2030 = vst [vmem:[#allocation3 + $0x698] sm:$0xff] %v1998
        %2031 = vst [vmem:[#allocation3 + $0x700] sm:$0xff] %v1999
        %2032 = vst [vmem:[#allocation3 + $0x768] sm:$0xff] %v2000
        %2033 = vst [vmem:[#allocation3 + $0x7d0] sm:$0xff] %v2001
        %2034 = vst [vmem:[#allocation3 + $0x838] sm:$0xff] %v2002
        %2035 = vst [vmem:[#allocation3 + $0x8a0] sm:$0xff] %v2003
        %2036 = vst [vmem:[#allocation3 + $0x908] sm:$0xff] %v2004
        %2037 = vst [vmem:[#allocation3 + $0x970] sm:$0xff] %v2005
        %2038 = vst [vmem:[#allocation3 + $0x9d8] sm:$0xff] %v2006
        %2039 = vst [vmem:[#allocation3 + $0xa40] sm:$0xff] %v2007
        %2040 = vst [vmem:[#allocation3 + $0xaa8] sm:$0xff] %v2008
        %2041 = vst [vmem:[#allocation3 + $0xb10] sm:$0xff] %v2009
        %2042 = vst [vmem:[#allocation3 + $0xb78] sm:$0xff] %v2010
        %2043 = vst [vmem:[#allocation3 + $0xbe0] sm:$0xff] %v2011
        %2044 = vst [vmem:[#allocation3 + $0xc48] sm:$0xff] %v2012
        %2045 = vst [vmem:[#allocation3 + $0xcb0] sm:$0xff] %v2013
        %v2046 = vld [vmem:[%s1565 + $0x3] sm:$0xff]
        %v2047 = vld [vmem:[%s1565 + $0xb] sm:$0xff]
        %v2048 = vld [vmem:[%s1565 + $0x1b] sm:$0xff]
        %v2049 = vld [vmem:[%s1565 + $0x23] sm:$0xff]
        %v2050 = vld [vmem:[%s1565 + $0x33] sm:$0xff]
        %v2051 = vld [vmem:[%s1565 + $0x3b] sm:$0xff]
        %v2052 = vld [vmem:[%s1565 + $0x4b] sm:$0xff]
        %v2053 = vld [vmem:[%s1565 + $0x53] sm:$0xff]
        %v2054 = vld [vmem:[%s1565 + $0x63] sm:$0xff]
        %v2055 = vld [vmem:[%s1565 + $0x6b] sm:$0xff]
        %v2056 = vld [vmem:[%s1565 + $0x7b] sm:$0xff]
        %v2057 = vld [vmem:[%s1565 + $0x83] sm:$0xff]
        %v2058 = vld [vmem:[%s1565 + $0x93] sm:$0xff]
        %v2059 = vld [vmem:[%s1565 + $0x9b] sm:$0xff]
        %v2060 = vld [vmem:[%s1565 + $0xab] sm:$0xff]
        %v2061 = vld [vmem:[%s1565 + $0xb3] sm:$0xff]
        %v2062 = vld [vmem:[%s1565 + $0xc3] sm:$0xff]
        %v2063 = vld [vmem:[%s1565 + $0xcb] sm:$0xff]
        %v2064 = vld [vmem:[%s1565 + $0xdb] sm:$0xff]
        %v2065 = vld [vmem:[%s1565 + $0xe3] sm:$0xff]
        %v2066 = vld [vmem:[%s1565 + $0xf3] sm:$0xff]
        %v2067 = vld [vmem:[%s1565 + $0xfb] sm:$0xff]
        %v2068 = vld [vmem:[%s1565 + $0x10b] sm:$0xff]
        %v2069 = vld [vmem:[%s1565 + $0x113] sm:$0xff]
        %v2070 = vld [vmem:[%s1565 + $0x123] sm:$0xff]
        %v2071 = vld [vmem:[%s1565 + $0x12b] sm:$0xff]
        %v2072 = vld [vmem:[%s1565 + $0x13b] sm:$0xff]
        %v2073 = vld [vmem:[%s1565 + $0x143] sm:$0xff]
        %v2074 = vld [vmem:[%s1565 + $0x153] sm:$0xff]
        %v2075 = vld [vmem:[%s1565 + $0x15b] sm:$0xff]
        %v2076 = vld [vmem:[%s1565 + $0x16b] sm:$0xff]
        %v2077 = vld [vmem:[%s1565 + $0x173] sm:$0xff]
        %v2078 = vld [vmem:[%s1565 + $0x4] sm:$0xff]
        %v2079 = vld [vmem:[%s1565 + $0xc] sm:$0xff]
        %v2080 = vld [vmem:[%s1565 + $0x1c] sm:$0xff]
        %v2081 = vld [vmem:[%s1565 + $0x24] sm:$0xff]
        %v2082 = vld [vmem:[%s1565 + $0x34] sm:$0xff]
        %v2083 = vld [vmem:[%s1565 + $0x3c] sm:$0xff]
        %v2084 = vld [vmem:[%s1565 + $0x4c] sm:$0xff]
        %v2085 = vld [vmem:[%s1565 + $0x54] sm:$0xff]
        %v2086 = vld [vmem:[%s1565 + $0x64] sm:$0xff]
        %v2087 = vld [vmem:[%s1565 + $0x6c] sm:$0xff]
        %v2088 = vld [vmem:[%s1565 + $0x7c] sm:$0xff]
        %v2089 = vld [vmem:[%s1565 + $0x84] sm:$0xff]
        %v2090 = vld [vmem:[%s1565 + $0x94] sm:$0xff]
        %v2091 = vld [vmem:[%s1565 + $0x9c] sm:$0xff]
        %v2092 = vld [vmem:[%s1565 + $0xac] sm:$0xff]
        %v2093 = vld [vmem:[%s1565 + $0xb4] sm:$0xff]
        %v2094 = vld [vmem:[%s1565 + $0xc4] sm:$0xff]
        %v2095 = vld [vmem:[%s1565 + $0xcc] sm:$0xff]
        %v2096 = vld [vmem:[%s1565 + $0xdc] sm:$0xff]
        %v2097 = vld [vmem:[%s1565 + $0xe4] sm:$0xff]
        %v2098 = vld [vmem:[%s1565 + $0xf4] sm:$0xff]
        %v2099 = vld [vmem:[%s1565 + $0xfc] sm:$0xff]
        %v2100 = vld [vmem:[%s1565 + $0x10c] sm:$0xff]
        %v2101 = vld [vmem:[%s1565 + $0x114] sm:$0xff]
        %v2102 = vld [vmem:[%s1565 + $0x124] sm:$0xff]
        %v2103 = vld [vmem:[%s1565 + $0x12c] sm:$0xff]
        %v2104 = vld [vmem:[%s1565 + $0x13c] sm:$0xff]
        %v2105 = vld [vmem:[%s1565 + $0x144] sm:$0xff]
        %v2106 = vld [vmem:[%s1565 + $0x154] sm:$0xff]
        %v2107 = vld [vmem:[%s1565 + $0x15c] sm:$0xff]
        %v2108 = vld [vmem:[%s1565 + $0x16c] sm:$0xff]
        %v2109 = vld [vmem:[%s1565 + $0x174] sm:$0xff]
        %2142 = vrot.lane.b32.xlu0 %v2078, 64
        %v2143 = vpop.permute.xlu0 %2142
        %2144 = vrot.lane.b32.xlu0 %v2079, 64
        %v2145 = vpop.permute.xlu0 %2144
        %2146 = vrot.lane.b32.xlu0 %v2080, 64
        %v2147 = vpop.permute.xlu0 %2146
        %2148 = vrot.lane.b32.xlu0 %v2081, 64
        %v2149 = vpop.permute.xlu0 %2148
        %2150 = vrot.lane.b32.xlu0 %v2082, 64
        %v2151 = vpop.permute.xlu0 %2150
        %2152 = vrot.lane.b32.xlu0 %v2083, 64
        %v2153 = vpop.permute.xlu0 %2152
        %2154 = vrot.lane.b32.xlu0 %v2084, 64
        %v2155 = vpop.permute.xlu0 %2154
        %2156 = vrot.lane.b32.xlu0 %v2085, 64
        %v2157 = vpop.permute.xlu0 %2156
        %2158 = vrot.lane.b32.xlu0 %v2086, 64
        %v2159 = vpop.permute.xlu0 %2158
        %2160 = vrot.lane.b32.xlu0 %v2087, 64
        %v2161 = vpop.permute.xlu0 %2160
        %2162 = vrot.lane.b32.xlu0 %v2088, 64
        %v2163 = vpop.permute.xlu0 %2162
        %2164 = vrot.lane.b32.xlu0 %v2089, 64
        %v2165 = vpop.permute.xlu0 %2164
        %2166 = vrot.lane.b32.xlu0 %v2090, 64
        %v2167 = vpop.permute.xlu0 %2166
        %2168 = vrot.lane.b32.xlu0 %v2091, 64
        %v2169 = vpop.permute.xlu0 %2168
        %2170 = vrot.lane.b32.xlu0 %v2092, 64
        %v2171 = vpop.permute.xlu0 %2170
        %2172 = vrot.lane.b32.xlu0 %v2093, 64
        %v2173 = vpop.permute.xlu0 %2172
        %2174 = vrot.lane.b32.xlu0 %v2094, 64
        %v2175 = vpop.permute.xlu0 %2174
        %2176 = vrot.lane.b32.xlu0 %v2095, 64
        %v2177 = vpop.permute.xlu0 %2176
        %2178 = vrot.lane.b32.xlu0 %v2096, 64
        %v2179 = vpop.permute.xlu0 %2178
        %2180 = vrot.lane.b32.xlu0 %v2097, 64
        %v2181 = vpop.permute.xlu0 %2180
        %2182 = vrot.lane.b32.xlu0 %v2098, 64
        %v2183 = vpop.permute.xlu0 %2182
        %2184 = vrot.lane.b32.xlu0 %v2099, 64
        %v2185 = vpop.permute.xlu0 %2184
        %2186 = vrot.lane.b32.xlu0 %v2100, 64
        %v2187 = vpop.permute.xlu0 %2186
        %2188 = vrot.lane.b32.xlu0 %v2101, 64
        %v2189 = vpop.permute.xlu0 %2188
        %2190 = vrot.lane.b32.xlu0 %v2102, 64
        %v2191 = vpop.permute.xlu0 %2190
        %2192 = vrot.lane.b32.xlu0 %v2103, 64
        %v2193 = vpop.permute.xlu0 %2192
        %2194 = vrot.lane.b32.xlu0 %v2104, 64
        %v2195 = vpop.permute.xlu0 %2194
        %2196 = vrot.lane.b32.xlu0 %v2105, 64
        %v2197 = vpop.permute.xlu0 %2196
        %2198 = vrot.lane.b32.xlu0 %v2106, 64
        %v2199 = vpop.permute.xlu0 %2198
        %2200 = vrot.lane.b32.xlu0 %v2107, 64
        %v2201 = vpop.permute.xlu0 %2200
        %2202 = vrot.lane.b32.xlu0 %v2108, 64
        %v2203 = vpop.permute.xlu0 %2202
        %2204 = vrot.lane.b32.xlu0 %v2109, 64
        %v2205 = vpop.permute.xlu0 %2204
        %v2238 = vsel %vm1212, %v2046, %v2143
        %v2239 = vsel %vm1212, %v2047, %v2145
        %v2240 = vsel %vm1212, %v2048, %v2147
        %v2241 = vsel %vm1212, %v2049, %v2149
        %v2242 = vsel %vm1212, %v2050, %v2151
        %v2243 = vsel %vm1212, %v2051, %v2153
        %v2244 = vsel %vm1212, %v2052, %v2155
        %v2245 = vsel %vm1212, %v2053, %v2157
        %v2246 = vsel %vm1212, %v2054, %v2159
        %v2247 = vsel %vm1212, %v2055, %v2161
        %v2248 = vsel %vm1212, %v2056, %v2163
        %v2249 = vsel %vm1212, %v2057, %v2165
        %v2250 = vsel %vm1212, %v2058, %v2167
        %v2251 = vsel %vm1212, %v2059, %v2169
        %v2252 = vsel %vm1212, %v2060, %v2171
        %v2253 = vsel %vm1212, %v2061, %v2173
        %v2254 = vsel %vm1212, %v2062, %v2175
        %v2255 = vsel %vm1212, %v2063, %v2177
        %v2256 = vsel %vm1212, %v2064, %v2179
        %v2257 = vsel %vm1212, %v2065, %v2181
        %v2258 = vsel %vm1212, %v2066, %v2183
        %v2259 = vsel %vm1212, %v2067, %v2185
        %v2260 = vsel %vm1212, %v2068, %v2187
        %v2261 = vsel %vm1212, %v2069, %v2189
        %v2262 = vsel %vm1212, %v2070, %v2191
        %v2263 = vsel %vm1212, %v2071, %v2193
        %v2264 = vsel %vm1212, %v2072, %v2195
        %v2265 = vsel %vm1212, %v2073, %v2197
        %v2266 = vsel %vm1212, %v2074, %v2199
        %v2267 = vsel %vm1212, %v2075, %v2201
        %v2268 = vsel %vm1212, %v2076, %v2203
        %v2269 = vsel %vm1212, %v2077, %v2205
        %2270 = vst [vmem:[#allocation3 + $0x20] sm:$0xff] %v2238
        %2271 = vst [vmem:[#allocation3 + $0x88] sm:$0xff] %v2239
        %2272 = vst [vmem:[#allocation3 + $0xf0] sm:$0xff] %v2240
        %2273 = vst [vmem:[#allocation3 + $0x158] sm:$0xff] %v2241
        %2274 = vst [vmem:[#allocation3 + $0x1c0] sm:$0xff] %v2242
        %2275 = vst [vmem:[#allocation3 + $0x228] sm:$0xff] %v2243
        %2276 = vst [vmem:[#allocation3 + $0x290] sm:$0xff] %v2244
        %2277 = vst [vmem:[#allocation3 + $0x2f8] sm:$0xff] %v2245
        %2278 = vst [vmem:[#allocation3 + $0x360] sm:$0xff] %v2246
        %2279 = vst [vmem:[#allocation3 + $0x3c8] sm:$0xff] %v2247
        %2280 = vst [vmem:[#allocation3 + $0x430] sm:$0xff] %v2248
        %2281 = vst [vmem:[#allocation3 + $0x498] sm:$0xff] %v2249
        %2282 = vst [vmem:[#allocation3 + $0x500] sm:$0xff] %v2250
        %2283 = vst [vmem:[#allocation3 + $0x568] sm:$0xff] %v2251
        %2284 = vst [vmem:[#allocation3 + $0x5d0] sm:$0xff] %v2252
        %2285 = vst [vmem:[#allocation3 + $0x638] sm:$0xff] %v2253
        %2286 = vst [vmem:[#allocation3 + $0x6a0] sm:$0xff] %v2254
        %2287 = vst [vmem:[#allocation3 + $0x708] sm:$0xff] %v2255
        %2288 = vst [vmem:[#allocation3 + $0x770] sm:$0xff] %v2256
        %2289 = vst [vmem:[#allocation3 + $0x7d8] sm:$0xff] %v2257
        %2290 = vst [vmem:[#allocation3 + $0x840] sm:$0xff] %v2258
        %2291 = vst [vmem:[#allocation3 + $0x8a8] sm:$0xff] %v2259
        %2292 = vst [vmem:[#allocation3 + $0x910] sm:$0xff] %v2260
        %2293 = vst [vmem:[#allocation3 + $0x978] sm:$0xff] %v2261
        %2294 = vst [vmem:[#allocation3 + $0x9e0] sm:$0xff] %v2262
        %2295 = vst [vmem:[#allocation3 + $0xa48] sm:$0xff] %v2263
        %2296 = vst [vmem:[#allocation3 + $0xab0] sm:$0xff] %v2264
        %2297 = vst [vmem:[#allocation3 + $0xb18] sm:$0xff] %v2265
        %2298 = vst [vmem:[#allocation3 + $0xb80] sm:$0xff] %v2266
        %2299 = vst [vmem:[#allocation3 + $0xbe8] sm:$0xff] %v2267
        %2300 = vst [vmem:[#allocation3 + $0xc50] sm:$0xff] %v2268
        %2301 = vst [vmem:[#allocation3 + $0xcb8] sm:$0xff] %v2269
        %s2302 = scalar_lea.vmem [#allocation2], 48
        %v2303 = vld [vmem:[%s2302] sm:$0xff]
        %v2304 = vld [vmem:[%s2302 + $0x8] sm:$0xff]
        %v2305 = vld [vmem:[%s2302 + $0x18] sm:$0xff]
        %v2306 = vld [vmem:[%s2302 + $0x20] sm:$0xff]
        %v2307 = vld [vmem:[%s2302 + $0x30] sm:$0xff]
        %v2308 = vld [vmem:[%s2302 + $0x38] sm:$0xff]
        %v2309 = vld [vmem:[%s2302 + $0x48] sm:$0xff]
        %v2310 = vld [vmem:[%s2302 + $0x50] sm:$0xff]
        %v2311 = vld [vmem:[%s2302 + $0x60] sm:$0xff]
        %v2312 = vld [vmem:[%s2302 + $0x68] sm:$0xff]
        %v2313 = vld [vmem:[%s2302 + $0x78] sm:$0xff]
        %v2314 = vld [vmem:[%s2302 + $0x80] sm:$0xff]
        %v2315 = vld [vmem:[%s2302 + $0x90] sm:$0xff]
        %v2316 = vld [vmem:[%s2302 + $0x98] sm:$0xff]
        %v2317 = vld [vmem:[%s2302 + $0xa8] sm:$0xff]
        %v2318 = vld [vmem:[%s2302 + $0xb0] sm:$0xff]
        %v2319 = vld [vmem:[%s2302 + $0xc0] sm:$0xff]
        %v2320 = vld [vmem:[%s2302 + $0xc8] sm:$0xff]
        %v2321 = vld [vmem:[%s2302 + $0xd8] sm:$0xff]
        %v2322 = vld [vmem:[%s2302 + $0xe0] sm:$0xff]
        %v2323 = vld [vmem:[%s2302 + $0xf0] sm:$0xff]
        %v2324 = vld [vmem:[%s2302 + $0xf8] sm:$0xff]
        %v2325 = vld [vmem:[%s2302 + $0x108] sm:$0xff]
        %v2326 = vld [vmem:[%s2302 + $0x110] sm:$0xff]
        %v2327 = vld [vmem:[%s2302 + $0x120] sm:$0xff]
        %v2328 = vld [vmem:[%s2302 + $0x128] sm:$0xff]
        %v2329 = vld [vmem:[%s2302 + $0x138] sm:$0xff]
        %v2330 = vld [vmem:[%s2302 + $0x140] sm:$0xff]
        %v2331 = vld [vmem:[%s2302 + $0x150] sm:$0xff]
        %v2332 = vld [vmem:[%s2302 + $0x158] sm:$0xff]
        %v2333 = vld [vmem:[%s2302 + $0x168] sm:$0xff]
        %v2334 = vld [vmem:[%s2302 + $0x170] sm:$0xff]
        %v2335 = vld [vmem:[%s2302 + $0x1] sm:$0xff]
        %v2336 = vld [vmem:[%s2302 + $0x9] sm:$0xff]
        %v2337 = vld [vmem:[%s2302 + $0x19] sm:$0xff]
        %v2338 = vld [vmem:[%s2302 + $0x21] sm:$0xff]
        %v2339 = vld [vmem:[%s2302 + $0x31] sm:$0xff]
        %v2340 = vld [vmem:[%s2302 + $0x39] sm:$0xff]
        %v2341 = vld [vmem:[%s2302 + $0x49] sm:$0xff]
        %v2342 = vld [vmem:[%s2302 + $0x51] sm:$0xff]
        %v2343 = vld [vmem:[%s2302 + $0x61] sm:$0xff]
        %v2344 = vld [vmem:[%s2302 + $0x69] sm:$0xff]
        %v2345 = vld [vmem:[%s2302 + $0x79] sm:$0xff]
        %v2346 = vld [vmem:[%s2302 + $0x81] sm:$0xff]
        %v2347 = vld [vmem:[%s2302 + $0x91] sm:$0xff]
        %v2348 = vld [vmem:[%s2302 + $0x99] sm:$0xff]
        %v2349 = vld [vmem:[%s2302 + $0xa9] sm:$0xff]
        %v2350 = vld [vmem:[%s2302 + $0xb1] sm:$0xff]
        %v2351 = vld [vmem:[%s2302 + $0xc1] sm:$0xff]
        %v2352 = vld [vmem:[%s2302 + $0xc9] sm:$0xff]
        %v2353 = vld [vmem:[%s2302 + $0xd9] sm:$0xff]
        %v2354 = vld [vmem:[%s2302 + $0xe1] sm:$0xff]
        %v2355 = vld [vmem:[%s2302 + $0xf1] sm:$0xff]
        %v2356 = vld [vmem:[%s2302 + $0xf9] sm:$0xff]
        %v2357 = vld [vmem:[%s2302 + $0x109] sm:$0xff]
        %v2358 = vld [vmem:[%s2302 + $0x111] sm:$0xff]
        %v2359 = vld [vmem:[%s2302 + $0x121] sm:$0xff]
        %v2360 = vld [vmem:[%s2302 + $0x129] sm:$0xff]
        %v2361 = vld [vmem:[%s2302 + $0x139] sm:$0xff]
        %v2362 = vld [vmem:[%s2302 + $0x141] sm:$0xff]
        %v2363 = vld [vmem:[%s2302 + $0x151] sm:$0xff]
        %v2364 = vld [vmem:[%s2302 + $0x159] sm:$0xff]
        %v2365 = vld [vmem:[%s2302 + $0x169] sm:$0xff]
        %v2366 = vld [vmem:[%s2302 + $0x171] sm:$0xff]
        %2399 = vrot.lane.b32.xlu0 %v2335, 64
        %v2400 = vpop.permute.xlu0 %2399
        %2401 = vrot.lane.b32.xlu0 %v2336, 64
        %v2402 = vpop.permute.xlu0 %2401
        %2403 = vrot.lane.b32.xlu0 %v2337, 64
        %v2404 = vpop.permute.xlu0 %2403
        %2405 = vrot.lane.b32.xlu0 %v2338, 64
        %v2406 = vpop.permute.xlu0 %2405
        %2407 = vrot.lane.b32.xlu0 %v2339, 64
        %v2408 = vpop.permute.xlu0 %2407
        %2409 = vrot.lane.b32.xlu0 %v2340, 64
        %v2410 = vpop.permute.xlu0 %2409
        %2411 = vrot.lane.b32.xlu0 %v2341, 64
        %v2412 = vpop.permute.xlu0 %2411
        %2413 = vrot.lane.b32.xlu0 %v2342, 64
        %v2414 = vpop.permute.xlu0 %2413
        %2415 = vrot.lane.b32.xlu0 %v2343, 64
        %v2416 = vpop.permute.xlu0 %2415
        %2417 = vrot.lane.b32.xlu0 %v2344, 64
        %v2418 = vpop.permute.xlu0 %2417
        %2419 = vrot.lane.b32.xlu0 %v2345, 64
        %v2420 = vpop.permute.xlu0 %2419
        %2421 = vrot.lane.b32.xlu0 %v2346, 64
        %v2422 = vpop.permute.xlu0 %2421
        %2423 = vrot.lane.b32.xlu0 %v2347, 64
        %v2424 = vpop.permute.xlu0 %2423
        %2425 = vrot.lane.b32.xlu0 %v2348, 64
        %v2426 = vpop.permute.xlu0 %2425
        %2427 = vrot.lane.b32.xlu0 %v2349, 64
        %v2428 = vpop.permute.xlu0 %2427
        %2429 = vrot.lane.b32.xlu0 %v2350, 64
        %v2430 = vpop.permute.xlu0 %2429
        %2431 = vrot.lane.b32.xlu0 %v2351, 64
        %v2432 = vpop.permute.xlu0 %2431
        %2433 = vrot.lane.b32.xlu0 %v2352, 64
        %v2434 = vpop.permute.xlu0 %2433
        %2435 = vrot.lane.b32.xlu0 %v2353, 64
        %v2436 = vpop.permute.xlu0 %2435
        %2437 = vrot.lane.b32.xlu0 %v2354, 64
        %v2438 = vpop.permute.xlu0 %2437
        %2439 = vrot.lane.b32.xlu0 %v2355, 64
        %v2440 = vpop.permute.xlu0 %2439
        %2441 = vrot.lane.b32.xlu0 %v2356, 64
        %v2442 = vpop.permute.xlu0 %2441
        %2443 = vrot.lane.b32.xlu0 %v2357, 64
        %v2444 = vpop.permute.xlu0 %2443
        %2445 = vrot.lane.b32.xlu0 %v2358, 64
        %v2446 = vpop.permute.xlu0 %2445
        %2447 = vrot.lane.b32.xlu0 %v2359, 64
        %v2448 = vpop.permute.xlu0 %2447
        %2449 = vrot.lane.b32.xlu0 %v2360, 64
        %v2450 = vpop.permute.xlu0 %2449
        %2451 = vrot.lane.b32.xlu0 %v2361, 64
        %v2452 = vpop.permute.xlu0 %2451
        %2453 = vrot.lane.b32.xlu0 %v2362, 64
        %v2454 = vpop.permute.xlu0 %2453
        %2455 = vrot.lane.b32.xlu0 %v2363, 64
        %v2456 = vpop.permute.xlu0 %2455
        %2457 = vrot.lane.b32.xlu0 %v2364, 64
        %v2458 = vpop.permute.xlu0 %2457
        %2459 = vrot.lane.b32.xlu0 %v2365, 64
        %v2460 = vpop.permute.xlu0 %2459
        %2461 = vrot.lane.b32.xlu0 %v2366, 64
        %v2462 = vpop.permute.xlu0 %2461
        %v2495 = vsel %vm1212, %v2303, %v2400
        %v2496 = vsel %vm1212, %v2304, %v2402
        %v2497 = vsel %vm1212, %v2305, %v2404
        %v2498 = vsel %vm1212, %v2306, %v2406
        %v2499 = vsel %vm1212, %v2307, %v2408
        %v2500 = vsel %vm1212, %v2308, %v2410
        %v2501 = vsel %vm1212, %v2309, %v2412
        %v2502 = vsel %vm1212, %v2310, %v2414
        %v2503 = vsel %vm1212, %v2311, %v2416
        %v2504 = vsel %vm1212, %v2312, %v2418
        %v2505 = vsel %vm1212, %v2313, %v2420
        %v2506 = vsel %vm1212, %v2314, %v2422
        %v2507 = vsel %vm1212, %v2315, %v2424
        %v2508 = vsel %vm1212, %v2316, %v2426
        %v2509 = vsel %vm1212, %v2317, %v2428
        %v2510 = vsel %vm1212, %v2318, %v2430
        %v2511 = vsel %vm1212, %v2319, %v2432
        %v2512 = vsel %vm1212, %v2320, %v2434
        %v2513 = vsel %vm1212, %v2321, %v2436
        %v2514 = vsel %vm1212, %v2322, %v2438
        %v2515 = vsel %vm1212, %v2323, %v2440
        %v2516 = vsel %vm1212, %v2324, %v2442
        %v2517 = vsel %vm1212, %v2325, %v2444
        %v2518 = vsel %vm1212, %v2326, %v2446
        %v2519 = vsel %vm1212, %v2327, %v2448
        %v2520 = vsel %vm1212, %v2328, %v2450
        %v2521 = vsel %vm1212, %v2329, %v2452
        %v2522 = vsel %vm1212, %v2330, %v2454
        %v2523 = vsel %vm1212, %v2331, %v2456
        %v2524 = vsel %vm1212, %v2332, %v2458
        %v2525 = vsel %vm1212, %v2333, %v2460
        %v2526 = vsel %vm1212, %v2334, %v2462
        %2527 = vst [vmem:[#allocation3 + $0x28] sm:$0xff] %v2495
        %2528 = vst [vmem:[#allocation3 + $0x90] sm:$0xff] %v2496
        %2529 = vst [vmem:[#allocation3 + $0xf8] sm:$0xff] %v2497
        %2530 = vst [vmem:[#allocation3 + $0x160] sm:$0xff] %v2498
        %2531 = vst [vmem:[#allocation3 + $0x1c8] sm:$0xff] %v2499
        %2532 = vst [vmem:[#allocation3 + $0x230] sm:$0xff] %v2500
        %2533 = vst [vmem:[#allocation3 + $0x298] sm:$0xff] %v2501
        %2534 = vst [vmem:[#allocation3 + $0x300] sm:$0xff] %v2502
        %2535 = vst [vmem:[#allocation3 + $0x368] sm:$0xff] %v2503
        %2536 = vst [vmem:[#allocation3 + $0x3d0] sm:$0xff] %v2504
        %2537 = vst [vmem:[#allocation3 + $0x438] sm:$0xff] %v2505
        %2538 = vst [vmem:[#allocation3 + $0x4a0] sm:$0xff] %v2506
        %2539 = vst [vmem:[#allocation3 + $0x508] sm:$0xff] %v2507
        %2540 = vst [vmem:[#allocation3 + $0x570] sm:$0xff] %v2508
        %2541 = vst [vmem:[#allocation3 + $0x5d8] sm:$0xff] %v2509
        %2542 = vst [vmem:[#allocation3 + $0x640] sm:$0xff] %v2510
        %2543 = vst [vmem:[#allocation3 + $0x6a8] sm:$0xff] %v2511
        %2544 = vst [vmem:[#allocation3 + $0x710] sm:$0xff] %v2512
        %2545 = vst [vmem:[#allocation3 + $0x778] sm:$0xff] %v2513
        %2546 = vst [vmem:[#allocation3 + $0x7e0] sm:$0xff] %v2514
        %2547 = vst [vmem:[#allocation3 + $0x848] sm:$0xff] %v2515
        %2548 = vst [vmem:[#allocation3 + $0x8b0] sm:$0xff] %v2516
        %2549 = vst [vmem:[#allocation3 + $0x918] sm:$0xff] %v2517
        %2550 = vst [vmem:[#allocation3 + $0x980] sm:$0xff] %v2518
        %2551 = vst [vmem:[#allocation3 + $0x9e8] sm:$0xff] %v2519
        %2552 = vst [vmem:[#allocation3 + $0xa50] sm:$0xff] %v2520
        %2553 = vst [vmem:[#allocation3 + $0xab8] sm:$0xff] %v2521
        %2554 = vst [vmem:[#allocation3 + $0xb20] sm:$0xff] %v2522
        %2555 = vst [vmem:[#allocation3 + $0xb88] sm:$0xff] %v2523
        %2556 = vst [vmem:[#allocation3 + $0xbf0] sm:$0xff] %v2524
        %2557 = vst [vmem:[#allocation3 + $0xc58] sm:$0xff] %v2525
        %2558 = vst [vmem:[#allocation3 + $0xcc0] sm:$0xff] %v2526
        %v2559 = vld [vmem:[%s2302 + $0x2] sm:$0xff]
        %v2560 = vld [vmem:[%s2302 + $0xa] sm:$0xff]
        %v2561 = vld [vmem:[%s2302 + $0x1a] sm:$0xff]
        %v2562 = vld [vmem:[%s2302 + $0x22] sm:$0xff]
        %v2563 = vld [vmem:[%s2302 + $0x32] sm:$0xff]
        %v2564 = vld [vmem:[%s2302 + $0x3a] sm:$0xff]
        %v2565 = vld [vmem:[%s2302 + $0x4a] sm:$0xff]
        %v2566 = vld [vmem:[%s2302 + $0x52] sm:$0xff]
        %v2567 = vld [vmem:[%s2302 + $0x62] sm:$0xff]
        %v2568 = vld [vmem:[%s2302 + $0x6a] sm:$0xff]
        %v2569 = vld [vmem:[%s2302 + $0x7a] sm:$0xff]
        %v2570 = vld [vmem:[%s2302 + $0x82] sm:$0xff]
        %v2571 = vld [vmem:[%s2302 + $0x92] sm:$0xff]
        %v2572 = vld [vmem:[%s2302 + $0x9a] sm:$0xff]
        %v2573 = vld [vmem:[%s2302 + $0xaa] sm:$0xff]
        %v2574 = vld [vmem:[%s2302 + $0xb2] sm:$0xff]
        %v2575 = vld [vmem:[%s2302 + $0xc2] sm:$0xff]
        %v2576 = vld [vmem:[%s2302 + $0xca] sm:$0xff]
        %v2577 = vld [vmem:[%s2302 + $0xda] sm:$0xff]
        %v2578 = vld [vmem:[%s2302 + $0xe2] sm:$0xff]
        %v2579 = vld [vmem:[%s2302 + $0xf2] sm:$0xff]
        %v2580 = vld [vmem:[%s2302 + $0xfa] sm:$0xff]
        %v2581 = vld [vmem:[%s2302 + $0x10a] sm:$0xff]
        %v2582 = vld [vmem:[%s2302 + $0x112] sm:$0xff]
        %v2583 = vld [vmem:[%s2302 + $0x122] sm:$0xff]
        %v2584 = vld [vmem:[%s2302 + $0x12a] sm:$0xff]
        %v2585 = vld [vmem:[%s2302 + $0x13a] sm:$0xff]
        %v2586 = vld [vmem:[%s2302 + $0x142] sm:$0xff]
        %v2587 = vld [vmem:[%s2302 + $0x152] sm:$0xff]
        %v2588 = vld [vmem:[%s2302 + $0x15a] sm:$0xff]
        %v2589 = vld [vmem:[%s2302 + $0x16a] sm:$0xff]
        %v2590 = vld [vmem:[%s2302 + $0x172] sm:$0xff]
        %v2591 = vld [vmem:[%s2302 + $0x3] sm:$0xff]
        %v2592 = vld [vmem:[%s2302 + $0xb] sm:$0xff]
        %v2593 = vld [vmem:[%s2302 + $0x1b] sm:$0xff]
        %v2594 = vld [vmem:[%s2302 + $0x23] sm:$0xff]
        %v2595 = vld [vmem:[%s2302 + $0x33] sm:$0xff]
        %v2596 = vld [vmem:[%s2302 + $0x3b] sm:$0xff]
        %v2597 = vld [vmem:[%s2302 + $0x4b] sm:$0xff]
        %v2598 = vld [vmem:[%s2302 + $0x53] sm:$0xff]
        %v2599 = vld [vmem:[%s2302 + $0x63] sm:$0xff]
        %v2600 = vld [vmem:[%s2302 + $0x6b] sm:$0xff]
        %v2601 = vld [vmem:[%s2302 + $0x7b] sm:$0xff]
        %v2602 = vld [vmem:[%s2302 + $0x83] sm:$0xff]
        %v2603 = vld [vmem:[%s2302 + $0x93] sm:$0xff]
        %v2604 = vld [vmem:[%s2302 + $0x9b] sm:$0xff]
        %v2605 = vld [vmem:[%s2302 + $0xab] sm:$0xff]
        %v2606 = vld [vmem:[%s2302 + $0xb3] sm:$0xff]
        %v2607 = vld [vmem:[%s2302 + $0xc3] sm:$0xff]
        %v2608 = vld [vmem:[%s2302 + $0xcb] sm:$0xff]
        %v2609 = vld [vmem:[%s2302 + $0xdb] sm:$0xff]
        %v2610 = vld [vmem:[%s2302 + $0xe3] sm:$0xff]
        %v2611 = vld [vmem:[%s2302 + $0xf3] sm:$0xff]
        %v2612 = vld [vmem:[%s2302 + $0xfb] sm:$0xff]
        %v2613 = vld [vmem:[%s2302 + $0x10b] sm:$0xff]
        %v2614 = vld [vmem:[%s2302 + $0x113] sm:$0xff]
        %v2615 = vld [vmem:[%s2302 + $0x123] sm:$0xff]
        %v2616 = vld [vmem:[%s2302 + $0x12b] sm:$0xff]
        %v2617 = vld [vmem:[%s2302 + $0x13b] sm:$0xff]
        %v2618 = vld [vmem:[%s2302 + $0x143] sm:$0xff]
        %v2619 = vld [vmem:[%s2302 + $0x153] sm:$0xff]
        %v2620 = vld [vmem:[%s2302 + $0x15b] sm:$0xff]
        %v2621 = vld [vmem:[%s2302 + $0x16b] sm:$0xff]
        %v2622 = vld [vmem:[%s2302 + $0x173] sm:$0xff]
        %2655 = vrot.lane.b32.xlu0 %v2591, 64
        %v2656 = vpop.permute.xlu0 %2655
        %2657 = vrot.lane.b32.xlu0 %v2592, 64
        %v2658 = vpop.permute.xlu0 %2657
        %2659 = vrot.lane.b32.xlu0 %v2593, 64
        %v2660 = vpop.permute.xlu0 %2659
        %2661 = vrot.lane.b32.xlu0 %v2594, 64
        %v2662 = vpop.permute.xlu0 %2661
        %2663 = vrot.lane.b32.xlu0 %v2595, 64
        %v2664 = vpop.permute.xlu0 %2663
        %2665 = vrot.lane.b32.xlu0 %v2596, 64
        %v2666 = vpop.permute.xlu0 %2665
        %2667 = vrot.lane.b32.xlu0 %v2597, 64
        %v2668 = vpop.permute.xlu0 %2667
        %2669 = vrot.lane.b32.xlu0 %v2598, 64
        %v2670 = vpop.permute.xlu0 %2669
        %2671 = vrot.lane.b32.xlu0 %v2599, 64
        %v2672 = vpop.permute.xlu0 %2671
        %2673 = vrot.lane.b32.xlu0 %v2600, 64
        %v2674 = vpop.permute.xlu0 %2673
        %2675 = vrot.lane.b32.xlu0 %v2601, 64
        %v2676 = vpop.permute.xlu0 %2675
        %2677 = vrot.lane.b32.xlu0 %v2602, 64
        %v2678 = vpop.permute.xlu0 %2677
        %2679 = vrot.lane.b32.xlu0 %v2603, 64
        %v2680 = vpop.permute.xlu0 %2679
        %2681 = vrot.lane.b32.xlu0 %v2604, 64
        %v2682 = vpop.permute.xlu0 %2681
        %2683 = vrot.lane.b32.xlu0 %v2605, 64
        %v2684 = vpop.permute.xlu0 %2683
        %2685 = vrot.lane.b32.xlu0 %v2606, 64
        %v2686 = vpop.permute.xlu0 %2685
        %2687 = vrot.lane.b32.xlu0 %v2607, 64
        %v2688 = vpop.permute.xlu0 %2687
        %2689 = vrot.lane.b32.xlu0 %v2608, 64
        %v2690 = vpop.permute.xlu0 %2689
        %2691 = vrot.lane.b32.xlu0 %v2609, 64
        %v2692 = vpop.permute.xlu0 %2691
        %2693 = vrot.lane.b32.xlu0 %v2610, 64
        %v2694 = vpop.permute.xlu0 %2693
        %2695 = vrot.lane.b32.xlu0 %v2611, 64
        %v2696 = vpop.permute.xlu0 %2695
        %2697 = vrot.lane.b32.xlu0 %v2612, 64
        %v2698 = vpop.permute.xlu0 %2697
        %2699 = vrot.lane.b32.xlu0 %v2613, 64
        %v2700 = vpop.permute.xlu0 %2699
        %2701 = vrot.lane.b32.xlu0 %v2614, 64
        %v2702 = vpop.permute.xlu0 %2701
        %2703 = vrot.lane.b32.xlu0 %v2615, 64
        %v2704 = vpop.permute.xlu0 %2703
        %2705 = vrot.lane.b32.xlu0 %v2616, 64
        %v2706 = vpop.permute.xlu0 %2705
        %2707 = vrot.lane.b32.xlu0 %v2617, 64
        %v2708 = vpop.permute.xlu0 %2707
        %2709 = vrot.lane.b32.xlu0 %v2618, 64
        %v2710 = vpop.permute.xlu0 %2709
        %2711 = vrot.lane.b32.xlu0 %v2619, 64
        %v2712 = vpop.permute.xlu0 %2711
        %2713 = vrot.lane.b32.xlu0 %v2620, 64
        %v2714 = vpop.permute.xlu0 %2713
        %2715 = vrot.lane.b32.xlu0 %v2621, 64
        %v2716 = vpop.permute.xlu0 %2715
        %2717 = vrot.lane.b32.xlu0 %v2622, 64
        %v2718 = vpop.permute.xlu0 %2717
        %v2751 = vsel %vm1212, %v2559, %v2656
        %v2752 = vsel %vm1212, %v2560, %v2658
        %v2753 = vsel %vm1212, %v2561, %v2660
        %v2754 = vsel %vm1212, %v2562, %v2662
        %v2755 = vsel %vm1212, %v2563, %v2664
        %v2756 = vsel %vm1212, %v2564, %v2666
        %v2757 = vsel %vm1212, %v2565, %v2668
        %v2758 = vsel %vm1212, %v2566, %v2670
        %v2759 = vsel %vm1212, %v2567, %v2672
        %v2760 = vsel %vm1212, %v2568, %v2674
        %v2761 = vsel %vm1212, %v2569, %v2676
        %v2762 = vsel %vm1212, %v2570, %v2678
        %v2763 = vsel %vm1212, %v2571, %v2680
        %v2764 = vsel %vm1212, %v2572, %v2682
        %v2765 = vsel %vm1212, %v2573, %v2684
        %v2766 = vsel %vm1212, %v2574, %v2686
        %v2767 = vsel %vm1212, %v2575, %v2688
        %v2768 = vsel %vm1212, %v2576, %v2690
        %v2769 = vsel %vm1212, %v2577, %v2692
        %v2770 = vsel %vm1212, %v2578, %v2694
        %v2771 = vsel %vm1212, %v2579, %v2696
        %v2772 = vsel %vm1212, %v2580, %v2698
        %v2773 = vsel %vm1212, %v2581, %v2700
        %v2774 = vsel %vm1212, %v2582, %v2702
        %v2775 = vsel %vm1212, %v2583, %v2704
        %v2776 = vsel %vm1212, %v2584, %v2706
        %v2777 = vsel %vm1212, %v2585, %v2708
        %v2778 = vsel %vm1212, %v2586, %v2710
        %v2779 = vsel %vm1212, %v2587, %v2712
        %v2780 = vsel %vm1212, %v2588, %v2714
        %v2781 = vsel %vm1212, %v2589, %v2716
        %v2782 = vsel %vm1212, %v2590, %v2718
        %2783 = vst [vmem:[#allocation3 + $0x30] sm:$0xff] %v2751
        %2784 = vst [vmem:[#allocation3 + $0x98] sm:$0xff] %v2752
        %2785 = vst [vmem:[#allocation3 + $0x100] sm:$0xff] %v2753
        %2786 = vst [vmem:[#allocation3 + $0x168] sm:$0xff] %v2754
        %2787 = vst [vmem:[#allocation3 + $0x1d0] sm:$0xff] %v2755
        %2788 = vst [vmem:[#allocation3 + $0x238] sm:$0xff] %v2756
        %2789 = vst [vmem:[#allocation3 + $0x2a0] sm:$0xff] %v2757
        %2790 = vst [vmem:[#allocation3 + $0x308] sm:$0xff] %v2758
        %2791 = vst [vmem:[#allocation3 + $0x370] sm:$0xff] %v2759
        %2792 = vst [vmem:[#allocation3 + $0x3d8] sm:$0xff] %v2760
        %2793 = vst [vmem:[#allocation3 + $0x440] sm:$0xff] %v2761
        %2794 = vst [vmem:[#allocation3 + $0x4a8] sm:$0xff] %v2762
        %2795 = vst [vmem:[#allocation3 + $0x510] sm:$0xff] %v2763
        %2796 = vst [vmem:[#allocation3 + $0x578] sm:$0xff] %v2764
        %2797 = vst [vmem:[#allocation3 + $0x5e0] sm:$0xff] %v2765
        %2798 = vst [vmem:[#allocation3 + $0x648] sm:$0xff] %v2766
        %2799 = vst [vmem:[#allocation3 + $0x6b0] sm:$0xff] %v2767
        %2800 = vst [vmem:[#allocation3 + $0x718] sm:$0xff] %v2768
        %2801 = vst [vmem:[#allocation3 + $0x780] sm:$0xff] %v2769
        %2802 = vst [vmem:[#allocation3 + $0x7e8] sm:$0xff] %v2770
        %2803 = vst [vmem:[#allocation3 + $0x850] sm:$0xff] %v2771
        %2804 = vst [vmem:[#allocation3 + $0x8b8] sm:$0xff] %v2772
        %2805 = vst [vmem:[#allocation3 + $0x920] sm:$0xff] %v2773
        %2806 = vst [vmem:[#allocation3 + $0x988] sm:$0xff] %v2774
        %2807 = vst [vmem:[#allocation3 + $0x9f0] sm:$0xff] %v2775
        %2808 = vst [vmem:[#allocation3 + $0xa58] sm:$0xff] %v2776
        %2809 = vst [vmem:[#allocation3 + $0xac0] sm:$0xff] %v2777
        %2810 = vst [vmem:[#allocation3 + $0xb28] sm:$0xff] %v2778
        %2811 = vst [vmem:[#allocation3 + $0xb90] sm:$0xff] %v2779
        %2812 = vst [vmem:[#allocation3 + $0xbf8] sm:$0xff] %v2780
        %2813 = vst [vmem:[#allocation3 + $0xc60] sm:$0xff] %v2781
        %2814 = vst [vmem:[#allocation3 + $0xcc8] sm:$0xff] %v2782
        %v2815 = vld [vmem:[%s2302 + $0x4] sm:$0xff]
        %v2816 = vld [vmem:[%s2302 + $0xc] sm:$0xff]
        %v2817 = vld [vmem:[%s2302 + $0x1c] sm:$0xff]
        %v2818 = vld [vmem:[%s2302 + $0x24] sm:$0xff]
        %v2819 = vld [vmem:[%s2302 + $0x34] sm:$0xff]
        %v2820 = vld [vmem:[%s2302 + $0x3c] sm:$0xff]
        %v2821 = vld [vmem:[%s2302 + $0x4c] sm:$0xff]
        %v2822 = vld [vmem:[%s2302 + $0x54] sm:$0xff]
        %v2823 = vld [vmem:[%s2302 + $0x64] sm:$0xff]
        %v2824 = vld [vmem:[%s2302 + $0x6c] sm:$0xff]
        %v2825 = vld [vmem:[%s2302 + $0x7c] sm:$0xff]
        %v2826 = vld [vmem:[%s2302 + $0x84] sm:$0xff]
        %v2827 = vld [vmem:[%s2302 + $0x94] sm:$0xff]
        %v2828 = vld [vmem:[%s2302 + $0x9c] sm:$0xff]
        %v2829 = vld [vmem:[%s2302 + $0xac] sm:$0xff]
        %v2830 = vld [vmem:[%s2302 + $0xb4] sm:$0xff]
        %v2831 = vld [vmem:[%s2302 + $0xc4] sm:$0xff]
        %v2832 = vld [vmem:[%s2302 + $0xcc] sm:$0xff]
        %v2833 = vld [vmem:[%s2302 + $0xdc] sm:$0xff]
        %v2834 = vld [vmem:[%s2302 + $0xe4] sm:$0xff]
        %v2835 = vld [vmem:[%s2302 + $0xf4] sm:$0xff]
        %v2836 = vld [vmem:[%s2302 + $0xfc] sm:$0xff]
        %v2837 = vld [vmem:[%s2302 + $0x10c] sm:$0xff]
        %v2838 = vld [vmem:[%s2302 + $0x114] sm:$0xff]
        %v2839 = vld [vmem:[%s2302 + $0x124] sm:$0xff]
        %v2840 = vld [vmem:[%s2302 + $0x12c] sm:$0xff]
        %v2841 = vld [vmem:[%s2302 + $0x13c] sm:$0xff]
        %v2842 = vld [vmem:[%s2302 + $0x144] sm:$0xff]
        %v2843 = vld [vmem:[%s2302 + $0x154] sm:$0xff]
        %v2844 = vld [vmem:[%s2302 + $0x15c] sm:$0xff]
        %v2845 = vld [vmem:[%s2302 + $0x16c] sm:$0xff]
        %v2846 = vld [vmem:[%s2302 + $0x174] sm:$0xff]
        %s2847 = scalar_lea.vmem [#allocation2], 72
        %v2848 = vld [vmem:[%s2847] sm:$0xff]
        %v2849 = vld [vmem:[%s2847 + $0x8] sm:$0xff]
        %v2850 = vld [vmem:[%s2847 + $0x18] sm:$0xff]
        %v2851 = vld [vmem:[%s2847 + $0x20] sm:$0xff]
        %v2852 = vld [vmem:[%s2847 + $0x30] sm:$0xff]
        %v2853 = vld [vmem:[%s2847 + $0x38] sm:$0xff]
        %v2854 = vld [vmem:[%s2847 + $0x48] sm:$0xff]
        %v2855 = vld [vmem:[%s2847 + $0x50] sm:$0xff]
        %v2856 = vld [vmem:[%s2847 + $0x60] sm:$0xff]
        %v2857 = vld [vmem:[%s2847 + $0x68] sm:$0xff]
        %v2858 = vld [vmem:[%s2847 + $0x78] sm:$0xff]
        %v2859 = vld [vmem:[%s2847 + $0x80] sm:$0xff]
        %v2860 = vld [vmem:[%s2847 + $0x90] sm:$0xff]
        %v2861 = vld [vmem:[%s2847 + $0x98] sm:$0xff]
        %v2862 = vld [vmem:[%s2847 + $0xa8] sm:$0xff]
        %v2863 = vld [vmem:[%s2847 + $0xb0] sm:$0xff]
        %v2864 = vld [vmem:[%s2847 + $0xc0] sm:$0xff]
        %v2865 = vld [vmem:[%s2847 + $0xc8] sm:$0xff]
        %v2866 = vld [vmem:[%s2847 + $0xd8] sm:$0xff]
        %v2867 = vld [vmem:[%s2847 + $0xe0] sm:$0xff]
        %v2868 = vld [vmem:[%s2847 + $0xf0] sm:$0xff]
        %v2869 = vld [vmem:[%s2847 + $0xf8] sm:$0xff]
        %v2870 = vld [vmem:[%s2847 + $0x108] sm:$0xff]
        %v2871 = vld [vmem:[%s2847 + $0x110] sm:$0xff]
        %v2872 = vld [vmem:[%s2847 + $0x120] sm:$0xff]
        %v2873 = vld [vmem:[%s2847 + $0x128] sm:$0xff]
        %v2874 = vld [vmem:[%s2847 + $0x138] sm:$0xff]
        %v2875 = vld [vmem:[%s2847 + $0x140] sm:$0xff]
        %v2876 = vld [vmem:[%s2847 + $0x150] sm:$0xff]
        %v2877 = vld [vmem:[%s2847 + $0x158] sm:$0xff]
        %v2878 = vld [vmem:[%s2847 + $0x168] sm:$0xff]
        %v2879 = vld [vmem:[%s2847 + $0x170] sm:$0xff]
        %2912 = vrot.lane.b32.xlu0 %v2848, 64
        %v2913 = vpop.permute.xlu0 %2912
        %2914 = vrot.lane.b32.xlu0 %v2849, 64
        %v2915 = vpop.permute.xlu0 %2914
        %2916 = vrot.lane.b32.xlu0 %v2850, 64
        %v2917 = vpop.permute.xlu0 %2916
        %2918 = vrot.lane.b32.xlu0 %v2851, 64
        %v2919 = vpop.permute.xlu0 %2918
        %2920 = vrot.lane.b32.xlu0 %v2852, 64
        %v2921 = vpop.permute.xlu0 %2920
        %2922 = vrot.lane.b32.xlu0 %v2853, 64
        %v2923 = vpop.permute.xlu0 %2922
        %2924 = vrot.lane.b32.xlu0 %v2854, 64
        %v2925 = vpop.permute.xlu0 %2924
        %2926 = vrot.lane.b32.xlu0 %v2855, 64
        %v2927 = vpop.permute.xlu0 %2926
        %2928 = vrot.lane.b32.xlu0 %v2856, 64
        %v2929 = vpop.permute.xlu0 %2928
        %2930 = vrot.lane.b32.xlu0 %v2857, 64
        %v2931 = vpop.permute.xlu0 %2930
        %2932 = vrot.lane.b32.xlu0 %v2858, 64
        %v2933 = vpop.permute.xlu0 %2932
        %2934 = vrot.lane.b32.xlu0 %v2859, 64
        %v2935 = vpop.permute.xlu0 %2934
        %2936 = vrot.lane.b32.xlu0 %v2860, 64
        %v2937 = vpop.permute.xlu0 %2936
        %2938 = vrot.lane.b32.xlu0 %v2861, 64
        %v2939 = vpop.permute.xlu0 %2938
        %2940 = vrot.lane.b32.xlu0 %v2862, 64
        %v2941 = vpop.permute.xlu0 %2940
        %2942 = vrot.lane.b32.xlu0 %v2863, 64
        %v2943 = vpop.permute.xlu0 %2942
        %2944 = vrot.lane.b32.xlu0 %v2864, 64
        %v2945 = vpop.permute.xlu0 %2944
        %2946 = vrot.lane.b32.xlu0 %v2865, 64
        %v2947 = vpop.permute.xlu0 %2946
        %2948 = vrot.lane.b32.xlu0 %v2866, 64
        %v2949 = vpop.permute.xlu0 %2948
        %2950 = vrot.lane.b32.xlu0 %v2867, 64
        %v2951 = vpop.permute.xlu0 %2950
        %2952 = vrot.lane.b32.xlu0 %v2868, 64
        %v2953 = vpop.permute.xlu0 %2952
        %2954 = vrot.lane.b32.xlu0 %v2869, 64
        %v2955 = vpop.permute.xlu0 %2954
        %2956 = vrot.lane.b32.xlu0 %v2870, 64
        %v2957 = vpop.permute.xlu0 %2956
        %2958 = vrot.lane.b32.xlu0 %v2871, 64
        %v2959 = vpop.permute.xlu0 %2958
        %2960 = vrot.lane.b32.xlu0 %v2872, 64
        %v2961 = vpop.permute.xlu0 %2960
        %2962 = vrot.lane.b32.xlu0 %v2873, 64
        %v2963 = vpop.permute.xlu0 %2962
        %2964 = vrot.lane.b32.xlu0 %v2874, 64
        %v2965 = vpop.permute.xlu0 %2964
        %2966 = vrot.lane.b32.xlu0 %v2875, 64
        %v2967 = vpop.permute.xlu0 %2966
        %2968 = vrot.lane.b32.xlu0 %v2876, 64
        %v2969 = vpop.permute.xlu0 %2968
        %2970 = vrot.lane.b32.xlu0 %v2877, 64
        %v2971 = vpop.permute.xlu0 %2970
        %2972 = vrot.lane.b32.xlu0 %v2878, 64
        %v2973 = vpop.permute.xlu0 %2972
        %2974 = vrot.lane.b32.xlu0 %v2879, 64
        %v2975 = vpop.permute.xlu0 %2974
        %v3008 = vsel %vm1212, %v2815, %v2913
        %v3009 = vsel %vm1212, %v2816, %v2915
        %v3010 = vsel %vm1212, %v2817, %v2917
        %v3011 = vsel %vm1212, %v2818, %v2919
        %v3012 = vsel %vm1212, %v2819, %v2921
        %v3013 = vsel %vm1212, %v2820, %v2923
        %v3014 = vsel %vm1212, %v2821, %v2925
        %v3015 = vsel %vm1212, %v2822, %v2927
        %v3016 = vsel %vm1212, %v2823, %v2929
        %v3017 = vsel %vm1212, %v2824, %v2931
        %v3018 = vsel %vm1212, %v2825, %v2933
        %v3019 = vsel %vm1212, %v2826, %v2935
        %v3020 = vsel %vm1212, %v2827, %v2937
        %v3021 = vsel %vm1212, %v2828, %v2939
        %v3022 = vsel %vm1212, %v2829, %v2941
        %v3023 = vsel %vm1212, %v2830, %v2943
        %v3024 = vsel %vm1212, %v2831, %v2945
        %v3025 = vsel %vm1212, %v2832, %v2947
        %v3026 = vsel %vm1212, %v2833, %v2949
        %v3027 = vsel %vm1212, %v2834, %v2951
        %v3028 = vsel %vm1212, %v2835, %v2953
        %v3029 = vsel %vm1212, %v2836, %v2955
        %v3030 = vsel %vm1212, %v2837, %v2957
        %v3031 = vsel %vm1212, %v2838, %v2959
        %v3032 = vsel %vm1212, %v2839, %v2961
        %v3033 = vsel %vm1212, %v2840, %v2963
        %v3034 = vsel %vm1212, %v2841, %v2965
        %v3035 = vsel %vm1212, %v2842, %v2967
        %v3036 = vsel %vm1212, %v2843, %v2969
        %v3037 = vsel %vm1212, %v2844, %v2971
        %v3038 = vsel %vm1212, %v2845, %v2973
        %v3039 = vsel %vm1212, %v2846, %v2975
        %3040 = vst [vmem:[#allocation3 + $0x38] sm:$0xff] %v3008
        %3041 = vst [vmem:[#allocation3 + $0xa0] sm:$0xff] %v3009
        %3042 = vst [vmem:[#allocation3 + $0x108] sm:$0xff] %v3010
        %3043 = vst [vmem:[#allocation3 + $0x170] sm:$0xff] %v3011
        %3044 = vst [vmem:[#allocation3 + $0x1d8] sm:$0xff] %v3012
        %3045 = vst [vmem:[#allocation3 + $0x240] sm:$0xff] %v3013
        %3046 = vst [vmem:[#allocation3 + $0x2a8] sm:$0xff] %v3014
        %3047 = vst [vmem:[#allocation3 + $0x310] sm:$0xff] %v3015
        %3048 = vst [vmem:[#allocation3 + $0x378] sm:$0xff] %v3016
        %3049 = vst [vmem:[#allocation3 + $0x3e0] sm:$0xff] %v3017
        %3050 = vst [vmem:[#allocation3 + $0x448] sm:$0xff] %v3018
        %3051 = vst [vmem:[#allocation3 + $0x4b0] sm:$0xff] %v3019
        %3052 = vst [vmem:[#allocation3 + $0x518] sm:$0xff] %v3020
        %3053 = vst [vmem:[#allocation3 + $0x580] sm:$0xff] %v3021
        %3054 = vst [vmem:[#allocation3 + $0x5e8] sm:$0xff] %v3022
        %3055 = vst [vmem:[#allocation3 + $0x650] sm:$0xff] %v3023
        %3056 = vst [vmem:[#allocation3 + $0x6b8] sm:$0xff] %v3024
        %3057 = vst [vmem:[#allocation3 + $0x720] sm:$0xff] %v3025
        %3058 = vst [vmem:[#allocation3 + $0x788] sm:$0xff] %v3026
        %3059 = vst [vmem:[#allocation3 + $0x7f0] sm:$0xff] %v3027
        %3060 = vst [vmem:[#allocation3 + $0x858] sm:$0xff] %v3028
        %3061 = vst [vmem:[#allocation3 + $0x8c0] sm:$0xff] %v3029
        %3062 = vst [vmem:[#allocation3 + $0x928] sm:$0xff] %v3030
        %3063 = vst [vmem:[#allocation3 + $0x990] sm:$0xff] %v3031
        %3064 = vst [vmem:[#allocation3 + $0x9f8] sm:$0xff] %v3032
        %3065 = vst [vmem:[#allocation3 + $0xa60] sm:$0xff] %v3033
        %3066 = vst [vmem:[#allocation3 + $0xac8] sm:$0xff] %v3034
        %3067 = vst [vmem:[#allocation3 + $0xb30] sm:$0xff] %v3035
        %3068 = vst [vmem:[#allocation3 + $0xb98] sm:$0xff] %v3036
        %3069 = vst [vmem:[#allocation3 + $0xc00] sm:$0xff] %v3037
        %3070 = vst [vmem:[#allocation3 + $0xc68] sm:$0xff] %v3038
        %3071 = vst [vmem:[#allocation3 + $0xcd0] sm:$0xff] %v3039
        %v3072 = vld [vmem:[%s2847 + $0x1] sm:$0xff]
        %v3073 = vld [vmem:[%s2847 + $0x9] sm:$0xff]
        %v3074 = vld [vmem:[%s2847 + $0x19] sm:$0xff]
        %v3075 = vld [vmem:[%s2847 + $0x21] sm:$0xff]
        %v3076 = vld [vmem:[%s2847 + $0x31] sm:$0xff]
        %v3077 = vld [vmem:[%s2847 + $0x39] sm:$0xff]
        %v3078 = vld [vmem:[%s2847 + $0x49] sm:$0xff]
        %v3079 = vld [vmem:[%s2847 + $0x51] sm:$0xff]
        %v3080 = vld [vmem:[%s2847 + $0x61] sm:$0xff]
        %v3081 = vld [vmem:[%s2847 + $0x69] sm:$0xff]
        %v3082 = vld [vmem:[%s2847 + $0x79] sm:$0xff]
        %v3083 = vld [vmem:[%s2847 + $0x81] sm:$0xff]
        %v3084 = vld [vmem:[%s2847 + $0x91] sm:$0xff]
        %v3085 = vld [vmem:[%s2847 + $0x99] sm:$0xff]
        %v3086 = vld [vmem:[%s2847 + $0xa9] sm:$0xff]
        %v3087 = vld [vmem:[%s2847 + $0xb1] sm:$0xff]
        %v3088 = vld [vmem:[%s2847 + $0xc1] sm:$0xff]
        %v3089 = vld [vmem:[%s2847 + $0xc9] sm:$0xff]
        %v3090 = vld [vmem:[%s2847 + $0xd9] sm:$0xff]
        %v3091 = vld [vmem:[%s2847 + $0xe1] sm:$0xff]
        %v3092 = vld [vmem:[%s2847 + $0xf1] sm:$0xff]
        %v3093 = vld [vmem:[%s2847 + $0xf9] sm:$0xff]
        %v3094 = vld [vmem:[%s2847 + $0x109] sm:$0xff]
        %v3095 = vld [vmem:[%s2847 + $0x111] sm:$0xff]
        %v3096 = vld [vmem:[%s2847 + $0x121] sm:$0xff]
        %v3097 = vld [vmem:[%s2847 + $0x129] sm:$0xff]
        %v3098 = vld [vmem:[%s2847 + $0x139] sm:$0xff]
        %v3099 = vld [vmem:[%s2847 + $0x141] sm:$0xff]
        %v3100 = vld [vmem:[%s2847 + $0x151] sm:$0xff]
        %v3101 = vld [vmem:[%s2847 + $0x159] sm:$0xff]
        %v3102 = vld [vmem:[%s2847 + $0x169] sm:$0xff]
        %v3103 = vld [vmem:[%s2847 + $0x171] sm:$0xff]
        %v3104 = vld [vmem:[%s2847 + $0x2] sm:$0xff]
        %v3105 = vld [vmem:[%s2847 + $0xa] sm:$0xff]
        %v3106 = vld [vmem:[%s2847 + $0x1a] sm:$0xff]
        %v3107 = vld [vmem:[%s2847 + $0x22] sm:$0xff]
        %v3108 = vld [vmem:[%s2847 + $0x32] sm:$0xff]
        %v3109 = vld [vmem:[%s2847 + $0x3a] sm:$0xff]
        %v3110 = vld [vmem:[%s2847 + $0x4a] sm:$0xff]
        %v3111 = vld [vmem:[%s2847 + $0x52] sm:$0xff]
        %v3112 = vld [vmem:[%s2847 + $0x62] sm:$0xff]
        %v3113 = vld [vmem:[%s2847 + $0x6a] sm:$0xff]
        %v3114 = vld [vmem:[%s2847 + $0x7a] sm:$0xff]
        %v3115 = vld [vmem:[%s2847 + $0x82] sm:$0xff]
        %v3116 = vld [vmem:[%s2847 + $0x92] sm:$0xff]
        %v3117 = vld [vmem:[%s2847 + $0x9a] sm:$0xff]
        %v3118 = vld [vmem:[%s2847 + $0xaa] sm:$0xff]
        %v3119 = vld [vmem:[%s2847 + $0xb2] sm:$0xff]
        %v3120 = vld [vmem:[%s2847 + $0xc2] sm:$0xff]
        %v3121 = vld [vmem:[%s2847 + $0xca] sm:$0xff]
        %v3122 = vld [vmem:[%s2847 + $0xda] sm:$0xff]
        %v3123 = vld [vmem:[%s2847 + $0xe2] sm:$0xff]
        %v3124 = vld [vmem:[%s2847 + $0xf2] sm:$0xff]
        %v3125 = vld [vmem:[%s2847 + $0xfa] sm:$0xff]
        %v3126 = vld [vmem:[%s2847 + $0x10a] sm:$0xff]
        %v3127 = vld [vmem:[%s2847 + $0x112] sm:$0xff]
        %v3128 = vld [vmem:[%s2847 + $0x122] sm:$0xff]
        %v3129 = vld [vmem:[%s2847 + $0x12a] sm:$0xff]
        %v3130 = vld [vmem:[%s2847 + $0x13a] sm:$0xff]
        %v3131 = vld [vmem:[%s2847 + $0x142] sm:$0xff]
        %v3132 = vld [vmem:[%s2847 + $0x152] sm:$0xff]
        %v3133 = vld [vmem:[%s2847 + $0x15a] sm:$0xff]
        %v3134 = vld [vmem:[%s2847 + $0x16a] sm:$0xff]
        %v3135 = vld [vmem:[%s2847 + $0x172] sm:$0xff]
        %3168 = vrot.lane.b32.xlu0 %v3104, 64
        %v3169 = vpop.permute.xlu0 %3168
        %3170 = vrot.lane.b32.xlu0 %v3105, 64
        %v3171 = vpop.permute.xlu0 %3170
        %3172 = vrot.lane.b32.xlu0 %v3106, 64
        %v3173 = vpop.permute.xlu0 %3172
        %3174 = vrot.lane.b32.xlu0 %v3107, 64
        %v3175 = vpop.permute.xlu0 %3174
        %3176 = vrot.lane.b32.xlu0 %v3108, 64
        %v3177 = vpop.permute.xlu0 %3176
        %3178 = vrot.lane.b32.xlu0 %v3109, 64
        %v3179 = vpop.permute.xlu0 %3178
        %3180 = vrot.lane.b32.xlu0 %v3110, 64
        %v3181 = vpop.permute.xlu0 %3180
        %3182 = vrot.lane.b32.xlu0 %v3111, 64
        %v3183 = vpop.permute.xlu0 %3182
        %3184 = vrot.lane.b32.xlu0 %v3112, 64
        %v3185 = vpop.permute.xlu0 %3184
        %3186 = vrot.lane.b32.xlu0 %v3113, 64
        %v3187 = vpop.permute.xlu0 %3186
        %3188 = vrot.lane.b32.xlu0 %v3114, 64
        %v3189 = vpop.permute.xlu0 %3188
        %3190 = vrot.lane.b32.xlu0 %v3115, 64
        %v3191 = vpop.permute.xlu0 %3190
        %3192 = vrot.lane.b32.xlu0 %v3116, 64
        %v3193 = vpop.permute.xlu0 %3192
        %3194 = vrot.lane.b32.xlu0 %v3117, 64
        %v3195 = vpop.permute.xlu0 %3194
        %3196 = vrot.lane.b32.xlu0 %v3118, 64
        %v3197 = vpop.permute.xlu0 %3196
        %3198 = vrot.lane.b32.xlu0 %v3119, 64
        %v3199 = vpop.permute.xlu0 %3198
        %3200 = vrot.lane.b32.xlu0 %v3120, 64
        %v3201 = vpop.permute.xlu0 %3200
        %3202 = vrot.lane.b32.xlu0 %v3121, 64
        %v3203 = vpop.permute.xlu0 %3202
        %3204 = vrot.lane.b32.xlu0 %v3122, 64
        %v3205 = vpop.permute.xlu0 %3204
        %3206 = vrot.lane.b32.xlu0 %v3123, 64
        %v3207 = vpop.permute.xlu0 %3206
        %3208 = vrot.lane.b32.xlu0 %v3124, 64
        %v3209 = vpop.permute.xlu0 %3208
        %3210 = vrot.lane.b32.xlu0 %v3125, 64
        %v3211 = vpop.permute.xlu0 %3210
        %3212 = vrot.lane.b32.xlu0 %v3126, 64
        %v3213 = vpop.permute.xlu0 %3212
        %3214 = vrot.lane.b32.xlu0 %v3127, 64
        %v3215 = vpop.permute.xlu0 %3214
        %3216 = vrot.lane.b32.xlu0 %v3128, 64
        %v3217 = vpop.permute.xlu0 %3216
        %3218 = vrot.lane.b32.xlu0 %v3129, 64
        %v3219 = vpop.permute.xlu0 %3218
        %3220 = vrot.lane.b32.xlu0 %v3130, 64
        %v3221 = vpop.permute.xlu0 %3220
        %3222 = vrot.lane.b32.xlu0 %v3131, 64
        %v3223 = vpop.permute.xlu0 %3222
        %3224 = vrot.lane.b32.xlu0 %v3132, 64
        %v3225 = vpop.permute.xlu0 %3224
        %3226 = vrot.lane.b32.xlu0 %v3133, 64
        %v3227 = vpop.permute.xlu0 %3226
        %3228 = vrot.lane.b32.xlu0 %v3134, 64
        %v3229 = vpop.permute.xlu0 %3228
        %3230 = vrot.lane.b32.xlu0 %v3135, 64
        %v3231 = vpop.permute.xlu0 %3230
        %v3264 = vsel %vm1212, %v3072, %v3169
        %v3265 = vsel %vm1212, %v3073, %v3171
        %v3266 = vsel %vm1212, %v3074, %v3173
        %v3267 = vsel %vm1212, %v3075, %v3175
        %v3268 = vsel %vm1212, %v3076, %v3177
        %v3269 = vsel %vm1212, %v3077, %v3179
        %v3270 = vsel %vm1212, %v3078, %v3181
        %v3271 = vsel %vm1212, %v3079, %v3183
        %v3272 = vsel %vm1212, %v3080, %v3185
        %v3273 = vsel %vm1212, %v3081, %v3187
        %v3274 = vsel %vm1212, %v3082, %v3189
        %v3275 = vsel %vm1212, %v3083, %v3191
        %v3276 = vsel %vm1212, %v3084, %v3193
        %v3277 = vsel %vm1212, %v3085, %v3195
        %v3278 = vsel %vm1212, %v3086, %v3197
        %v3279 = vsel %vm1212, %v3087, %v3199
        %v3280 = vsel %vm1212, %v3088, %v3201
        %v3281 = vsel %vm1212, %v3089, %v3203
        %v3282 = vsel %vm1212, %v3090, %v3205
        %v3283 = vsel %vm1212, %v3091, %v3207
        %v3284 = vsel %vm1212, %v3092, %v3209
        %v3285 = vsel %vm1212, %v3093, %v3211
        %v3286 = vsel %vm1212, %v3094, %v3213
        %v3287 = vsel %vm1212, %v3095, %v3215
        %v3288 = vsel %vm1212, %v3096, %v3217
        %v3289 = vsel %vm1212, %v3097, %v3219
        %v3290 = vsel %vm1212, %v3098, %v3221
        %v3291 = vsel %vm1212, %v3099, %v3223
        %v3292 = vsel %vm1212, %v3100, %v3225
        %v3293 = vsel %vm1212, %v3101, %v3227
        %v3294 = vsel %vm1212, %v3102, %v3229
        %v3295 = vsel %vm1212, %v3103, %v3231
        %3296 = vst [vmem:[#allocation3 + $0x40] sm:$0xff] %v3264
        %3297 = vst [vmem:[#allocation3 + $0xa8] sm:$0xff] %v3265
        %3298 = vst [vmem:[#allocation3 + $0x110] sm:$0xff] %v3266
        %3299 = vst [vmem:[#allocation3 + $0x178] sm:$0xff] %v3267
        %3300 = vst [vmem:[#allocation3 + $0x1e0] sm:$0xff] %v3268
        %3301 = vst [vmem:[#allocation3 + $0x248] sm:$0xff] %v3269
        %3302 = vst [vmem:[#allocation3 + $0x2b0] sm:$0xff] %v3270
        %3303 = vst [vmem:[#allocation3 + $0x318] sm:$0xff] %v3271
        %3304 = vst [vmem:[#allocation3 + $0x380] sm:$0xff] %v3272
        %3305 = vst [vmem:[#allocation3 + $0x3e8] sm:$0xff] %v3273
        %3306 = vst [vmem:[#allocation3 + $0x450] sm:$0xff] %v3274
        %3307 = vst [vmem:[#allocation3 + $0x4b8] sm:$0xff] %v3275
        %3308 = vst [vmem:[#allocation3 + $0x520] sm:$0xff] %v3276
        %3309 = vst [vmem:[#allocation3 + $0x588] sm:$0xff] %v3277
        %3310 = vst [vmem:[#allocation3 + $0x5f0] sm:$0xff] %v3278
        %3311 = vst [vmem:[#allocation3 + $0x658] sm:$0xff] %v3279
        %3312 = vst [vmem:[#allocation3 + $0x6c0] sm:$0xff] %v3280
        %3313 = vst [vmem:[#allocation3 + $0x728] sm:$0xff] %v3281
        %3314 = vst [vmem:[#allocation3 + $0x790] sm:$0xff] %v3282
        %3315 = vst [vmem:[#allocation3 + $0x7f8] sm:$0xff] %v3283
        %3316 = vst [vmem:[#allocation3 + $0x860] sm:$0xff] %v3284
        %3317 = vst [vmem:[#allocation3 + $0x8c8] sm:$0xff] %v3285
        %3318 = vst [vmem:[#allocation3 + $0x930] sm:$0xff] %v3286
        %3319 = vst [vmem:[#allocation3 + $0x998] sm:$0xff] %v3287
        %3320 = vst [vmem:[#allocation3 + $0xa00] sm:$0xff] %v3288
        %3321 = vst [vmem:[#allocation3 + $0xa68] sm:$0xff] %v3289
        %3322 = vst [vmem:[#allocation3 + $0xad0] sm:$0xff] %v3290
        %3323 = vst [vmem:[#allocation3 + $0xb38] sm:$0xff] %v3291
        %3324 = vst [vmem:[#allocation3 + $0xba0] sm:$0xff] %v3292
        %3325 = vst [vmem:[#allocation3 + $0xc08] sm:$0xff] %v3293
        %3326 = vst [vmem:[#allocation3 + $0xc70] sm:$0xff] %v3294
        %3327 = vst [vmem:[#allocation3 + $0xcd8] sm:$0xff] %v3295
        %v3328 = vld [vmem:[%s2847 + $0x3] sm:$0xff]
        %v3329 = vld [vmem:[%s2847 + $0xb] sm:$0xff]
        %v3330 = vld [vmem:[%s2847 + $0x1b] sm:$0xff]
        %v3331 = vld [vmem:[%s2847 + $0x23] sm:$0xff]
        %v3332 = vld [vmem:[%s2847 + $0x33] sm:$0xff]
        %v3333 = vld [vmem:[%s2847 + $0x3b] sm:$0xff]
        %v3334 = vld [vmem:[%s2847 + $0x4b] sm:$0xff]
        %v3335 = vld [vmem:[%s2847 + $0x53] sm:$0xff]
        %v3336 = vld [vmem:[%s2847 + $0x63] sm:$0xff]
        %v3337 = vld [vmem:[%s2847 + $0x6b] sm:$0xff]
        %v3338 = vld [vmem:[%s2847 + $0x7b] sm:$0xff]
        %v3339 = vld [vmem:[%s2847 + $0x83] sm:$0xff]
        %v3340 = vld [vmem:[%s2847 + $0x93] sm:$0xff]
        %v3341 = vld [vmem:[%s2847 + $0x9b] sm:$0xff]
        %v3342 = vld [vmem:[%s2847 + $0xab] sm:$0xff]
        %v3343 = vld [vmem:[%s2847 + $0xb3] sm:$0xff]
        %v3344 = vld [vmem:[%s2847 + $0xc3] sm:$0xff]
        %v3345 = vld [vmem:[%s2847 + $0xcb] sm:$0xff]
        %v3346 = vld [vmem:[%s2847 + $0xdb] sm:$0xff]
        %v3347 = vld [vmem:[%s2847 + $0xe3] sm:$0xff]
        %v3348 = vld [vmem:[%s2847 + $0xf3] sm:$0xff]
        %v3349 = vld [vmem:[%s2847 + $0xfb] sm:$0xff]
        %v3350 = vld [vmem:[%s2847 + $0x10b] sm:$0xff]
        %v3351 = vld [vmem:[%s2847 + $0x113] sm:$0xff]
        %v3352 = vld [vmem:[%s2847 + $0x123] sm:$0xff]
        %v3353 = vld [vmem:[%s2847 + $0x12b] sm:$0xff]
        %v3354 = vld [vmem:[%s2847 + $0x13b] sm:$0xff]
        %v3355 = vld [vmem:[%s2847 + $0x143] sm:$0xff]
        %v3356 = vld [vmem:[%s2847 + $0x153] sm:$0xff]
        %v3357 = vld [vmem:[%s2847 + $0x15b] sm:$0xff]
        %v3358 = vld [vmem:[%s2847 + $0x16b] sm:$0xff]
        %v3359 = vld [vmem:[%s2847 + $0x173] sm:$0xff]
        %v3360 = vld [vmem:[%s2847 + $0x4] sm:$0xff]
        %v3361 = vld [vmem:[%s2847 + $0xc] sm:$0xff]
        %v3362 = vld [vmem:[%s2847 + $0x1c] sm:$0xff]
        %v3363 = vld [vmem:[%s2847 + $0x24] sm:$0xff]
        %v3364 = vld [vmem:[%s2847 + $0x34] sm:$0xff]
        %v3365 = vld [vmem:[%s2847 + $0x3c] sm:$0xff]
        %v3366 = vld [vmem:[%s2847 + $0x4c] sm:$0xff]
        %v3367 = vld [vmem:[%s2847 + $0x54] sm:$0xff]
        %v3368 = vld [vmem:[%s2847 + $0x64] sm:$0xff]
        %v3369 = vld [vmem:[%s2847 + $0x6c] sm:$0xff]
        %v3370 = vld [vmem:[%s2847 + $0x7c] sm:$0xff]
        %v3371 = vld [vmem:[%s2847 + $0x84] sm:$0xff]
        %v3372 = vld [vmem:[%s2847 + $0x94] sm:$0xff]
        %v3373 = vld [vmem:[%s2847 + $0x9c] sm:$0xff]
        %v3374 = vld [vmem:[%s2847 + $0xac] sm:$0xff]
        %v3375 = vld [vmem:[%s2847 + $0xb4] sm:$0xff]
        %v3376 = vld [vmem:[%s2847 + $0xc4] sm:$0xff]
        %v3377 = vld [vmem:[%s2847 + $0xcc] sm:$0xff]
        %v3378 = vld [vmem:[%s2847 + $0xdc] sm:$0xff]
        %v3379 = vld [vmem:[%s2847 + $0xe4] sm:$0xff]
        %v3380 = vld [vmem:[%s2847 + $0xf4] sm:$0xff]
        %v3381 = vld [vmem:[%s2847 + $0xfc] sm:$0xff]
        %v3382 = vld [vmem:[%s2847 + $0x10c] sm:$0xff]
        %v3383 = vld [vmem:[%s2847 + $0x114] sm:$0xff]
        %v3384 = vld [vmem:[%s2847 + $0x124] sm:$0xff]
        %v3385 = vld [vmem:[%s2847 + $0x12c] sm:$0xff]
        %v3386 = vld [vmem:[%s2847 + $0x13c] sm:$0xff]
        %v3387 = vld [vmem:[%s2847 + $0x144] sm:$0xff]
        %v3388 = vld [vmem:[%s2847 + $0x154] sm:$0xff]
        %v3389 = vld [vmem:[%s2847 + $0x15c] sm:$0xff]
        %v3390 = vld [vmem:[%s2847 + $0x16c] sm:$0xff]
        %v3391 = vld [vmem:[%s2847 + $0x174] sm:$0xff]
        %3424 = vrot.lane.b32.xlu0 %v3360, 64
        %v3425 = vpop.permute.xlu0 %3424
        %3426 = vrot.lane.b32.xlu0 %v3361, 64
        %v3427 = vpop.permute.xlu0 %3426
        %3428 = vrot.lane.b32.xlu0 %v3362, 64
        %v3429 = vpop.permute.xlu0 %3428
        %3430 = vrot.lane.b32.xlu0 %v3363, 64
        %v3431 = vpop.permute.xlu0 %3430
        %3432 = vrot.lane.b32.xlu0 %v3364, 64
        %v3433 = vpop.permute.xlu0 %3432
        %3434 = vrot.lane.b32.xlu0 %v3365, 64
        %v3435 = vpop.permute.xlu0 %3434
        %3436 = vrot.lane.b32.xlu0 %v3366, 64
        %v3437 = vpop.permute.xlu0 %3436
        %3438 = vrot.lane.b32.xlu0 %v3367, 64
        %v3439 = vpop.permute.xlu0 %3438
        %3440 = vrot.lane.b32.xlu0 %v3368, 64
        %v3441 = vpop.permute.xlu0 %3440
        %3442 = vrot.lane.b32.xlu0 %v3369, 64
        %v3443 = vpop.permute.xlu0 %3442
        %3444 = vrot.lane.b32.xlu0 %v3370, 64
        %v3445 = vpop.permute.xlu0 %3444
        %3446 = vrot.lane.b32.xlu0 %v3371, 64
        %v3447 = vpop.permute.xlu0 %3446
        %3448 = vrot.lane.b32.xlu0 %v3372, 64
        %v3449 = vpop.permute.xlu0 %3448
        %3450 = vrot.lane.b32.xlu0 %v3373, 64
        %v3451 = vpop.permute.xlu0 %3450
        %3452 = vrot.lane.b32.xlu0 %v3374, 64
        %v3453 = vpop.permute.xlu0 %3452
        %3454 = vrot.lane.b32.xlu0 %v3375, 64
        %v3455 = vpop.permute.xlu0 %3454
        %3456 = vrot.lane.b32.xlu0 %v3376, 64
        %v3457 = vpop.permute.xlu0 %3456
        %3458 = vrot.lane.b32.xlu0 %v3377, 64
        %v3459 = vpop.permute.xlu0 %3458
        %3460 = vrot.lane.b32.xlu0 %v3378, 64
        %v3461 = vpop.permute.xlu0 %3460
        %3462 = vrot.lane.b32.xlu0 %v3379, 64
        %v3463 = vpop.permute.xlu0 %3462
        %3464 = vrot.lane.b32.xlu0 %v3380, 64
        %v3465 = vpop.permute.xlu0 %3464
        %3466 = vrot.lane.b32.xlu0 %v3381, 64
        %v3467 = vpop.permute.xlu0 %3466
        %3468 = vrot.lane.b32.xlu0 %v3382, 64
        %v3469 = vpop.permute.xlu0 %3468
        %3470 = vrot.lane.b32.xlu0 %v3383, 64
        %v3471 = vpop.permute.xlu0 %3470
        %3472 = vrot.lane.b32.xlu0 %v3384, 64
        %v3473 = vpop.permute.xlu0 %3472
        %3474 = vrot.lane.b32.xlu0 %v3385, 64
        %v3475 = vpop.permute.xlu0 %3474
        %3476 = vrot.lane.b32.xlu0 %v3386, 64
        %v3477 = vpop.permute.xlu0 %3476
        %3478 = vrot.lane.b32.xlu0 %v3387, 64
        %v3479 = vpop.permute.xlu0 %3478
        %3480 = vrot.lane.b32.xlu0 %v3388, 64
        %v3481 = vpop.permute.xlu0 %3480
        %3482 = vrot.lane.b32.xlu0 %v3389, 64
        %v3483 = vpop.permute.xlu0 %3482
        %3484 = vrot.lane.b32.xlu0 %v3390, 64
        %v3485 = vpop.permute.xlu0 %3484
        %3486 = vrot.lane.b32.xlu0 %v3391, 64
        %v3487 = vpop.permute.xlu0 %3486
        %v3520 = vsel %vm1212, %v3328, %v3425
        %v3521 = vsel %vm1212, %v3329, %v3427
        %v3522 = vsel %vm1212, %v3330, %v3429
        %v3523 = vsel %vm1212, %v3331, %v3431
        %v3524 = vsel %vm1212, %v3332, %v3433
        %v3525 = vsel %vm1212, %v3333, %v3435
        %v3526 = vsel %vm1212, %v3334, %v3437
        %v3527 = vsel %vm1212, %v3335, %v3439
        %v3528 = vsel %vm1212, %v3336, %v3441
        %v3529 = vsel %vm1212, %v3337, %v3443
        %v3530 = vsel %vm1212, %v3338, %v3445
        %v3531 = vsel %vm1212, %v3339, %v3447
        %v3532 = vsel %vm1212, %v3340, %v3449
        %v3533 = vsel %vm1212, %v3341, %v3451
        %v3534 = vsel %vm1212, %v3342, %v3453
        %v3535 = vsel %vm1212, %v3343, %v3455
        %v3536 = vsel %vm1212, %v3344, %v3457
        %v3537 = vsel %vm1212, %v3345, %v3459
        %v3538 = vsel %vm1212, %v3346, %v3461
        %v3539 = vsel %vm1212, %v3347, %v3463
        %v3540 = vsel %vm1212, %v3348, %v3465
        %v3541 = vsel %vm1212, %v3349, %v3467
        %v3542 = vsel %vm1212, %v3350, %v3469
        %v3543 = vsel %vm1212, %v3351, %v3471
        %v3544 = vsel %vm1212, %v3352, %v3473
        %v3545 = vsel %vm1212, %v3353, %v3475
        %v3546 = vsel %vm1212, %v3354, %v3477
        %v3547 = vsel %vm1212, %v3355, %v3479
        %v3548 = vsel %vm1212, %v3356, %v3481
        %v3549 = vsel %vm1212, %v3357, %v3483
        %v3550 = vsel %vm1212, %v3358, %v3485
        %v3551 = vsel %vm1212, %v3359, %v3487
        %3552 = vst [vmem:[#allocation3 + $0x48] sm:$0xff] %v3520
        %3553 = vst [vmem:[#allocation3 + $0xb0] sm:$0xff] %v3521
        %3554 = vst [vmem:[#allocation3 + $0x118] sm:$0xff] %v3522
        %3555 = vst [vmem:[#allocation3 + $0x180] sm:$0xff] %v3523
        %3556 = vst [vmem:[#allocation3 + $0x1e8] sm:$0xff] %v3524
        %3557 = vst [vmem:[#allocation3 + $0x250] sm:$0xff] %v3525
        %3558 = vst [vmem:[#allocation3 + $0x2b8] sm:$0xff] %v3526
        %3559 = vst [vmem:[#allocation3 + $0x320] sm:$0xff] %v3527
        %3560 = vst [vmem:[#allocation3 + $0x388] sm:$0xff] %v3528
        %3561 = vst [vmem:[#allocation3 + $0x3f0] sm:$0xff] %v3529
        %3562 = vst [vmem:[#allocation3 + $0x458] sm:$0xff] %v3530
        %3563 = vst [vmem:[#allocation3 + $0x4c0] sm:$0xff] %v3531
        %3564 = vst [vmem:[#allocation3 + $0x528] sm:$0xff] %v3532
        %3565 = vst [vmem:[#allocation3 + $0x590] sm:$0xff] %v3533
        %3566 = vst [vmem:[#allocation3 + $0x5f8] sm:$0xff] %v3534
        %3567 = vst [vmem:[#allocation3 + $0x660] sm:$0xff] %v3535
        %3568 = vst [vmem:[#allocation3 + $0x6c8] sm:$0xff] %v3536
        %3569 = vst [vmem:[#allocation3 + $0x730] sm:$0xff] %v3537
        %3570 = vst [vmem:[#allocation3 + $0x798] sm:$0xff] %v3538
        %3571 = vst [vmem:[#allocation3 + $0x800] sm:$0xff] %v3539
        %3572 = vst [vmem:[#allocation3 + $0x868] sm:$0xff] %v3540
        %3573 = vst [vmem:[#allocation3 + $0x8d0] sm:$0xff] %v3541
        %3574 = vst [vmem:[#allocation3 + $0x938] sm:$0xff] %v3542
        %3575 = vst [vmem:[#allocation3 + $0x9a0] sm:$0xff] %v3543
        %3576 = vst [vmem:[#allocation3 + $0xa08] sm:$0xff] %v3544
        %3577 = vst [vmem:[#allocation3 + $0xa70] sm:$0xff] %v3545
        %3578 = vst [vmem:[#allocation3 + $0xad8] sm:$0xff] %v3546
        %3579 = vst [vmem:[#allocation3 + $0xb40] sm:$0xff] %v3547
        %3580 = vst [vmem:[#allocation3 + $0xba8] sm:$0xff] %v3548
        %3581 = vst [vmem:[#allocation3 + $0xc10] sm:$0xff] %v3549
        %3582 = vst [vmem:[#allocation3 + $0xc78] sm:$0xff] %v3550
        %3583 = vst [vmem:[#allocation3 + $0xce0] sm:$0xff] %v3551
        %s3584 = scalar_lea.vmem [#allocation2], 96
        %v3585 = vld [vmem:[%s3584] sm:$0xff]
        %v3586 = vld [vmem:[%s3584 + $0x8] sm:$0xff]
        %v3587 = vld [vmem:[%s3584 + $0x18] sm:$0xff]
        %v3588 = vld [vmem:[%s3584 + $0x20] sm:$0xff]
        %v3589 = vld [vmem:[%s3584 + $0x30] sm:$0xff]
        %v3590 = vld [vmem:[%s3584 + $0x38] sm:$0xff]
        %v3591 = vld [vmem:[%s3584 + $0x48] sm:$0xff]
        %v3592 = vld [vmem:[%s3584 + $0x50] sm:$0xff]
        %v3593 = vld [vmem:[%s3584 + $0x60] sm:$0xff]
        %v3594 = vld [vmem:[%s3584 + $0x68] sm:$0xff]
        %v3595 = vld [vmem:[%s3584 + $0x78] sm:$0xff]
        %v3596 = vld [vmem:[%s3584 + $0x80] sm:$0xff]
        %v3597 = vld [vmem:[%s3584 + $0x90] sm:$0xff]
        %v3598 = vld [vmem:[%s3584 + $0x98] sm:$0xff]
        %v3599 = vld [vmem:[%s3584 + $0xa8] sm:$0xff]
        %v3600 = vld [vmem:[%s3584 + $0xb0] sm:$0xff]
        %v3601 = vld [vmem:[%s3584 + $0xc0] sm:$0xff]
        %v3602 = vld [vmem:[%s3584 + $0xc8] sm:$0xff]
        %v3603 = vld [vmem:[%s3584 + $0xd8] sm:$0xff]
        %v3604 = vld [vmem:[%s3584 + $0xe0] sm:$0xff]
        %v3605 = vld [vmem:[%s3584 + $0xf0] sm:$0xff]
        %v3606 = vld [vmem:[%s3584 + $0xf8] sm:$0xff]
        %v3607 = vld [vmem:[%s3584 + $0x108] sm:$0xff]
        %v3608 = vld [vmem:[%s3584 + $0x110] sm:$0xff]
        %v3609 = vld [vmem:[%s3584 + $0x120] sm:$0xff]
        %v3610 = vld [vmem:[%s3584 + $0x128] sm:$0xff]
        %v3611 = vld [vmem:[%s3584 + $0x138] sm:$0xff]
        %v3612 = vld [vmem:[%s3584 + $0x140] sm:$0xff]
        %v3613 = vld [vmem:[%s3584 + $0x150] sm:$0xff]
        %v3614 = vld [vmem:[%s3584 + $0x158] sm:$0xff]
        %v3615 = vld [vmem:[%s3584 + $0x168] sm:$0xff]
        %v3616 = vld [vmem:[%s3584 + $0x170] sm:$0xff]
        %v3617 = vld [vmem:[%s3584 + $0x1] sm:$0xff]
        %v3618 = vld [vmem:[%s3584 + $0x9] sm:$0xff]
        %v3619 = vld [vmem:[%s3584 + $0x19] sm:$0xff]
        %v3620 = vld [vmem:[%s3584 + $0x21] sm:$0xff]
        %v3621 = vld [vmem:[%s3584 + $0x31] sm:$0xff]
        %v3622 = vld [vmem:[%s3584 + $0x39] sm:$0xff]
        %v3623 = vld [vmem:[%s3584 + $0x49] sm:$0xff]
        %v3624 = vld [vmem:[%s3584 + $0x51] sm:$0xff]
        %v3625 = vld [vmem:[%s3584 + $0x61] sm:$0xff]
        %v3626 = vld [vmem:[%s3584 + $0x69] sm:$0xff]
        %v3627 = vld [vmem:[%s3584 + $0x79] sm:$0xff]
        %v3628 = vld [vmem:[%s3584 + $0x81] sm:$0xff]
        %v3629 = vld [vmem:[%s3584 + $0x91] sm:$0xff]
        %v3630 = vld [vmem:[%s3584 + $0x99] sm:$0xff]
        %v3631 = vld [vmem:[%s3584 + $0xa9] sm:$0xff]
        %v3632 = vld [vmem:[%s3584 + $0xb1] sm:$0xff]
        %v3633 = vld [vmem:[%s3584 + $0xc1] sm:$0xff]
        %v3634 = vld [vmem:[%s3584 + $0xc9] sm:$0xff]
        %v3635 = vld [vmem:[%s3584 + $0xd9] sm:$0xff]
        %v3636 = vld [vmem:[%s3584 + $0xe1] sm:$0xff]
        %v3637 = vld [vmem:[%s3584 + $0xf1] sm:$0xff]
        %v3638 = vld [vmem:[%s3584 + $0xf9] sm:$0xff]
        %v3639 = vld [vmem:[%s3584 + $0x109] sm:$0xff]
        %v3640 = vld [vmem:[%s3584 + $0x111] sm:$0xff]
        %v3641 = vld [vmem:[%s3584 + $0x121] sm:$0xff]
        %v3642 = vld [vmem:[%s3584 + $0x129] sm:$0xff]
        %v3643 = vld [vmem:[%s3584 + $0x139] sm:$0xff]
        %v3644 = vld [vmem:[%s3584 + $0x141] sm:$0xff]
        %v3645 = vld [vmem:[%s3584 + $0x151] sm:$0xff]
        %v3646 = vld [vmem:[%s3584 + $0x159] sm:$0xff]
        %v3647 = vld [vmem:[%s3584 + $0x169] sm:$0xff]
        %v3648 = vld [vmem:[%s3584 + $0x171] sm:$0xff]
        %3681 = vrot.lane.b32.xlu0 %v3617, 64
        %v3682 = vpop.permute.xlu0 %3681
        %3683 = vrot.lane.b32.xlu0 %v3618, 64
        %v3684 = vpop.permute.xlu0 %3683
        %3685 = vrot.lane.b32.xlu0 %v3619, 64
        %v3686 = vpop.permute.xlu0 %3685
        %3687 = vrot.lane.b32.xlu0 %v3620, 64
        %v3688 = vpop.permute.xlu0 %3687
        %3689 = vrot.lane.b32.xlu0 %v3621, 64
        %v3690 = vpop.permute.xlu0 %3689
        %3691 = vrot.lane.b32.xlu0 %v3622, 64
        %v3692 = vpop.permute.xlu0 %3691
        %3693 = vrot.lane.b32.xlu0 %v3623, 64
        %v3694 = vpop.permute.xlu0 %3693
        %3695 = vrot.lane.b32.xlu0 %v3624, 64
        %v3696 = vpop.permute.xlu0 %3695
        %3697 = vrot.lane.b32.xlu0 %v3625, 64
        %v3698 = vpop.permute.xlu0 %3697
        %3699 = vrot.lane.b32.xlu0 %v3626, 64
        %v3700 = vpop.permute.xlu0 %3699
        %3701 = vrot.lane.b32.xlu0 %v3627, 64
        %v3702 = vpop.permute.xlu0 %3701
        %3703 = vrot.lane.b32.xlu0 %v3628, 64
        %v3704 = vpop.permute.xlu0 %3703
        %3705 = vrot.lane.b32.xlu0 %v3629, 64
        %v3706 = vpop.permute.xlu0 %3705
        %3707 = vrot.lane.b32.xlu0 %v3630, 64
        %v3708 = vpop.permute.xlu0 %3707
        %3709 = vrot.lane.b32.xlu0 %v3631, 64
        %v3710 = vpop.permute.xlu0 %3709
        %3711 = vrot.lane.b32.xlu0 %v3632, 64
        %v3712 = vpop.permute.xlu0 %3711
        %3713 = vrot.lane.b32.xlu0 %v3633, 64
        %v3714 = vpop.permute.xlu0 %3713
        %3715 = vrot.lane.b32.xlu0 %v3634, 64
        %v3716 = vpop.permute.xlu0 %3715
        %3717 = vrot.lane.b32.xlu0 %v3635, 64
        %v3718 = vpop.permute.xlu0 %3717
        %3719 = vrot.lane.b32.xlu0 %v3636, 64
        %v3720 = vpop.permute.xlu0 %3719
        %3721 = vrot.lane.b32.xlu0 %v3637, 64
        %v3722 = vpop.permute.xlu0 %3721
        %3723 = vrot.lane.b32.xlu0 %v3638, 64
        %v3724 = vpop.permute.xlu0 %3723
        %3725 = vrot.lane.b32.xlu0 %v3639, 64
        %v3726 = vpop.permute.xlu0 %3725
        %3727 = vrot.lane.b32.xlu0 %v3640, 64
        %v3728 = vpop.permute.xlu0 %3727
        %3729 = vrot.lane.b32.xlu0 %v3641, 64
        %v3730 = vpop.permute.xlu0 %3729
        %3731 = vrot.lane.b32.xlu0 %v3642, 64
        %v3732 = vpop.permute.xlu0 %3731
        %3733 = vrot.lane.b32.xlu0 %v3643, 64
        %v3734 = vpop.permute.xlu0 %3733
        %3735 = vrot.lane.b32.xlu0 %v3644, 64
        %v3736 = vpop.permute.xlu0 %3735
        %3737 = vrot.lane.b32.xlu0 %v3645, 64
        %v3738 = vpop.permute.xlu0 %3737
        %3739 = vrot.lane.b32.xlu0 %v3646, 64
        %v3740 = vpop.permute.xlu0 %3739
        %3741 = vrot.lane.b32.xlu0 %v3647, 64
        %v3742 = vpop.permute.xlu0 %3741
        %3743 = vrot.lane.b32.xlu0 %v3648, 64
        %v3744 = vpop.permute.xlu0 %3743
        %v3777 = vsel %vm1212, %v3585, %v3682
        %v3778 = vsel %vm1212, %v3586, %v3684
        %v3779 = vsel %vm1212, %v3587, %v3686
        %v3780 = vsel %vm1212, %v3588, %v3688
        %v3781 = vsel %vm1212, %v3589, %v3690
        %v3782 = vsel %vm1212, %v3590, %v3692
        %v3783 = vsel %vm1212, %v3591, %v3694
        %v3784 = vsel %vm1212, %v3592, %v3696
        %v3785 = vsel %vm1212, %v3593, %v3698
        %v3786 = vsel %vm1212, %v3594, %v3700
        %v3787 = vsel %vm1212, %v3595, %v3702
        %v3788 = vsel %vm1212, %v3596, %v3704
        %v3789 = vsel %vm1212, %v3597, %v3706
        %v3790 = vsel %vm1212, %v3598, %v3708
        %v3791 = vsel %vm1212, %v3599, %v3710
        %v3792 = vsel %vm1212, %v3600, %v3712
        %v3793 = vsel %vm1212, %v3601, %v3714
        %v3794 = vsel %vm1212, %v3602, %v3716
        %v3795 = vsel %vm1212, %v3603, %v3718
        %v3796 = vsel %vm1212, %v3604, %v3720
        %v3797 = vsel %vm1212, %v3605, %v3722
        %v3798 = vsel %vm1212, %v3606, %v3724
        %v3799 = vsel %vm1212, %v3607, %v3726
        %v3800 = vsel %vm1212, %v3608, %v3728
        %v3801 = vsel %vm1212, %v3609, %v3730
        %v3802 = vsel %vm1212, %v3610, %v3732
        %v3803 = vsel %vm1212, %v3611, %v3734
        %v3804 = vsel %vm1212, %v3612, %v3736
        %v3805 = vsel %vm1212, %v3613, %v3738
        %v3806 = vsel %vm1212, %v3614, %v3740
        %v3807 = vsel %vm1212, %v3615, %v3742
        %v3808 = vsel %vm1212, %v3616, %v3744
        %3809 = vst [vmem:[#allocation3 + $0x50] sm:$0xff] %v3777
        %3810 = vst [vmem:[#allocation3 + $0xb8] sm:$0xff] %v3778
        %3811 = vst [vmem:[#allocation3 + $0x120] sm:$0xff] %v3779
        %3812 = vst [vmem:[#allocation3 + $0x188] sm:$0xff] %v3780
        %3813 = vst [vmem:[#allocation3 + $0x1f0] sm:$0xff] %v3781
        %3814 = vst [vmem:[#allocation3 + $0x258] sm:$0xff] %v3782
        %3815 = vst [vmem:[#allocation3 + $0x2c0] sm:$0xff] %v3783
        %3816 = vst [vmem:[#allocation3 + $0x328] sm:$0xff] %v3784
        %3817 = vst [vmem:[#allocation3 + $0x390] sm:$0xff] %v3785
        %3818 = vst [vmem:[#allocation3 + $0x3f8] sm:$0xff] %v3786
        %3819 = vst [vmem:[#allocation3 + $0x460] sm:$0xff] %v3787
        %3820 = vst [vmem:[#allocation3 + $0x4c8] sm:$0xff] %v3788
        %3821 = vst [vmem:[#allocation3 + $0x530] sm:$0xff] %v3789
        %3822 = vst [vmem:[#allocation3 + $0x598] sm:$0xff] %v3790
        %3823 = vst [vmem:[#allocation3 + $0x600] sm:$0xff] %v3791
        %3824 = vst [vmem:[#allocation3 + $0x668] sm:$0xff] %v3792
        %3825 = vst [vmem:[#allocation3 + $0x6d0] sm:$0xff] %v3793
        %3826 = vst [vmem:[#allocation3 + $0x738] sm:$0xff] %v3794
        %3827 = vst [vmem:[#allocation3 + $0x7a0] sm:$0xff] %v3795
        %3828 = vst [vmem:[#allocation3 + $0x808] sm:$0xff] %v3796
        %3829 = vst [vmem:[#allocation3 + $0x870] sm:$0xff] %v3797
        %3830 = vst [vmem:[#allocation3 + $0x8d8] sm:$0xff] %v3798
        %3831 = vst [vmem:[#allocation3 + $0x940] sm:$0xff] %v3799
        %3832 = vst [vmem:[#allocation3 + $0x9a8] sm:$0xff] %v3800
        %3833 = vst [vmem:[#allocation3 + $0xa10] sm:$0xff] %v3801
        %3834 = vst [vmem:[#allocation3 + $0xa78] sm:$0xff] %v3802
        %3835 = vst [vmem:[#allocation3 + $0xae0] sm:$0xff] %v3803
        %3836 = vst [vmem:[#allocation3 + $0xb48] sm:$0xff] %v3804
        %3837 = vst [vmem:[#allocation3 + $0xbb0] sm:$0xff] %v3805
        %3838 = vst [vmem:[#allocation3 + $0xc18] sm:$0xff] %v3806
        %3839 = vst [vmem:[#allocation3 + $0xc80] sm:$0xff] %v3807
        %3840 = vst [vmem:[#allocation3 + $0xce8] sm:$0xff] %v3808
        %v3841 = vld [vmem:[%s3584 + $0x2] sm:$0xff]
        %v3842 = vld [vmem:[%s3584 + $0xa] sm:$0xff]
        %v3843 = vld [vmem:[%s3584 + $0x1a] sm:$0xff]
        %v3844 = vld [vmem:[%s3584 + $0x22] sm:$0xff]
        %v3845 = vld [vmem:[%s3584 + $0x32] sm:$0xff]
        %v3846 = vld [vmem:[%s3584 + $0x3a] sm:$0xff]
        %v3847 = vld [vmem:[%s3584 + $0x4a] sm:$0xff]
        %v3848 = vld [vmem:[%s3584 + $0x52] sm:$0xff]
        %v3849 = vld [vmem:[%s3584 + $0x62] sm:$0xff]
        %v3850 = vld [vmem:[%s3584 + $0x6a] sm:$0xff]
        %v3851 = vld [vmem:[%s3584 + $0x7a] sm:$0xff]
        %v3852 = vld [vmem:[%s3584 + $0x82] sm:$0xff]
        %v3853 = vld [vmem:[%s3584 + $0x92] sm:$0xff]
        %v3854 = vld [vmem:[%s3584 + $0x9a] sm:$0xff]
        %v3855 = vld [vmem:[%s3584 + $0xaa] sm:$0xff]
        %v3856 = vld [vmem:[%s3584 + $0xb2] sm:$0xff]
        %v3857 = vld [vmem:[%s3584 + $0xc2] sm:$0xff]
        %v3858 = vld [vmem:[%s3584 + $0xca] sm:$0xff]
        %v3859 = vld [vmem:[%s3584 + $0xda] sm:$0xff]
        %v3860 = vld [vmem:[%s3584 + $0xe2] sm:$0xff]
        %v3861 = vld [vmem:[%s3584 + $0xf2] sm:$0xff]
        %v3862 = vld [vmem:[%s3584 + $0xfa] sm:$0xff]
        %v3863 = vld [vmem:[%s3584 + $0x10a] sm:$0xff]
        %v3864 = vld [vmem:[%s3584 + $0x112] sm:$0xff]
        %v3865 = vld [vmem:[%s3584 + $0x122] sm:$0xff]
        %v3866 = vld [vmem:[%s3584 + $0x12a] sm:$0xff]
        %v3867 = vld [vmem:[%s3584 + $0x13a] sm:$0xff]
        %v3868 = vld [vmem:[%s3584 + $0x142] sm:$0xff]
        %v3869 = vld [vmem:[%s3584 + $0x152] sm:$0xff]
        %v3870 = vld [vmem:[%s3584 + $0x15a] sm:$0xff]
        %v3871 = vld [vmem:[%s3584 + $0x16a] sm:$0xff]
        %v3872 = vld [vmem:[%s3584 + $0x172] sm:$0xff]
        %v3873 = vld [vmem:[%s3584 + $0x3] sm:$0xff]
        %v3874 = vld [vmem:[%s3584 + $0xb] sm:$0xff]
        %v3875 = vld [vmem:[%s3584 + $0x1b] sm:$0xff]
        %v3876 = vld [vmem:[%s3584 + $0x23] sm:$0xff]
        %v3877 = vld [vmem:[%s3584 + $0x33] sm:$0xff]
        %v3878 = vld [vmem:[%s3584 + $0x3b] sm:$0xff]
        %v3879 = vld [vmem:[%s3584 + $0x4b] sm:$0xff]
        %v3880 = vld [vmem:[%s3584 + $0x53] sm:$0xff]
        %v3881 = vld [vmem:[%s3584 + $0x63] sm:$0xff]
        %v3882 = vld [vmem:[%s3584 + $0x6b] sm:$0xff]
        %v3883 = vld [vmem:[%s3584 + $0x7b] sm:$0xff]
        %v3884 = vld [vmem:[%s3584 + $0x83] sm:$0xff]
        %v3885 = vld [vmem:[%s3584 + $0x93] sm:$0xff]
        %v3886 = vld [vmem:[%s3584 + $0x9b] sm:$0xff]
        %v3887 = vld [vmem:[%s3584 + $0xab] sm:$0xff]
        %v3888 = vld [vmem:[%s3584 + $0xb3] sm:$0xff]
        %v3889 = vld [vmem:[%s3584 + $0xc3] sm:$0xff]
        %v3890 = vld [vmem:[%s3584 + $0xcb] sm:$0xff]
        %v3891 = vld [vmem:[%s3584 + $0xdb] sm:$0xff]
        %v3892 = vld [vmem:[%s3584 + $0xe3] sm:$0xff]
        %v3893 = vld [vmem:[%s3584 + $0xf3] sm:$0xff]
        %v3894 = vld [vmem:[%s3584 + $0xfb] sm:$0xff]
        %v3895 = vld [vmem:[%s3584 + $0x10b] sm:$0xff]
        %v3896 = vld [vmem:[%s3584 + $0x113] sm:$0xff]
        %v3897 = vld [vmem:[%s3584 + $0x123] sm:$0xff]
        %v3898 = vld [vmem:[%s3584 + $0x12b] sm:$0xff]
        %v3899 = vld [vmem:[%s3584 + $0x13b] sm:$0xff]
        %v3900 = vld [vmem:[%s3584 + $0x143] sm:$0xff]
        %v3901 = vld [vmem:[%s3584 + $0x153] sm:$0xff]
        %v3902 = vld [vmem:[%s3584 + $0x15b] sm:$0xff]
        %v3903 = vld [vmem:[%s3584 + $0x16b] sm:$0xff]
        %v3904 = vld [vmem:[%s3584 + $0x173] sm:$0xff]
        %3937 = vrot.lane.b32.xlu0 %v3873, 64
        %v3938 = vpop.permute.xlu0 %3937
        %3939 = vrot.lane.b32.xlu0 %v3874, 64
        %v3940 = vpop.permute.xlu0 %3939
        %3941 = vrot.lane.b32.xlu0 %v3875, 64
        %v3942 = vpop.permute.xlu0 %3941
        %3943 = vrot.lane.b32.xlu0 %v3876, 64
        %v3944 = vpop.permute.xlu0 %3943
        %3945 = vrot.lane.b32.xlu0 %v3877, 64
        %v3946 = vpop.permute.xlu0 %3945
        %3947 = vrot.lane.b32.xlu0 %v3878, 64
        %v3948 = vpop.permute.xlu0 %3947
        %3949 = vrot.lane.b32.xlu0 %v3879, 64
        %v3950 = vpop.permute.xlu0 %3949
        %3951 = vrot.lane.b32.xlu0 %v3880, 64
        %v3952 = vpop.permute.xlu0 %3951
        %3953 = vrot.lane.b32.xlu0 %v3881, 64
        %v3954 = vpop.permute.xlu0 %3953
        %3955 = vrot.lane.b32.xlu0 %v3882, 64
        %v3956 = vpop.permute.xlu0 %3955
        %3957 = vrot.lane.b32.xlu0 %v3883, 64
        %v3958 = vpop.permute.xlu0 %3957
        %3959 = vrot.lane.b32.xlu0 %v3884, 64
        %v3960 = vpop.permute.xlu0 %3959
        %3961 = vrot.lane.b32.xlu0 %v3885, 64
        %v3962 = vpop.permute.xlu0 %3961
        %3963 = vrot.lane.b32.xlu0 %v3886, 64
        %v3964 = vpop.permute.xlu0 %3963
        %3965 = vrot.lane.b32.xlu0 %v3887, 64
        %v3966 = vpop.permute.xlu0 %3965
        %3967 = vrot.lane.b32.xlu0 %v3888, 64
        %v3968 = vpop.permute.xlu0 %3967
        %3969 = vrot.lane.b32.xlu0 %v3889, 64
        %v3970 = vpop.permute.xlu0 %3969
        %3971 = vrot.lane.b32.xlu0 %v3890, 64
        %v3972 = vpop.permute.xlu0 %3971
        %3973 = vrot.lane.b32.xlu0 %v3891, 64
        %v3974 = vpop.permute.xlu0 %3973
        %3975 = vrot.lane.b32.xlu0 %v3892, 64
        %v3976 = vpop.permute.xlu0 %3975
        %3977 = vrot.lane.b32.xlu0 %v3893, 64
        %v3978 = vpop.permute.xlu0 %3977
        %3979 = vrot.lane.b32.xlu0 %v3894, 64
        %v3980 = vpop.permute.xlu0 %3979
        %3981 = vrot.lane.b32.xlu0 %v3895, 64
        %v3982 = vpop.permute.xlu0 %3981
        %3983 = vrot.lane.b32.xlu0 %v3896, 64
        %v3984 = vpop.permute.xlu0 %3983
        %3985 = vrot.lane.b32.xlu0 %v3897, 64
        %v3986 = vpop.permute.xlu0 %3985
        %3987 = vrot.lane.b32.xlu0 %v3898, 64
        %v3988 = vpop.permute.xlu0 %3987
        %3989 = vrot.lane.b32.xlu0 %v3899, 64
        %v3990 = vpop.permute.xlu0 %3989
        %3991 = vrot.lane.b32.xlu0 %v3900, 64
        %v3992 = vpop.permute.xlu0 %3991
        %3993 = vrot.lane.b32.xlu0 %v3901, 64
        %v3994 = vpop.permute.xlu0 %3993
        %3995 = vrot.lane.b32.xlu0 %v3902, 64
        %v3996 = vpop.permute.xlu0 %3995
        %3997 = vrot.lane.b32.xlu0 %v3903, 64
        %v3998 = vpop.permute.xlu0 %3997
        %3999 = vrot.lane.b32.xlu0 %v3904, 64
        %v4000 = vpop.permute.xlu0 %3999
        %v4033 = vsel %vm1212, %v3841, %v3938
        %v4034 = vsel %vm1212, %v3842, %v3940
        %v4035 = vsel %vm1212, %v3843, %v3942
        %v4036 = vsel %vm1212, %v3844, %v3944
        %v4037 = vsel %vm1212, %v3845, %v3946
        %v4038 = vsel %vm1212, %v3846, %v3948
        %v4039 = vsel %vm1212, %v3847, %v3950
        %v4040 = vsel %vm1212, %v3848, %v3952
        %v4041 = vsel %vm1212, %v3849, %v3954
        %v4042 = vsel %vm1212, %v3850, %v3956
        %v4043 = vsel %vm1212, %v3851, %v3958
        %v4044 = vsel %vm1212, %v3852, %v3960
        %v4045 = vsel %vm1212, %v3853, %v3962
        %v4046 = vsel %vm1212, %v3854, %v3964
        %v4047 = vsel %vm1212, %v3855, %v3966
        %v4048 = vsel %vm1212, %v3856, %v3968
        %v4049 = vsel %vm1212, %v3857, %v3970
        %v4050 = vsel %vm1212, %v3858, %v3972
        %v4051 = vsel %vm1212, %v3859, %v3974
        %v4052 = vsel %vm1212, %v3860, %v3976
        %v4053 = vsel %vm1212, %v3861, %v3978
        %v4054 = vsel %vm1212, %v3862, %v3980
        %v4055 = vsel %vm1212, %v3863, %v3982
        %v4056 = vsel %vm1212, %v3864, %v3984
        %v4057 = vsel %vm1212, %v3865, %v3986
        %v4058 = vsel %vm1212, %v3866, %v3988
        %v4059 = vsel %vm1212, %v3867, %v3990
        %v4060 = vsel %vm1212, %v3868, %v3992
        %v4061 = vsel %vm1212, %v3869, %v3994
        %v4062 = vsel %vm1212, %v3870, %v3996
        %v4063 = vsel %vm1212, %v3871, %v3998
        %v4064 = vsel %vm1212, %v3872, %v4000
        %4065 = vst [vmem:[#allocation3 + $0x58] sm:$0xff] %v4033
        %4066 = vst [vmem:[#allocation3 + $0xc0] sm:$0xff] %v4034
        %4067 = vst [vmem:[#allocation3 + $0x128] sm:$0xff] %v4035
        %4068 = vst [vmem:[#allocation3 + $0x190] sm:$0xff] %v4036
        %4069 = vst [vmem:[#allocation3 + $0x1f8] sm:$0xff] %v4037
        %4070 = vst [vmem:[#allocation3 + $0x260] sm:$0xff] %v4038
        %4071 = vst [vmem:[#allocation3 + $0x2c8] sm:$0xff] %v4039
        %4072 = vst [vmem:[#allocation3 + $0x330] sm:$0xff] %v4040
        %4073 = vst [vmem:[#allocation3 + $0x398] sm:$0xff] %v4041
        %4074 = vst [vmem:[#allocation3 + $0x400] sm:$0xff] %v4042
        %4075 = vst [vmem:[#allocation3 + $0x468] sm:$0xff] %v4043
        %4076 = vst [vmem:[#allocation3 + $0x4d0] sm:$0xff] %v4044
        %4077 = vst [vmem:[#allocation3 + $0x538] sm:$0xff] %v4045
        %4078 = vst [vmem:[#allocation3 + $0x5a0] sm:$0xff] %v4046
        %4079 = vst [vmem:[#allocation3 + $0x608] sm:$0xff] %v4047
        %4080 = vst [vmem:[#allocation3 + $0x670] sm:$0xff] %v4048
        %4081 = vst [vmem:[#allocation3 + $0x6d8] sm:$0xff] %v4049
        %4082 = vst [vmem:[#allocation3 + $0x740] sm:$0xff] %v4050
        %4083 = vst [vmem:[#allocation3 + $0x7a8] sm:$0xff] %v4051
        %4084 = vst [vmem:[#allocation3 + $0x810] sm:$0xff] %v4052
        %4085 = vst [vmem:[#allocation3 + $0x878] sm:$0xff] %v4053
        %4086 = vst [vmem:[#allocation3 + $0x8e0] sm:$0xff] %v4054
        %4087 = vst [vmem:[#allocation3 + $0x948] sm:$0xff] %v4055
        %4088 = vst [vmem:[#allocation3 + $0x9b0] sm:$0xff] %v4056
        %4089 = vst [vmem:[#allocation3 + $0xa18] sm:$0xff] %v4057
        %4090 = vst [vmem:[#allocation3 + $0xa80] sm:$0xff] %v4058
        %4091 = vst [vmem:[#allocation3 + $0xae8] sm:$0xff] %v4059
        %4092 = vst [vmem:[#allocation3 + $0xb50] sm:$0xff] %v4060
        %4093 = vst [vmem:[#allocation3 + $0xbb8] sm:$0xff] %v4061
        %4094 = vst [vmem:[#allocation3 + $0xc20] sm:$0xff] %v4062
        %4095 = vst [vmem:[#allocation3 + $0xc88] sm:$0xff] %v4063
        %4096 = vst [vmem:[#allocation3 + $0xcf0] sm:$0xff] %v4064
        %v4097 = vld [vmem:[%s3584 + $0x4] sm:$0xff]
        %v4098 = vld [vmem:[%s3584 + $0xc] sm:$0xff]
        %v4099 = vld [vmem:[%s3584 + $0x1c] sm:$0xff]
        %v4100 = vld [vmem:[%s3584 + $0x24] sm:$0xff]
        %v4101 = vld [vmem:[%s3584 + $0x34] sm:$0xff]
        %v4102 = vld [vmem:[%s3584 + $0x3c] sm:$0xff]
        %v4103 = vld [vmem:[%s3584 + $0x4c] sm:$0xff]
        %v4104 = vld [vmem:[%s3584 + $0x54] sm:$0xff]
        %v4105 = vld [vmem:[%s3584 + $0x64] sm:$0xff]
        %v4106 = vld [vmem:[%s3584 + $0x6c] sm:$0xff]
        %v4107 = vld [vmem:[%s3584 + $0x7c] sm:$0xff]
        %v4108 = vld [vmem:[%s3584 + $0x84] sm:$0xff]
        %v4109 = vld [vmem:[%s3584 + $0x94] sm:$0xff]
        %v4110 = vld [vmem:[%s3584 + $0x9c] sm:$0xff]
        %v4111 = vld [vmem:[%s3584 + $0xac] sm:$0xff]
        %v4112 = vld [vmem:[%s3584 + $0xb4] sm:$0xff]
        %v4113 = vld [vmem:[%s3584 + $0xc4] sm:$0xff]
        %v4114 = vld [vmem:[%s3584 + $0xcc] sm:$0xff]
        %v4115 = vld [vmem:[%s3584 + $0xdc] sm:$0xff]
        %v4116 = vld [vmem:[%s3584 + $0xe4] sm:$0xff]
        %v4117 = vld [vmem:[%s3584 + $0xf4] sm:$0xff]
        %v4118 = vld [vmem:[%s3584 + $0xfc] sm:$0xff]
        %v4119 = vld [vmem:[%s3584 + $0x10c] sm:$0xff]
        %v4120 = vld [vmem:[%s3584 + $0x114] sm:$0xff]
        %v4121 = vld [vmem:[%s3584 + $0x124] sm:$0xff]
        %v4122 = vld [vmem:[%s3584 + $0x12c] sm:$0xff]
        %v4123 = vld [vmem:[%s3584 + $0x13c] sm:$0xff]
        %v4124 = vld [vmem:[%s3584 + $0x144] sm:$0xff]
        %v4125 = vld [vmem:[%s3584 + $0x154] sm:$0xff]
        %v4126 = vld [vmem:[%s3584 + $0x15c] sm:$0xff]
        %v4127 = vld [vmem:[%s3584 + $0x16c] sm:$0xff]
        %v4128 = vld [vmem:[%s3584 + $0x174] sm:$0xff]
        %4161 = vrot.lane.b32.xlu0 %v4097, 64
        %v4162 = vpop.permute.xlu0 %4161
        %4163 = vrot.lane.b32.xlu0 %v4098, 64
        %v4164 = vpop.permute.xlu0 %4163
        %4165 = vrot.lane.b32.xlu0 %v4099, 64
        %v4166 = vpop.permute.xlu0 %4165
        %4167 = vrot.lane.b32.xlu0 %v4100, 64
        %v4168 = vpop.permute.xlu0 %4167
        %4169 = vrot.lane.b32.xlu0 %v4101, 64
        %v4170 = vpop.permute.xlu0 %4169
        %4171 = vrot.lane.b32.xlu0 %v4102, 64
        %v4172 = vpop.permute.xlu0 %4171
        %4173 = vrot.lane.b32.xlu0 %v4103, 64
        %v4174 = vpop.permute.xlu0 %4173
        %4175 = vrot.lane.b32.xlu0 %v4104, 64
        %v4176 = vpop.permute.xlu0 %4175
        %4177 = vrot.lane.b32.xlu0 %v4105, 64
        %v4178 = vpop.permute.xlu0 %4177
        %4179 = vrot.lane.b32.xlu0 %v4106, 64
        %v4180 = vpop.permute.xlu0 %4179
        %4181 = vrot.lane.b32.xlu0 %v4107, 64
        %v4182 = vpop.permute.xlu0 %4181
        %4183 = vrot.lane.b32.xlu0 %v4108, 64
        %v4184 = vpop.permute.xlu0 %4183
        %4185 = vrot.lane.b32.xlu0 %v4109, 64
        %v4186 = vpop.permute.xlu0 %4185
        %4187 = vrot.lane.b32.xlu0 %v4110, 64
        %v4188 = vpop.permute.xlu0 %4187
        %4189 = vrot.lane.b32.xlu0 %v4111, 64
        %v4190 = vpop.permute.xlu0 %4189
        %4191 = vrot.lane.b32.xlu0 %v4112, 64
        %v4192 = vpop.permute.xlu0 %4191
        %4193 = vrot.lane.b32.xlu0 %v4113, 64
        %v4194 = vpop.permute.xlu0 %4193
        %4195 = vrot.lane.b32.xlu0 %v4114, 64
        %v4196 = vpop.permute.xlu0 %4195
        %4197 = vrot.lane.b32.xlu0 %v4115, 64
        %v4198 = vpop.permute.xlu0 %4197
        %4199 = vrot.lane.b32.xlu0 %v4116, 64
        %v4200 = vpop.permute.xlu0 %4199
        %4201 = vrot.lane.b32.xlu0 %v4117, 64
        %v4202 = vpop.permute.xlu0 %4201
        %4203 = vrot.lane.b32.xlu0 %v4118, 64
        %v4204 = vpop.permute.xlu0 %4203
        %4205 = vrot.lane.b32.xlu0 %v4119, 64
        %v4206 = vpop.permute.xlu0 %4205
        %4207 = vrot.lane.b32.xlu0 %v4120, 64
        %v4208 = vpop.permute.xlu0 %4207
        %4209 = vrot.lane.b32.xlu0 %v4121, 64
        %v4210 = vpop.permute.xlu0 %4209
        %4211 = vrot.lane.b32.xlu0 %v4122, 64
        %v4212 = vpop.permute.xlu0 %4211
        %4213 = vrot.lane.b32.xlu0 %v4123, 64
        %v4214 = vpop.permute.xlu0 %4213
        %4215 = vrot.lane.b32.xlu0 %v4124, 64
        %v4216 = vpop.permute.xlu0 %4215
        %4217 = vrot.lane.b32.xlu0 %v4125, 64
        %v4218 = vpop.permute.xlu0 %4217
        %4219 = vrot.lane.b32.xlu0 %v4126, 64
        %v4220 = vpop.permute.xlu0 %4219
        %4221 = vrot.lane.b32.xlu0 %v4127, 64
        %v4222 = vpop.permute.xlu0 %4221
        %4223 = vrot.lane.b32.xlu0 %v4128, 64
        %v4224 = vpop.permute.xlu0 %4223
        %v4257 = vsel %vm1212, %v4097, %v4162
        %v4258 = vsel %vm1212, %v4098, %v4164
        %v4259 = vsel %vm1212, %v4099, %v4166
        %v4260 = vsel %vm1212, %v4100, %v4168
        %v4261 = vsel %vm1212, %v4101, %v4170
        %v4262 = vsel %vm1212, %v4102, %v4172
        %v4263 = vsel %vm1212, %v4103, %v4174
        %v4264 = vsel %vm1212, %v4104, %v4176
        %v4265 = vsel %vm1212, %v4105, %v4178
        %v4266 = vsel %vm1212, %v4106, %v4180
        %v4267 = vsel %vm1212, %v4107, %v4182
        %v4268 = vsel %vm1212, %v4108, %v4184
        %v4269 = vsel %vm1212, %v4109, %v4186
        %v4270 = vsel %vm1212, %v4110, %v4188
        %v4271 = vsel %vm1212, %v4111, %v4190
        %v4272 = vsel %vm1212, %v4112, %v4192
        %v4273 = vsel %vm1212, %v4113, %v4194
        %v4274 = vsel %vm1212, %v4114, %v4196
        %v4275 = vsel %vm1212, %v4115, %v4198
        %v4276 = vsel %vm1212, %v4116, %v4200
        %v4277 = vsel %vm1212, %v4117, %v4202
        %v4278 = vsel %vm1212, %v4118, %v4204
        %v4279 = vsel %vm1212, %v4119, %v4206
        %v4280 = vsel %vm1212, %v4120, %v4208
        %v4281 = vsel %vm1212, %v4121, %v4210
        %v4282 = vsel %vm1212, %v4122, %v4212
        %v4283 = vsel %vm1212, %v4123, %v4214
        %v4284 = vsel %vm1212, %v4124, %v4216
        %v4285 = vsel %vm1212, %v4125, %v4218
        %v4286 = vsel %vm1212, %v4126, %v4220
        %v4287 = vsel %vm1212, %v4127, %v4222
        %v4288 = vsel %vm1212, %v4128, %v4224
        %4289 = vst [vmem:[#allocation3 + $0x60] sm:$0xff] %v4257
        %4290 = vst [vmem:[#allocation3 + $0xc8] sm:$0xff] %v4258
        %4291 = vst [vmem:[#allocation3 + $0x130] sm:$0xff] %v4259
        %4292 = vst [vmem:[#allocation3 + $0x198] sm:$0xff] %v4260
        %4293 = vst [vmem:[#allocation3 + $0x200] sm:$0xff] %v4261
        %4294 = vst [vmem:[#allocation3 + $0x268] sm:$0xff] %v4262
        %4295 = vst [vmem:[#allocation3 + $0x2d0] sm:$0xff] %v4263
        %4296 = vst [vmem:[#allocation3 + $0x338] sm:$0xff] %v4264
        %4297 = vst [vmem:[#allocation3 + $0x3a0] sm:$0xff] %v4265
        %4298 = vst [vmem:[#allocation3 + $0x408] sm:$0xff] %v4266
        %4299 = vst [vmem:[#allocation3 + $0x470] sm:$0xff] %v4267
        %4300 = vst [vmem:[#allocation3 + $0x4d8] sm:$0xff] %v4268
        %4301 = vst [vmem:[#allocation3 + $0x540] sm:$0xff] %v4269
        %4302 = vst [vmem:[#allocation3 + $0x5a8] sm:$0xff] %v4270
        %4303 = vst [vmem:[#allocation3 + $0x610] sm:$0xff] %v4271
        %4304 = vst [vmem:[#allocation3 + $0x678] sm:$0xff] %v4272
        %4305 = vst [vmem:[#allocation3 + $0x6e0] sm:$0xff] %v4273
        %4306 = vst [vmem:[#allocation3 + $0x748] sm:$0xff] %v4274
        %4307 = vst [vmem:[#allocation3 + $0x7b0] sm:$0xff] %v4275
        %4308 = vst [vmem:[#allocation3 + $0x818] sm:$0xff] %v4276
        %4309 = vst [vmem:[#allocation3 + $0x880] sm:$0xff] %v4277
        %4310 = vst [vmem:[#allocation3 + $0x8e8] sm:$0xff] %v4278
        %4311 = vst [vmem:[#allocation3 + $0x950] sm:$0xff] %v4279
        %4312 = vst [vmem:[#allocation3 + $0x9b8] sm:$0xff] %v4280
        %4313 = vst [vmem:[#allocation3 + $0xa20] sm:$0xff] %v4281
        %4314 = vst [vmem:[#allocation3 + $0xa88] sm:$0xff] %v4282
        %4315 = vst [vmem:[#allocation3 + $0xaf0] sm:$0xff] %v4283
        %4316 = vst [vmem:[#allocation3 + $0xb58] sm:$0xff] %v4284
        %4317 = vst [vmem:[#allocation3 + $0xbc0] sm:$0xff] %v4285
        %4318 = vst [vmem:[#allocation3 + $0xc28] sm:$0xff] %v4286
        %4319 = vst [vmem:[#allocation3 + $0xc90] sm:$0xff] %v4287
        %4320 = vst [vmem:[#allocation3 + $0xcf8] sm:$0xff] %v4288
        %v4321 = vld [vmem:[#allocation3] sm:$0xff]
        %v4322 = vld [vmem:[#allocation3 + $0x8] sm:$0xff]
        %v4323 = vld [vmem:[#allocation3 + $0x10] sm:$0xff]
        %v4324 = vld [vmem:[#allocation3 + $0x18] sm:$0xff]
        %v4325 = vld [vmem:[#allocation3 + $0x20] sm:$0xff]
        %v4326 = vld [vmem:[#allocation3 + $0x28] sm:$0xff]
        %v4327 = vld [vmem:[#allocation3 + $0x30] sm:$0xff]
        %v4328 = vld [vmem:[#allocation3 + $0x38] sm:$0xff]
        %v4329 = vld [vmem:[#allocation3 + $0x40] sm:$0xff]
        %v4330 = vld [vmem:[#allocation3 + $0x48] sm:$0xff]
        %v4331 = vld [vmem:[#allocation3 + $0x50] sm:$0xff]
        %v4332 = vld [vmem:[#allocation3 + $0x58] sm:$0xff]
        %v4333 = vld [vmem:[#allocation3 + $0x60] sm:$0xff]
        %v4334 = vld [vmem:[#allocation3 + $0x68] sm:$0xff]
        %v4335 = vld [vmem:[#allocation3 + $0x70] sm:$0xff]
        %v4336 = vld [vmem:[#allocation3 + $0x78] sm:$0xff]
        %v4337 = vld [vmem:[#allocation3 + $0x80] sm:$0xff]
        %v4338 = vld [vmem:[#allocation3 + $0x88] sm:$0xff]
        %v4339 = vld [vmem:[#allocation3 + $0x90] sm:$0xff]
        %v4340 = vld [vmem:[#allocation3 + $0x98] sm:$0xff]
        %v4341 = vld [vmem:[#allocation3 + $0xa0] sm:$0xff]
        %v4342 = vld [vmem:[#allocation3 + $0xa8] sm:$0xff]
        %v4343 = vld [vmem:[#allocation3 + $0xb0] sm:$0xff]
        %v4344 = vld [vmem:[#allocation3 + $0xb8] sm:$0xff]
        %v4345 = vld [vmem:[#allocation3 + $0xc0] sm:$0xff]
        %v4346 = vld [vmem:[#allocation3 + $0xc8] sm:$0xff]
        %v4347 = vld [vmem:[#allocation3 + $0xd0] sm:$0xff]
        %v4348 = vld [vmem:[#allocation3 + $0xd8] sm:$0xff]
        %v4349 = vld [vmem:[#allocation3 + $0xe0] sm:$0xff]
        %v4350 = vld [vmem:[#allocation3 + $0xe8] sm:$0xff]
        %v4351 = vld [vmem:[#allocation3 + $0xf0] sm:$0xff]
        %v4352 = vld [vmem:[#allocation3 + $0xf8] sm:$0xff]
        %v4353 = vld [vmem:[#allocation3 + $0x100] sm:$0xff]
        %v4354 = vld [vmem:[#allocation3 + $0x108] sm:$0xff]
        %v4355 = vld [vmem:[#allocation3 + $0x110] sm:$0xff]
        %v4356 = vld [vmem:[#allocation3 + $0x118] sm:$0xff]
        %v4357 = vld [vmem:[#allocation3 + $0x120] sm:$0xff]
        %v4358 = vld [vmem:[#allocation3 + $0x128] sm:$0xff]
        %v4359 = vld [vmem:[#allocation3 + $0x130] sm:$0xff]
        %v4360 = vld [vmem:[#allocation3 + $0x138] sm:$0xff]
        %v4361 = vld [vmem:[#allocation3 + $0x140] sm:$0xff]
        %v4362 = vld [vmem:[#allocation3 + $0x148] sm:$0xff]
        %v4363 = vld [vmem:[#allocation3 + $0x150] sm:$0xff]
        %v4364 = vld [vmem:[#allocation3 + $0x158] sm:$0xff]
        %v4365 = vld [vmem:[#allocation3 + $0x160] sm:$0xff]
        %v4366 = vld [vmem:[#allocation3 + $0x168] sm:$0xff]
        %v4367 = vld [vmem:[#allocation3 + $0x170] sm:$0xff]
        %v4368 = vld [vmem:[#allocation3 + $0x178] sm:$0xff]
        %v4369 = vld [vmem:[#allocation3 + $0x180] sm:$0xff]
        %v4370 = vld [vmem:[#allocation3 + $0x188] sm:$0xff]
        %v4371 = vld [vmem:[#allocation3 + $0x190] sm:$0xff]
        %v4372 = vld [vmem:[#allocation3 + $0x198] sm:$0xff]
        %v4373 = vld [vmem:[#allocation3 + $0x1a0] sm:$0xff]
        %v4374 = vld [vmem:[#allocation3 + $0x1a8] sm:$0xff]
        %v4375 = vld [vmem:[#allocation3 + $0x1b0] sm:$0xff]
        %v4376 = vld [vmem:[#allocation3 + $0x1b8] sm:$0xff]
        %v4377 = vld [vmem:[#allocation3 + $0x1c0] sm:$0xff]
        %v4378 = vld [vmem:[#allocation3 + $0x1c8] sm:$0xff]
        %v4379 = vld [vmem:[#allocation3 + $0x1d0] sm:$0xff]
        %v4380 = vld [vmem:[#allocation3 + $0x1d8] sm:$0xff]
        %v4381 = vld [vmem:[#allocation3 + $0x1e0] sm:$0xff]
        %v4382 = vld [vmem:[#allocation3 + $0x1e8] sm:$0xff]
        %v4383 = vld [vmem:[#allocation3 + $0x1f0] sm:$0xff]
        %v4384 = vld [vmem:[#allocation3 + $0x1f8] sm:$0xff]
        %v4385 = vld [vmem:[#allocation3 + $0x200] sm:$0xff]
        %v4386 = vld [vmem:[#allocation3 + $0x208] sm:$0xff]
        %v4387 = vld [vmem:[#allocation3 + $0x210] sm:$0xff]
        %v4388 = vld [vmem:[#allocation3 + $0x218] sm:$0xff]
        %v4389 = vld [vmem:[#allocation3 + $0x220] sm:$0xff]
        %v4390 = vld [vmem:[#allocation3 + $0x228] sm:$0xff]
        %v4391 = vld [vmem:[#allocation3 + $0x230] sm:$0xff]
        %v4392 = vld [vmem:[#allocation3 + $0x238] sm:$0xff]
        %v4393 = vld [vmem:[#allocation3 + $0x240] sm:$0xff]
        %v4394 = vld [vmem:[#allocation3 + $0x248] sm:$0xff]
        %v4395 = vld [vmem:[#allocation3 + $0x250] sm:$0xff]
        %v4396 = vld [vmem:[#allocation3 + $0x258] sm:$0xff]
        %v4397 = vld [vmem:[#allocation3 + $0x260] sm:$0xff]
        %v4398 = vld [vmem:[#allocation3 + $0x268] sm:$0xff]
        %v4399 = vld [vmem:[#allocation3 + $0x270] sm:$0xff]
        %v4400 = vld [vmem:[#allocation3 + $0x278] sm:$0xff]
        %v4401 = vld [vmem:[#allocation3 + $0x280] sm:$0xff]
        %v4402 = vld [vmem:[#allocation3 + $0x288] sm:$0xff]
        %v4403 = vld [vmem:[#allocation3 + $0x290] sm:$0xff]
        %v4404 = vld [vmem:[#allocation3 + $0x298] sm:$0xff]
        %v4405 = vld [vmem:[#allocation3 + $0x2a0] sm:$0xff]
        %v4406 = vld [vmem:[#allocation3 + $0x2a8] sm:$0xff]
        %v4407 = vld [vmem:[#allocation3 + $0x2b0] sm:$0xff]
        %v4408 = vld [vmem:[#allocation3 + $0x2b8] sm:$0xff]
        %v4409 = vld [vmem:[#allocation3 + $0x2c0] sm:$0xff]
        %v4410 = vld [vmem:[#allocation3 + $0x2c8] sm:$0xff]
        %v4411 = vld [vmem:[#allocation3 + $0x2d0] sm:$0xff]
        %v4412 = vld [vmem:[#allocation3 + $0x2d8] sm:$0xff]
        %v4413 = vld [vmem:[#allocation3 + $0x2e0] sm:$0xff]
        %v4414 = vld [vmem:[#allocation3 + $0x2e8] sm:$0xff]
        %v4415 = vld [vmem:[#allocation3 + $0x2f0] sm:$0xff]
        %v4416 = vld [vmem:[#allocation3 + $0x2f8] sm:$0xff]
        %v4417 = vld [vmem:[#allocation3 + $0x300] sm:$0xff]
        %v4418 = vld [vmem:[#allocation3 + $0x308] sm:$0xff]
        %v4419 = vld [vmem:[#allocation3 + $0x310] sm:$0xff]
        %v4420 = vld [vmem:[#allocation3 + $0x318] sm:$0xff]
        %v4421 = vld [vmem:[#allocation3 + $0x320] sm:$0xff]
        %v4422 = vld [vmem:[#allocation3 + $0x328] sm:$0xff]
        %v4423 = vld [vmem:[#allocation3 + $0x330] sm:$0xff]
        %v4424 = vld [vmem:[#allocation3 + $0x338] sm:$0xff]
        %v4425 = vld [vmem:[#allocation3 + $0x340] sm:$0xff]
        %v4426 = vld [vmem:[#allocation3 + $0x348] sm:$0xff]
        %v4427 = vld [vmem:[#allocation3 + $0x350] sm:$0xff]
        %v4428 = vld [vmem:[#allocation3 + $0x358] sm:$0xff]
        %v4429 = vld [vmem:[#allocation3 + $0x360] sm:$0xff]
        %v4430 = vld [vmem:[#allocation3 + $0x368] sm:$0xff]
        %v4431 = vld [vmem:[#allocation3 + $0x370] sm:$0xff]
        %v4432 = vld [vmem:[#allocation3 + $0x378] sm:$0xff]
        %v4433 = vld [vmem:[#allocation3 + $0x380] sm:$0xff]
        %v4434 = vld [vmem:[#allocation3 + $0x388] sm:$0xff]
        %v4435 = vld [vmem:[#allocation3 + $0x390] sm:$0xff]
        %v4436 = vld [vmem:[#allocation3 + $0x398] sm:$0xff]
        %v4437 = vld [vmem:[#allocation3 + $0x3a0] sm:$0xff]
        %v4438 = vld [vmem:[#allocation3 + $0x3a8] sm:$0xff]
        %v4439 = vld [vmem:[#allocation3 + $0x3b0] sm:$0xff]
        %v4440 = vld [vmem:[#allocation3 + $0x3b8] sm:$0xff]
        %v4441 = vld [vmem:[#allocation3 + $0x3c0] sm:$0xff]
        %v4442 = vld [vmem:[#allocation3 + $0x3c8] sm:$0xff]
        %v4443 = vld [vmem:[#allocation3 + $0x3d0] sm:$0xff]
        %v4444 = vld [vmem:[#allocation3 + $0x3d8] sm:$0xff]
        %v4445 = vld [vmem:[#allocation3 + $0x3e0] sm:$0xff]
        %v4446 = vld [vmem:[#allocation3 + $0x3e8] sm:$0xff]
        %v4447 = vld [vmem:[#allocation3 + $0x3f0] sm:$0xff]
        %v4448 = vld [vmem:[#allocation3 + $0x3f8] sm:$0xff]
        %v4449 = vld [vmem:[#allocation3 + $0x400] sm:$0xff]
        %v4450 = vld [vmem:[#allocation3 + $0x408] sm:$0xff]
        %v4451 = vld [vmem:[#allocation3 + $0x410] sm:$0xff]
        %v4452 = vld [vmem:[#allocation3 + $0x418] sm:$0xff]
        %v4453 = vld [vmem:[#allocation3 + $0x420] sm:$0xff]
        %v4454 = vld [vmem:[#allocation3 + $0x428] sm:$0xff]
        %v4455 = vld [vmem:[#allocation3 + $0x430] sm:$0xff]
        %v4456 = vld [vmem:[#allocation3 + $0x438] sm:$0xff]
        %v4457 = vld [vmem:[#allocation3 + $0x440] sm:$0xff]
        %v4458 = vld [vmem:[#allocation3 + $0x448] sm:$0xff]
        %v4459 = vld [vmem:[#allocation3 + $0x450] sm:$0xff]
        %v4460 = vld [vmem:[#allocation3 + $0x458] sm:$0xff]
        %v4461 = vld [vmem:[#allocation3 + $0x460] sm:$0xff]
        %v4462 = vld [vmem:[#allocation3 + $0x468] sm:$0xff]
        %v4463 = vld [vmem:[#allocation3 + $0x470] sm:$0xff]
        %v4464 = vld [vmem:[#allocation3 + $0x478] sm:$0xff]
        %v4465 = vld [vmem:[#allocation3 + $0x480] sm:$0xff]
        %v4466 = vld [vmem:[#allocation3 + $0x488] sm:$0xff]
        %v4467 = vld [vmem:[#allocation3 + $0x490] sm:$0xff]
        %v4468 = vld [vmem:[#allocation3 + $0x498] sm:$0xff]
        %v4469 = vld [vmem:[#allocation3 + $0x4a0] sm:$0xff]
        %v4470 = vld [vmem:[#allocation3 + $0x4a8] sm:$0xff]
        %v4471 = vld [vmem:[#allocation3 + $0x4b0] sm:$0xff]
        %v4472 = vld [vmem:[#allocation3 + $0x4b8] sm:$0xff]
        %v4473 = vld [vmem:[#allocation3 + $0x4c0] sm:$0xff]
        %v4474 = vld [vmem:[#allocation3 + $0x4c8] sm:$0xff]
        %v4475 = vld [vmem:[#allocation3 + $0x4d0] sm:$0xff]
        %v4476 = vld [vmem:[#allocation3 + $0x4d8] sm:$0xff]
        %v4477 = vld [vmem:[#allocation3 + $0x4e0] sm:$0xff]
        %v4478 = vld [vmem:[#allocation3 + $0x4e8] sm:$0xff]
        %v4479 = vld [vmem:[#allocation3 + $0x4f0] sm:$0xff]
        %v4480 = vld [vmem:[#allocation3 + $0x4f8] sm:$0xff]
        %v4481 = vld [vmem:[#allocation3 + $0x500] sm:$0xff]
        %v4482 = vld [vmem:[#allocation3 + $0x508] sm:$0xff]
        %v4483 = vld [vmem:[#allocation3 + $0x510] sm:$0xff]
        %v4484 = vld [vmem:[#allocation3 + $0x518] sm:$0xff]
        %v4485 = vld [vmem:[#allocation3 + $0x520] sm:$0xff]
        %v4486 = vld [vmem:[#allocation3 + $0x528] sm:$0xff]
        %v4487 = vld [vmem:[#allocation3 + $0x530] sm:$0xff]
        %v4488 = vld [vmem:[#allocation3 + $0x538] sm:$0xff]
        %v4489 = vld [vmem:[#allocation3 + $0x540] sm:$0xff]
        %v4490 = vld [vmem:[#allocation3 + $0x548] sm:$0xff]
        %v4491 = vld [vmem:[#allocation3 + $0x550] sm:$0xff]
        %v4492 = vld [vmem:[#allocation3 + $0x558] sm:$0xff]
        %v4493 = vld [vmem:[#allocation3 + $0x560] sm:$0xff]
        %v4494 = vld [vmem:[#allocation3 + $0x568] sm:$0xff]
        %v4495 = vld [vmem:[#allocation3 + $0x570] sm:$0xff]
        %v4496 = vld [vmem:[#allocation3 + $0x578] sm:$0xff]
        %v4497 = vld [vmem:[#allocation3 + $0x580] sm:$0xff]
        %v4498 = vld [vmem:[#allocation3 + $0x588] sm:$0xff]
        %v4499 = vld [vmem:[#allocation3 + $0x590] sm:$0xff]
        %v4500 = vld [vmem:[#allocation3 + $0x598] sm:$0xff]
        %v4501 = vld [vmem:[#allocation3 + $0x5a0] sm:$0xff]
        %v4502 = vld [vmem:[#allocation3 + $0x5a8] sm:$0xff]
        %v4503 = vld [vmem:[#allocation3 + $0x5b0] sm:$0xff]
        %v4504 = vld [vmem:[#allocation3 + $0x5b8] sm:$0xff]
        %v4505 = vld [vmem:[#allocation3 + $0x5c0] sm:$0xff]
        %v4506 = vld [vmem:[#allocation3 + $0x5c8] sm:$0xff]
        %v4507 = vld [vmem:[#allocation3 + $0x5d0] sm:$0xff]
        %v4508 = vld [vmem:[#allocation3 + $0x5d8] sm:$0xff]
        %v4509 = vld [vmem:[#allocation3 + $0x5e0] sm:$0xff]
        %v4510 = vld [vmem:[#allocation3 + $0x5e8] sm:$0xff]
        %v4511 = vld [vmem:[#allocation3 + $0x5f0] sm:$0xff]
        %v4512 = vld [vmem:[#allocation3 + $0x5f8] sm:$0xff]
        %v4513 = vld [vmem:[#allocation3 + $0x600] sm:$0xff]
        %v4514 = vld [vmem:[#allocation3 + $0x608] sm:$0xff]
        %v4515 = vld [vmem:[#allocation3 + $0x610] sm:$0xff]
        %v4516 = vld [vmem:[#allocation3 + $0x618] sm:$0xff]
        %v4517 = vld [vmem:[#allocation3 + $0x620] sm:$0xff]
        %v4518 = vld [vmem:[#allocation3 + $0x628] sm:$0xff]
        %v4519 = vld [vmem:[#allocation3 + $0x630] sm:$0xff]
        %v4520 = vld [vmem:[#allocation3 + $0x638] sm:$0xff]
        %v4521 = vld [vmem:[#allocation3 + $0x640] sm:$0xff]
        %v4522 = vld [vmem:[#allocation3 + $0x648] sm:$0xff]
        %v4523 = vld [vmem:[#allocation3 + $0x650] sm:$0xff]
        %v4524 = vld [vmem:[#allocation3 + $0x658] sm:$0xff]
        %v4525 = vld [vmem:[#allocation3 + $0x660] sm:$0xff]
        %v4526 = vld [vmem:[#allocation3 + $0x668] sm:$0xff]
        %v4527 = vld [vmem:[#allocation3 + $0x670] sm:$0xff]
        %v4528 = vld [vmem:[#allocation3 + $0x678] sm:$0xff]
        %v4529 = vld [vmem:[#allocation3 + $0x680] sm:$0xff]
        %v4530 = vld [vmem:[#allocation3 + $0x688] sm:$0xff]
        %v4531 = vld [vmem:[#allocation3 + $0x690] sm:$0xff]
        %v4532 = vld [vmem:[#allocation3 + $0x698] sm:$0xff]
        %v4533 = vld [vmem:[#allocation3 + $0x6a0] sm:$0xff]
        %v4534 = vld [vmem:[#allocation3 + $0x6a8] sm:$0xff]
        %v4535 = vld [vmem:[#allocation3 + $0x6b0] sm:$0xff]
        %v4536 = vld [vmem:[#allocation3 + $0x6b8] sm:$0xff]
        %v4537 = vld [vmem:[#allocation3 + $0x6c0] sm:$0xff]
        %v4538 = vld [vmem:[#allocation3 + $0x6c8] sm:$0xff]
        %v4539 = vld [vmem:[#allocation3 + $0x6d0] sm:$0xff]
        %v4540 = vld [vmem:[#allocation3 + $0x6d8] sm:$0xff]
        %v4541 = vld [vmem:[#allocation3 + $0x6e0] sm:$0xff]
        %v4542 = vld [vmem:[#allocation3 + $0x6e8] sm:$0xff]
        %v4543 = vld [vmem:[#allocation3 + $0x6f0] sm:$0xff]
        %v4544 = vld [vmem:[#allocation3 + $0x6f8] sm:$0xff]
        %v4545 = vld [vmem:[#allocation3 + $0x700] sm:$0xff]
        %v4546 = vld [vmem:[#allocation3 + $0x708] sm:$0xff]
        %v4547 = vld [vmem:[#allocation3 + $0x710] sm:$0xff]
        %v4548 = vld [vmem:[#allocation3 + $0x718] sm:$0xff]
        %v4549 = vld [vmem:[#allocation3 + $0x720] sm:$0xff]
        %v4550 = vld [vmem:[#allocation3 + $0x728] sm:$0xff]
        %v4551 = vld [vmem:[#allocation3 + $0x730] sm:$0xff]
        %v4552 = vld [vmem:[#allocation3 + $0x738] sm:$0xff]
        %v4553 = vld [vmem:[#allocation3 + $0x740] sm:$0xff]
        %v4554 = vld [vmem:[#allocation3 + $0x748] sm:$0xff]
        %v4555 = vld [vmem:[#allocation3 + $0x750] sm:$0xff]
        %v4556 = vld [vmem:[#allocation3 + $0x758] sm:$0xff]
        %v4557 = vld [vmem:[#allocation3 + $0x760] sm:$0xff]
        %v4558 = vld [vmem:[#allocation3 + $0x768] sm:$0xff]
        %v4559 = vld [vmem:[#allocation3 + $0x770] sm:$0xff]
        %v4560 = vld [vmem:[#allocation3 + $0x778] sm:$0xff]
        %v4561 = vld [vmem:[#allocation3 + $0x780] sm:$0xff]
        %v4562 = vld [vmem:[#allocation3 + $0x788] sm:$0xff]
        %v4563 = vld [vmem:[#allocation3 + $0x790] sm:$0xff]
        %v4564 = vld [vmem:[#allocation3 + $0x798] sm:$0xff]
        %v4565 = vld [vmem:[#allocation3 + $0x7a0] sm:$0xff]
        %v4566 = vld [vmem:[#allocation3 + $0x7a8] sm:$0xff]
        %v4567 = vld [vmem:[#allocation3 + $0x7b0] sm:$0xff]
        %v4568 = vld [vmem:[#allocation3 + $0x7b8] sm:$0xff]
        %v4569 = vld [vmem:[#allocation3 + $0x7c0] sm:$0xff]
        %v4570 = vld [vmem:[#allocation3 + $0x7c8] sm:$0xff]
        %v4571 = vld [vmem:[#allocation3 + $0x7d0] sm:$0xff]
        %v4572 = vld [vmem:[#allocation3 + $0x7d8] sm:$0xff]
        %v4573 = vld [vmem:[#allocation3 + $0x7e0] sm:$0xff]
        %v4574 = vld [vmem:[#allocation3 + $0x7e8] sm:$0xff]
        %v4575 = vld [vmem:[#allocation3 + $0x7f0] sm:$0xff]
        %v4576 = vld [vmem:[#allocation3 + $0x7f8] sm:$0xff]
        %v4577 = vld [vmem:[#allocation3 + $0x800] sm:$0xff]
        %v4578 = vld [vmem:[#allocation3 + $0x808] sm:$0xff]
        %v4579 = vld [vmem:[#allocation3 + $0x810] sm:$0xff]
        %v4580 = vld [vmem:[#allocation3 + $0x818] sm:$0xff]
        %v4581 = vld [vmem:[#allocation3 + $0x820] sm:$0xff]
        %v4582 = vld [vmem:[#allocation3 + $0x828] sm:$0xff]
        %v4583 = vld [vmem:[#allocation3 + $0x830] sm:$0xff]
        %v4584 = vld [vmem:[#allocation3 + $0x838] sm:$0xff]
        %v4585 = vld [vmem:[#allocation3 + $0x840] sm:$0xff]
        %v4586 = vld [vmem:[#allocation3 + $0x848] sm:$0xff]
        %v4587 = vld [vmem:[#allocation3 + $0x850] sm:$0xff]
        %v4588 = vld [vmem:[#allocation3 + $0x858] sm:$0xff]
        %v4589 = vld [vmem:[#allocation3 + $0x860] sm:$0xff]
        %v4590 = vld [vmem:[#allocation3 + $0x868] sm:$0xff]
        %v4591 = vld [vmem:[#allocation3 + $0x870] sm:$0xff]
        %v4592 = vld [vmem:[#allocation3 + $0x878] sm:$0xff]
        %v4593 = vld [vmem:[#allocation3 + $0x880] sm:$0xff]
        %v4594 = vld [vmem:[#allocation3 + $0x888] sm:$0xff]
        %v4595 = vld [vmem:[#allocation3 + $0x890] sm:$0xff]
        %v4596 = vld [vmem:[#allocation3 + $0x898] sm:$0xff]
        %v4597 = vld [vmem:[#allocation3 + $0x8a0] sm:$0xff]
        %v4598 = vld [vmem:[#allocation3 + $0x8a8] sm:$0xff]
        %v4599 = vld [vmem:[#allocation3 + $0x8b0] sm:$0xff]
        %v4600 = vld [vmem:[#allocation3 + $0x8b8] sm:$0xff]
        %v4601 = vld [vmem:[#allocation3 + $0x8c0] sm:$0xff]
        %v4602 = vld [vmem:[#allocation3 + $0x8c8] sm:$0xff]
        %v4603 = vld [vmem:[#allocation3 + $0x8d0] sm:$0xff]
        %v4604 = vld [vmem:[#allocation3 + $0x8d8] sm:$0xff]
        %v4605 = vld [vmem:[#allocation3 + $0x8e0] sm:$0xff]
        %v4606 = vld [vmem:[#allocation3 + $0x8e8] sm:$0xff]
        %v4607 = vld [vmem:[#allocation3 + $0x8f0] sm:$0xff]
        %v4608 = vld [vmem:[#allocation3 + $0x8f8] sm:$0xff]
        %v4609 = vld [vmem:[#allocation3 + $0x900] sm:$0xff]
        %v4610 = vld [vmem:[#allocation3 + $0x908] sm:$0xff]
        %v4611 = vld [vmem:[#allocation3 + $0x910] sm:$0xff]
        %v4612 = vld [vmem:[#allocation3 + $0x918] sm:$0xff]
        %v4613 = vld [vmem:[#allocation3 + $0x920] sm:$0xff]
        %v4614 = vld [vmem:[#allocation3 + $0x928] sm:$0xff]
        %v4615 = vld [vmem:[#allocation3 + $0x930] sm:$0xff]
        %v4616 = vld [vmem:[#allocation3 + $0x938] sm:$0xff]
        %v4617 = vld [vmem:[#allocation3 + $0x940] sm:$0xff]
        %v4618 = vld [vmem:[#allocation3 + $0x948] sm:$0xff]
        %v4619 = vld [vmem:[#allocation3 + $0x950] sm:$0xff]
        %v4620 = vld [vmem:[#allocation3 + $0x958] sm:$0xff]
        %v4621 = vld [vmem:[#allocation3 + $0x960] sm:$0xff]
        %v4622 = vld [vmem:[#allocation3 + $0x968] sm:$0xff]
        %v4623 = vld [vmem:[#allocation3 + $0x970] sm:$0xff]
        %v4624 = vld [vmem:[#allocation3 + $0x978] sm:$0xff]
        %v4625 = vld [vmem:[#allocation3 + $0x980] sm:$0xff]
        %v4626 = vld [vmem:[#allocation3 + $0x988] sm:$0xff]
        %v4627 = vld [vmem:[#allocation3 + $0x990] sm:$0xff]
        %v4628 = vld [vmem:[#allocation3 + $0x998] sm:$0xff]
        %v4629 = vld [vmem:[#allocation3 + $0x9a0] sm:$0xff]
        %v4630 = vld [vmem:[#allocation3 + $0x9a8] sm:$0xff]
        %v4631 = vld [vmem:[#allocation3 + $0x9b0] sm:$0xff]
        %v4632 = vld [vmem:[#allocation3 + $0x9b8] sm:$0xff]
        %v4633 = vld [vmem:[#allocation3 + $0x9c0] sm:$0xff]
        %v4634 = vld [vmem:[#allocation3 + $0x9c8] sm:$0xff]
        %v4635 = vld [vmem:[#allocation3 + $0x9d0] sm:$0xff]
        %v4636 = vld [vmem:[#allocation3 + $0x9d8] sm:$0xff]
        %v4637 = vld [vmem:[#allocation3 + $0x9e0] sm:$0xff]
        %v4638 = vld [vmem:[#allocation3 + $0x9e8] sm:$0xff]
        %v4639 = vld [vmem:[#allocation3 + $0x9f0] sm:$0xff]
        %v4640 = vld [vmem:[#allocation3 + $0x9f8] sm:$0xff]
        %v4641 = vld [vmem:[#allocation3 + $0xa00] sm:$0xff]
        %v4642 = vld [vmem:[#allocation3 + $0xa08] sm:$0xff]
        %v4643 = vld [vmem:[#allocation3 + $0xa10] sm:$0xff]
        %v4644 = vld [vmem:[#allocation3 + $0xa18] sm:$0xff]
        %v4645 = vld [vmem:[#allocation3 + $0xa20] sm:$0xff]
        %v4646 = vld [vmem:[#allocation3 + $0xa28] sm:$0xff]
        %v4647 = vld [vmem:[#allocation3 + $0xa30] sm:$0xff]
        %v4648 = vld [vmem:[#allocation3 + $0xa38] sm:$0xff]
        %v4649 = vld [vmem:[#allocation3 + $0xa40] sm:$0xff]
        %v4650 = vld [vmem:[#allocation3 + $0xa48] sm:$0xff]
        %v4651 = vld [vmem:[#allocation3 + $0xa50] sm:$0xff]
        %v4652 = vld [vmem:[#allocation3 + $0xa58] sm:$0xff]
        %v4653 = vld [vmem:[#allocation3 + $0xa60] sm:$0xff]
        %v4654 = vld [vmem:[#allocation3 + $0xa68] sm:$0xff]
        %v4655 = vld [vmem:[#allocation3 + $0xa70] sm:$0xff]
        %v4656 = vld [vmem:[#allocation3 + $0xa78] sm:$0xff]
        %v4657 = vld [vmem:[#allocation3 + $0xa80] sm:$0xff]
        %v4658 = vld [vmem:[#allocation3 + $0xa88] sm:$0xff]
        %v4659 = vld [vmem:[#allocation3 + $0xa90] sm:$0xff]
        %v4660 = vld [vmem:[#allocation3 + $0xa98] sm:$0xff]
        %v4661 = vld [vmem:[#allocation3 + $0xaa0] sm:$0xff]
        %v4662 = vld [vmem:[#allocation3 + $0xaa8] sm:$0xff]
        %v4663 = vld [vmem:[#allocation3 + $0xab0] sm:$0xff]
        %v4664 = vld [vmem:[#allocation3 + $0xab8] sm:$0xff]
        %v4665 = vld [vmem:[#allocation3 + $0xac0] sm:$0xff]
        %v4666 = vld [vmem:[#allocation3 + $0xac8] sm:$0xff]
        %v4667 = vld [vmem:[#allocation3 + $0xad0] sm:$0xff]
        %v4668 = vld [vmem:[#allocation3 + $0xad8] sm:$0xff]
        %v4669 = vld [vmem:[#allocation3 + $0xae0] sm:$0xff]
        %v4670 = vld [vmem:[#allocation3 + $0xae8] sm:$0xff]
        %v4671 = vld [vmem:[#allocation3 + $0xaf0] sm:$0xff]
        %v4672 = vld [vmem:[#allocation3 + $0xaf8] sm:$0xff]
        %v4673 = vld [vmem:[#allocation3 + $0xb00] sm:$0xff]
        %v4674 = vld [vmem:[#allocation3 + $0xb08] sm:$0xff]
        %v4675 = vld [vmem:[#allocation3 + $0xb10] sm:$0xff]
        %v4676 = vld [vmem:[#allocation3 + $0xb18] sm:$0xff]
        %v4677 = vld [vmem:[#allocation3 + $0xb20] sm:$0xff]
        %v4678 = vld [vmem:[#allocation3 + $0xb28] sm:$0xff]
        %v4679 = vld [vmem:[#allocation3 + $0xb30] sm:$0xff]
        %v4680 = vld [vmem:[#allocation3 + $0xb38] sm:$0xff]
        %v4681 = vld [vmem:[#allocation3 + $0xb40] sm:$0xff]
        %v4682 = vld [vmem:[#allocation3 + $0xb48] sm:$0xff]
        %v4683 = vld [vmem:[#allocation3 + $0xb50] sm:$0xff]
        %v4684 = vld [vmem:[#allocation3 + $0xb58] sm:$0xff]
        %v4685 = vld [vmem:[#allocation3 + $0xb60] sm:$0xff]
        %v4686 = vld [vmem:[#allocation3 + $0xb68] sm:$0xff]
        %v4687 = vld [vmem:[#allocation3 + $0xb70] sm:$0xff]
        %v4688 = vld [vmem:[#allocation3 + $0xb78] sm:$0xff]
        %v4689 = vld [vmem:[#allocation3 + $0xb80] sm:$0xff]
        %v4690 = vld [vmem:[#allocation3 + $0xb88] sm:$0xff]
        %v4691 = vld [vmem:[#allocation3 + $0xb90] sm:$0xff]
        %v4692 = vld [vmem:[#allocation3 + $0xb98] sm:$0xff]
        %v4693 = vld [vmem:[#allocation3 + $0xba0] sm:$0xff]
        %v4694 = vld [vmem:[#allocation3 + $0xba8] sm:$0xff]
        %v4695 = vld [vmem:[#allocation3 + $0xbb0] sm:$0xff]
        %v4696 = vld [vmem:[#allocation3 + $0xbb8] sm:$0xff]
        %v4697 = vld [vmem:[#allocation3 + $0xbc0] sm:$0xff]
        %v4698 = vld [vmem:[#allocation3 + $0xbc8] sm:$0xff]
        %v4699 = vld [vmem:[#allocation3 + $0xbd0] sm:$0xff]
        %v4700 = vld [vmem:[#allocation3 + $0xbd8] sm:$0xff]
        %v4701 = vld [vmem:[#allocation3 + $0xbe0] sm:$0xff]
        %v4702 = vld [vmem:[#allocation3 + $0xbe8] sm:$0xff]
        %v4703 = vld [vmem:[#allocation3 + $0xbf0] sm:$0xff]
        %v4704 = vld [vmem:[#allocation3 + $0xbf8] sm:$0xff]
        %v4705 = vld [vmem:[#allocation3 + $0xc00] sm:$0xff]
        %v4706 = vld [vmem:[#allocation3 + $0xc08] sm:$0xff]
        %v4707 = vld [vmem:[#allocation3 + $0xc10] sm:$0xff]
        %v4708 = vld [vmem:[#allocation3 + $0xc18] sm:$0xff]
        %v4709 = vld [vmem:[#allocation3 + $0xc20] sm:$0xff]
        %v4710 = vld [vmem:[#allocation3 + $0xc28] sm:$0xff]
        %v4711 = vld [vmem:[#allocation3 + $0xc30] sm:$0xff]
        %v4712 = vld [vmem:[#allocation3 + $0xc38] sm:$0xff]
        %v4713 = vld [vmem:[#allocation3 + $0xc40] sm:$0xff]
        %v4714 = vld [vmem:[#allocation3 + $0xc48] sm:$0xff]
        %v4715 = vld [vmem:[#allocation3 + $0xc50] sm:$0xff]
        %v4716 = vld [vmem:[#allocation3 + $0xc58] sm:$0xff]
        %v4717 = vld [vmem:[#allocation3 + $0xc60] sm:$0xff]
        %v4718 = vld [vmem:[#allocation3 + $0xc68] sm:$0xff]
        %v4719 = vld [vmem:[#allocation3 + $0xc70] sm:$0xff]
        %v4720 = vld [vmem:[#allocation3 + $0xc78] sm:$0xff]
        %v4721 = vld [vmem:[#allocation3 + $0xc80] sm:$0xff]
        %v4722 = vld [vmem:[#allocation3 + $0xc88] sm:$0xff]
        %v4723 = vld [vmem:[#allocation3 + $0xc90] sm:$0xff]
        %v4724 = vld [vmem:[#allocation3 + $0xc98] sm:$0xff]
        %v4725 = vld [vmem:[#allocation3 + $0xca0] sm:$0xff]
        %v4726 = vld [vmem:[#allocation3 + $0xca8] sm:$0xff]
        %v4727 = vld [vmem:[#allocation3 + $0xcb0] sm:$0xff]
        %v4728 = vld [vmem:[#allocation3 + $0xcb8] sm:$0xff]
        %v4729 = vld [vmem:[#allocation3 + $0xcc0] sm:$0xff]
        %v4730 = vld [vmem:[#allocation3 + $0xcc8] sm:$0xff]
        %v4731 = vld [vmem:[#allocation3 + $0xcd0] sm:$0xff]
        %v4732 = vld [vmem:[#allocation3 + $0xcd8] sm:$0xff]
        %v4733 = vld [vmem:[#allocation3 + $0xce0] sm:$0xff]
        %v4734 = vld [vmem:[#allocation3 + $0xce8] sm:$0xff]
        %v4735 = vld [vmem:[#allocation3 + $0xcf0] sm:$0xff]
        %v4736 = vld [vmem:[#allocation3 + $0xcf8] sm:$0xff]
        %v4737 = vld [vmem:[%s271] sm:$0xff]
        %v4738 = vld [vmem:[%s271 + $0x8] sm:$0xff]
        %v4739 = vld [vmem:[%s271 + $0x10] sm:$0xff]
        %v4740 = vld [vmem:[%s271 + $0x18] sm:$0xff]
        %v4741 = vld [vmem:[%s271 + $0x20] sm:$0xff]
        %v4742 = vld [vmem:[%s271 + $0x28] sm:$0xff]
        %v4743 = vld [vmem:[%s271 + $0x30] sm:$0xff]
        %v4744 = vld [vmem:[%s271 + $0x38] sm:$0xff]
        %v4745 = vld [vmem:[%s271 + $0x40] sm:$0xff]
        %v4746 = vld [vmem:[%s271 + $0x48] sm:$0xff]
        %v4747 = vld [vmem:[%s271 + $0x50] sm:$0xff]
        %v4748 = vld [vmem:[%s271 + $0x58] sm:$0xff]
        %v4749 = vld [vmem:[%s271 + $0x60] sm:$0xff]
        %v4750 = vld [vmem:[%s271 + $0x68] sm:$0xff]
        %v4751 = vld [vmem:[%s271 + $0x70] sm:$0xff]
        %v4752 = vld [vmem:[%s271 + $0x78] sm:$0xff]
        %v4753 = vld [vmem:[%s271 + $0x80] sm:$0xff]
        %v4754 = vld [vmem:[%s271 + $0x88] sm:$0xff]
        %v4755 = vld [vmem:[%s271 + $0x90] sm:$0xff]
        %v4756 = vld [vmem:[%s271 + $0x98] sm:$0xff]
        %v4757 = vld [vmem:[%s271 + $0xa0] sm:$0xff]
        %v4758 = vld [vmem:[%s271 + $0xa8] sm:$0xff]
        %v4759 = vld [vmem:[%s271 + $0xb0] sm:$0xff]
        %v4760 = vld [vmem:[%s271 + $0xb8] sm:$0xff]
        %v4761 = vld [vmem:[%s271 + $0xc0] sm:$0xff]
        %v4762 = vld [vmem:[%s271 + $0xc8] sm:$0xff]
        %v4763 = vld [vmem:[%s271 + $0xd0] sm:$0xff]
        %v4764 = vld [vmem:[%s271 + $0xd8] sm:$0xff]
        %v4765 = vld [vmem:[%s271 + $0xe0] sm:$0xff]
        %v4766 = vld [vmem:[%s271 + $0xe8] sm:$0xff]
        %v4767 = vld [vmem:[%s271 + $0xf0] sm:$0xff]
        %v4768 = vld [vmem:[%s271 + $0xf8] sm:$0xff]
        %v4769 = vld [vmem:[%s271 + $0x100] sm:$0xff]
        %v4770 = vld [vmem:[%s271 + $0x108] sm:$0xff]
        %v4771 = vld [vmem:[%s271 + $0x110] sm:$0xff]
        %v4772 = vld [vmem:[%s271 + $0x118] sm:$0xff]
        %v4773 = vld [vmem:[%s271 + $0x120] sm:$0xff]
        %v4774 = vld [vmem:[%s271 + $0x128] sm:$0xff]
        %v4775 = vld [vmem:[%s271 + $0x130] sm:$0xff]
        %v4776 = vld [vmem:[%s271 + $0x138] sm:$0xff]
        %v4777 = vld [vmem:[%s271 + $0x140] sm:$0xff]
        %v4778 = vld [vmem:[%s271 + $0x148] sm:$0xff]
        %v4779 = vld [vmem:[%s271 + $0x150] sm:$0xff]
        %v4780 = vld [vmem:[%s271 + $0x158] sm:$0xff]
        %v4781 = vld [vmem:[%s271 + $0x160] sm:$0xff]
        %v4782 = vld [vmem:[%s271 + $0x168] sm:$0xff]
        %v4783 = vld [vmem:[%s271 + $0x170] sm:$0xff]
        %v4784 = vld [vmem:[%s271 + $0x178] sm:$0xff]
        %v4785 = vld [vmem:[%s271 + $0x180] sm:$0xff]
        %v4786 = vld [vmem:[%s271 + $0x188] sm:$0xff]
        %v4787 = vld [vmem:[%s271 + $0x190] sm:$0xff]
        %v4788 = vld [vmem:[%s271 + $0x198] sm:$0xff]
        %v4789 = vld [vmem:[%s271 + $0x1a0] sm:$0xff]
        %v4790 = vld [vmem:[%s271 + $0x1a8] sm:$0xff]
        %v4791 = vld [vmem:[%s271 + $0x1b0] sm:$0xff]
        %v4792 = vld [vmem:[%s271 + $0x1b8] sm:$0xff]
        %v4793 = vld [vmem:[%s271 + $0x1c0] sm:$0xff]
        %v4794 = vld [vmem:[%s271 + $0x1c8] sm:$0xff]
        %v4795 = vld [vmem:[%s271 + $0x1d0] sm:$0xff]
        %v4796 = vld [vmem:[%s271 + $0x1d8] sm:$0xff]
        %v4797 = vld [vmem:[%s271 + $0x1e0] sm:$0xff]
        %v4798 = vld [vmem:[%s271 + $0x1e8] sm:$0xff]
        %v4799 = vld [vmem:[%s271 + $0x1f0] sm:$0xff]
        %v4800 = vld [vmem:[%s271 + $0x1f8] sm:$0xff]
        %v4801 = vld [vmem:[%s271 + $0x200] sm:$0xff]
        %v4802 = vld [vmem:[%s271 + $0x208] sm:$0xff]
        %v4803 = vld [vmem:[%s271 + $0x210] sm:$0xff]
        %v4804 = vld [vmem:[%s271 + $0x218] sm:$0xff]
        %v4805 = vld [vmem:[%s271 + $0x220] sm:$0xff]
        %v4806 = vld [vmem:[%s271 + $0x228] sm:$0xff]
        %v4807 = vld [vmem:[%s271 + $0x230] sm:$0xff]
        %v4808 = vld [vmem:[%s271 + $0x238] sm:$0xff]
        %v4809 = vld [vmem:[%s271 + $0x240] sm:$0xff]
        %v4810 = vld [vmem:[%s271 + $0x248] sm:$0xff]
        %v4811 = vld [vmem:[%s271 + $0x250] sm:$0xff]
        %v4812 = vld [vmem:[%s271 + $0x258] sm:$0xff]
        %v4813 = vld [vmem:[%s271 + $0x260] sm:$0xff]
        %v4814 = vld [vmem:[%s271 + $0x268] sm:$0xff]
        %v4815 = vld [vmem:[%s271 + $0x270] sm:$0xff]
        %v4816 = vld [vmem:[%s271 + $0x278] sm:$0xff]
        %v4817 = vld [vmem:[%s271 + $0x280] sm:$0xff]
        %v4818 = vld [vmem:[%s271 + $0x288] sm:$0xff]
        %v4819 = vld [vmem:[%s271 + $0x290] sm:$0xff]
        %v4820 = vld [vmem:[%s271 + $0x298] sm:$0xff]
        %v4821 = vld [vmem:[%s271 + $0x2a0] sm:$0xff]
        %v4822 = vld [vmem:[%s271 + $0x2a8] sm:$0xff]
        %v4823 = vld [vmem:[%s271 + $0x2b0] sm:$0xff]
        %v4824 = vld [vmem:[%s271 + $0x2b8] sm:$0xff]
        %v4825 = vld [vmem:[%s271 + $0x2c0] sm:$0xff]
        %v4826 = vld [vmem:[%s271 + $0x2c8] sm:$0xff]
        %v4827 = vld [vmem:[%s271 + $0x2d0] sm:$0xff]
        %v4828 = vld [vmem:[%s271 + $0x2d8] sm:$0xff]
        %v4829 = vld [vmem:[%s271 + $0x2e0] sm:$0xff]
        %v4830 = vld [vmem:[%s271 + $0x2e8] sm:$0xff]
        %v4831 = vld [vmem:[%s271 + $0x2f0] sm:$0xff]
        %v4832 = vld [vmem:[%s271 + $0x2f8] sm:$0xff]
        %v4833 = vld [vmem:[%s271 + $0x300] sm:$0xff]
        %v4834 = vld [vmem:[%s271 + $0x308] sm:$0xff]
        %v4835 = vld [vmem:[%s271 + $0x310] sm:$0xff]
        %v4836 = vld [vmem:[%s271 + $0x318] sm:$0xff]
        %v4837 = vld [vmem:[%s271 + $0x320] sm:$0xff]
        %v4838 = vld [vmem:[%s271 + $0x328] sm:$0xff]
        %v4839 = vld [vmem:[%s271 + $0x330] sm:$0xff]
        %v4840 = vld [vmem:[%s271 + $0x338] sm:$0xff]
        %v4841 = vld [vmem:[%s271 + $0x340] sm:$0xff]
        %v4842 = vld [vmem:[%s271 + $0x348] sm:$0xff]
        %v4843 = vld [vmem:[%s271 + $0x350] sm:$0xff]
        %v4844 = vld [vmem:[%s271 + $0x358] sm:$0xff]
        %v4845 = vld [vmem:[%s271 + $0x360] sm:$0xff]
        %v4846 = vld [vmem:[%s271 + $0x368] sm:$0xff]
        %v4847 = vld [vmem:[%s271 + $0x370] sm:$0xff]
        %v4848 = vld [vmem:[%s271 + $0x378] sm:$0xff]
        %v4849 = vld [vmem:[%s271 + $0x380] sm:$0xff]
        %v4850 = vld [vmem:[%s271 + $0x388] sm:$0xff]
        %v4851 = vld [vmem:[%s271 + $0x390] sm:$0xff]
        %v4852 = vld [vmem:[%s271 + $0x398] sm:$0xff]
        %v4853 = vld [vmem:[%s271 + $0x3a0] sm:$0xff]
        %v4854 = vld [vmem:[%s271 + $0x3a8] sm:$0xff]
        %v4855 = vld [vmem:[%s271 + $0x3b0] sm:$0xff]
        %v4856 = vld [vmem:[%s271 + $0x3b8] sm:$0xff]
        %v4857 = vld [vmem:[%s271 + $0x3c0] sm:$0xff]
        %v4858 = vld [vmem:[%s271 + $0x3c8] sm:$0xff]
        %v4859 = vld [vmem:[%s271 + $0x3d0] sm:$0xff]
        %v4860 = vld [vmem:[%s271 + $0x3d8] sm:$0xff]
        %v4861 = vld [vmem:[%s271 + $0x3e0] sm:$0xff]
        %v4862 = vld [vmem:[%s271 + $0x3e8] sm:$0xff]
        %v4863 = vld [vmem:[%s271 + $0x3f0] sm:$0xff]
        %v4864 = vld [vmem:[%s271 + $0x3f8] sm:$0xff]
        %v4865 = vld [vmem:[%s271 + $0x400] sm:$0xff]
        %v4866 = vld [vmem:[%s271 + $0x408] sm:$0xff]
        %v4867 = vld [vmem:[%s271 + $0x410] sm:$0xff]
        %v4868 = vld [vmem:[%s271 + $0x418] sm:$0xff]
        %v4869 = vld [vmem:[%s271 + $0x420] sm:$0xff]
        %v4870 = vld [vmem:[%s271 + $0x428] sm:$0xff]
        %v4871 = vld [vmem:[%s271 + $0x430] sm:$0xff]
        %v4872 = vld [vmem:[%s271 + $0x438] sm:$0xff]
        %v4873 = vld [vmem:[%s271 + $0x440] sm:$0xff]
        %v4874 = vld [vmem:[%s271 + $0x448] sm:$0xff]
        %v4875 = vld [vmem:[%s271 + $0x450] sm:$0xff]
        %v4876 = vld [vmem:[%s271 + $0x458] sm:$0xff]
        %v4877 = vld [vmem:[%s271 + $0x460] sm:$0xff]
        %v4878 = vld [vmem:[%s271 + $0x468] sm:$0xff]
        %v4879 = vld [vmem:[%s271 + $0x470] sm:$0xff]
        %v4880 = vld [vmem:[%s271 + $0x478] sm:$0xff]
        %v4881 = vld [vmem:[%s271 + $0x480] sm:$0xff]
        %v4882 = vld [vmem:[%s271 + $0x488] sm:$0xff]
        %v4883 = vld [vmem:[%s271 + $0x490] sm:$0xff]
        %v4884 = vld [vmem:[%s271 + $0x498] sm:$0xff]
        %v4885 = vld [vmem:[%s271 + $0x4a0] sm:$0xff]
        %v4886 = vld [vmem:[%s271 + $0x4a8] sm:$0xff]
        %v4887 = vld [vmem:[%s271 + $0x4b0] sm:$0xff]
        %v4888 = vld [vmem:[%s271 + $0x4b8] sm:$0xff]
        %v4889 = vld [vmem:[%s271 + $0x4c0] sm:$0xff]
        %v4890 = vld [vmem:[%s271 + $0x4c8] sm:$0xff]
        %v4891 = vld [vmem:[%s271 + $0x4d0] sm:$0xff]
        %v4892 = vld [vmem:[%s271 + $0x4d8] sm:$0xff]
        %v4893 = vld [vmem:[%s271 + $0x4e0] sm:$0xff]
        %v4894 = vld [vmem:[%s271 + $0x4e8] sm:$0xff]
        %v4895 = vld [vmem:[%s271 + $0x4f0] sm:$0xff]
        %v4896 = vld [vmem:[%s271 + $0x4f8] sm:$0xff]
        %v4897 = vld [vmem:[%s271 + $0x500] sm:$0xff]
        %v4898 = vld [vmem:[%s271 + $0x508] sm:$0xff]
        %v4899 = vld [vmem:[%s271 + $0x510] sm:$0xff]
        %v4900 = vld [vmem:[%s271 + $0x518] sm:$0xff]
        %v4901 = vld [vmem:[%s271 + $0x520] sm:$0xff]
        %v4902 = vld [vmem:[%s271 + $0x528] sm:$0xff]
        %v4903 = vld [vmem:[%s271 + $0x530] sm:$0xff]
        %v4904 = vld [vmem:[%s271 + $0x538] sm:$0xff]
        %v4905 = vld [vmem:[%s271 + $0x540] sm:$0xff]
        %v4906 = vld [vmem:[%s271 + $0x548] sm:$0xff]
        %v4907 = vld [vmem:[%s271 + $0x550] sm:$0xff]
        %v4908 = vld [vmem:[%s271 + $0x558] sm:$0xff]
        %v4909 = vld [vmem:[%s271 + $0x560] sm:$0xff]
        %v4910 = vld [vmem:[%s271 + $0x568] sm:$0xff]
        %v4911 = vld [vmem:[%s271 + $0x570] sm:$0xff]
        %v4912 = vld [vmem:[%s271 + $0x578] sm:$0xff]
        %v4913 = vld [vmem:[%s271 + $0x580] sm:$0xff]
        %v4914 = vld [vmem:[%s271 + $0x588] sm:$0xff]
        %v4915 = vld [vmem:[%s271 + $0x590] sm:$0xff]
        %v4916 = vld [vmem:[%s271 + $0x598] sm:$0xff]
        %v4917 = vld [vmem:[%s271 + $0x5a0] sm:$0xff]
        %v4918 = vld [vmem:[%s271 + $0x5a8] sm:$0xff]
        %v4919 = vld [vmem:[%s271 + $0x5b0] sm:$0xff]
        %v4920 = vld [vmem:[%s271 + $0x5b8] sm:$0xff]
        %v4921 = vld [vmem:[%s271 + $0x5c0] sm:$0xff]
        %v4922 = vld [vmem:[%s271 + $0x5c8] sm:$0xff]
        %v4923 = vld [vmem:[%s271 + $0x5d0] sm:$0xff]
        %v4924 = vld [vmem:[%s271 + $0x5d8] sm:$0xff]
        %v4925 = vld [vmem:[%s271 + $0x5e0] sm:$0xff]
        %v4926 = vld [vmem:[%s271 + $0x5e8] sm:$0xff]
        %v4927 = vld [vmem:[%s271 + $0x5f0] sm:$0xff]
        %v4928 = vld [vmem:[%s271 + $0x5f8] sm:$0xff]
        %v4929 = vld [vmem:[%s271 + $0x600] sm:$0xff]
        %v4930 = vld [vmem:[%s271 + $0x608] sm:$0xff]
        %v4931 = vld [vmem:[%s271 + $0x610] sm:$0xff]
        %v4932 = vld [vmem:[%s271 + $0x618] sm:$0xff]
        %v4933 = vld [vmem:[%s271 + $0x620] sm:$0xff]
        %v4934 = vld [vmem:[%s271 + $0x628] sm:$0xff]
        %v4935 = vld [vmem:[%s271 + $0x630] sm:$0xff]
        %v4936 = vld [vmem:[%s271 + $0x638] sm:$0xff]
        %v4937 = vld [vmem:[%s271 + $0x640] sm:$0xff]
        %v4938 = vld [vmem:[%s271 + $0x648] sm:$0xff]
        %v4939 = vld [vmem:[%s271 + $0x650] sm:$0xff]
        %v4940 = vld [vmem:[%s271 + $0x658] sm:$0xff]
        %v4941 = vld [vmem:[%s271 + $0x660] sm:$0xff]
        %v4942 = vld [vmem:[%s271 + $0x668] sm:$0xff]
        %v4943 = vld [vmem:[%s271 + $0x670] sm:$0xff]
        %v4944 = vld [vmem:[%s271 + $0x678] sm:$0xff]
        %v4945 = vld [vmem:[%s282] sm:$0x1]
        %v4947 = vlaneseq
        %v4948 = vshrl.u32 %v4947, 7
        %v4949 = vsub.s32 0, %v4948
        %v4950 = vrot.slane %v4945, %v4949
        %4952 = vmatprep.subr.mxu0 0.0
        %4953 = vmatpush1.msra.mxu0 %v4737
        %4954 = vmatprep.subr.mxu0 0.0
        %4955 = vmatpush1.msra.mxu0 %v4738
        %4956 = vmatprep.subr.mxu0 0.0
        %4957 = vmatpush1.msra.mxu0 %v4739
        %4958 = vmatprep.subr.mxu0 0.0
        %4959 = vmatpush1.msra.mxu0 %v4740
        %4960 = vmatprep.subr.mxu0 0.0
        %4961 = vmatpush1.msra.mxu0 %v4741
        %4962 = vmatprep.subr.mxu0 0.0
        %4963 = vmatpush1.msra.mxu0 %v4742
        %4964 = vmatprep.subr.mxu0 0.0
        %4965 = vmatpush1.msra.mxu0 %v4743
        %4966 = vmatprep.subr.mxu0 0.0
        %4967 = vmatpush1.msra.mxu0 %v4744
        %4968 = vmatprep.subr.mxu0 0.0
        %4969 = vmatpush1.msra.mxu0 %v4745
        %4970 = vmatprep.subr.mxu0 0.0
        %4971 = vmatpush1.msra.mxu0 %v4746
        %4972 = vmatprep.subr.mxu0 0.0
        %4973 = vmatpush1.msra.mxu0 %v4747
        %4974 = vmatprep.subr.mxu0 0.0
        %4975 = vmatpush1.msra.mxu0 %v4748
        %4976 = vmatprep.subr.mxu0 0.0
        %4977 = vmatpush1.msra.mxu0 %v4749
        %4978 = vmatprep.subr.mxu0 0.0
        %4979 = vmatpush1.msra.mxu0 %v4750
        %4980 = vmatprep.subr.mxu0 0.0
        %4981 = vmatpush1.msra.mxu0 %v4751
        %4982 = vmatprep.subr.mxu0 0.0
        %4983 = vmatpush1.msra.mxu0 %v4752
        %4984 = vmatprep.subr.mxu0 0.0
        %4985 = vmatpush1.msra.mxu0 %v4753
        %4986 = vmatprep.subr.mxu0 0.0
        %4987 = vmatpush1.msra.mxu0 %v4754
        %4988 = vmatprep.subr.mxu0 0.0
        %4989 = vmatpush1.msra.mxu0 %v4755
        %4990 = vmatprep.subr.mxu0 0.0
        %4991 = vmatpush1.msra.mxu0 %v4756
        %4992 = vmatprep.subr.mxu0 0.0
        %4993 = vmatpush1.msra.mxu0 %v4757
        %4994 = vmatprep.subr.mxu0 0.0
        %4995 = vmatpush1.msra.mxu0 %v4758
        %4996 = vmatprep.subr.mxu0 0.0
        %4997 = vmatpush1.msra.mxu0 %v4759
        %4998 = vmatprep.subr.mxu0 0.0
        %4999 = vmatpush1.msra.mxu0 %v4760
        %5000 = vmatprep.subr.mxu0 0.0
        %5001 = vmatpush1.msra.mxu0 %v4761
        %5002 = vmatprep.subr.mxu0 0.0
        %5003 = vmatpush1.msra.mxu0 %v4762
        %5004 = vmatprep.subr.mxu0 0.0
        %5005 = vmatpush1.msra.mxu0 %v4763
        %5006 = vmatprep.subr.mxu0 0.0
        %5007 = vmatpush1.msra.mxu0 %v4764
        %5008 = vmatprep.subr.mxu0 0.0
        %5009 = vmatpush1.msra.mxu0 %v4765
        %5010 = vmatprep.subr.mxu0 0.0
        %5011 = vmatpush1.msra.mxu0 %v4766
        %5012 = vmatprep.subr.mxu0 0.0
        %5013 = vmatpush1.msra.mxu0 %v4767
        %5014 = vmatprep.subr.mxu0 0.0
        %5015 = vmatpush1.msra.mxu0 %v4768
        %5016 = vmatprep.mubr.f32.mxu0 %v4322
        %5017 = vmatmul.mubr.f32.gmra.mrb[0].mxu0 %v4321
        %v5018 = vpop.f32.mrb[0].mxu0
        %v5019 = vadd.f32 %v4950, %v5018
        %v5020 = vpop.f32.mrb[0].mxu0
        %5021 = vmatprep.mubr.f32.mxu0 %v4335
        %5022 = vmatmul.mubr.f32.gmra.mrb[0].mxu0 %v4334
        %v5023 = vpop.f32.mrb[0].mxu0
        %v5024 = vadd.f32 %v4950, %v5023
        %v5025 = vpop.f32.mrb[0].mxu0
        %5026 = vmatprep.mubr.f32.mxu0 %v4348
        %5027 = vmatmul.mubr.f32.gmra.mrb[0].mxu0 %v4347
        %v5028 = vpop.f32.mrb[0].mxu0
        %v5029 = vadd.f32 %v4950, %v5028
        %v5030 = vpop.f32.mrb[0].mxu0
        %5031 = vmatprep.mubr.f32.mxu0 %v4361
        %5032 = vmatmul.mubr.f32.gmra.mrb[0].mxu0 %v4360
        %v5033 = vpop.f32.mrb[0].mxu0
        %v5034 = vadd.f32 %v4950, %v5033
        %v5035 = vpop.f32.mrb[0].mxu0
        %5036 = vmatprep.mubr.f32.mxu0 %v4374
        %5037 = vmatmul.mubr.f32.gmra.mrb[0].mxu0 %v4373
        %v5038 = vpop.f32.mrb[0].mxu0
        %v5039 = vadd.f32 %v4950, %v5038
        %v5040 = vpop.f32.mrb[0].mxu0
        %5041 = vmatprep.mubr.f32.mxu0 %v4387
        %5042 = vmatmul.mubr.f32.gmra.mrb[0].mxu0 %v4386
        %v5043 = vpop.f32.mrb[0].mxu0
        %v5044 = vadd.f32 %v4950, %v5043
        %v5045 = vpop.f32.mrb[0].mxu0
        %5046 = vmatprep.mubr.f32.mxu0 %v4400
        %5047 = vmatmul.mubr.f32.gmra.mrb[0].mxu0 %v4399
        %v5048 = vpop.f32.mrb[0].mxu0
        %v5049 = vadd.f32 %v4950, %v5048
        %v5050 = vpop.f32.mrb[0].mxu0
        %5051 = vmatprep.mubr.f32.mxu0 %v4413
        %5052 = vmatmul.mubr.f32.gmra.mrb[0].mxu0 %v4412
        %v5053 = vpop.f32.mrb[0].mxu0
        %v5054 = vadd.f32 %v4950, %v5053
        %v5055 = vpop.f32.mrb[0].mxu0
        %5056 = vmatprep.mubr.f32.mxu0 %v4426
        %5057 = vmatmul.mubr.f32.gmra.mrb[0].mxu0 %v4425
        %v5058 = vpop.f32.mrb[0].mxu0
        %v5059 = vadd.f32 %v4950, %v5058
        %v5060 = vpop.f32.mrb[0].mxu0
        %5061 = vmatprep.mubr.f32.mxu0 %v4439
        %5062 = vmatmul.mubr.f32.gmra.mrb[0].mxu0 %v4438
        %v5063 = vpop.f32.mrb[0].mxu0
        %v5064 = vadd.f32 %v4950, %v5063
        %v5065 = vpop.f32.mrb[0].mxu0
        %5066 = vmatprep.mubr.f32.mxu0 %v4452
        %5067 = vmatmul.mubr.f32.gmra.mrb[0].mxu0 %v4451
        %v5068 = vpop.f32.mrb[0].mxu0
        %v5069 = vadd.f32 %v4950, %v5068
        %v5070 = vpop.f32.mrb[0].mxu0
        %5071 = vmatprep.mubr.f32.mxu0 %v4465
        %5072 = vmatmul.mubr.f32.gmra.mrb[0].mxu0 %v4464
        %v5073 = vpop.f32.mrb[0].mxu0
        %v5074 = vadd.f32 %v4950, %v5073
        %v5075 = vpop.f32.mrb[0].mxu0
        %5076 = vmatprep.mubr.f32.mxu0 %v4478
        %5077 = vmatmul.mubr.f32.gmra.mrb[0].mxu0 %v4477
        %v5078 = vpop.f32.mrb[0].mxu0
        %v5079 = vadd.f32 %v4950, %v5078
        %v5080 = vpop.f32.mrb[0].mxu0
        %5081 = vmatprep.mubr.f32.mxu0 %v4491
        %5082 = vmatmul.mubr.f32.gmra.mrb[0].mxu0 %v4490
        %v5083 = vpop.f32.mrb[0].mxu0
        %v5084 = vadd.f32 %v4950, %v5083
        %v5085 = vpop.f32.mrb[0].mxu0
        %5086 = vmatprep.mubr.f32.mxu0 %v4504
        %5087 = vmatmul.mubr.f32.gmra.mrb[0].mxu0 %v4503
        %v5088 = vpop.f32.mrb[0].mxu0
        %v5089 = vadd.f32 %v4950, %v5088
        %v5090 = vpop.f32.mrb[0].mxu0
        %5091 = vmatprep.mubr.f32.mxu0 %v4517
        %5092 = vmatmul.mubr.f32.gmra.mrb[0].mxu0 %v4516
        %v5093 = vpop.f32.mrb[0].mxu0
        %v5094 = vadd.f32 %v4950, %v5093
        %v5095 = vpop.f32.mrb[0].mxu0
        %5096 = vmatprep.mubr.f32.mxu0 %v4530
        %5097 = vmatmul.mubr.f32.gmra.mrb[0].mxu0 %v4529
        %v5098 = vpop.f32.mrb[0].mxu0
        %v5099 = vadd.f32 %v4950, %v5098
        %v5100 = vpop.f32.mrb[0].mxu0
        %5101 = vmatprep.mubr.f32.mxu0 %v4543
        %5102 = vmatmul.mubr.f32.gmra.mrb[0].mxu0 %v4542
        %v5103 = vpop.f32.mrb[0].mxu0
        %v5104 = vadd.f32 %v4950, %v5103
        %v5105 = vpop.f32.mrb[0].mxu0
        %5106 = vmatprep.mubr.f32.mxu0 %v4556
        %5107 = vmatmul.mubr.f32.gmra.mrb[0].mxu0 %v4555
        %v5108 = vpop.f32.mrb[0].mxu0
        %v5109 = vadd.f32 %v4950, %v5108
        %v5110 = vpop.f32.mrb[0].mxu0
        %5111 = vmatprep.mubr.f32.mxu0 %v4569
        %5112 = vmatmul.mubr.f32.gmra.mrb[0].mxu0 %v4568
        %v5113 = vpop.f32.mrb[0].mxu0
        %v5114 = vadd.f32 %v4950, %v5113
        %v5115 = vpop.f32.mrb[0].mxu0
        %5116 = vmatprep.mubr.f32.mxu0 %v4582
        %5117 = vmatmul.mubr.f32.gmra.mrb[0].mxu0 %v4581
        %v5118 = vpop.f32.mrb[0].mxu0
        %v5119 = vadd.f32 %v4950, %v5118
        %v5120 = vpop.f32.mrb[0].mxu0
        %5121 = vmatprep.mubr.f32.mxu0 %v4595
        %5122 = vmatmul.mubr.f32.gmra.mrb[0].mxu0 %v4594
        %v5123 = vpop.f32.mrb[0].mxu0
        %v5124 = vadd.f32 %v4950, %v5123
        %v5125 = vpop.f32.mrb[0].mxu0
        %5126 = vmatprep.mubr.f32.mxu0 %v4608
        %5127 = vmatmul.mubr.f32.gmra.mrb[0].mxu0 %v4607
        %v5128 = vpop.f32.mrb[0].mxu0
        %v5129 = vadd.f32 %v4950, %v5128
        %v5130 = vpop.f32.mrb[0].mxu0
        %5131 = vmatprep.mubr.f32.mxu0 %v4621
        %5132 = vmatmul.mubr.f32.gmra.mrb[0].mxu0 %v4620
        %v5133 = vpop.f32.mrb[0].mxu0
        %v5134 = vadd.f32 %v4950, %v5133
        %v5135 = vpop.f32.mrb[0].mxu0
        %5136 = vmatprep.mubr.f32.mxu0 %v4634
        %5137 = vmatmul.mubr.f32.gmra.mrb[0].mxu0 %v4633
        %v5138 = vpop.f32.mrb[0].mxu0
        %v5139 = vadd.f32 %v4950, %v5138
        %v5140 = vpop.f32.mrb[0].mxu0
        %5141 = vmatprep.mubr.f32.mxu0 %v4647
        %5142 = vmatmul.mubr.f32.gmra.mrb[0].mxu0 %v4646
        %v5143 = vpop.f32.mrb[0].mxu0
        %v5144 = vadd.f32 %v4950, %v5143
        %v5145 = vpop.f32.mrb[0].mxu0
        %5146 = vmatprep.mubr.f32.mxu0 %v4660
        %5147 = vmatmul.mubr.f32.gmra.mrb[0].mxu0 %v4659
        %v5148 = vpop.f32.mrb[0].mxu0
        %v5149 = vadd.f32 %v4950, %v5148
        %v5150 = vpop.f32.mrb[0].mxu0
        %5151 = vmatprep.mubr.f32.mxu0 %v4673
        %5152 = vmatmul.mubr.f32.gmra.mrb[0].mxu0 %v4672
        %v5153 = vpop.f32.mrb[0].mxu0
        %v5154 = vadd.f32 %v4950, %v5153
        %v5155 = vpop.f32.mrb[0].mxu0
        %5156 = vmatprep.mubr.f32.mxu0 %v4686
        %5157 = vmatmul.mubr.f32.gmra.mrb[0].mxu0 %v4685
        %v5158 = vpop.f32.mrb[0].mxu0
        %v5159 = vadd.f32 %v4950, %v5158
        %v5160 = vpop.f32.mrb[0].mxu0
        %5161 = vmatprep.mubr.f32.mxu0 %v4699
        %5162 = vmatmul.mubr.f32.gmra.mrb[0].mxu0 %v4698
        %v5163 = vpop.f32.mrb[0].mxu0
        %v5164 = vadd.f32 %v4950, %v5163
        %v5165 = vpop.f32.mrb[0].mxu0
        %5166 = vmatprep.mubr.f32.mxu0 %v4712
        %5167 = vmatmul.mubr.f32.gmra.mrb[0].mxu0 %v4711
        %v5168 = vpop.f32.mrb[0].mxu0
        %v5169 = vadd.f32 %v4950, %v5168
        %v5170 = vpop.f32.mrb[0].mxu0
        %5171 = vmatprep.mubr.f32.mxu0 %v4725
        %5172 = vmatmul.mubr.f32.gmra.mrb[0].mxu0 %v4724
        %v5173 = vpop.f32.mrb[0].mxu0
        %v5174 = vadd.f32 %v4950, %v5173
        %v5175 = vpop.f32.mrb[0].mxu0
        %5176 = vdwg.mxu0
        %5177 = vmatprep.subr.mxu0 0.0
        %5178 = vmatpush1.msra.mxu0 %v4769
        %5179 = vmatprep.subr.mxu0 0.0
        %5180 = vmatpush1.msra.mxu0 %v4770
        %5181 = vmatprep.subr.mxu0 0.0
        %5182 = vmatpush1.msra.mxu0 %v4771
        %5183 = vmatprep.subr.mxu0 0.0
        %5184 = vmatpush1.msra.mxu0 %v4772
        %5185 = vmatprep.subr.mxu0 0.0
        %5186 = vmatpush1.msra.mxu0 %v4773
        %5187 = vmatprep.subr.mxu0 0.0
        %5188 = vmatpush1.msra.mxu0 %v4774
        %5189 = vmatprep.subr.mxu0 0.0
        %5190 = vmatpush1.msra.mxu0 %v4775
        %5191 = vmatprep.subr.mxu0 0.0
        %5192 = vmatpush1.msra.mxu0 %v4776
        %5193 = vmatprep.subr.mxu0 0.0
        %5194 = vmatpush1.msra.mxu0 %v4777
        %5195 = vmatprep.subr.mxu0 0.0
        %5196 = vmatpush1.msra.mxu0 %v4778
        %5197 = vmatprep.subr.mxu0 0.0
        %5198 = vmatpush1.msra.mxu0 %v4779
        %5199 = vmatprep.subr.mxu0 0.0
        %5200 = vmatpush1.msra.mxu0 %v4780
        %5201 = vmatprep.subr.mxu0 0.0
        %5202 = vmatpush1.msra.mxu0 %v4781
        %5203 = vmatprep.subr.mxu0 0.0
        %5204 = vmatpush1.msra.mxu0 %v4782
        %5205 = vmatprep.subr.mxu0 0.0
        %5206 = vmatpush1.msra.mxu0 %v4783
        %5207 = vmatprep.subr.mxu0 0.0
        %5208 = vmatpush1.msra.mxu0 %v4784
        %5209 = vmatprep.subr.mxu0 0.0
        %5210 = vmatpush1.msra.mxu0 %v4785
        %5211 = vmatprep.subr.mxu0 0.0
        %5212 = vmatpush1.msra.mxu0 %v4786
        %5213 = vmatprep.subr.mxu0 0.0
        %5214 = vmatpush1.msra.mxu0 %v4787
        %5215 = vmatprep.subr.mxu0 0.0
        %5216 = vmatpush1.msra.mxu0 %v4788
        %5217 = vmatprep.subr.mxu0 0.0
        %5218 = vmatpush1.msra.mxu0 %v4789
        %5219 = vmatprep.subr.mxu0 0.0
        %5220 = vmatpush1.msra.mxu0 %v4790
        %5221 = vmatprep.subr.mxu0 0.0
        %5222 = vmatpush1.msra.mxu0 %v4791
        %5223 = vmatprep.subr.mxu0 0.0
        %5224 = vmatpush1.msra.mxu0 %v4792
        %5225 = vmatprep.subr.mxu0 0.0
        %5226 = vmatpush1.msra.mxu0 %v4793
        %5227 = vmatprep.subr.mxu0 0.0
        %5228 = vmatpush1.msra.mxu0 %v4794
        %5229 = vmatprep.subr.mxu0 0.0
        %5230 = vmatpush1.msra.mxu0 %v4795
        %5231 = vmatprep.subr.mxu0 0.0
        %5232 = vmatpush1.msra.mxu0 %v4796
        %5233 = vmatprep.subr.mxu0 0.0
        %5234 = vmatpush1.msra.mxu0 %v4797
        %5235 = vmatprep.subr.mxu0 0.0
        %5236 = vmatpush1.msra.mxu0 %v4798
        %5237 = vmatprep.subr.mxu0 0.0
        %5238 = vmatpush1.msra.mxu0 %v4799
        %5239 = vmatprep.subr.mxu0 0.0
        %5240 = vmatpush1.msra.mxu0 %v4800
        %5241 = vmatprep.mubr.f32.mxu0 %v4324
        %5242 = vmatmul.mubr.f32.gmra.mrb[0].mxu0 %v4323
        %v5243 = vpop.f32.mrb[0].mxu0
        %v5244 = vadd.f32 %v5019, %v5243
        %v5245 = vpop.f32.mrb[0].mxu0
        %5246 = vmatprep.mubr.f32.mxu0 %v4337
        %5247 = vmatmul.mubr.f32.gmra.mrb[0].mxu0 %v4336
        %v5248 = vpop.f32.mrb[0].mxu0
        %v5249 = vadd.f32 %v5024, %v5248
        %v5250 = vpop.f32.mrb[0].mxu0
        %5251 = vmatprep.mubr.f32.mxu0 %v4350
        %5252 = vmatmul.mubr.f32.gmra.mrb[0].mxu0 %v4349
        %v5253 = vpop.f32.mrb[0].mxu0
        %v5254 = vadd.f32 %v5029, %v5253
        %v5255 = vpop.f32.mrb[0].mxu0
        %5256 = vmatprep.mubr.f32.mxu0 %v4363
        %5257 = vmatmul.mubr.f32.gmra.mrb[0].mxu0 %v4362
        %v5258 = vpop.f32.mrb[0].mxu0
        %v5259 = vadd.f32 %v5034, %v5258
        %v5260 = vpop.f32.mrb[0].mxu0
        %5261 = vmatprep.mubr.f32.mxu0 %v4376
        %5262 = vmatmul.mubr.f32.gmra.mrb[0].mxu0 %v4375
        %v5263 = vpop.f32.mrb[0].mxu0
        %v5264 = vadd.f32 %v5039, %v5263
        %v5265 = vpop.f32.mrb[0].mxu0
        %5266 = vmatprep.mubr.f32.mxu0 %v4389
        %5267 = vmatmul.mubr.f32.gmra.mrb[0].mxu0 %v4388
        %v5268 = vpop.f32.mrb[0].mxu0
        %v5269 = vadd.f32 %v5044, %v5268
        %v5270 = vpop.f32.mrb[0].mxu0
        %5271 = vmatprep.mubr.f32.mxu0 %v4402
        %5272 = vmatmul.mubr.f32.gmra.mrb[0].mxu0 %v4401
        %v5273 = vpop.f32.mrb[0].mxu0
        %v5274 = vadd.f32 %v5049, %v5273
        %v5275 = vpop.f32.mrb[0].mxu0
        %5276 = vmatprep.mubr.f32.mxu0 %v4415
        %5277 = vmatmul.mubr.f32.gmra.mrb[0].mxu0 %v4414
        %v5278 = vpop.f32.mrb[0].mxu0
        %v5279 = vadd.f32 %v5054, %v5278
        %v5280 = vpop.f32.mrb[0].mxu0
        %5281 = vmatprep.mubr.f32.mxu0 %v4428
        %5282 = vmatmul.mubr.f32.gmra.mrb[0].mxu0 %v4427
        %v5283 = vpop.f32.mrb[0].mxu0
        %v5284 = vadd.f32 %v5059, %v5283
        %v5285 = vpop.f32.mrb[0].mxu0
        %5286 = vmatprep.mubr.f32.mxu0 %v4441
        %5287 = vmatmul.mubr.f32.gmra.mrb[0].mxu0 %v4440
        %v5288 = vpop.f32.mrb[0].mxu0
        %v5289 = vadd.f32 %v5064, %v5288
        %v5290 = vpop.f32.mrb[0].mxu0
        %5291 = vmatprep.mubr.f32.mxu0 %v4454
        %5292 = vmatmul.mubr.f32.gmra.mrb[0].mxu0 %v4453
        %v5293 = vpop.f32.mrb[0].mxu0
        %v5294 = vadd.f32 %v5069, %v5293
        %v5295 = vpop.f32.mrb[0].mxu0
        %5296 = vmatprep.mubr.f32.mxu0 %v4467
        %5297 = vmatmul.mubr.f32.gmra.mrb[0].mxu0 %v4466
        %v5298 = vpop.f32.mrb[0].mxu0
        %v5299 = vadd.f32 %v5074, %v5298
        %v5300 = vpop.f32.mrb[0].mxu0
        %5301 = vmatprep.mubr.f32.mxu0 %v4480
        %5302 = vmatmul.mubr.f32.gmra.mrb[0].mxu0 %v4479
        %v5303 = vpop.f32.mrb[0].mxu0
        %v5304 = vadd.f32 %v5079, %v5303
        %v5305 = vpop.f32.mrb[0].mxu0
        %5306 = vmatprep.mubr.f32.mxu0 %v4493
        %5307 = vmatmul.mubr.f32.gmra.mrb[0].mxu0 %v4492
        %v5308 = vpop.f32.mrb[0].mxu0
        %v5309 = vadd.f32 %v5084, %v5308
        %v5310 = vpop.f32.mrb[0].mxu0
        %5311 = vmatprep.mubr.f32.mxu0 %v4506
        %5312 = vmatmul.mubr.f32.gmra.mrb[0].mxu0 %v4505
        %v5313 = vpop.f32.mrb[0].mxu0
        %v5314 = vadd.f32 %v5089, %v5313
        %v5315 = vpop.f32.mrb[0].mxu0
        %5316 = vmatprep.mubr.f32.mxu0 %v4519
        %5317 = vmatmul.mubr.f32.gmra.mrb[0].mxu0 %v4518
        %v5318 = vpop.f32.mrb[0].mxu0
        %v5319 = vadd.f32 %v5094, %v5318
        %v5320 = vpop.f32.mrb[0].mxu0
        %5321 = vmatprep.mubr.f32.mxu0 %v4532
        %5322 = vmatmul.mubr.f32.gmra.mrb[0].mxu0 %v4531
        %v5323 = vpop.f32.mrb[0].mxu0
        %v5324 = vadd.f32 %v5099, %v5323
        %v5325 = vpop.f32.mrb[0].mxu0
        %5326 = vmatprep.mubr.f32.mxu0 %v4545
        %5327 = vmatmul.mubr.f32.gmra.mrb[0].mxu0 %v4544
        %v5328 = vpop.f32.mrb[0].mxu0
        %v5329 = vadd.f32 %v5104, %v5328
        %v5330 = vpop.f32.mrb[0].mxu0
        %5331 = vmatprep.mubr.f32.mxu0 %v4558
        %5332 = vmatmul.mubr.f32.gmra.mrb[0].mxu0 %v4557
        %v5333 = vpop.f32.mrb[0].mxu0
        %v5334 = vadd.f32 %v5109, %v5333
        %v5335 = vpop.f32.mrb[0].mxu0
        %5336 = vmatprep.mubr.f32.mxu0 %v4571
        %5337 = vmatmul.mubr.f32.gmra.mrb[0].mxu0 %v4570
        %v5338 = vpop.f32.mrb[0].mxu0
        %v5339 = vadd.f32 %v5114, %v5338
        %v5340 = vpop.f32.mrb[0].mxu0
        %5341 = vmatprep.mubr.f32.mxu0 %v4584
        %5342 = vmatmul.mubr.f32.gmra.mrb[0].mxu0 %v4583
        %v5343 = vpop.f32.mrb[0].mxu0
        %v5344 = vadd.f32 %v5119, %v5343
        %v5345 = vpop.f32.mrb[0].mxu0
        %5346 = vmatprep.mubr.f32.mxu0 %v4597
        %5347 = vmatmul.mubr.f32.gmra.mrb[0].mxu0 %v4596
        %v5348 = vpop.f32.mrb[0].mxu0
        %v5349 = vadd.f32 %v5124, %v5348
        %v5350 = vpop.f32.mrb[0].mxu0
        %5351 = vmatprep.mubr.f32.mxu0 %v4610
        %5352 = vmatmul.mubr.f32.gmra.mrb[0].mxu0 %v4609
        %v5353 = vpop.f32.mrb[0].mxu0
        %v5354 = vadd.f32 %v5129, %v5353
        %v5355 = vpop.f32.mrb[0].mxu0
        %5356 = vmatprep.mubr.f32.mxu0 %v4623
        %5357 = vmatmul.mubr.f32.gmra.mrb[0].mxu0 %v4622
        %v5358 = vpop.f32.mrb[0].mxu0
        %v5359 = vadd.f32 %v5134, %v5358
        %v5360 = vpop.f32.mrb[0].mxu0
        %5361 = vmatprep.mubr.f32.mxu0 %v4636
        %5362 = vmatmul.mubr.f32.gmra.mrb[0].mxu0 %v4635
        %v5363 = vpop.f32.mrb[0].mxu0
        %v5364 = vadd.f32 %v5139, %v5363
        %v5365 = vpop.f32.mrb[0].mxu0
        %5366 = vmatprep.mubr.f32.mxu0 %v4649
        %5367 = vmatmul.mubr.f32.gmra.mrb[0].mxu0 %v4648
        %v5368 = vpop.f32.mrb[0].mxu0
        %v5369 = vadd.f32 %v5144, %v5368
        %v5370 = vpop.f32.mrb[0].mxu0
        %5371 = vmatprep.mubr.f32.mxu0 %v4662
        %5372 = vmatmul.mubr.f32.gmra.mrb[0].mxu0 %v4661
        %v5373 = vpop.f32.mrb[0].mxu0
        %v5374 = vadd.f32 %v5149, %v5373
        %v5375 = vpop.f32.mrb[0].mxu0
        %5376 = vmatprep.mubr.f32.mxu0 %v4675
        %5377 = vmatmul.mubr.f32.gmra.mrb[0].mxu0 %v4674
        %v5378 = vpop.f32.mrb[0].mxu0
        %v5379 = vadd.f32 %v5154, %v5378
        %v5380 = vpop.f32.mrb[0].mxu0
        %5381 = vmatprep.mubr.f32.mxu0 %v4688
        %5382 = vmatmul.mubr.f32.gmra.mrb[0].mxu0 %v4687
        %v5383 = vpop.f32.mrb[0].mxu0
        %v5384 = vadd.f32 %v5159, %v5383
        %v5385 = vpop.f32.mrb[0].mxu0
        %5386 = vmatprep.mubr.f32.mxu0 %v4701
        %5387 = vmatmul.mubr.f32.gmra.mrb[0].mxu0 %v4700
        %v5388 = vpop.f32.mrb[0].mxu0
        %v5389 = vadd.f32 %v5164, %v5388
        %v5390 = vpop.f32.mrb[0].mxu0
        %5391 = vmatprep.mubr.f32.mxu0 %v4714
        %5392 = vmatmul.mubr.f32.gmra.mrb[0].mxu0 %v4713
        %v5393 = vpop.f32.mrb[0].mxu0
        %v5394 = vadd.f32 %v5169, %v5393
        %v5395 = vpop.f32.mrb[0].mxu0
        %5396 = vmatprep.mubr.f32.mxu0 %v4727
        %5397 = vmatmul.mubr.f32.gmra.mrb[0].mxu0 %v4726
        %v5398 = vpop.f32.mrb[0].mxu0
        %v5399 = vadd.f32 %v5174, %v5398
        %v5400 = vpop.f32.mrb[0].mxu0
        %5401 = vdwg.mxu0
        %5402 = vmatprep.subr.mxu0 0.0
        %5403 = vmatpush1.msra.mxu0 %v4801
        %5404 = vmatprep.subr.mxu0 0.0
        %5405 = vmatpush1.msra.mxu0 %v4802
        %5406 = vmatprep.subr.mxu0 0.0
        %5407 = vmatpush1.msra.mxu0 %v4803
        %5408 = vmatprep.subr.mxu0 0.0
        %5409 = vmatpush1.msra.mxu0 %v4804
        %5410 = vmatprep.subr.mxu0 0.0
        %5411 = vmatpush1.msra.mxu0 %v4805
        %5412 = vmatprep.subr.mxu0 0.0
        %5413 = vmatpush1.msra.mxu0 %v4806
        %5414 = vmatprep.subr.mxu0 0.0
        %5415 = vmatpush1.msra.mxu0 %v4807
        %5416 = vmatprep.subr.mxu0 0.0
        %5417 = vmatpush1.msra.mxu0 %v4808
        %5418 = vmatprep.subr.mxu0 0.0
        %5419 = vmatpush1.msra.mxu0 %v4809
        %5420 = vmatprep.subr.mxu0 0.0
        %5421 = vmatpush1.msra.mxu0 %v4810
        %5422 = vmatprep.subr.mxu0 0.0
        %5423 = vmatpush1.msra.mxu0 %v4811
        %5424 = vmatprep.subr.mxu0 0.0
        %5425 = vmatpush1.msra.mxu0 %v4812
        %5426 = vmatprep.subr.mxu0 0.0
        %5427 = vmatpush1.msra.mxu0 %v4813
        %5428 = vmatprep.subr.mxu0 0.0
        %5429 = vmatpush1.msra.mxu0 %v4814
        %5430 = vmatprep.subr.mxu0 0.0
        %5431 = vmatpush1.msra.mxu0 %v4815
        %5432 = vmatprep.subr.mxu0 0.0
        %5433 = vmatpush1.msra.mxu0 %v4816
        %5434 = vmatprep.subr.mxu0 0.0
        %5435 = vmatpush1.msra.mxu0 %v4817
        %5436 = vmatprep.subr.mxu0 0.0
        %5437 = vmatpush1.msra.mxu0 %v4818
        %5438 = vmatprep.subr.mxu0 0.0
        %5439 = vmatpush1.msra.mxu0 %v4819
        %5440 = vmatprep.subr.mxu0 0.0
        %5441 = vmatpush1.msra.mxu0 %v4820
        %5442 = vmatprep.subr.mxu0 0.0
        %5443 = vmatpush1.msra.mxu0 %v4821
        %5444 = vmatprep.subr.mxu0 0.0
        %5445 = vmatpush1.msra.mxu0 %v4822
        %5446 = vmatprep.subr.mxu0 0.0
        %5447 = vmatpush1.msra.mxu0 %v4823
        %5448 = vmatprep.subr.mxu0 0.0
        %5449 = vmatpush1.msra.mxu0 %v4824
        %5450 = vmatprep.subr.mxu0 0.0
        %5451 = vmatpush1.msra.mxu0 %v4825
        %5452 = vmatprep.subr.mxu0 0.0
        %5453 = vmatpush1.msra.mxu0 %v4826
        %5454 = vmatprep.subr.mxu0 0.0
        %5455 = vmatpush1.msra.mxu0 %v4827
        %5456 = vmatprep.subr.mxu0 0.0
        %5457 = vmatpush1.msra.mxu0 %v4828
        %5458 = vmatprep.subr.mxu0 0.0
        %5459 = vmatpush1.msra.mxu0 %v4829
        %5460 = vmatprep.subr.mxu0 0.0
        %5461 = vmatpush1.msra.mxu0 %v4830
        %5462 = vmatprep.subr.mxu0 0.0
        %5463 = vmatpush1.msra.mxu0 %v4831
        %5464 = vmatprep.subr.mxu0 0.0
        %5465 = vmatpush1.msra.mxu0 %v4832
        %5466 = vmatprep.mubr.f32.mxu0 %v4326
        %5467 = vmatmul.mubr.f32.gmra.mrb[0].mxu0 %v4325
        %v5468 = vpop.f32.mrb[0].mxu0
        %v5469 = vadd.f32 %v5244, %v5468
        %v5470 = vpop.f32.mrb[0].mxu0
        %5471 = vmatprep.mubr.f32.mxu0 %v4339
        %5472 = vmatmul.mubr.f32.gmra.mrb[0].mxu0 %v4338
        %v5473 = vpop.f32.mrb[0].mxu0
        %v5474 = vadd.f32 %v5249, %v5473
        %v5475 = vpop.f32.mrb[0].mxu0
        %5476 = vmatprep.mubr.f32.mxu0 %v4352
        %5477 = vmatmul.mubr.f32.gmra.mrb[0].mxu0 %v4351
        %v5478 = vpop.f32.mrb[0].mxu0
        %v5479 = vadd.f32 %v5254, %v5478
        %v5480 = vpop.f32.mrb[0].mxu0
        %5481 = vmatprep.mubr.f32.mxu0 %v4365
        %5482 = vmatmul.mubr.f32.gmra.mrb[0].mxu0 %v4364
        %v5483 = vpop.f32.mrb[0].mxu0
        %v5484 = vadd.f32 %v5259, %v5483
        %v5485 = vpop.f32.mrb[0].mxu0
        %5486 = vmatprep.mubr.f32.mxu0 %v4378
        %5487 = vmatmul.mubr.f32.gmra.mrb[0].mxu0 %v4377
        %v5488 = vpop.f32.mrb[0].mxu0
        %v5489 = vadd.f32 %v5264, %v5488
        %v5490 = vpop.f32.mrb[0].mxu0
        %5491 = vmatprep.mubr.f32.mxu0 %v4391
        %5492 = vmatmul.mubr.f32.gmra.mrb[0].mxu0 %v4390
        %v5493 = vpop.f32.mrb[0].mxu0
        %v5494 = vadd.f32 %v5269, %v5493
        %v5495 = vpop.f32.mrb[0].mxu0
        %5496 = vmatprep.mubr.f32.mxu0 %v4404
        %5497 = vmatmul.mubr.f32.gmra.mrb[0].mxu0 %v4403
        %v5498 = vpop.f32.mrb[0].mxu0
        %v5499 = vadd.f32 %v5274, %v5498
        %v5500 = vpop.f32.mrb[0].mxu0
        %5501 = vmatprep.mubr.f32.mxu0 %v4417
        %5502 = vmatmul.mubr.f32.gmra.mrb[0].mxu0 %v4416
        %v5503 = vpop.f32.mrb[0].mxu0
        %v5504 = vadd.f32 %v5279, %v5503
        %v5505 = vpop.f32.mrb[0].mxu0
        %5506 = vmatprep.mubr.f32.mxu0 %v4430
        %5507 = vmatmul.mubr.f32.gmra.mrb[0].mxu0 %v4429
        %v5508 = vpop.f32.mrb[0].mxu0
        %v5509 = vadd.f32 %v5284, %v5508
        %v5510 = vpop.f32.mrb[0].mxu0
        %5511 = vmatprep.mubr.f32.mxu0 %v4443
        %5512 = vmatmul.mubr.f32.gmra.mrb[0].mxu0 %v4442
        %v5513 = vpop.f32.mrb[0].mxu0
        %v5514 = vadd.f32 %v5289, %v5513
        %v5515 = vpop.f32.mrb[0].mxu0
        %5516 = vmatprep.mubr.f32.mxu0 %v4456
        %5517 = vmatmul.mubr.f32.gmra.mrb[0].mxu0 %v4455
        %v5518 = vpop.f32.mrb[0].mxu0
        %v5519 = vadd.f32 %v5294, %v5518
        %v5520 = vpop.f32.mrb[0].mxu0
        %5521 = vmatprep.mubr.f32.mxu0 %v4469
        %5522 = vmatmul.mubr.f32.gmra.mrb[0].mxu0 %v4468
        %v5523 = vpop.f32.mrb[0].mxu0
        %v5524 = vadd.f32 %v5299, %v5523
        %v5525 = vpop.f32.mrb[0].mxu0
        %5526 = vmatprep.mubr.f32.mxu0 %v4482
        %5527 = vmatmul.mubr.f32.gmra.mrb[0].mxu0 %v4481
        %v5528 = vpop.f32.mrb[0].mxu0
        %v5529 = vadd.f32 %v5304, %v5528
        %v5530 = vpop.f32.mrb[0].mxu0
        %5531 = vmatprep.mubr.f32.mxu0 %v4495
        %5532 = vmatmul.mubr.f32.gmra.mrb[0].mxu0 %v4494
        %v5533 = vpop.f32.mrb[0].mxu0
        %v5534 = vadd.f32 %v5309, %v5533
        %v5535 = vpop.f32.mrb[0].mxu0
        %5536 = vmatprep.mubr.f32.mxu0 %v4508
        %5537 = vmatmul.mubr.f32.gmra.mrb[0].mxu0 %v4507
        %v5538 = vpop.f32.mrb[0].mxu0
        %v5539 = vadd.f32 %v5314, %v5538
        %v5540 = vpop.f32.mrb[0].mxu0
        %5541 = vmatprep.mubr.f32.mxu0 %v4521
        %5542 = vmatmul.mubr.f32.gmra.mrb[0].mxu0 %v4520
        %v5543 = vpop.f32.mrb[0].mxu0
        %v5544 = vadd.f32 %v5319, %v5543
        %v5545 = vpop.f32.mrb[0].mxu0
        %5546 = vmatprep.mubr.f32.mxu0 %v4534
        %5547 = vmatmul.mubr.f32.gmra.mrb[0].mxu0 %v4533
        %v5548 = vpop.f32.mrb[0].mxu0
        %v5549 = vadd.f32 %v5324, %v5548
        %v5550 = vpop.f32.mrb[0].mxu0
        %5551 = vmatprep.mubr.f32.mxu0 %v4547
        %5552 = vmatmul.mubr.f32.gmra.mrb[0].mxu0 %v4546
        %v5553 = vpop.f32.mrb[0].mxu0
        %v5554 = vadd.f32 %v5329, %v5553
        %v5555 = vpop.f32.mrb[0].mxu0
        %5556 = vmatprep.mubr.f32.mxu0 %v4560
        %5557 = vmatmul.mubr.f32.gmra.mrb[0].mxu0 %v4559
        %v5558 = vpop.f32.mrb[0].mxu0
        %v5559 = vadd.f32 %v5334, %v5558
        %v5560 = vpop.f32.mrb[0].mxu0
        %5561 = vmatprep.mubr.f32.mxu0 %v4573
        %5562 = vmatmul.mubr.f32.gmra.mrb[0].mxu0 %v4572
        %v5563 = vpop.f32.mrb[0].mxu0
        %v5564 = vadd.f32 %v5339, %v5563
        %v5565 = vpop.f32.mrb[0].mxu0
        %5566 = vmatprep.mubr.f32.mxu0 %v4586
        %5567 = vmatmul.mubr.f32.gmra.mrb[0].mxu0 %v4585
        %v5568 = vpop.f32.mrb[0].mxu0
        %v5569 = vadd.f32 %v5344, %v5568
        %v5570 = vpop.f32.mrb[0].mxu0
        %5571 = vmatprep.mubr.f32.mxu0 %v4599
        %5572 = vmatmul.mubr.f32.gmra.mrb[0].mxu0 %v4598
        %v5573 = vpop.f32.mrb[0].mxu0
        %v5574 = vadd.f32 %v5349, %v5573
        %v5575 = vpop.f32.mrb[0].mxu0
        %5576 = vmatprep.mubr.f32.mxu0 %v4612
        %5577 = vmatmul.mubr.f32.gmra.mrb[0].mxu0 %v4611
        %v5578 = vpop.f32.mrb[0].mxu0
        %v5579 = vadd.f32 %v5354, %v5578
        %v5580 = vpop.f32.mrb[0].mxu0
        %5581 = vmatprep.mubr.f32.mxu0 %v4625
        %5582 = vmatmul.mubr.f32.gmra.mrb[0].mxu0 %v4624
        %v5583 = vpop.f32.mrb[0].mxu0
        %v5584 = vadd.f32 %v5359, %v5583
        %v5585 = vpop.f32.mrb[0].mxu0
        %5586 = vmatprep.mubr.f32.mxu0 %v4638
        %5587 = vmatmul.mubr.f32.gmra.mrb[0].mxu0 %v4637
        %v5588 = vpop.f32.mrb[0].mxu0
        %v5589 = vadd.f32 %v5364, %v5588
        %v5590 = vpop.f32.mrb[0].mxu0
        %5591 = vmatprep.mubr.f32.mxu0 %v4651
        %5592 = vmatmul.mubr.f32.gmra.mrb[0].mxu0 %v4650
        %v5593 = vpop.f32.mrb[0].mxu0
        %v5594 = vadd.f32 %v5369, %v5593
        %v5595 = vpop.f32.mrb[0].mxu0
        %5596 = vmatprep.mubr.f32.mxu0 %v4664
        %5597 = vmatmul.mubr.f32.gmra.mrb[0].mxu0 %v4663
        %v5598 = vpop.f32.mrb[0].mxu0
        %v5599 = vadd.f32 %v5374, %v5598
        %v5600 = vpop.f32.mrb[0].mxu0
        %5601 = vmatprep.mubr.f32.mxu0 %v4677
        %5602 = vmatmul.mubr.f32.gmra.mrb[0].mxu0 %v4676
        %v5603 = vpop.f32.mrb[0].mxu0
        %v5604 = vadd.f32 %v5379, %v5603
        %v5605 = vpop.f32.mrb[0].mxu0
        %5606 = vmatprep.mubr.f32.mxu0 %v4690
        %5607 = vmatmul.mubr.f32.gmra.mrb[0].mxu0 %v4689
        %v5608 = vpop.f32.mrb[0].mxu0
        %v5609 = vadd.f32 %v5384, %v5608
        %v5610 = vpop.f32.mrb[0].mxu0
        %5611 = vmatprep.mubr.f32.mxu0 %v4703
        %5612 = vmatmul.mubr.f32.gmra.mrb[0].mxu0 %v4702
        %v5613 = vpop.f32.mrb[0].mxu0
        %v5614 = vadd.f32 %v5389, %v5613
        %v5615 = vpop.f32.mrb[0].mxu0
        %5616 = vmatprep.mubr.f32.mxu0 %v4716
        %5617 = vmatmul.mubr.f32.gmra.mrb[0].mxu0 %v4715
        %v5618 = vpop.f32.mrb[0].mxu0
        %v5619 = vadd.f32 %v5394, %v5618
        %v5620 = vpop.f32.mrb[0].mxu0
        %5621 = vmatprep.mubr.f32.mxu0 %v4729
        %5622 = vmatmul.mubr.f32.gmra.mrb[0].mxu0 %v4728
        %v5623 = vpop.f32.mrb[0].mxu0
        %v5624 = vadd.f32 %v5399, %v5623
        %v5625 = vpop.f32.mrb[0].mxu0
        %5626 = vdwg.mxu0
        %5627 = vmatprep.subr.mxu0 0.0
        %5628 = vmatpush1.msra.mxu0 %v4833
        %5629 = vmatprep.subr.mxu0 0.0
        %5630 = vmatpush1.msra.mxu0 %v4834
        %5631 = vmatprep.subr.mxu0 0.0
        %5632 = vmatpush1.msra.mxu0 %v4835
        %5633 = vmatprep.subr.mxu0 0.0
        %5634 = vmatpush1.msra.mxu0 %v4836
        %5635 = vmatprep.subr.mxu0 0.0
        %5636 = vmatpush1.msra.mxu0 %v4837
        %5637 = vmatprep.subr.mxu0 0.0
        %5638 = vmatpush1.msra.mxu0 %v4838
        %5639 = vmatprep.subr.mxu0 0.0
        %5640 = vmatpush1.msra.mxu0 %v4839
        %5641 = vmatprep.subr.mxu0 0.0
        %5642 = vmatpush1.msra.mxu0 %v4840
        %5643 = vmatprep.subr.mxu0 0.0
        %5644 = vmatpush1.msra.mxu0 %v4841
        %5645 = vmatprep.subr.mxu0 0.0
        %5646 = vmatpush1.msra.mxu0 %v4842
        %5647 = vmatprep.subr.mxu0 0.0
        %5648 = vmatpush1.msra.mxu0 %v4843
        %5649 = vmatprep.subr.mxu0 0.0
        %5650 = vmatpush1.msra.mxu0 %v4844
        %5651 = vmatprep.subr.mxu0 0.0
        %5652 = vmatpush1.msra.mxu0 %v4845
        %5653 = vmatprep.subr.mxu0 0.0
        %5654 = vmatpush1.msra.mxu0 %v4846
        %5655 = vmatprep.subr.mxu0 0.0
        %5656 = vmatpush1.msra.mxu0 %v4847
        %5657 = vmatprep.subr.mxu0 0.0
        %5658 = vmatpush1.msra.mxu0 %v4848
        %5659 = vmatprep.subr.mxu0 0.0
        %5660 = vmatpush1.msra.mxu0 %v4849
        %5661 = vmatprep.subr.mxu0 0.0
        %5662 = vmatpush1.msra.mxu0 %v4850
        %5663 = vmatprep.subr.mxu0 0.0
        %5664 = vmatpush1.msra.mxu0 %v4851
        %5665 = vmatprep.subr.mxu0 0.0
        %5666 = vmatpush1.msra.mxu0 %v4852
        %5667 = vmatprep.subr.mxu0 0.0
        %5668 = vmatpush1.msra.mxu0 %v4853
        %5669 = vmatprep.subr.mxu0 0.0
        %5670 = vmatpush1.msra.mxu0 %v4854
        %5671 = vmatprep.subr.mxu0 0.0
        %5672 = vmatpush1.msra.mxu0 %v4855
        %5673 = vmatprep.subr.mxu0 0.0
        %5674 = vmatpush1.msra.mxu0 %v4856
        %5675 = vmatprep.subr.mxu0 0.0
        %5676 = vmatpush1.msra.mxu0 %v4857
        %5677 = vmatprep.subr.mxu0 0.0
        %5678 = vmatpush1.msra.mxu0 %v4858
        %5679 = vmatprep.subr.mxu0 0.0
        %5680 = vmatpush1.msra.mxu0 %v4859
        %5681 = vmatprep.subr.mxu0 0.0
        %5682 = vmatpush1.msra.mxu0 %v4860
        %5683 = vmatprep.subr.mxu0 0.0
        %5684 = vmatpush1.msra.mxu0 %v4861
        %5685 = vmatprep.subr.mxu0 0.0
        %5686 = vmatpush1.msra.mxu0 %v4862
        %5687 = vmatprep.subr.mxu0 0.0
        %5688 = vmatpush1.msra.mxu0 %v4863
        %5689 = vmatprep.subr.mxu0 0.0
        %5690 = vmatpush1.msra.mxu0 %v4864
        %5691 = vmatprep.mubr.f32.mxu0 %v4328
        %5692 = vmatmul.mubr.f32.gmra.mrb[0].mxu0 %v4327
        %v5693 = vpop.f32.mrb[0].mxu0
        %v5694 = vadd.f32 %v5469, %v5693
        %v5695 = vpop.f32.mrb[0].mxu0
        %5696 = vmatprep.mubr.f32.mxu0 %v4341
        %5697 = vmatmul.mubr.f32.gmra.mrb[0].mxu0 %v4340
        %v5698 = vpop.f32.mrb[0].mxu0
        %v5699 = vadd.f32 %v5474, %v5698
        %v5700 = vpop.f32.mrb[0].mxu0
        %5701 = vmatprep.mubr.f32.mxu0 %v4354
        %5702 = vmatmul.mubr.f32.gmra.mrb[0].mxu0 %v4353
        %v5703 = vpop.f32.mrb[0].mxu0
        %v5704 = vadd.f32 %v5479, %v5703
        %v5705 = vpop.f32.mrb[0].mxu0
        %5706 = vmatprep.mubr.f32.mxu0 %v4367
        %5707 = vmatmul.mubr.f32.gmra.mrb[0].mxu0 %v4366
        %v5708 = vpop.f32.mrb[0].mxu0
        %v5709 = vadd.f32 %v5484, %v5708
        %v5710 = vpop.f32.mrb[0].mxu0
        %5711 = vmatprep.mubr.f32.mxu0 %v4380
        %5712 = vmatmul.mubr.f32.gmra.mrb[0].mxu0 %v4379
        %v5713 = vpop.f32.mrb[0].mxu0
        %v5714 = vadd.f32 %v5489, %v5713
        %v5715 = vpop.f32.mrb[0].mxu0
        %5716 = vmatprep.mubr.f32.mxu0 %v4393
        %5717 = vmatmul.mubr.f32.gmra.mrb[0].mxu0 %v4392
        %v5718 = vpop.f32.mrb[0].mxu0
        %v5719 = vadd.f32 %v5494, %v5718
        %v5720 = vpop.f32.mrb[0].mxu0
        %5721 = vmatprep.mubr.f32.mxu0 %v4406
        %5722 = vmatmul.mubr.f32.gmra.mrb[0].mxu0 %v4405
        %v5723 = vpop.f32.mrb[0].mxu0
        %v5724 = vadd.f32 %v5499, %v5723
        %v5725 = vpop.f32.mrb[0].mxu0
        %5726 = vmatprep.mubr.f32.mxu0 %v4419
        %5727 = vmatmul.mubr.f32.gmra.mrb[0].mxu0 %v4418
        %v5728 = vpop.f32.mrb[0].mxu0
        %v5729 = vadd.f32 %v5504, %v5728
        %v5730 = vpop.f32.mrb[0].mxu0
        %5731 = vmatprep.mubr.f32.mxu0 %v4432
        %5732 = vmatmul.mubr.f32.gmra.mrb[0].mxu0 %v4431
        %v5733 = vpop.f32.mrb[0].mxu0
        %v5734 = vadd.f32 %v5509, %v5733
        %v5735 = vpop.f32.mrb[0].mxu0
        %5736 = vmatprep.mubr.f32.mxu0 %v4445
        %5737 = vmatmul.mubr.f32.gmra.mrb[0].mxu0 %v4444
        %v5738 = vpop.f32.mrb[0].mxu0
        %v5739 = vadd.f32 %v5514, %v5738
        %v5740 = vpop.f32.mrb[0].mxu0
        %5741 = vmatprep.mubr.f32.mxu0 %v4458
        %5742 = vmatmul.mubr.f32.gmra.mrb[0].mxu0 %v4457
        %v5743 = vpop.f32.mrb[0].mxu0
        %v5744 = vadd.f32 %v5519, %v5743
        %v5745 = vpop.f32.mrb[0].mxu0
        %5746 = vmatprep.mubr.f32.mxu0 %v4471
        %5747 = vmatmul.mubr.f32.gmra.mrb[0].mxu0 %v4470
        %v5748 = vpop.f32.mrb[0].mxu0
        %v5749 = vadd.f32 %v5524, %v5748
        %v5750 = vpop.f32.mrb[0].mxu0
        %5751 = vmatprep.mubr.f32.mxu0 %v4484
        %5752 = vmatmul.mubr.f32.gmra.mrb[0].mxu0 %v4483
        %v5753 = vpop.f32.mrb[0].mxu0
        %v5754 = vadd.f32 %v5529, %v5753
        %v5755 = vpop.f32.mrb[0].mxu0
        %5756 = vmatprep.mubr.f32.mxu0 %v4497
        %5757 = vmatmul.mubr.f32.gmra.mrb[0].mxu0 %v4496
        %v5758 = vpop.f32.mrb[0].mxu0
        %v5759 = vadd.f32 %v5534, %v5758
        %v5760 = vpop.f32.mrb[0].mxu0
        %5761 = vmatprep.mubr.f32.mxu0 %v4510
        %5762 = vmatmul.mubr.f32.gmra.mrb[0].mxu0 %v4509
        %v5763 = vpop.f32.mrb[0].mxu0
        %v5764 = vadd.f32 %v5539, %v5763
        %v5765 = vpop.f32.mrb[0].mxu0
        %5766 = vmatprep.mubr.f32.mxu0 %v4523
        %5767 = vmatmul.mubr.f32.gmra.mrb[0].mxu0 %v4522
        %v5768 = vpop.f32.mrb[0].mxu0
        %v5769 = vadd.f32 %v5544, %v5768
        %v5770 = vpop.f32.mrb[0].mxu0
        %5771 = vmatprep.mubr.f32.mxu0 %v4536
        %5772 = vmatmul.mubr.f32.gmra.mrb[0].mxu0 %v4535
        %v5773 = vpop.f32.mrb[0].mxu0
        %v5774 = vadd.f32 %v5549, %v5773
        %v5775 = vpop.f32.mrb[0].mxu0
        %5776 = vmatprep.mubr.f32.mxu0 %v4549
        %5777 = vmatmul.mubr.f32.gmra.mrb[0].mxu0 %v4548
        %v5778 = vpop.f32.mrb[0].mxu0
        %v5779 = vadd.f32 %v5554, %v5778
        %v5780 = vpop.f32.mrb[0].mxu0
        %5781 = vmatprep.mubr.f32.mxu0 %v4562
        %5782 = vmatmul.mubr.f32.gmra.mrb[0].mxu0 %v4561
        %v5783 = vpop.f32.mrb[0].mxu0
        %v5784 = vadd.f32 %v5559, %v5783
        %v5785 = vpop.f32.mrb[0].mxu0
        %5786 = vmatprep.mubr.f32.mxu0 %v4575
        %5787 = vmatmul.mubr.f32.gmra.mrb[0].mxu0 %v4574
        %v5788 = vpop.f32.mrb[0].mxu0
        %v5789 = vadd.f32 %v5564, %v5788
        %v5790 = vpop.f32.mrb[0].mxu0
        %5791 = vmatprep.mubr.f32.mxu0 %v4588
        %5792 = vmatmul.mubr.f32.gmra.mrb[0].mxu0 %v4587
        %v5793 = vpop.f32.mrb[0].mxu0
        %v5794 = vadd.f32 %v5569, %v5793
        %v5795 = vpop.f32.mrb[0].mxu0
        %5796 = vmatprep.mubr.f32.mxu0 %v4601
        %5797 = vmatmul.mubr.f32.gmra.mrb[0].mxu0 %v4600
        %v5798 = vpop.f32.mrb[0].mxu0
        %v5799 = vadd.f32 %v5574, %v5798
        %v5800 = vpop.f32.mrb[0].mxu0
        %5801 = vmatprep.mubr.f32.mxu0 %v4614
        %5802 = vmatmul.mubr.f32.gmra.mrb[0].mxu0 %v4613
        %v5803 = vpop.f32.mrb[0].mxu0
        %v5804 = vadd.f32 %v5579, %v5803
        %v5805 = vpop.f32.mrb[0].mxu0
        %5806 = vmatprep.mubr.f32.mxu0 %v4627
        %5807 = vmatmul.mubr.f32.gmra.mrb[0].mxu0 %v4626
        %v5808 = vpop.f32.mrb[0].mxu0
        %v5809 = vadd.f32 %v5584, %v5808
        %v5810 = vpop.f32.mrb[0].mxu0
        %5811 = vmatprep.mubr.f32.mxu0 %v4640
        %5812 = vmatmul.mubr.f32.gmra.mrb[0].mxu0 %v4639
        %v5813 = vpop.f32.mrb[0].mxu0
        %v5814 = vadd.f32 %v5589, %v5813
        %v5815 = vpop.f32.mrb[0].mxu0
        %5816 = vmatprep.mubr.f32.mxu0 %v4653
        %5817 = vmatmul.mubr.f32.gmra.mrb[0].mxu0 %v4652
        %v5818 = vpop.f32.mrb[0].mxu0
        %v5819 = vadd.f32 %v5594, %v5818
        %v5820 = vpop.f32.mrb[0].mxu0
        %5821 = vmatprep.mubr.f32.mxu0 %v4666
        %5822 = vmatmul.mubr.f32.gmra.mrb[0].mxu0 %v4665
        %v5823 = vpop.f32.mrb[0].mxu0
        %v5824 = vadd.f32 %v5599, %v5823
        %v5825 = vpop.f32.mrb[0].mxu0
        %5826 = vmatprep.mubr.f32.mxu0 %v4679
        %5827 = vmatmul.mubr.f32.gmra.mrb[0].mxu0 %v4678
        %v5828 = vpop.f32.mrb[0].mxu0
        %v5829 = vadd.f32 %v5604, %v5828
        %v5830 = vpop.f32.mrb[0].mxu0
        %5831 = vmatprep.mubr.f32.mxu0 %v4692
        %5832 = vmatmul.mubr.f32.gmra.mrb[0].mxu0 %v4691
        %v5833 = vpop.f32.mrb[0].mxu0
        %v5834 = vadd.f32 %v5609, %v5833
        %v5835 = vpop.f32.mrb[0].mxu0
        %5836 = vmatprep.mubr.f32.mxu0 %v4705
        %5837 = vmatmul.mubr.f32.gmra.mrb[0].mxu0 %v4704
        %v5838 = vpop.f32.mrb[0].mxu0
        %v5839 = vadd.f32 %v5614, %v5838
        %v5840 = vpop.f32.mrb[0].mxu0
        %5841 = vmatprep.mubr.f32.mxu0 %v4718
        %5842 = vmatmul.mubr.f32.gmra.mrb[0].mxu0 %v4717
        %v5843 = vpop.f32.mrb[0].mxu0
        %v5844 = vadd.f32 %v5619, %v5843
        %v5845 = vpop.f32.mrb[0].mxu0
        %5846 = vmatprep.mubr.f32.mxu0 %v4731
        %5847 = vmatmul.mubr.f32.gmra.mrb[0].mxu0 %v4730
        %v5848 = vpop.f32.mrb[0].mxu0
        %v5849 = vadd.f32 %v5624, %v5848
        %v5850 = vpop.f32.mrb[0].mxu0
        %5851 = vdwg.mxu0
        %5852 = vmatprep.subr.mxu0 0.0
        %5853 = vmatpush1.msra.mxu0 %v4865
        %5854 = vmatprep.subr.mxu0 0.0
        %5855 = vmatpush1.msra.mxu0 %v4866
        %5856 = vmatprep.subr.mxu0 0.0
        %5857 = vmatpush1.msra.mxu0 %v4867
        %5858 = vmatprep.subr.mxu0 0.0
        %5859 = vmatpush1.msra.mxu0 %v4868
        %5860 = vmatprep.subr.mxu0 0.0
        %5861 = vmatpush1.msra.mxu0 %v4869
        %5862 = vmatprep.subr.mxu0 0.0
        %5863 = vmatpush1.msra.mxu0 %v4870
        %5864 = vmatprep.subr.mxu0 0.0
        %5865 = vmatpush1.msra.mxu0 %v4871
        %5866 = vmatprep.subr.mxu0 0.0
        %5867 = vmatpush1.msra.mxu0 %v4872
        %5868 = vmatprep.subr.mxu0 0.0
        %5869 = vmatpush1.msra.mxu0 %v4873
        %5870 = vmatprep.subr.mxu0 0.0
        %5871 = vmatpush1.msra.mxu0 %v4874
        %5872 = vmatprep.subr.mxu0 0.0
        %5873 = vmatpush1.msra.mxu0 %v4875
        %5874 = vmatprep.subr.mxu0 0.0
        %5875 = vmatpush1.msra.mxu0 %v4876
        %5876 = vmatprep.subr.mxu0 0.0
        %5877 = vmatpush1.msra.mxu0 %v4877
        %5878 = vmatprep.subr.mxu0 0.0
        %5879 = vmatpush1.msra.mxu0 %v4878
        %5880 = vmatprep.subr.mxu0 0.0
        %5881 = vmatpush1.msra.mxu0 %v4879
        %5882 = vmatprep.subr.mxu0 0.0
        %5883 = vmatpush1.msra.mxu0 %v4880
        %5884 = vmatprep.subr.mxu0 0.0
        %5885 = vmatpush1.msra.mxu0 %v4881
        %5886 = vmatprep.subr.mxu0 0.0
        %5887 = vmatpush1.msra.mxu0 %v4882
        %5888 = vmatprep.subr.mxu0 0.0
        %5889 = vmatpush1.msra.mxu0 %v4883
        %5890 = vmatprep.subr.mxu0 0.0
        %5891 = vmatpush1.msra.mxu0 %v4884
        %5892 = vmatprep.subr.mxu0 0.0
        %5893 = vmatpush1.msra.mxu0 %v4885
        %5894 = vmatprep.subr.mxu0 0.0
        %5895 = vmatpush1.msra.mxu0 %v4886
        %5896 = vmatprep.subr.mxu0 0.0
        %5897 = vmatpush1.msra.mxu0 %v4887
        %5898 = vmatprep.subr.mxu0 0.0
        %5899 = vmatpush1.msra.mxu0 %v4888
        %5900 = vmatprep.subr.mxu0 0.0
        %5901 = vmatpush1.msra.mxu0 %v4889
        %5902 = vmatprep.subr.mxu0 0.0
        %5903 = vmatpush1.msra.mxu0 %v4890
        %5904 = vmatprep.subr.mxu0 0.0
        %5905 = vmatpush1.msra.mxu0 %v4891
        %5906 = vmatprep.subr.mxu0 0.0
        %5907 = vmatpush1.msra.mxu0 %v4892
        %5908 = vmatprep.subr.mxu0 0.0
        %5909 = vmatpush1.msra.mxu0 %v4893
        %5910 = vmatprep.subr.mxu0 0.0
        %5911 = vmatpush1.msra.mxu0 %v4894
        %5912 = vmatprep.subr.mxu0 0.0
        %5913 = vmatpush1.msra.mxu0 %v4895
        %5914 = vmatprep.subr.mxu0 0.0
        %5915 = vmatpush1.msra.mxu0 %v4896
        %5916 = vmatprep.mubr.f32.mxu0 %v4330
        %5917 = vmatmul.mubr.f32.gmra.mrb[0].mxu0 %v4329
        %v5918 = vpop.f32.mrb[0].mxu0
        %v5919 = vadd.f32 %v5694, %v5918
        %v5920 = vpop.f32.mrb[0].mxu0
        %5921 = vmatprep.mubr.f32.mxu0 %v4343
        %5922 = vmatmul.mubr.f32.gmra.mrb[0].mxu0 %v4342
        %v5923 = vpop.f32.mrb[0].mxu0
        %v5924 = vadd.f32 %v5699, %v5923
        %v5925 = vpop.f32.mrb[0].mxu0
        %5926 = vmatprep.mubr.f32.mxu0 %v4356
        %5927 = vmatmul.mubr.f32.gmra.mrb[0].mxu0 %v4355
        %v5928 = vpop.f32.mrb[0].mxu0
        %v5929 = vadd.f32 %v5704, %v5928
        %v5930 = vpop.f32.mrb[0].mxu0
        %5931 = vmatprep.mubr.f32.mxu0 %v4369
        %5932 = vmatmul.mubr.f32.gmra.mrb[0].mxu0 %v4368
        %v5933 = vpop.f32.mrb[0].mxu0
        %v5934 = vadd.f32 %v5709, %v5933
        %v5935 = vpop.f32.mrb[0].mxu0
        %5936 = vmatprep.mubr.f32.mxu0 %v4382
        %5937 = vmatmul.mubr.f32.gmra.mrb[0].mxu0 %v4381
        %v5938 = vpop.f32.mrb[0].mxu0
        %v5939 = vadd.f32 %v5714, %v5938
        %v5940 = vpop.f32.mrb[0].mxu0
        %5941 = vmatprep.mubr.f32.mxu0 %v4395
        %5942 = vmatmul.mubr.f32.gmra.mrb[0].mxu0 %v4394
        %v5943 = vpop.f32.mrb[0].mxu0
        %v5944 = vadd.f32 %v5719, %v5943
        %v5945 = vpop.f32.mrb[0].mxu0
        %5946 = vmatprep.mubr.f32.mxu0 %v4408
        %5947 = vmatmul.mubr.f32.gmra.mrb[0].mxu0 %v4407
        %v5948 = vpop.f32.mrb[0].mxu0
        %v5949 = vadd.f32 %v5724, %v5948
        %v5950 = vpop.f32.mrb[0].mxu0
        %5951 = vmatprep.mubr.f32.mxu0 %v4421
        %5952 = vmatmul.mubr.f32.gmra.mrb[0].mxu0 %v4420
        %v5953 = vpop.f32.mrb[0].mxu0
        %v5954 = vadd.f32 %v5729, %v5953
        %v5955 = vpop.f32.mrb[0].mxu0
        %5956 = vmatprep.mubr.f32.mxu0 %v4434
        %5957 = vmatmul.mubr.f32.gmra.mrb[0].mxu0 %v4433
        %v5958 = vpop.f32.mrb[0].mxu0
        %v5959 = vadd.f32 %v5734, %v5958
        %v5960 = vpop.f32.mrb[0].mxu0
        %5961 = vmatprep.mubr.f32.mxu0 %v4447
        %5962 = vmatmul.mubr.f32.gmra.mrb[0].mxu0 %v4446
        %v5963 = vpop.f32.mrb[0].mxu0
        %v5964 = vadd.f32 %v5739, %v5963
        %v5965 = vpop.f32.mrb[0].mxu0
        %5966 = vmatprep.mubr.f32.mxu0 %v4460
        %5967 = vmatmul.mubr.f32.gmra.mrb[0].mxu0 %v4459
        %v5968 = vpop.f32.mrb[0].mxu0
        %v5969 = vadd.f32 %v5744, %v5968
        %v5970 = vpop.f32.mrb[0].mxu0
        %5971 = vmatprep.mubr.f32.mxu0 %v4473
        %5972 = vmatmul.mubr.f32.gmra.mrb[0].mxu0 %v4472
        %v5973 = vpop.f32.mrb[0].mxu0
        %v5974 = vadd.f32 %v5749, %v5973
        %v5975 = vpop.f32.mrb[0].mxu0
        %5976 = vmatprep.mubr.f32.mxu0 %v4486
        %5977 = vmatmul.mubr.f32.gmra.mrb[0].mxu0 %v4485
        %v5978 = vpop.f32.mrb[0].mxu0
        %v5979 = vadd.f32 %v5754, %v5978
        %v5980 = vpop.f32.mrb[0].mxu0
        %5981 = vmatprep.mubr.f32.mxu0 %v4499
        %5982 = vmatmul.mubr.f32.gmra.mrb[0].mxu0 %v4498
        %v5983 = vpop.f32.mrb[0].mxu0
        %v5984 = vadd.f32 %v5759, %v5983
        %v5985 = vpop.f32.mrb[0].mxu0
        %5986 = vmatprep.mubr.f32.mxu0 %v4512
        %5987 = vmatmul.mubr.f32.gmra.mrb[0].mxu0 %v4511
        %v5988 = vpop.f32.mrb[0].mxu0
        %v5989 = vadd.f32 %v5764, %v5988
        %v5990 = vpop.f32.mrb[0].mxu0
        %5991 = vmatprep.mubr.f32.mxu0 %v4525
        %5992 = vmatmul.mubr.f32.gmra.mrb[0].mxu0 %v4524
        %v5993 = vpop.f32.mrb[0].mxu0
        %v5994 = vadd.f32 %v5769, %v5993
        %v5995 = vpop.f32.mrb[0].mxu0
        %5996 = vmatprep.mubr.f32.mxu0 %v4538
        %5997 = vmatmul.mubr.f32.gmra.mrb[0].mxu0 %v4537
        %v5998 = vpop.f32.mrb[0].mxu0
        %v5999 = vadd.f32 %v5774, %v5998
        %v6000 = vpop.f32.mrb[0].mxu0
        %6001 = vmatprep.mubr.f32.mxu0 %v4551
        %6002 = vmatmul.mubr.f32.gmra.mrb[0].mxu0 %v4550
        %v6003 = vpop.f32.mrb[0].mxu0
        %v6004 = vadd.f32 %v5779, %v6003
        %v6005 = vpop.f32.mrb[0].mxu0
        %6006 = vmatprep.mubr.f32.mxu0 %v4564
        %6007 = vmatmul.mubr.f32.gmra.mrb[0].mxu0 %v4563
        %v6008 = vpop.f32.mrb[0].mxu0
        %v6009 = vadd.f32 %v5784, %v6008
        %v6010 = vpop.f32.mrb[0].mxu0
        %6011 = vmatprep.mubr.f32.mxu0 %v4577
        %6012 = vmatmul.mubr.f32.gmra.mrb[0].mxu0 %v4576
        %v6013 = vpop.f32.mrb[0].mxu0
        %v6014 = vadd.f32 %v5789, %v6013
        %v6015 = vpop.f32.mrb[0].mxu0
        %6016 = vmatprep.mubr.f32.mxu0 %v4590
        %6017 = vmatmul.mubr.f32.gmra.mrb[0].mxu0 %v4589
        %v6018 = vpop.f32.mrb[0].mxu0
        %v6019 = vadd.f32 %v5794, %v6018
        %v6020 = vpop.f32.mrb[0].mxu0
        %6021 = vmatprep.mubr.f32.mxu0 %v4603
        %6022 = vmatmul.mubr.f32.gmra.mrb[0].mxu0 %v4602
        %v6023 = vpop.f32.mrb[0].mxu0
        %v6024 = vadd.f32 %v5799, %v6023
        %v6025 = vpop.f32.mrb[0].mxu0
        %6026 = vmatprep.mubr.f32.mxu0 %v4616
        %6027 = vmatmul.mubr.f32.gmra.mrb[0].mxu0 %v4615
        %v6028 = vpop.f32.mrb[0].mxu0
        %v6029 = vadd.f32 %v5804, %v6028
        %v6030 = vpop.f32.mrb[0].mxu0
        %6031 = vmatprep.mubr.f32.mxu0 %v4629
        %6032 = vmatmul.mubr.f32.gmra.mrb[0].mxu0 %v4628
        %v6033 = vpop.f32.mrb[0].mxu0
        %v6034 = vadd.f32 %v5809, %v6033
        %v6035 = vpop.f32.mrb[0].mxu0
        %6036 = vmatprep.mubr.f32.mxu0 %v4642
        %6037 = vmatmul.mubr.f32.gmra.mrb[0].mxu0 %v4641
        %v6038 = vpop.f32.mrb[0].mxu0
        %v6039 = vadd.f32 %v5814, %v6038
        %v6040 = vpop.f32.mrb[0].mxu0
        %6041 = vmatprep.mubr.f32.mxu0 %v4655
        %6042 = vmatmul.mubr.f32.gmra.mrb[0].mxu0 %v4654
        %v6043 = vpop.f32.mrb[0].mxu0
        %v6044 = vadd.f32 %v5819, %v6043
        %v6045 = vpop.f32.mrb[0].mxu0
        %6046 = vmatprep.mubr.f32.mxu0 %v4668
        %6047 = vmatmul.mubr.f32.gmra.mrb[0].mxu0 %v4667
        %v6048 = vpop.f32.mrb[0].mxu0
        %v6049 = vadd.f32 %v5824, %v6048
        %v6050 = vpop.f32.mrb[0].mxu0
        %6051 = vmatprep.mubr.f32.mxu0 %v4681
        %6052 = vmatmul.mubr.f32.gmra.mrb[0].mxu0 %v4680
        %v6053 = vpop.f32.mrb[0].mxu0
        %v6054 = vadd.f32 %v5829, %v6053
        %v6055 = vpop.f32.mrb[0].mxu0
        %6056 = vmatprep.mubr.f32.mxu0 %v4694
        %6057 = vmatmul.mubr.f32.gmra.mrb[0].mxu0 %v4693
        %v6058 = vpop.f32.mrb[0].mxu0
        %v6059 = vadd.f32 %v5834, %v6058
        %v6060 = vpop.f32.mrb[0].mxu0
        %6061 = vmatprep.mubr.f32.mxu0 %v4707
        %6062 = vmatmul.mubr.f32.gmra.mrb[0].mxu0 %v4706
        %v6063 = vpop.f32.mrb[0].mxu0
        %v6064 = vadd.f32 %v5839, %v6063
        %v6065 = vpop.f32.mrb[0].mxu0
        %6066 = vmatprep.mubr.f32.mxu0 %v4720
        %6067 = vmatmul.mubr.f32.gmra.mrb[0].mxu0 %v4719
        %v6068 = vpop.f32.mrb[0].mxu0
        %v6069 = vadd.f32 %v5844, %v6068
        %v6070 = vpop.f32.mrb[0].mxu0
        %6071 = vmatprep.mubr.f32.mxu0 %v4733
        %6072 = vmatmul.mubr.f32.gmra.mrb[0].mxu0 %v4732
        %v6073 = vpop.f32.mrb[0].mxu0
        %v6074 = vadd.f32 %v5849, %v6073
        %v6075 = vpop.f32.mrb[0].mxu0
        %6076 = vdwg.mxu0
        %6077 = vmatprep.subr.mxu0 0.0
        %6078 = vmatpush1.msra.mxu0 %v4897
        %6079 = vmatprep.subr.mxu0 0.0
        %6080 = vmatpush1.msra.mxu0 %v4898
        %6081 = vmatprep.subr.mxu0 0.0
        %6082 = vmatpush1.msra.mxu0 %v4899
        %6083 = vmatprep.subr.mxu0 0.0
        %6084 = vmatpush1.msra.mxu0 %v4900
        %6085 = vmatprep.subr.mxu0 0.0
        %6086 = vmatpush1.msra.mxu0 %v4901
        %6087 = vmatprep.subr.mxu0 0.0
        %6088 = vmatpush1.msra.mxu0 %v4902
        %6089 = vmatprep.subr.mxu0 0.0
        %6090 = vmatpush1.msra.mxu0 %v4903
        %6091 = vmatprep.subr.mxu0 0.0
        %6092 = vmatpush1.msra.mxu0 %v4904
        %6093 = vmatprep.subr.mxu0 0.0
        %6094 = vmatpush1.msra.mxu0 %v4905
        %6095 = vmatprep.subr.mxu0 0.0
        %6096 = vmatpush1.msra.mxu0 %v4906
        %6097 = vmatprep.subr.mxu0 0.0
        %6098 = vmatpush1.msra.mxu0 %v4907
        %6099 = vmatprep.subr.mxu0 0.0
        %6100 = vmatpush1.msra.mxu0 %v4908
        %6101 = vmatprep.subr.mxu0 0.0
        %6102 = vmatpush1.msra.mxu0 %v4909
        %6103 = vmatprep.subr.mxu0 0.0
        %6104 = vmatpush1.msra.mxu0 %v4910
        %6105 = vmatprep.subr.mxu0 0.0
        %6106 = vmatpush1.msra.mxu0 %v4911
        %6107 = vmatprep.subr.mxu0 0.0
        %6108 = vmatpush1.msra.mxu0 %v4912
        %6109 = vmatprep.subr.mxu0 0.0
        %6110 = vmatpush1.msra.mxu0 %v4913
        %6111 = vmatprep.subr.mxu0 0.0
        %6112 = vmatpush1.msra.mxu0 %v4914
        %6113 = vmatprep.subr.mxu0 0.0
        %6114 = vmatpush1.msra.mxu0 %v4915
        %6115 = vmatprep.subr.mxu0 0.0
        %6116 = vmatpush1.msra.mxu0 %v4916
        %6117 = vmatprep.subr.mxu0 0.0
        %6118 = vmatpush1.msra.mxu0 %v4917
        %6119 = vmatprep.subr.mxu0 0.0
        %6120 = vmatpush1.msra.mxu0 %v4918
        %6121 = vmatprep.subr.mxu0 0.0
        %6122 = vmatpush1.msra.mxu0 %v4919
        %6123 = vmatprep.subr.mxu0 0.0
        %6124 = vmatpush1.msra.mxu0 %v4920
        %6125 = vmatprep.subr.mxu0 0.0
        %6126 = vmatpush1.msra.mxu0 %v4921
        %6127 = vmatprep.subr.mxu0 0.0
        %6128 = vmatpush1.msra.mxu0 %v4922
        %6129 = vmatprep.subr.mxu0 0.0
        %6130 = vmatpush1.msra.mxu0 %v4923
        %6131 = vmatprep.subr.mxu0 0.0
        %6132 = vmatpush1.msra.mxu0 %v4924
        %6133 = vmatprep.subr.mxu0 0.0
        %6134 = vmatpush1.msra.mxu0 %v4925
        %6135 = vmatprep.subr.mxu0 0.0
        %6136 = vmatpush1.msra.mxu0 %v4926
        %6137 = vmatprep.subr.mxu0 0.0
        %6138 = vmatpush1.msra.mxu0 %v4927
        %6139 = vmatprep.subr.mxu0 0.0
        %6140 = vmatpush1.msra.mxu0 %v4928
        %6141 = vmatprep.mubr.f32.mxu0 %v4332
        %6142 = vmatmul.mubr.f32.gmra.mrb[0].mxu0 %v4331
        %v6143 = vpop.f32.mrb[0].mxu0
        %v6144 = vadd.f32 %v5919, %v6143
        %v6145 = vpop.f32.mrb[0].mxu0
        %6146 = vmatprep.mubr.f32.mxu0 %v4345
        %6147 = vmatmul.mubr.f32.gmra.mrb[0].mxu0 %v4344
        %v6148 = vpop.f32.mrb[0].mxu0
        %v6149 = vadd.f32 %v5924, %v6148
        %v6150 = vpop.f32.mrb[0].mxu0
        %6151 = vmatprep.mubr.f32.mxu0 %v4358
        %6152 = vmatmul.mubr.f32.gmra.mrb[0].mxu0 %v4357
        %v6153 = vpop.f32.mrb[0].mxu0
        %v6154 = vadd.f32 %v5929, %v6153
        %v6155 = vpop.f32.mrb[0].mxu0
        %6156 = vmatprep.mubr.f32.mxu0 %v4371
        %6157 = vmatmul.mubr.f32.gmra.mrb[0].mxu0 %v4370
        %v6158 = vpop.f32.mrb[0].mxu0
        %v6159 = vadd.f32 %v5934, %v6158
        %v6160 = vpop.f32.mrb[0].mxu0
        %6161 = vmatprep.mubr.f32.mxu0 %v4384
        %6162 = vmatmul.mubr.f32.gmra.mrb[0].mxu0 %v4383
        %v6163 = vpop.f32.mrb[0].mxu0
        %v6164 = vadd.f32 %v5939, %v6163
        %v6165 = vpop.f32.mrb[0].mxu0
        %6166 = vmatprep.mubr.f32.mxu0 %v4397
        %6167 = vmatmul.mubr.f32.gmra.mrb[0].mxu0 %v4396
        %v6168 = vpop.f32.mrb[0].mxu0
        %v6169 = vadd.f32 %v5944, %v6168
        %v6170 = vpop.f32.mrb[0].mxu0
        %6171 = vmatprep.mubr.f32.mxu0 %v4410
        %6172 = vmatmul.mubr.f32.gmra.mrb[0].mxu0 %v4409
        %v6173 = vpop.f32.mrb[0].mxu0
        %v6174 = vadd.f32 %v5949, %v6173
        %v6175 = vpop.f32.mrb[0].mxu0
        %6176 = vmatprep.mubr.f32.mxu0 %v4423
        %6177 = vmatmul.mubr.f32.gmra.mrb[0].mxu0 %v4422
        %v6178 = vpop.f32.mrb[0].mxu0
        %v6179 = vadd.f32 %v5954, %v6178
        %v6180 = vpop.f32.mrb[0].mxu0
        %6181 = vmatprep.mubr.f32.mxu0 %v4436
        %6182 = vmatmul.mubr.f32.gmra.mrb[0].mxu0 %v4435
        %v6183 = vpop.f32.mrb[0].mxu0
        %v6184 = vadd.f32 %v5959, %v6183
        %v6185 = vpop.f32.mrb[0].mxu0
        %6186 = vmatprep.mubr.f32.mxu0 %v4449
        %6187 = vmatmul.mubr.f32.gmra.mrb[0].mxu0 %v4448
        %v6188 = vpop.f32.mrb[0].mxu0
        %v6189 = vadd.f32 %v5964, %v6188
        %v6190 = vpop.f32.mrb[0].mxu0
        %6191 = vmatprep.mubr.f32.mxu0 %v4462
        %6192 = vmatmul.mubr.f32.gmra.mrb[0].mxu0 %v4461
        %v6193 = vpop.f32.mrb[0].mxu0
        %v6194 = vadd.f32 %v5969, %v6193
        %v6195 = vpop.f32.mrb[0].mxu0
        %6196 = vmatprep.mubr.f32.mxu0 %v4475
        %6197 = vmatmul.mubr.f32.gmra.mrb[0].mxu0 %v4474
        %v6198 = vpop.f32.mrb[0].mxu0
        %v6199 = vadd.f32 %v5974, %v6198
        %v6200 = vpop.f32.mrb[0].mxu0
        %6201 = vmatprep.mubr.f32.mxu0 %v4488
        %6202 = vmatmul.mubr.f32.gmra.mrb[0].mxu0 %v4487
        %v6203 = vpop.f32.mrb[0].mxu0
        %v6204 = vadd.f32 %v5979, %v6203
        %v6205 = vpop.f32.mrb[0].mxu0
        %6206 = vmatprep.mubr.f32.mxu0 %v4501
        %6207 = vmatmul.mubr.f32.gmra.mrb[0].mxu0 %v4500
        %v6208 = vpop.f32.mrb[0].mxu0
        %v6209 = vadd.f32 %v5984, %v6208
        %v6210 = vpop.f32.mrb[0].mxu0
        %6211 = vmatprep.mubr.f32.mxu0 %v4514
        %6212 = vmatmul.mubr.f32.gmra.mrb[0].mxu0 %v4513
        %v6213 = vpop.f32.mrb[0].mxu0
        %v6214 = vadd.f32 %v5989, %v6213
        %v6215 = vpop.f32.mrb[0].mxu0
        %6216 = vmatprep.mubr.f32.mxu0 %v4527
        %6217 = vmatmul.mubr.f32.gmra.mrb[0].mxu0 %v4526
        %v6218 = vpop.f32.mrb[0].mxu0
        %v6219 = vadd.f32 %v5994, %v6218
        %v6220 = vpop.f32.mrb[0].mxu0
        %6221 = vmatprep.mubr.f32.mxu0 %v4540
        %6222 = vmatmul.mubr.f32.gmra.mrb[0].mxu0 %v4539
        %v6223 = vpop.f32.mrb[0].mxu0
        %v6224 = vadd.f32 %v5999, %v6223
        %v6225 = vpop.f32.mrb[0].mxu0
        %6226 = vmatprep.mubr.f32.mxu0 %v4553
        %6227 = vmatmul.mubr.f32.gmra.mrb[0].mxu0 %v4552
        %v6228 = vpop.f32.mrb[0].mxu0
        %v6229 = vadd.f32 %v6004, %v6228
        %v6230 = vpop.f32.mrb[0].mxu0
        %6231 = vmatprep.mubr.f32.mxu0 %v4566
        %6232 = vmatmul.mubr.f32.gmra.mrb[0].mxu0 %v4565
        %v6233 = vpop.f32.mrb[0].mxu0
        %v6234 = vadd.f32 %v6009, %v6233
        %v6235 = vpop.f32.mrb[0].mxu0
        %6236 = vmatprep.mubr.f32.mxu0 %v4579
        %6237 = vmatmul.mubr.f32.gmra.mrb[0].mxu0 %v4578
        %v6238 = vpop.f32.mrb[0].mxu0
        %v6239 = vadd.f32 %v6014, %v6238
        %v6240 = vpop.f32.mrb[0].mxu0
        %6241 = vmatprep.mubr.f32.mxu0 %v4592
        %6242 = vmatmul.mubr.f32.gmra.mrb[0].mxu0 %v4591
        %v6243 = vpop.f32.mrb[0].mxu0
        %v6244 = vadd.f32 %v6019, %v6243
        %v6245 = vpop.f32.mrb[0].mxu0
        %6246 = vmatprep.mubr.f32.mxu0 %v4605
        %6247 = vmatmul.mubr.f32.gmra.mrb[0].mxu0 %v4604
        %v6248 = vpop.f32.mrb[0].mxu0
        %v6249 = vadd.f32 %v6024, %v6248
        %v6250 = vpop.f32.mrb[0].mxu0
        %6251 = vmatprep.mubr.f32.mxu0 %v4618
        %6252 = vmatmul.mubr.f32.gmra.mrb[0].mxu0 %v4617
        %v6253 = vpop.f32.mrb[0].mxu0
        %v6254 = vadd.f32 %v6029, %v6253
        %v6255 = vpop.f32.mrb[0].mxu0
        %6256 = vmatprep.mubr.f32.mxu0 %v4631
        %6257 = vmatmul.mubr.f32.gmra.mrb[0].mxu0 %v4630
        %v6258 = vpop.f32.mrb[0].mxu0
        %v6259 = vadd.f32 %v6034, %v6258
        %v6260 = vpop.f32.mrb[0].mxu0
        %6261 = vmatprep.mubr.f32.mxu0 %v4644
        %6262 = vmatmul.mubr.f32.gmra.mrb[0].mxu0 %v4643
        %v6263 = vpop.f32.mrb[0].mxu0
        %v6264 = vadd.f32 %v6039, %v6263
        %v6265 = vpop.f32.mrb[0].mxu0
        %6266 = vmatprep.mubr.f32.mxu0 %v4657
        %6267 = vmatmul.mubr.f32.gmra.mrb[0].mxu0 %v4656
        %v6268 = vpop.f32.mrb[0].mxu0
        %v6269 = vadd.f32 %v6044, %v6268
        %v6270 = vpop.f32.mrb[0].mxu0
        %6271 = vmatprep.mubr.f32.mxu0 %v4670
        %6272 = vmatmul.mubr.f32.gmra.mrb[0].mxu0 %v4669
        %v6273 = vpop.f32.mrb[0].mxu0
        %v6274 = vadd.f32 %v6049, %v6273
        %v6275 = vpop.f32.mrb[0].mxu0
        %6276 = vmatprep.mubr.f32.mxu0 %v4683
        %6277 = vmatmul.mubr.f32.gmra.mrb[0].mxu0 %v4682
        %v6278 = vpop.f32.mrb[0].mxu0
        %v6279 = vadd.f32 %v6054, %v6278
        %v6280 = vpop.f32.mrb[0].mxu0
        %6281 = vmatprep.mubr.f32.mxu0 %v4696
        %6282 = vmatmul.mubr.f32.gmra.mrb[0].mxu0 %v4695
        %v6283 = vpop.f32.mrb[0].mxu0
        %v6284 = vadd.f32 %v6059, %v6283
        %v6285 = vpop.f32.mrb[0].mxu0
        %6286 = vmatprep.mubr.f32.mxu0 %v4709
        %6287 = vmatmul.mubr.f32.gmra.mrb[0].mxu0 %v4708
        %v6288 = vpop.f32.mrb[0].mxu0
        %v6289 = vadd.f32 %v6064, %v6288
        %v6290 = vpop.f32.mrb[0].mxu0
        %6291 = vmatprep.mubr.f32.mxu0 %v4722
        %6292 = vmatmul.mubr.f32.gmra.mrb[0].mxu0 %v4721
        %v6293 = vpop.f32.mrb[0].mxu0
        %v6294 = vadd.f32 %v6069, %v6293
        %v6295 = vpop.f32.mrb[0].mxu0
        %6296 = vmatprep.mubr.f32.mxu0 %v4735
        %6297 = vmatmul.mubr.f32.gmra.mrb[0].mxu0 %v4734
        %v6298 = vpop.f32.mrb[0].mxu0
        %v6299 = vadd.f32 %v6074, %v6298
        %v6300 = vpop.f32.mrb[0].mxu0
        %6301 = vdwg.mxu0
        %6302 = vmatprep.subr.mxu0 0.0
        %6303 = vmatpush1.msra.mxu0 %v4929
        %6304 = vmatprep.subr.mxu0 0.0
        %6305 = vmatpush1.msra.mxu0 %v4930
        %6306 = vmatprep.subr.mxu0 0.0
        %6307 = vmatpush1.msra.mxu0 %v4931
        %6308 = vmatprep.subr.mxu0 0.0
        %6309 = vmatpush1.msra.mxu0 %v4932
        %6310 = vmatprep.subr.mxu0 0.0
        %6311 = vmatpush1.msra.mxu0 %v4933
        %6312 = vmatprep.subr.mxu0 0.0
        %6313 = vmatpush1.msra.mxu0 %v4934
        %6314 = vmatprep.subr.mxu0 0.0
        %6315 = vmatpush1.msra.mxu0 %v4935
        %6316 = vmatprep.subr.mxu0 0.0
        %6317 = vmatpush1.msra.mxu0 %v4936
        %6318 = vmatprep.subr.mxu0 0.0
        %6319 = vmatpush1.msra.mxu0 %v4937
        %6320 = vmatprep.subr.mxu0 0.0
        %6321 = vmatpush1.msra.mxu0 %v4938
        %6322 = vmatprep.subr.mxu0 0.0
        %6323 = vmatpush1.msra.mxu0 %v4939
        %6324 = vmatprep.subr.mxu0 0.0
        %6325 = vmatpush1.msra.mxu0 %v4940
        %6326 = vmatprep.subr.mxu0 0.0
        %6327 = vmatpush1.msra.mxu0 %v4941
        %6328 = vmatprep.subr.mxu0 0.0
        %6329 = vmatpush1.msra.mxu0 %v4942
        %6330 = vmatprep.subr.mxu0 0.0
        %6331 = vmatpush1.msra.mxu0 %v4943
        %6332 = vmatprep.subr.mxu0 0.0
        %6333 = vmatpush1.msra.mxu0 %v4944
        %6334 = vmatprep.subr.mxu0 0.0
        %6335 = vmatpush1.msra.mxu0 0.0
        %6336 = vmatprep.subr.mxu0 0.0
        %6337 = vmatpush1.msra.mxu0 0.0
        %6338 = vmatprep.subr.mxu0 0.0
        %6339 = vmatpush1.msra.mxu0 0.0
        %6340 = vmatprep.subr.mxu0 0.0
        %6341 = vmatpush1.msra.mxu0 0.0
        %6342 = vmatprep.subr.mxu0 0.0
        %6343 = vmatpush1.msra.mxu0 0.0
        %6344 = vmatprep.subr.mxu0 0.0
        %6345 = vmatpush1.msra.mxu0 0.0
        %6346 = vmatprep.subr.mxu0 0.0
        %6347 = vmatpush1.msra.mxu0 0.0
        %6348 = vmatprep.subr.mxu0 0.0
        %6349 = vmatpush1.msra.mxu0 0.0
        %6350 = vmatprep.subr.mxu0 0.0
        %6351 = vmatpush1.msra.mxu0 0.0
        %6352 = vmatprep.subr.mxu0 0.0
        %6353 = vmatpush1.msra.mxu0 0.0
        %6354 = vmatprep.subr.mxu0 0.0
        %6355 = vmatpush1.msra.mxu0 0.0
        %6356 = vmatprep.subr.mxu0 0.0
        %6357 = vmatpush1.msra.mxu0 0.0
        %6358 = vmatprep.subr.mxu0 0.0
        %6359 = vmatpush1.msra.mxu0 0.0
        %6360 = vmatprep.subr.mxu0 0.0
        %6361 = vmatpush1.msra.mxu0 0.0
        %6362 = vmatprep.subr.mxu0 0.0
        %6363 = vmatpush1.msra.mxu0 0.0
        %6364 = vmatprep.subr.mxu0 0.0
        %6365 = vmatpush1.msra.mxu0 0.0
        %6366 = vmatprep.mubr.f32.mxu0 0.0
        %6367 = vmatmul.mubr.f32.gmra.mrb[0].mxu0 %v4333
        %v6368 = vpop.f32.mrb[0].mxu0
        %v6369 = vadd.f32 %v6144, %v6368
        %v6370 = vpop.f32.mrb[0].mxu0
        %6371 = vmatprep.mubr.f32.mxu0 0.0
        %6372 = vmatmul.mubr.f32.gmra.mrb[0].mxu0 %v4346
        %v6373 = vpop.f32.mrb[0].mxu0
        %v6374 = vadd.f32 %v6149, %v6373
        %v6375 = vpop.f32.mrb[0].mxu0
        %6376 = vmatprep.mubr.f32.mxu0 0.0
        %6377 = vmatmul.mubr.f32.gmra.mrb[0].mxu0 %v4359
        %v6378 = vpop.f32.mrb[0].mxu0
        %v6379 = vadd.f32 %v6154, %v6378
        %v6380 = vpop.f32.mrb[0].mxu0
        %6381 = vmatprep.mubr.f32.mxu0 0.0
        %6382 = vmatmul.mubr.f32.gmra.mrb[0].mxu0 %v4372
        %v6383 = vpop.f32.mrb[0].mxu0
        %v6384 = vadd.f32 %v6159, %v6383
        %v6385 = vpop.f32.mrb[0].mxu0
        %6386 = vmatprep.mubr.f32.mxu0 0.0
        %6387 = vmatmul.mubr.f32.gmra.mrb[0].mxu0 %v4385
        %v6388 = vpop.f32.mrb[0].mxu0
        %v6389 = vadd.f32 %v6164, %v6388
        %v6390 = vpop.f32.mrb[0].mxu0
        %6391 = vmatprep.mubr.f32.mxu0 0.0
        %6392 = vmatmul.mubr.f32.gmra.mrb[0].mxu0 %v4398
        %v6393 = vpop.f32.mrb[0].mxu0
        %v6394 = vadd.f32 %v6169, %v6393
        %v6395 = vpop.f32.mrb[0].mxu0
        %6396 = vmatprep.mubr.f32.mxu0 0.0
        %6397 = vmatmul.mubr.f32.gmra.mrb[0].mxu0 %v4411
        %v6398 = vpop.f32.mrb[0].mxu0
        %v6399 = vadd.f32 %v6174, %v6398
        %v6400 = vpop.f32.mrb[0].mxu0
        %6401 = vmatprep.mubr.f32.mxu0 0.0
        %6402 = vmatmul.mubr.f32.gmra.mrb[0].mxu0 %v4424
        %v6403 = vpop.f32.mrb[0].mxu0
        %v6404 = vadd.f32 %v6179, %v6403
        %v6405 = vpop.f32.mrb[0].mxu0
        %6406 = vmatprep.mubr.f32.mxu0 0.0
        %6407 = vmatmul.mubr.f32.gmra.mrb[0].mxu0 %v4437
        %v6408 = vpop.f32.mrb[0].mxu0
        %v6409 = vadd.f32 %v6184, %v6408
        %v6410 = vpop.f32.mrb[0].mxu0
        %6411 = vmatprep.mubr.f32.mxu0 0.0
        %6412 = vmatmul.mubr.f32.gmra.mrb[0].mxu0 %v4450
        %v6413 = vpop.f32.mrb[0].mxu0
        %v6414 = vadd.f32 %v6189, %v6413
        %v6415 = vpop.f32.mrb[0].mxu0
        %6416 = vmatprep.mubr.f32.mxu0 0.0
        %6417 = vmatmul.mubr.f32.gmra.mrb[0].mxu0 %v4463
        %v6418 = vpop.f32.mrb[0].mxu0
        %v6419 = vadd.f32 %v6194, %v6418
        %v6420 = vpop.f32.mrb[0].mxu0
        %6421 = vmatprep.mubr.f32.mxu0 0.0
        %6422 = vmatmul.mubr.f32.gmra.mrb[0].mxu0 %v4476
        %v6423 = vpop.f32.mrb[0].mxu0
        %v6424 = vadd.f32 %v6199, %v6423
        %v6425 = vpop.f32.mrb[0].mxu0
        %6426 = vmatprep.mubr.f32.mxu0 0.0
        %6427 = vmatmul.mubr.f32.gmra.mrb[0].mxu0 %v4489
        %v6428 = vpop.f32.mrb[0].mxu0
        %v6429 = vadd.f32 %v6204, %v6428
        %v6430 = vpop.f32.mrb[0].mxu0
        %6431 = vmatprep.mubr.f32.mxu0 0.0
        %6432 = vmatmul.mubr.f32.gmra.mrb[0].mxu0 %v4502
        %v6433 = vpop.f32.mrb[0].mxu0
        %v6434 = vadd.f32 %v6209, %v6433
        %v6435 = vpop.f32.mrb[0].mxu0
        %6436 = vmatprep.mubr.f32.mxu0 0.0
        %6437 = vmatmul.mubr.f32.gmra.mrb[0].mxu0 %v4515
        %v6438 = vpop.f32.mrb[0].mxu0
        %v6439 = vadd.f32 %v6214, %v6438
        %v6440 = vpop.f32.mrb[0].mxu0
        %6441 = vmatprep.mubr.f32.mxu0 0.0
        %6442 = vmatmul.mubr.f32.gmra.mrb[0].mxu0 %v4528
        %v6443 = vpop.f32.mrb[0].mxu0
        %v6444 = vadd.f32 %v6219, %v6443
        %v6445 = vpop.f32.mrb[0].mxu0
        %6446 = vmatprep.mubr.f32.mxu0 0.0
        %6447 = vmatmul.mubr.f32.gmra.mrb[0].mxu0 %v4541
        %v6448 = vpop.f32.mrb[0].mxu0
        %v6449 = vadd.f32 %v6224, %v6448
        %v6450 = vpop.f32.mrb[0].mxu0
        %6451 = vmatprep.mubr.f32.mxu0 0.0
        %6452 = vmatmul.mubr.f32.gmra.mrb[0].mxu0 %v4554
        %v6453 = vpop.f32.mrb[0].mxu0
        %v6454 = vadd.f32 %v6229, %v6453
        %v6455 = vpop.f32.mrb[0].mxu0
        %6456 = vmatprep.mubr.f32.mxu0 0.0
        %6457 = vmatmul.mubr.f32.gmra.mrb[0].mxu0 %v4567
        %v6458 = vpop.f32.mrb[0].mxu0
        %v6459 = vadd.f32 %v6234, %v6458
        %v6460 = vpop.f32.mrb[0].mxu0
        %6461 = vmatprep.mubr.f32.mxu0 0.0
        %6462 = vmatmul.mubr.f32.gmra.mrb[0].mxu0 %v4580
        %v6463 = vpop.f32.mrb[0].mxu0
        %v6464 = vadd.f32 %v6239, %v6463
        %v6465 = vpop.f32.mrb[0].mxu0
        %6466 = vmatprep.mubr.f32.mxu0 0.0
        %6467 = vmatmul.mubr.f32.gmra.mrb[0].mxu0 %v4593
        %v6468 = vpop.f32.mrb[0].mxu0
        %v6469 = vadd.f32 %v6244, %v6468
        %v6470 = vpop.f32.mrb[0].mxu0
        %6471 = vmatprep.mubr.f32.mxu0 0.0
        %6472 = vmatmul.mubr.f32.gmra.mrb[0].mxu0 %v4606
        %v6473 = vpop.f32.mrb[0].mxu0
        %v6474 = vadd.f32 %v6249, %v6473
        %v6475 = vpop.f32.mrb[0].mxu0
        %6476 = vmatprep.mubr.f32.mxu0 0.0
        %6477 = vmatmul.mubr.f32.gmra.mrb[0].mxu0 %v4619
        %v6478 = vpop.f32.mrb[0].mxu0
        %v6479 = vadd.f32 %v6254, %v6478
        %v6480 = vpop.f32.mrb[0].mxu0
        %6481 = vmatprep.mubr.f32.mxu0 0.0
        %6482 = vmatmul.mubr.f32.gmra.mrb[0].mxu0 %v4632
        %v6483 = vpop.f32.mrb[0].mxu0
        %v6484 = vadd.f32 %v6259, %v6483
        %v6485 = vpop.f32.mrb[0].mxu0
        %6486 = vmatprep.mubr.f32.mxu0 0.0
        %6487 = vmatmul.mubr.f32.gmra.mrb[0].mxu0 %v4645
        %v6488 = vpop.f32.mrb[0].mxu0
        %v6489 = vadd.f32 %v6264, %v6488
        %v6490 = vpop.f32.mrb[0].mxu0
        %6491 = vmatprep.mubr.f32.mxu0 0.0
        %6492 = vmatmul.mubr.f32.gmra.mrb[0].mxu0 %v4658
        %v6493 = vpop.f32.mrb[0].mxu0
        %v6494 = vadd.f32 %v6269, %v6493
        %v6495 = vpop.f32.mrb[0].mxu0
        %6496 = vmatprep.mubr.f32.mxu0 0.0
        %6497 = vmatmul.mubr.f32.gmra.mrb[0].mxu0 %v4671
        %v6498 = vpop.f32.mrb[0].mxu0
        %v6499 = vadd.f32 %v6274, %v6498
        %v6500 = vpop.f32.mrb[0].mxu0
        %6501 = vmatprep.mubr.f32.mxu0 0.0
        %6502 = vmatmul.mubr.f32.gmra.mrb[0].mxu0 %v4684
        %v6503 = vpop.f32.mrb[0].mxu0
        %v6504 = vadd.f32 %v6279, %v6503
        %v6505 = vpop.f32.mrb[0].mxu0
        %6506 = vmatprep.mubr.f32.mxu0 0.0
        %6507 = vmatmul.mubr.f32.gmra.mrb[0].mxu0 %v4697
        %v6508 = vpop.f32.mrb[0].mxu0
        %v6509 = vadd.f32 %v6284, %v6508
        %v6510 = vpop.f32.mrb[0].mxu0
        %6511 = vmatprep.mubr.f32.mxu0 0.0
        %6512 = vmatmul.mubr.f32.gmra.mrb[0].mxu0 %v4710
        %v6513 = vpop.f32.mrb[0].mxu0
        %v6514 = vadd.f32 %v6289, %v6513
        %v6515 = vpop.f32.mrb[0].mxu0
        %6516 = vmatprep.mubr.f32.mxu0 0.0
        %6517 = vmatmul.mubr.f32.gmra.mrb[0].mxu0 %v4723
        %v6518 = vpop.f32.mrb[0].mxu0
        %v6519 = vadd.f32 %v6294, %v6518
        %v6520 = vpop.f32.mrb[0].mxu0
        %6521 = vmatprep.mubr.f32.mxu0 0.0
        %6522 = vmatmul.mubr.f32.gmra.mrb[0].mxu0 %v4736
        %v6523 = vpop.f32.mrb[0].mxu0
        %v6524 = vadd.f32 %v6299, %v6523
        %v6525 = vpop.f32.mrb[0].mxu0
        %6526 = vdwg.mxu0
        %6527 = vst.msk [vmem:[%s2302 + $0x2] sm:$0xff] %vm1212, %v6369
        %6528 = vst.msk [vmem:[%s2302 + $0xa] sm:$0xff] %vm1212, %v6374
        %6529 = vst.msk [vmem:[%s2302 + $0x1a] sm:$0xff] %vm1212, %v6379
        %6530 = vst.msk [vmem:[%s2302 + $0x22] sm:$0xff] %vm1212, %v6384
        %6531 = vst.msk [vmem:[%s2302 + $0x32] sm:$0xff] %vm1212, %v6389
        %6532 = vst.msk [vmem:[%s2302 + $0x3a] sm:$0xff] %vm1212, %v6394
        %6533 = vst.msk [vmem:[%s2302 + $0x4a] sm:$0xff] %vm1212, %v6399
        %6534 = vst.msk [vmem:[%s2302 + $0x52] sm:$0xff] %vm1212, %v6404
        %6535 = vst.msk [vmem:[%s2302 + $0x62] sm:$0xff] %vm1212, %v6409
        %6536 = vst.msk [vmem:[%s2302 + $0x6a] sm:$0xff] %vm1212, %v6414
        %6537 = vst.msk [vmem:[%s2302 + $0x7a] sm:$0xff] %vm1212, %v6419
        %6538 = vst.msk [vmem:[%s2302 + $0x82] sm:$0xff] %vm1212, %v6424
        %6539 = vst.msk [vmem:[%s2302 + $0x92] sm:$0xff] %vm1212, %v6429
        %6540 = vst.msk [vmem:[%s2302 + $0x9a] sm:$0xff] %vm1212, %v6434
        %6541 = vst.msk [vmem:[%s2302 + $0xaa] sm:$0xff] %vm1212, %v6439
        %6542 = vst.msk [vmem:[%s2302 + $0xb2] sm:$0xff] %vm1212, %v6444
        %6543 = vst.msk [vmem:[%s2302 + $0xc2] sm:$0xff] %vm1212, %v6449
        %6544 = vst.msk [vmem:[%s2302 + $0xca] sm:$0xff] %vm1212, %v6454
        %6545 = vst.msk [vmem:[%s2302 + $0xda] sm:$0xff] %vm1212, %v6459
        %6546 = vst.msk [vmem:[%s2302 + $0xe2] sm:$0xff] %vm1212, %v6464
        %6547 = vst.msk [vmem:[%s2302 + $0xf2] sm:$0xff] %vm1212, %v6469
        %6548 = vst.msk [vmem:[%s2302 + $0xfa] sm:$0xff] %vm1212, %v6474
        %6549 = vst.msk [vmem:[%s2302 + $0x10a] sm:$0xff] %vm1212, %v6479
        %6550 = vst.msk [vmem:[%s2302 + $0x112] sm:$0xff] %vm1212, %v6484
        %6551 = vst.msk [vmem:[%s2302 + $0x122] sm:$0xff] %vm1212, %v6489
        %6552 = vst.msk [vmem:[%s2302 + $0x12a] sm:$0xff] %vm1212, %v6494
        %6553 = vst.msk [vmem:[%s2302 + $0x13a] sm:$0xff] %vm1212, %v6499
        %6554 = vst.msk [vmem:[%s2302 + $0x142] sm:$0xff] %vm1212, %v6504
        %6555 = vst.msk [vmem:[%s2302 + $0x152] sm:$0xff] %vm1212, %v6509
        %6556 = vst.msk [vmem:[%s2302 + $0x15a] sm:$0xff] %vm1212, %v6514
        %6557 = vst.msk [vmem:[%s2302 + $0x16a] sm:$0xff] %vm1212, %v6519
        %6558 = vst.msk [vmem:[%s2302 + $0x172] sm:$0xff] %vm1212, %v6524
      $region40: #{_subnet_apply.1} parent=31 // pred_fallthru
        _
      %p6559 = scmp.eq.s32.totalorder %s36, 2
      // Predicated region
      $region41: #{_subnet_apply.1} parent=31 // pred_check
        %p6560 = pneg %p6559
      $region42: #{_subnet_apply.1} parent=31 // pred_check_branch
        %6562 = sbr.rel (%p6560) target = $region44
      $region43: #{_subnet_apply.1} parent=31 // pred_region
        %s6563 = scalar_lea.vmem [#allocation2], 48
        %v6564 = vld [vmem:[%s6563 + $0x2] sm:$0xff]
        %v6565 = vld [vmem:[%s6563 + $0xa] sm:$0xff]
        %v6566 = vld [vmem:[%s6563 + $0x1a] sm:$0xff]
        %v6567 = vld [vmem:[%s6563 + $0x22] sm:$0xff]
        %v6568 = vld [vmem:[%s6563 + $0x32] sm:$0xff]
        %v6569 = vld [vmem:[%s6563 + $0x3a] sm:$0xff]
        %v6570 = vld [vmem:[%s6563 + $0x4a] sm:$0xff]
        %v6571 = vld [vmem:[%s6563 + $0x52] sm:$0xff]
        %v6572 = vld [vmem:[%s6563 + $0x62] sm:$0xff]
        %v6573 = vld [vmem:[%s6563 + $0x6a] sm:$0xff]
        %v6574 = vld [vmem:[%s6563 + $0x7a] sm:$0xff]
        %v6575 = vld [vmem:[%s6563 + $0x82] sm:$0xff]
        %v6576 = vld [vmem:[%s6563 + $0x92] sm:$0xff]
        %v6577 = vld [vmem:[%s6563 + $0x9a] sm:$0xff]
        %v6578 = vld [vmem:[%s6563 + $0xaa] sm:$0xff]
        %v6579 = vld [vmem:[%s6563 + $0xb2] sm:$0xff]
        %v6580 = vld [vmem:[%s6563 + $0xc2] sm:$0xff]
        %v6581 = vld [vmem:[%s6563 + $0xca] sm:$0xff]
        %v6582 = vld [vmem:[%s6563 + $0xda] sm:$0xff]
        %v6583 = vld [vmem:[%s6563 + $0xe2] sm:$0xff]
        %v6584 = vld [vmem:[%s6563 + $0xf2] sm:$0xff]
        %v6585 = vld [vmem:[%s6563 + $0xfa] sm:$0xff]
        %v6586 = vld [vmem:[%s6563 + $0x10a] sm:$0xff]
        %v6587 = vld [vmem:[%s6563 + $0x112] sm:$0xff]
        %v6588 = vld [vmem:[%s6563 + $0x122] sm:$0xff]
        %v6589 = vld [vmem:[%s6563 + $0x12a] sm:$0xff]
        %v6590 = vld [vmem:[%s6563 + $0x13a] sm:$0xff]
        %v6591 = vld [vmem:[%s6563 + $0x142] sm:$0xff]
        %v6592 = vld [vmem:[%s6563 + $0x152] sm:$0xff]
        %v6593 = vld [vmem:[%s6563 + $0x15a] sm:$0xff]
        %v6594 = vld [vmem:[%s6563 + $0x16a] sm:$0xff]
        %v6595 = vld [vmem:[%s6563 + $0x172] sm:$0xff]
        %v6596 = vcombine.low %v6564, %v6568
        %v6597 = vcombine.high %v6564, %v6568
        %v6599 = vunpack.c.l.s4 1983009808
        %v6600 = vunpack.c.0.s8 %v6599
        %v6601 = vlaneseq
        %v6602 = vshrl.u32 %v6601, 7
        %v6603 = vsub.s32 %v6600, %v6602
        %v6604 = vrot.slane %v6596, %v6603
        %v6606 = vunpack.c.l.s4 1983009808
        %v6607 = vunpack.c.0.s8 %v6606
        %v6608 = vlaneseq
        %v6609 = vshrl.u32 %v6608, 7
        %v6610 = vsub.s32 %v6607, %v6609
        %v6611 = vrot.slane %v6597, %v6610
        %v6612 = vcombine.low %v6566, %v6570
        %v6613 = vcombine.high %v6566, %v6570
        %v6615 = vunpack.c.l.s4 1983009808
        %v6616 = vunpack.c.0.s8 %v6615
        %v6617 = vlaneseq
        %v6618 = vshrl.u32 %v6617, 7
        %v6619 = vsub.s32 %v6616, %v6618
        %v6620 = vrot.slane %v6612, %v6619
        %v6622 = vunpack.c.l.s4 1983009808
        %v6623 = vunpack.c.0.s8 %v6622
        %v6624 = vlaneseq
        %v6625 = vshrl.u32 %v6624, 7
        %v6626 = vsub.s32 %v6623, %v6625
        %v6627 = vrot.slane %v6613, %v6626
        %v6628 = vcombine.low %v6572, %v6576
        %v6629 = vcombine.high %v6572, %v6576
        %v6631 = vunpack.c.l.s4 1983009808
        %v6632 = vunpack.c.0.s8 %v6631
        %v6633 = vlaneseq
        %v6634 = vshrl.u32 %v6633, 7
        %v6635 = vsub.s32 %v6632, %v6634
        %v6636 = vrot.slane %v6628, %v6635
        %v6638 = vunpack.c.l.s4 1983009808
        %v6639 = vunpack.c.0.s8 %v6638
        %v6640 = vlaneseq
        %v6641 = vshrl.u32 %v6640, 7
        %v6642 = vsub.s32 %v6639, %v6641
        %v6643 = vrot.slane %v6629, %v6642
        %v6644 = vcombine.low %v6574, %v6578
        %v6645 = vcombine.high %v6574, %v6578
        %v6647 = vunpack.c.l.s4 1983009808
        %v6648 = vunpack.c.0.s8 %v6647
        %v6649 = vlaneseq
        %v6650 = vshrl.u32 %v6649, 7
        %v6651 = vsub.s32 %v6648, %v6650
        %v6652 = vrot.slane %v6644, %v6651
        %v6654 = vunpack.c.l.s4 1983009808
        %v6655 = vunpack.c.0.s8 %v6654
        %v6656 = vlaneseq
        %v6657 = vshrl.u32 %v6656, 7
        %v6658 = vsub.s32 %v6655, %v6657
        %v6659 = vrot.slane %v6645, %v6658
        %v6660 = vcombine.low %v6604, %v6620
        %v6661 = vcombine.high %v6604, %v6620
        %v6663 = vunpack.c.l.s4 1934713408
        %v6664 = vunpack.c.0.s8 %v6663
        %v6665 = vlaneseq
        %v6666 = vshrl.u32 %v6665, 7
        %v6667 = vsub.s32 %v6664, %v6666
        %v6668 = vrot.slane %v6660, %v6667
        %v6670 = vunpack.c.l.s4 1934713408
        %v6671 = vunpack.c.0.s8 %v6670
        %v6672 = vlaneseq
        %v6673 = vshrl.u32 %v6672, 7
        %v6674 = vsub.s32 %v6671, %v6673
        %v6675 = vrot.slane %v6661, %v6674
        %v6676 = vcombine.low %v6611, %v6627
        %v6677 = vcombine.high %v6611, %v6627
        %v6679 = vunpack.c.l.s4 1934713408
        %v6680 = vunpack.c.0.s8 %v6679
        %v6681 = vlaneseq
        %v6682 = vshrl.u32 %v6681, 7
        %v6683 = vsub.s32 %v6680, %v6682
        %v6684 = vrot.slane %v6676, %v6683
        %v6686 = vunpack.c.l.s4 1934713408
        %v6687 = vunpack.c.0.s8 %v6686
        %v6688 = vlaneseq
        %v6689 = vshrl.u32 %v6688, 7
        %v6690 = vsub.s32 %v6687, %v6689
        %v6691 = vrot.slane %v6677, %v6690
        %v6692 = vcombine.low %v6636, %v6652
        %v6693 = vcombine.high %v6636, %v6652
        %v6695 = vunpack.c.l.s4 1934713408
        %v6696 = vunpack.c.0.s8 %v6695
        %v6697 = vlaneseq
        %v6698 = vshrl.u32 %v6697, 7
        %v6699 = vsub.s32 %v6696, %v6698
        %v6700 = vrot.slane %v6692, %v6699
        %v6702 = vunpack.c.l.s4 1934713408
        %v6703 = vunpack.c.0.s8 %v6702
        %v6704 = vlaneseq
        %v6705 = vshrl.u32 %v6704, 7
        %v6706 = vsub.s32 %v6703, %v6705
        %v6707 = vrot.slane %v6693, %v6706
        %v6708 = vcombine.low %v6643, %v6659
        %v6709 = vcombine.high %v6643, %v6659
        %v6711 = vunpack.c.l.s4 1934713408
        %v6712 = vunpack.c.0.s8 %v6711
        %v6713 = vlaneseq
        %v6714 = vshrl.u32 %v6713, 7
        %v6715 = vsub.s32 %v6712, %v6714
        %v6716 = vrot.slane %v6708, %v6715
        %v6718 = vunpack.c.l.s4 1934713408
        %v6719 = vunpack.c.0.s8 %v6718
        %v6720 = vlaneseq
        %v6721 = vshrl.u32 %v6720, 7
        %v6722 = vsub.s32 %v6719, %v6721
        %v6723 = vrot.slane %v6709, %v6722
        %v6724 = vcombine.low %v6668, %v6700
        %v6725 = vcombine.high %v6668, %v6700
        %v6726 = vcombine.low %v6675, %v6707
        %v6727 = vcombine.high %v6675, %v6707
        %v6728 = vcombine.low %v6684, %v6716
        %v6729 = vcombine.high %v6684, %v6716
        %v6730 = vcombine.low %v6691, %v6723
        %v6731 = vcombine.high %v6691, %v6723
        %v6732 = vcombine.low %v6580, %v6584
        %v6733 = vcombine.high %v6580, %v6584
        %v6735 = vunpack.c.l.s4 1983009808
        %v6736 = vunpack.c.0.s8 %v6735
        %v6737 = vlaneseq
        %v6738 = vshrl.u32 %v6737, 7
        %v6739 = vsub.s32 %v6736, %v6738
        %v6740 = vrot.slane %v6732, %v6739
        %v6742 = vunpack.c.l.s4 1983009808
        %v6743 = vunpack.c.0.s8 %v6742
        %v6744 = vlaneseq
        %v6745 = vshrl.u32 %v6744, 7
        %v6746 = vsub.s32 %v6743, %v6745
        %v6747 = vrot.slane %v6733, %v6746
        %v6748 = vcombine.low %v6582, %v6586
        %v6749 = vcombine.high %v6582, %v6586
        %v6751 = vunpack.c.l.s4 1983009808
        %v6752 = vunpack.c.0.s8 %v6751
        %v6753 = vlaneseq
        %v6754 = vshrl.u32 %v6753, 7
        %v6755 = vsub.s32 %v6752, %v6754
        %v6756 = vrot.slane %v6748, %v6755
        %v6758 = vunpack.c.l.s4 1983009808
        %v6759 = vunpack.c.0.s8 %v6758
        %v6760 = vlaneseq
        %v6761 = vshrl.u32 %v6760, 7
        %v6762 = vsub.s32 %v6759, %v6761
        %v6763 = vrot.slane %v6749, %v6762
        %v6764 = vcombine.low %v6588, %v6592
        %v6765 = vcombine.high %v6588, %v6592
        %v6767 = vunpack.c.l.s4 1983009808
        %v6768 = vunpack.c.0.s8 %v6767
        %v6769 = vlaneseq
        %v6770 = vshrl.u32 %v6769, 7
        %v6771 = vsub.s32 %v6768, %v6770
        %v6772 = vrot.slane %v6764, %v6771
        %v6774 = vunpack.c.l.s4 1983009808
        %v6775 = vunpack.c.0.s8 %v6774
        %v6776 = vlaneseq
        %v6777 = vshrl.u32 %v6776, 7
        %v6778 = vsub.s32 %v6775, %v6777
        %v6779 = vrot.slane %v6765, %v6778
        %v6780 = vcombine.low %v6590, %v6594
        %v6781 = vcombine.high %v6590, %v6594
        %v6783 = vunpack.c.l.s4 1983009808
        %v6784 = vunpack.c.0.s8 %v6783
        %v6785 = vlaneseq
        %v6786 = vshrl.u32 %v6785, 7
        %v6787 = vsub.s32 %v6784, %v6786
        %v6788 = vrot.slane %v6780, %v6787
        %v6790 = vunpack.c.l.s4 1983009808
        %v6791 = vunpack.c.0.s8 %v6790
        %v6792 = vlaneseq
        %v6793 = vshrl.u32 %v6792, 7
        %v6794 = vsub.s32 %v6791, %v6793
        %v6795 = vrot.slane %v6781, %v6794
        %v6796 = vcombine.low %v6740, %v6756
        %v6797 = vcombine.high %v6740, %v6756
        %v6799 = vunpack.c.l.s4 1934713408
        %v6800 = vunpack.c.0.s8 %v6799
        %v6801 = vlaneseq
        %v6802 = vshrl.u32 %v6801, 7
        %v6803 = vsub.s32 %v6800, %v6802
        %v6804 = vrot.slane %v6796, %v6803
        %v6806 = vunpack.c.l.s4 1934713408
        %v6807 = vunpack.c.0.s8 %v6806
        %v6808 = vlaneseq
        %v6809 = vshrl.u32 %v6808, 7
        %v6810 = vsub.s32 %v6807, %v6809
        %v6811 = vrot.slane %v6797, %v6810
        %v6812 = vcombine.low %v6747, %v6763
        %v6813 = vcombine.high %v6747, %v6763
        %v6815 = vunpack.c.l.s4 1934713408
        %v6816 = vunpack.c.0.s8 %v6815
        %v6817 = vlaneseq
        %v6818 = vshrl.u32 %v6817, 7
        %v6819 = vsub.s32 %v6816, %v6818
        %v6820 = vrot.slane %v6812, %v6819
        %v6822 = vunpack.c.l.s4 1934713408
        %v6823 = vunpack.c.0.s8 %v6822
        %v6824 = vlaneseq
        %v6825 = vshrl.u32 %v6824, 7
        %v6826 = vsub.s32 %v6823, %v6825
        %v6827 = vrot.slane %v6813, %v6826
        %v6828 = vcombine.low %v6772, %v6788
        %v6829 = vcombine.high %v6772, %v6788
        %v6831 = vunpack.c.l.s4 1934713408
        %v6832 = vunpack.c.0.s8 %v6831
        %v6833 = vlaneseq
        %v6834 = vshrl.u32 %v6833, 7
        %v6835 = vsub.s32 %v6832, %v6834
        %v6836 = vrot.slane %v6828, %v6835
        %v6838 = vunpack.c.l.s4 1934713408
        %v6839 = vunpack.c.0.s8 %v6838
        %v6840 = vlaneseq
        %v6841 = vshrl.u32 %v6840, 7
        %v6842 = vsub.s32 %v6839, %v6841
        %v6843 = vrot.slane %v6829, %v6842
        %v6844 = vcombine.low %v6779, %v6795
        %v6845 = vcombine.high %v6779, %v6795
        %v6847 = vunpack.c.l.s4 1934713408
        %v6848 = vunpack.c.0.s8 %v6847
        %v6849 = vlaneseq
        %v6850 = vshrl.u32 %v6849, 7
        %v6851 = vsub.s32 %v6848, %v6850
        %v6852 = vrot.slane %v6844, %v6851
        %v6854 = vunpack.c.l.s4 1934713408
        %v6855 = vunpack.c.0.s8 %v6854
        %v6856 = vlaneseq
        %v6857 = vshrl.u32 %v6856, 7
        %v6858 = vsub.s32 %v6855, %v6857
        %v6859 = vrot.slane %v6845, %v6858
        %v6860 = vcombine.low %v6804, %v6836
        %v6861 = vcombine.high %v6804, %v6836
        %v6862 = vcombine.low %v6811, %v6843
        %v6863 = vcombine.high %v6811, %v6843
        %v6864 = vcombine.low %v6820, %v6852
        %v6865 = vcombine.high %v6820, %v6852
        %v6866 = vcombine.low %v6827, %v6859
        %v6867 = vcombine.high %v6827, %v6859
        %v6868 = vcombine.low %v6565, %v6569
        %v6869 = vcombine.high %v6565, %v6569
        %v6871 = vunpack.c.l.s4 1983009808
        %v6872 = vunpack.c.0.s8 %v6871
        %v6873 = vlaneseq
        %v6874 = vshrl.u32 %v6873, 7
        %v6875 = vsub.s32 %v6872, %v6874
        %v6876 = vrot.slane %v6868, %v6875
        %v6878 = vunpack.c.l.s4 1983009808
        %v6879 = vunpack.c.0.s8 %v6878
        %v6880 = vlaneseq
        %v6881 = vshrl.u32 %v6880, 7
        %v6882 = vsub.s32 %v6879, %v6881
        %v6883 = vrot.slane %v6869, %v6882
        %v6884 = vcombine.low %v6567, %v6571
        %v6885 = vcombine.high %v6567, %v6571
        %v6887 = vunpack.c.l.s4 1983009808
        %v6888 = vunpack.c.0.s8 %v6887
        %v6889 = vlaneseq
        %v6890 = vshrl.u32 %v6889, 7
        %v6891 = vsub.s32 %v6888, %v6890
        %v6892 = vrot.slane %v6884, %v6891
        %v6894 = vunpack.c.l.s4 1983009808
        %v6895 = vunpack.c.0.s8 %v6894
        %v6896 = vlaneseq
        %v6897 = vshrl.u32 %v6896, 7
        %v6898 = vsub.s32 %v6895, %v6897
        %v6899 = vrot.slane %v6885, %v6898
        %v6900 = vcombine.low %v6573, %v6577
        %v6901 = vcombine.high %v6573, %v6577
        %v6903 = vunpack.c.l.s4 1983009808
        %v6904 = vunpack.c.0.s8 %v6903
        %v6905 = vlaneseq
        %v6906 = vshrl.u32 %v6905, 7
        %v6907 = vsub.s32 %v6904, %v6906
        %v6908 = vrot.slane %v6900, %v6907
        %v6910 = vunpack.c.l.s4 1983009808
        %v6911 = vunpack.c.0.s8 %v6910
        %v6912 = vlaneseq
        %v6913 = vshrl.u32 %v6912, 7
        %v6914 = vsub.s32 %v6911, %v6913
        %v6915 = vrot.slane %v6901, %v6914
        %v6916 = vcombine.low %v6575, %v6579
        %v6917 = vcombine.high %v6575, %v6579
        %v6919 = vunpack.c.l.s4 1983009808
        %v6920 = vunpack.c.0.s8 %v6919
        %v6921 = vlaneseq
        %v6922 = vshrl.u32 %v6921, 7
        %v6923 = vsub.s32 %v6920, %v6922
        %v6924 = vrot.slane %v6916, %v6923
        %v6926 = vunpack.c.l.s4 1983009808
        %v6927 = vunpack.c.0.s8 %v6926
        %v6928 = vlaneseq
        %v6929 = vshrl.u32 %v6928, 7
        %v6930 = vsub.s32 %v6927, %v6929
        %v6931 = vrot.slane %v6917, %v6930
        %v6932 = vcombine.low %v6876, %v6892
        %v6933 = vcombine.high %v6876, %v6892
        %v6935 = vunpack.c.l.s4 1934713408
        %v6936 = vunpack.c.0.s8 %v6935
        %v6937 = vlaneseq
        %v6938 = vshrl.u32 %v6937, 7
        %v6939 = vsub.s32 %v6936, %v6938
        %v6940 = vrot.slane %v6932, %v6939
        %v6942 = vunpack.c.l.s4 1934713408
        %v6943 = vunpack.c.0.s8 %v6942
        %v6944 = vlaneseq
        %v6945 = vshrl.u32 %v6944, 7
        %v6946 = vsub.s32 %v6943, %v6945
        %v6947 = vrot.slane %v6933, %v6946
        %v6948 = vcombine.low %v6883, %v6899
        %v6949 = vcombine.high %v6883, %v6899
        %v6951 = vunpack.c.l.s4 1934713408
        %v6952 = vunpack.c.0.s8 %v6951
        %v6953 = vlaneseq
        %v6954 = vshrl.u32 %v6953, 7
        %v6955 = vsub.s32 %v6952, %v6954
        %v6956 = vrot.slane %v6948, %v6955
        %v6958 = vunpack.c.l.s4 1934713408
        %v6959 = vunpack.c.0.s8 %v6958
        %v6960 = vlaneseq
        %v6961 = vshrl.u32 %v6960, 7
        %v6962 = vsub.s32 %v6959, %v6961
        %v6963 = vrot.slane %v6949, %v6962
        %v6964 = vcombine.low %v6908, %v6924
        %v6965 = vcombine.high %v6908, %v6924
        %v6967 = vunpack.c.l.s4 1934713408
        %v6968 = vunpack.c.0.s8 %v6967
        %v6969 = vlaneseq
        %v6970 = vshrl.u32 %v6969, 7
        %v6971 = vsub.s32 %v6968, %v6970
        %v6972 = vrot.slane %v6964, %v6971
        %v6974 = vunpack.c.l.s4 1934713408
        %v6975 = vunpack.c.0.s8 %v6974
        %v6976 = vlaneseq
        %v6977 = vshrl.u32 %v6976, 7
        %v6978 = vsub.s32 %v6975, %v6977
        %v6979 = vrot.slane %v6965, %v6978
        %v6980 = vcombine.low %v6915, %v6931
        %v6981 = vcombine.high %v6915, %v6931
        %v6983 = vunpack.c.l.s4 1934713408
        %v6984 = vunpack.c.0.s8 %v6983
        %v6985 = vlaneseq
        %v6986 = vshrl.u32 %v6985, 7
        %v6987 = vsub.s32 %v6984, %v6986
        %v6988 = vrot.slane %v6980, %v6987
        %v6990 = vunpack.c.l.s4 1934713408
        %v6991 = vunpack.c.0.s8 %v6990
        %v6992 = vlaneseq
        %v6993 = vshrl.u32 %v6992, 7
        %v6994 = vsub.s32 %v6991, %v6993
        %v6995 = vrot.slane %v6981, %v6994
        %v6996 = vcombine.low %v6940, %v6972
        %v6997 = vcombine.high %v6940, %v6972
        %v6998 = vcombine.low %v6947, %v6979
        %v6999 = vcombine.high %v6947, %v6979
        %v7000 = vcombine.low %v6956, %v6988
        %v7001 = vcombine.high %v6956, %v6988
        %v7002 = vcombine.low %v6963, %v6995
        %v7003 = vcombine.high %v6963, %v6995
        %v7004 = vcombine.low %v6581, %v6585
        %v7005 = vcombine.high %v6581, %v6585
        %v7007 = vunpack.c.l.s4 1983009808
        %v7008 = vunpack.c.0.s8 %v7007
        %v7009 = vlaneseq
        %v7010 = vshrl.u32 %v7009, 7
        %v7011 = vsub.s32 %v7008, %v7010
        %v7012 = vrot.slane %v7004, %v7011
        %v7014 = vunpack.c.l.s4 1983009808
        %v7015 = vunpack.c.0.s8 %v7014
        %v7016 = vlaneseq
        %v7017 = vshrl.u32 %v7016, 7
        %v7018 = vsub.s32 %v7015, %v7017
        %v7019 = vrot.slane %v7005, %v7018
        %v7020 = vcombine.low %v6583, %v6587
        %v7021 = vcombine.high %v6583, %v6587
        %v7023 = vunpack.c.l.s4 1983009808
        %v7024 = vunpack.c.0.s8 %v7023
        %v7025 = vlaneseq
        %v7026 = vshrl.u32 %v7025, 7
        %v7027 = vsub.s32 %v7024, %v7026
        %v7028 = vrot.slane %v7020, %v7027
        %v7030 = vunpack.c.l.s4 1983009808
        %v7031 = vunpack.c.0.s8 %v7030
        %v7032 = vlaneseq
        %v7033 = vshrl.u32 %v7032, 7
        %v7034 = vsub.s32 %v7031, %v7033
        %v7035 = vrot.slane %v7021, %v7034
        %v7036 = vcombine.low %v6589, %v6593
        %v7037 = vcombine.high %v6589, %v6593
        %v7039 = vunpack.c.l.s4 1983009808
        %v7040 = vunpack.c.0.s8 %v7039
        %v7041 = vlaneseq
        %v7042 = vshrl.u32 %v7041, 7
        %v7043 = vsub.s32 %v7040, %v7042
        %v7044 = vrot.slane %v7036, %v7043
        %v7046 = vunpack.c.l.s4 1983009808
        %v7047 = vunpack.c.0.s8 %v7046
        %v7048 = vlaneseq
        %v7049 = vshrl.u32 %v7048, 7
        %v7050 = vsub.s32 %v7047, %v7049
        %v7051 = vrot.slane %v7037, %v7050
        %v7052 = vcombine.low %v6591, %v6595
        %v7053 = vcombine.high %v6591, %v6595
        %v7055 = vunpack.c.l.s4 1983009808
        %v7056 = vunpack.c.0.s8 %v7055
        %v7057 = vlaneseq
        %v7058 = vshrl.u32 %v7057, 7
        %v7059 = vsub.s32 %v7056, %v7058
        %v7060 = vrot.slane %v7052, %v7059
        %v7062 = vunpack.c.l.s4 1983009808
        %v7063 = vunpack.c.0.s8 %v7062
        %v7064 = vlaneseq
        %v7065 = vshrl.u32 %v7064, 7
        %v7066 = vsub.s32 %v7063, %v7065
        %v7067 = vrot.slane %v7053, %v7066
        %v7068 = vcombine.low %v7012, %v7028
        %v7069 = vcombine.high %v7012, %v7028
        %v7071 = vunpack.c.l.s4 1934713408
        %v7072 = vunpack.c.0.s8 %v7071
        %v7073 = vlaneseq
        %v7074 = vshrl.u32 %v7073, 7
        %v7075 = vsub.s32 %v7072, %v7074
        %v7076 = vrot.slane %v7068, %v7075
        %v7078 = vunpack.c.l.s4 1934713408
        %v7079 = vunpack.c.0.s8 %v7078
        %v7080 = vlaneseq
        %v7081 = vshrl.u32 %v7080, 7
        %v7082 = vsub.s32 %v7079, %v7081
        %v7083 = vrot.slane %v7069, %v7082
        %v7084 = vcombine.low %v7019, %v7035
        %v7085 = vcombine.high %v7019, %v7035
        %v7087 = vunpack.c.l.s4 1934713408
        %v7088 = vunpack.c.0.s8 %v7087
        %v7089 = vlaneseq
        %v7090 = vshrl.u32 %v7089, 7
        %v7091 = vsub.s32 %v7088, %v7090
        %v7092 = vrot.slane %v7084, %v7091
        %v7094 = vunpack.c.l.s4 1934713408
        %v7095 = vunpack.c.0.s8 %v7094
        %v7096 = vlaneseq
        %v7097 = vshrl.u32 %v7096, 7
        %v7098 = vsub.s32 %v7095, %v7097
        %v7099 = vrot.slane %v7085, %v7098
        %v7100 = vcombine.low %v7044, %v7060
        %v7101 = vcombine.high %v7044, %v7060
        %v7103 = vunpack.c.l.s4 1934713408
        %v7104 = vunpack.c.0.s8 %v7103
        %v7105 = vlaneseq
        %v7106 = vshrl.u32 %v7105, 7
        %v7107 = vsub.s32 %v7104, %v7106
        %v7108 = vrot.slane %v7100, %v7107
        %v7110 = vunpack.c.l.s4 1934713408
        %v7111 = vunpack.c.0.s8 %v7110
        %v7112 = vlaneseq
        %v7113 = vshrl.u32 %v7112, 7
        %v7114 = vsub.s32 %v7111, %v7113
        %v7115 = vrot.slane %v7101, %v7114
        %v7116 = vcombine.low %v7051, %v7067
        %v7117 = vcombine.high %v7051, %v7067
        %v7119 = vunpack.c.l.s4 1934713408
        %v7120 = vunpack.c.0.s8 %v7119
        %v7121 = vlaneseq
        %v7122 = vshrl.u32 %v7121, 7
        %v7123 = vsub.s32 %v7120, %v7122
        %v7124 = vrot.slane %v7116, %v7123
        %v7126 = vunpack.c.l.s4 1934713408
        %v7127 = vunpack.c.0.s8 %v7126
        %v7128 = vlaneseq
        %v7129 = vshrl.u32 %v7128, 7
        %v7130 = vsub.s32 %v7127, %v7129
        %v7131 = vrot.slane %v7117, %v7130
        %v7132 = vcombine.low %v7076, %v7108
        %v7133 = vcombine.high %v7076, %v7108
        %v7134 = vcombine.low %v7083, %v7115
        %v7135 = vcombine.high %v7083, %v7115
        %v7136 = vcombine.low %v7092, %v7124
        %v7137 = vcombine.high %v7092, %v7124
        %v7138 = vcombine.low %v7099, %v7131
        %v7139 = vcombine.high %v7099, %v7131
        %7142 = vrot.lane.b32.xlu0 %v6725, 64
        %v7143 = vpop.permute.xlu0 %7142
        %7144 = vrot.lane.b32.xlu0 %v6861, 64
        %v7145 = vpop.permute.xlu0 %7144
        %7150 = vrot.lane.b32.xlu0 %v6727, 64
        %v7151 = vpop.permute.xlu0 %7150
        %7152 = vrot.lane.b32.xlu0 %v6863, 64
        %v7153 = vpop.permute.xlu0 %7152
        %7158 = vrot.lane.b32.xlu0 %v6729, 64
        %v7159 = vpop.permute.xlu0 %7158
        %7160 = vrot.lane.b32.xlu0 %v6865, 64
        %v7161 = vpop.permute.xlu0 %7160
        %7166 = vrot.lane.b32.xlu0 %v6731, 64
        %v7167 = vpop.permute.xlu0 %7166
        %7168 = vrot.lane.b32.xlu0 %v6867, 64
        %v7169 = vpop.permute.xlu0 %7168
        %7174 = vrot.lane.b32.xlu0 %v6997, 64
        %v7175 = vpop.permute.xlu0 %7174
        %7176 = vrot.lane.b32.xlu0 %v7133, 64
        %v7177 = vpop.permute.xlu0 %7176
        %7182 = vrot.lane.b32.xlu0 %v6999, 64
        %v7183 = vpop.permute.xlu0 %7182
        %7184 = vrot.lane.b32.xlu0 %v7135, 64
        %v7185 = vpop.permute.xlu0 %7184
        %7190 = vrot.lane.b32.xlu0 %v7001, 64
        %v7191 = vpop.permute.xlu0 %7190
        %7192 = vrot.lane.b32.xlu0 %v7137, 64
        %v7193 = vpop.permute.xlu0 %7192
        %7198 = vrot.lane.b32.xlu0 %v7003, 64
        %v7199 = vpop.permute.xlu0 %7198
        %7200 = vrot.lane.b32.xlu0 %v7139, 64
        %v7201 = vpop.permute.xlu0 %7200
        %vm7204 = vcmask 523264
        %v7205 = vsel %vm7204, %v6724, %v7143
        %v7206 = vsel %vm7204, %v6860, %v7145
        %v7207 = vsel %vm7204, %v6726, %v7151
        %v7208 = vsel %vm7204, %v6862, %v7153
        %v7209 = vsel %vm7204, %v6728, %v7159
        %v7210 = vsel %vm7204, %v6864, %v7161
        %v7211 = vsel %vm7204, %v6730, %v7167
        %v7212 = vsel %vm7204, %v6866, %v7169
        %v7213 = vsel %vm7204, %v6996, %v7175
        %v7214 = vsel %vm7204, %v7132, %v7177
        %v7215 = vsel %vm7204, %v6998, %v7183
        %v7216 = vsel %vm7204, %v7134, %v7185
        %v7217 = vsel %vm7204, %v7000, %v7191
        %v7218 = vsel %vm7204, %v7136, %v7193
        %v7219 = vsel %vm7204, %v7002, %v7199
        %v7220 = vsel %vm7204, %v7138, %v7201
        %7221 = vst [vmem:[%s289] sm:$0xff] %v7205
        %7222 = vst [vmem:[%s289 + $0x8] sm:$0xff] %v7207
        %7223 = vst [vmem:[%s289 + $0x10] sm:$0xff] %v7209
        %7224 = vst [vmem:[%s289 + $0x18] sm:$0xff] %v7211
        %7225 = vst [vmem:[%s289 + $0x20] sm:$0xff] %v7213
        %7226 = vst [vmem:[%s289 + $0x28] sm:$0xff] %v7215
        %7227 = vst [vmem:[%s289 + $0x30] sm:$0xff] %v7217
        %7228 = vst [vmem:[%s289 + $0x38] sm:$0xff] %v7219
        %7229 = vst [vmem:[%s289 + $0x40] sm:$0xff] %v7206
        %7230 = vst [vmem:[%s289 + $0x48] sm:$0xff] %v7208
        %7231 = vst [vmem:[%s289 + $0x50] sm:$0xff] %v7210
        %7232 = vst [vmem:[%s289 + $0x58] sm:$0xff] %v7212
        %7233 = vst [vmem:[%s289 + $0x60] sm:$0xff] %v7214
        %7234 = vst [vmem:[%s289 + $0x68] sm:$0xff] %v7216
        %7235 = vst [vmem:[%s289 + $0x70] sm:$0xff] %v7218
        %7236 = vst [vmem:[%s289 + $0x78] sm:$0xff] %v7220
      $region44: #{_subnet_apply.1} parent=31 // pred_fallthru
        _
      %p7237 = scmp.lt.s32.totalorder %s35, 1
      %s7238 = scalar_select %p7237, %s35, 1
      %s7239 = smul.addr %s7238, 16
      %s7240 = smul.addr %s7239, 8
      %s7241 = scalar_lea.vmem %s6, %s7240
      // Predicated region
      $region45: #{_subnet_apply.1} parent=31 // pred_check
        %p7242 = pneg %p151
      $region46: #{_subnet_apply.1} parent=31 // pred_check_branch
        %7244 = sbr.rel (%p7242) target = $region48
      $region47: #{_subnet_apply.1} parent=31 // pred_region
        _
      $region48: #{_subnet_apply.1} parent=31 // pred_fallthru
        _
    $region32: #{_subnet_apply.1} parent=5 // pred_fallthru
      _
    %p7245 = scmp.le.s32.totalorder 2, %s26
    // Predicated region
    $region49: #{_subnet_apply.1} parent=5 // pred_check
      %p7246 = pneg %p7245
    $region50: #{_subnet_apply.1} parent=5 // pred_check_branch
      %7248 = sbr.rel (%p7246) target = $region52
    $region51: #{_subnet_apply.1} parent=5 // pred_region
      %s7249 = ssub.s32 %s26, 2
      // Predicated region
      $region53: #{_subnet_apply.1} parent=51 // pred_check
        %p7250 = pneg %p157
      $region54: #{_subnet_apply.1} parent=51 // pred_check_branch
        %7252 = sbr.rel (%p7250) target = $region56
      $region55: #{_subnet_apply.1} parent=51 // pred_region
        %p7253 = scmp.lt.s32.totalorder %s37, 1
        %s7254 = scalar_select %p7253, %s37, 1
        %s7255 = smul.addr %s7254, 16
        %s7256 = smul.addr %s7255, 8
        %s7257 = scalar_lea.vmem %s6, %s7256
      $region56: #{_subnet_apply.1} parent=51 // pred_fallthru
        _
    $region52: #{_subnet_apply.1} parent=5 // pred_fallthru
      _
  $region6: #{_subnet_apply.1} parent=0 // loop_footer
    %s30 = sadd.s32 1, %s26
  $region7: #{_subnet_apply.1} parent=0 // loop_footer_branch
    %25 = sbr.rel target = $region3
  $region8: #{_subnet_apply.1} parent=0 // loop_exit
    _

</llo_original>
